<compile_context>
chip_gen: v5e
topology: v5e:2x2
jax: 0.10.0
libtpu: 0.0.40
codegen_flags: <defaults>
</compile_context>

<pallas_src>
import functools
import math

import jax
import jax.numpy as jnp
from jax.experimental import pallas as pl
from jax.experimental.pallas import tpu as pltpu

# ----------------------------- config ---------------------------------------
D_MODEL = 32
NHEAD = 4
DIM_FF = 64
NUM_LAYERS = 3
MASKING_RADIUS = (0.4, 0.8, 1.2)   # one radius per layer (all > 0 here)
LN_EPS = 1e-5
NEG_INF = -1e30

_W_ORDER = ("wq", "bq", "wk", "bk", "wv", "bv", "wo", "bo",
            "g1", "b1", "w1", "bf1", "w2", "bf2", "g2", "b2")


# ----------------------------- fused kernel ----------------------------------


def _layer_norm(x, g, b, eps=LN_EPS):
    mu = jnp.mean(x, axis=-1, keepdims=True)
    var = jnp.mean(jnp.square(x - mu), axis=-1, keepdims=True)
    return (x - mu) * jax.lax.rsqrt(var + eps) * g + b


def _encoder_stack_kernel(*refs, num_layers, nhead, bb, radii_sq, has_pos, has_pad):
    it = iter(refs)
    src_ref = next(it)
    pos_ref = next(it) if has_pos else None
    xyz_ref = next(it)
    pad_ref = next(it) if has_pad else None
    (wq_ref, bq_ref, wk_ref, bk_ref, wv_ref, bv_ref, wo_ref, bo_ref,
     g1_ref, b1_ref, w1_ref, bf1_ref, w2_ref, bf2_ref, g2_ref, b2_ref) = (
        next(it) for _ in range(16))
    out_ref = next(it)

    n = src_ref.shape[1]
    c = src_ref.shape[2]
    dh = c // nhead

    # Flatten the Bb batch elements into rows so every projection / FFN matmul runs
    # on Bb*N sublanes (better MXU fill, fewer pushes).  Done via per-element loads +
    # sublane concat (cheap, layout-safe).
    if bb == 1:
        x = src_ref[0].astype(jnp.float32)
        pos = pos_ref[0].astype(jnp.float32) if has_pos else None
    else:
        x = jnp.concatenate([src_ref[b] for b in range(bb)],
                            axis=0).astype(jnp.float32)
        pos = (jnp.concatenate([pos_ref[b] for b in range(bb)],
                               axis=0).astype(jnp.float32) if has_pos else None)

    # ---- squared pairwise distances per batch element (computed once, reused) ----
    d2 = []
    for b in range(bb):
        p3 = xyz_ref[b].astype(jnp.float32)                      # (N, 3)
        sq = jnp.sum(p3 * p3, axis=-1, keepdims=True)            # (N, 1)
        cross = jax.lax.dot_general(p3, p3, (((1,), (1,)), ((), ())),
                                    preferred_element_type=jnp.float32)
        d2.append(jnp.maximum(sq + sq.T - 2.0 * cross, 0.0))     # (N, N)

    pad = [pad_ref[b].astype(jnp.float32) for b in range(bb)] if has_pad else None

    # ---- per-layer additive bias: hoisted out of the layer loop & de-duplicated ----
    cache = {}
    bias_by_layer = []
    for l in range(num_layers):
        r2 = radii_sq[l]
        if r2 not in cache:
            if r2 is None:
                cache[r2] = pad if has_pad else [None] * bb      # (1,N) broadcast / none
            else:
                masks = [jnp.where(d2[b] >= r2, NEG_INF, 0.0) for b in range(bb)]
                if has_pad:
                    masks = [masks[b] + pad[b] for b in range(bb)]
                cache[r2] = masks
        bias_by_layer.append(cache[r2])

    for l in range(num_layers):                                  # layers unrolled
        xqk = x + pos if has_pos else x                          # q = k = src + pos ; v = src
        xqk16 = xqk.astype(jnp.bfloat16)
        x16 = x.astype(jnp.bfloat16)

        # ---- full-width QKV projections (1/sqrt(Dh) pre-folded into wq/bq) ----
        q = jnp.dot(xqk16, wq_ref[l], preferred_element_type=jnp.float32) + bq_ref[l]
        k = jnp.dot(xqk16, wk_ref[l], preferred_element_type=jnp.float32) + bk_ref[l]
        v = jnp.dot(x16, wv_ref[l], preferred_element_type=jnp.float32) + bv_ref[l]

        # ---- attention: heads only split for the (N,N) score / P@V part ----
        rows = []
        for b in range(bb):
            qb = q[b * n:(b + 1) * n].astype(jnp.bfloat16)
            kb = k[b * n:(b + 1) * n].astype(jnp.bfloat16)
            vb = v[b * n:(b + 1) * n].astype(jnp.bfloat16)
            bias = bias_by_layer[l][b]
            heads = []
            for h in range(nhead):
                qh = qb[:, h * dh:(h + 1) * dh]
                kh = kb[:, h * dh:(h + 1) * dh]
                vh = vb[:, h * dh:(h + 1) * dh]
                s = jax.lax.dot_general(qh, kh, (((1,), (1,)), ((), ())),
                                        preferred_element_type=jnp.float32)
                if bias is not None:
                    s = s + bias
                m = jnp.max(s, axis=-1, keepdims=True)
                e = jnp.exp(s - m)
                denom = jnp.sum(e, axis=-1, keepdims=True)
                pr = e * pl.reciprocal(denom, approx=False)      # exact; EUP path
                heads.append(jnp.dot(pr.astype(jnp.bfloat16), vh,
                                     preferred_element_type=jnp.float32))
            rows.append(jnp.concatenate(heads, axis=-1))         # (N, C) concat heads
        attn_in = jnp.concatenate(rows, axis=0) if bb > 1 else rows[0]   # (Bb*N, C)

        # single concat-heads output projection over all Bb*N rows
        attn = jnp.dot(attn_in.astype(jnp.bfloat16), wo_ref[l],
                       preferred_element_type=jnp.float32) + bo_ref[l]

        # ---- post-norm residual block 1 (residual add fused into LN, f32 stats) ----
        y = _layer_norm(x + attn, g1_ref[l], b1_ref[l])

        # ---- FFN + post-norm residual block 2 ----
        hdn = jnp.maximum(
            jnp.dot(y.astype(jnp.bfloat16), w1_ref[l],
                    preferred_element_type=jnp.float32) + bf1_ref[l], 0.0)
        f = jnp.dot(hdn.astype(jnp.bfloat16), w2_ref[l],
                    preferred_element_type=jnp.float32) + bf2_ref[l]
        x = _layer_norm(y + f, g2_ref[l], b2_ref[l])

    for b in range(bb):
        out_ref[b] = x[b * n:(b + 1) * n].astype(out_ref.dtype)


# ----------------------------- parameter init -------------------------------


def xavier_uniform(key, shape, dtype=jnp.float32):
    fan_out, fan_in = shape  # torch Linear / in_proj weights are (out, in)
    limit = math.sqrt(6.0 / (fan_in + fan_out))
    return jax.random.uniform(key, shape, dtype, -limit, limit)


def init_layer_params(key, d_model=D_MODEL, dim_ff=DIM_FF):
    ks = jax.random.split(key, 4)
    return {
        "in_proj_w": xavier_uniform(ks[0], (3 * d_model, d_model)),
        "in_proj_b": jnp.zeros((3 * d_model,), jnp.float32),
        "out_proj_w": xavier_uniform(ks[1], (d_model, d_model)),
        "out_proj_b": jnp.zeros((d_model,), jnp.float32),
        "lin1_w": xavier_uniform(ks[2], (dim_ff, d_model)),
        "lin1_b": jnp.zeros((dim_ff,), jnp.float32),
        "lin2_w": xavier_uniform(ks[3], (d_model, dim_ff)),
        "lin2_b": jnp.zeros((d_model,), jnp.float32),
        "norm1_g": jnp.ones((d_model,), jnp.float32),
        "norm1_b": jnp.zeros((d_model,), jnp.float32),
        "norm2_g": jnp.ones((d_model,), jnp.float32),
        "norm2_b": jnp.zeros((d_model,), jnp.float32),
    }


def _stack_params(layer_params, d_model, nhead, w_dtype=jnp.bfloat16):
    """Stack layers, fold 1/sqrt(Dh) into Wq/bq, transpose to (in, out).

    Matmul weights are stored in bf16 (MXU operands); biases / LN params stay f32.
    """
    C = d_model
    Dh = C // nhead
    scale = 1.0 / math.sqrt(Dh)

    acc = {k: [] for k in _W_ORDER}
    for p in layer_params:
        acc["wq"].append((p["in_proj_w"][:C] * scale).T)        # (C, C), pre-scaled
        acc["wk"].append(p["in_proj_w"][C:2 * C].T)
        acc["wv"].append(p["in_proj_w"][2 * C:].T)
        acc["bq"].append((p["in_proj_b"][:C] * scale).reshape(1, C))
        acc["bk"].append(p["in_proj_b"][C:2 * C].reshape(1, C))
        acc["bv"].append(p["in_proj_b"][2 * C:].reshape(1, C))
        acc["wo"].append(p["out_proj_w"].T)                     # (C, C), concat-head rows
        acc["bo"].append(p["out_proj_b"].reshape(1, C))
        acc["g1"].append(p["norm1_g"].reshape(1, C))
        acc["b1"].append(p["norm1_b"].reshape(1, C))
        acc["w1"].append(p["lin1_w"].T)                         # (C, FF)
        acc["bf1"].append(p["lin1_b"].reshape(1, -1))
        acc["w2"].append(p["lin2_w"].T)                         # (FF, C)
        acc["bf2"].append(p["lin2_b"].reshape(1, C))
        acc["g2"].append(p["norm2_g"].reshape(1, C))
        acc["b2"].append(p["norm2_b"].reshape(1, C))

    matrices = {"wq", "wk", "wv", "wo", "w1", "w2"}
    out = []
    for name in _W_ORDER:
        arr = jnp.stack(acc[name], axis=0)
        out.append(arr.astype(w_dtype) if name in matrices else arr.astype(jnp.float32))
    return tuple(out)


def _pick_batch_block(batch):
    """Batch several elements per grid step (amortizes the ~0.35 us per-step overhead
    and fills MXU sublanes) while keeping >= 2 grid steps so dimension_semantics
    ("parallel",) still splits work across v7x's two TensorCores."""
    if batch <= 1:
        return 1
    for steps in (2, 3, 4):
        if batch % steps == 0:
            return batch // steps
    return 1


# ----------------------------- encoder forward -------------------------------


def masked_transformer_encoder_forward(layer_params, src, xyz,
                                       masking_radius=MASKING_RADIUS,
                                       pos=None, src_key_padding_mask=None,
                                       nhead=NHEAD):
    # src: (N, B, C), xyz: (B, N, 3).  Returns (xyz, output, xyz_inds).
    N, B, C = src.shape
    L = len(layer_params)
    FF = layer_params[0]["lin1_w"].shape[0]

    has_pos = pos is not None
    has_pad = src_key_padding_mask is not None

    # single layout change for the whole stack: (N, B, C) -> (B, N, C)
    inputs = [jnp.transpose(src, (1, 0, 2))]
    if has_pos:
        inputs.append(jnp.transpose(pos, (1, 0, 2)))
    inputs.append(xyz)
    if has_pad:
        inputs.append(jnp.where(src_key_padding_mask[:, None, :],
                                jnp.float32(NEG_INF), jnp.float32(0.0)))  # (B, 1, N)

    weights = _stack_params(layer_params, d_model=C, nhead=nhead)
    radii_sq = tuple(float(r) ** 2 if r > 0 else None for r in masking_radius[:L])

    Bb = _pick_batch_block(B)
    G = B // Bb

    kern = functools.partial(_encoder_stack_kernel, num_layers=L, nhead=nhead,
                             bb=Bb, radii_sq=radii_sq,
                             has_pos=has_pos, has_pad=has_pad)

    data_specs = [pl.BlockSpec((Bb, N, C), lambda g: (g, 0, 0))]      # src
    if has_pos:
        data_specs.append(pl.BlockSpec((Bb, N, C), lambda g: (g, 0, 0)))
    data_specs.append(pl.BlockSpec((Bb, N, 3), lambda g: (g, 0, 0)))  # xyz
    if has_pad:
        data_specs.append(pl.BlockSpec((Bb, 1, N), lambda g: (g, 0, 0)))
    w_specs = [pl.BlockSpec(w.shape, lambda g, _n=w.ndim: (0,) * _n) for w in weights]

    # Explicit scoped-VMEM budget: double-buffered data blocks + resident weights +
    # f32 intermediates, with generous headroom (defaults are only 16/32 MiB).
    itemsize = jnp.dtype(src.dtype).itemsize
    blk_bytes = Bb * N * (C * 4 * (2 if has_pos else 1) + 3 * 4
                          + (4 if has_pad else 0) + C * itemsize)
    w_bytes = sum(int(w.size) * jnp.dtype(w.dtype).itemsize for w in weights)
    inter_bytes = (12 * Bb * N * max(C, FF) * 4
                   + (len(set(radii_sq)) + 4) * Bb * N * N * 4)
    est = 2 * blk_bytes + 2 * w_bytes + inter_bytes
    vmem_limit = int(min(max(4 * est, 32 * 1024 * 1024), 64 * 1024 * 1024))

    out_b = pl.pallas_call(
        kern,
        out_shape=jax.ShapeDtypeStruct((B, N, C), src.dtype),
        grid=(G,),
        in_specs=data_specs + w_specs,
        out_specs=pl.BlockSpec((Bb, N, C), lambda g: (g, 0, 0)),
        compiler_params=pltpu.CompilerParams(
            dimension_semantics=("parallel",),
            vmem_limit_bytes=vmem_limit),
    )(*inputs, *weights)

    output = jnp.transpose(out_b, (1, 0, 2))    # back to (N, B, C)
    # final norm is None in this configuration (self.norm = None)
    xyz_inds = None
    return xyz, output, xyz_inds


# ----------------------------- main ------------------------------------------

if __name__ == "__main__":
    key = jax.random.PRNGKey(0)
    keys = jax.random.split(key, 3 + NUM_LAYERS)
    k_src, k_xyz, k_pos = keys[0], keys[1], keys[2]
    k_layers = keys[3:]

    N, B = 16, 4          # B=4 -> 2 grid steps of 2 batch elements each
    src = jax.random.normal(k_src, (N, B, D_MODEL), jnp.float32)
    xyz = jax.random.uniform(k_xyz, (B, N, 3), jnp.float32)
    pos = 0.1 * jax.random.normal(k_pos, (N, B, D_MODEL), jnp.float32)

    layer_params = [init_layer_params(k) for k in k_layers]

    xyz_out, output, xyz_inds = masked_transformer_encoder_forward(
        layer_params, src, xyz, pos=pos)
    output = jax.block_until_ready(output)

    assert output.shape == (N, B, D_MODEL)
    assert xyz_out.shape == (B, N, 3)
    assert xyz_inds is None
    assert bool(jnp.all(jnp.isfinite(output)))
    print("KERNEL_OK")
</pallas_src>

<mosaic_0001>
module attributes {stable_mosaic.version = 11 : i64} {
  func.func @_encoder_stack_kernel(%arg0: i32, %arg1: memref<2x16x32xf32, #tpu.memory_space<vmem>>, %arg2: memref<2x16x32xf32, #tpu.memory_space<vmem>>, %arg3: memref<2x16x3xf32, #tpu.memory_space<vmem>>, %arg4: memref<3x32x32xbf16, #tpu.memory_space<vmem>>, %arg5: memref<3x1x32xf32, #tpu.memory_space<vmem>>, %arg6: memref<3x32x32xbf16, #tpu.memory_space<vmem>>, %arg7: memref<3x1x32xf32, #tpu.memory_space<vmem>>, %arg8: memref<3x32x32xbf16, #tpu.memory_space<vmem>>, %arg9: memref<3x1x32xf32, #tpu.memory_space<vmem>>, %arg10: memref<3x32x32xbf16, #tpu.memory_space<vmem>>, %arg11: memref<3x1x32xf32, #tpu.memory_space<vmem>>, %arg12: memref<3x1x32xf32, #tpu.memory_space<vmem>>, %arg13: memref<3x1x32xf32, #tpu.memory_space<vmem>>, %arg14: memref<3x32x64xbf16, #tpu.memory_space<vmem>>, %arg15: memref<3x1x64xf32, #tpu.memory_space<vmem>>, %arg16: memref<3x64x32xbf16, #tpu.memory_space<vmem>>, %arg17: memref<3x1x32xf32, #tpu.memory_space<vmem>>, %arg18: memref<3x1x32xf32, #tpu.memory_space<vmem>>, %arg19: memref<3x1x32xf32, #tpu.memory_space<vmem>>, %arg20: memref<2x16x32xf32, #tpu.memory_space<vmem>>) attributes {dimension_semantics = [#tpu.dimension_semantics<parallel>], iteration_bounds = array<i64: 2>, scalar_prefetch = 0 : i64, scratch_operands = 0 : i64, tpu.core_type = #tpu.core_type<tc>, window_params = [{transform_indices = @transform_0, window_bounds = array<i64: 2, 16, 32>}, {transform_indices = @transform_1, window_bounds = array<i64: 2, 16, 32>}, {transform_indices = @transform_2, window_bounds = array<i64: 2, 16, 3>}, {pipeline_mode = #tpu.pipeline_mode<synchronous>, transform_indices = @transform_3, window_bounds = array<i64: 3, 32, 32>}, {pipeline_mode = #tpu.pipeline_mode<synchronous>, transform_indices = @transform_4, window_bounds = array<i64: 3, 1, 32>}, {pipeline_mode = #tpu.pipeline_mode<synchronous>, transform_indices = @transform_5, window_bounds = array<i64: 3, 32, 32>}, {pipeline_mode = #tpu.pipeline_mode<synchronous>, transform_indices = @transform_6, window_bounds = array<i64: 3, 1, 32>}, {pipeline_mode = #tpu.pipeline_mode<synchronous>, transform_indices = @transform_7, window_bounds = array<i64: 3, 32, 32>}, {pipeline_mode = #tpu.pipeline_mode<synchronous>, transform_indices = @transform_8, window_bounds = array<i64: 3, 1, 32>}, {pipeline_mode = #tpu.pipeline_mode<synchronous>, transform_indices = @transform_9, window_bounds = array<i64: 3, 32, 32>}, {pipeline_mode = #tpu.pipeline_mode<synchronous>, transform_indices = @transform_10, window_bounds = array<i64: 3, 1, 32>}, {pipeline_mode = #tpu.pipeline_mode<synchronous>, transform_indices = @transform_11, window_bounds = array<i64: 3, 1, 32>}, {pipeline_mode = #tpu.pipeline_mode<synchronous>, transform_indices = @transform_12, window_bounds = array<i64: 3, 1, 32>}, {pipeline_mode = #tpu.pipeline_mode<synchronous>, transform_indices = @transform_13, window_bounds = array<i64: 3, 32, 64>}, {pipeline_mode = #tpu.pipeline_mode<synchronous>, transform_indices = @transform_14, window_bounds = array<i64: 3, 1, 64>}, {pipeline_mode = #tpu.pipeline_mode<synchronous>, transform_indices = @transform_15, window_bounds = array<i64: 3, 64, 32>}, {pipeline_mode = #tpu.pipeline_mode<synchronous>, transform_indices = @transform_16, window_bounds = array<i64: 3, 1, 32>}, {pipeline_mode = #tpu.pipeline_mode<synchronous>, transform_indices = @transform_17, window_bounds = array<i64: 3, 1, 32>}, {pipeline_mode = #tpu.pipeline_mode<synchronous>, transform_indices = @transform_18, window_bounds = array<i64: 3, 1, 32>}, {transform_indices = @transform_19, window_bounds = array<i64: 2, 16, 32>}]} {
    %c0 = arith.constant 0 : index
    %c0_0 = arith.constant 0 : index
    %c0_1 = arith.constant 0 : index
    %0 = vector.load %arg1[%c0, %c0_0, %c0_1] : memref<2x16x32xf32, #tpu.memory_space<vmem>>, vector<1x16x32xf32>
    %1 = vector.shape_cast %0 : vector<1x16x32xf32> to vector<16x32xf32>
    %c1 = arith.constant 1 : index
    %c0_2 = arith.constant 0 : index
    %c0_3 = arith.constant 0 : index
    %2 = vector.load %arg1[%c1, %c0_2, %c0_3] : memref<2x16x32xf32, #tpu.memory_space<vmem>>, vector<1x16x32xf32>
    %3 = vector.shape_cast %2 : vector<1x16x32xf32> to vector<16x32xf32>
    %4 = tpu.concatenate %1, %3 in 0 : vector<16x32xf32>, vector<16x32xf32> -> vector<32x32xf32>
    %c0_4 = arith.constant 0 : index
    %c0_5 = arith.constant 0 : index
    %c0_6 = arith.constant 0 : index
    %5 = vector.load %arg2[%c0_4, %c0_5, %c0_6] : memref<2x16x32xf32, #tpu.memory_space<vmem>>, vector<1x16x32xf32>
    %6 = vector.shape_cast %5 : vector<1x16x32xf32> to vector<16x32xf32>
    %c1_7 = arith.constant 1 : index
    %c0_8 = arith.constant 0 : index
    %c0_9 = arith.constant 0 : index
    %7 = vector.load %arg2[%c1_7, %c0_8, %c0_9] : memref<2x16x32xf32, #tpu.memory_space<vmem>>, vector<1x16x32xf32>
    %8 = vector.shape_cast %7 : vector<1x16x32xf32> to vector<16x32xf32>
    %9 = tpu.concatenate %6, %8 in 0 : vector<16x32xf32>, vector<16x32xf32> -> vector<32x32xf32>
    %c0_10 = arith.constant 0 : index
    %c0_11 = arith.constant 0 : index
    %c0_12 = arith.constant 0 : index
    %10 = vector.load %arg3[%c0_10, %c0_11, %c0_12] : memref<2x16x3xf32, #tpu.memory_space<vmem>>, vector<1x16x3xf32>
    %11 = vector.shape_cast %10 : vector<1x16x3xf32> to vector<16x3xf32>
    %12 = arith.mulf %11, %11 : vector<16x3xf32>
    %cst = arith.constant dense<0.000000e+00> : vector<16xf32>
    %13 = vector.multi_reduction <add>, %12, %cst [1] : vector<16x3xf32> to vector<16xf32>
    %14 = vector.shape_cast %13 : vector<16xf32> to vector<16x1xf32>
    %cst_13 = arith.constant dense<0.000000e+00> : vector<16x16xf32>
    %15 = tpu.matmul %11, %11, %cst_13 {dimension_numbers = #tpu.dot_dimension_numbers<[1], [1], [0], [0], [0, 0, 1, 0], [], []>} : vector<16x3xf32>, vector<16x3xf32>, vector<16x16xf32> -> vector<16x16xf32>
    %16 = tpu.transpose %14, [1, 0] : vector<16x1xf32> -> vector<1x16xf32>
    %17 = vector.broadcast %14 : vector<16x1xf32> to vector<16x16xf32>
    %18 = vector.broadcast %16 : vector<1x16xf32> to vector<16x16xf32>
    %19 = arith.addf %17, %18 : vector<16x16xf32>
    %cst_14 = arith.constant 2.000000e+00 : f32
    %20 = vector.broadcast %cst_14 : f32 to vector<16x16xf32>
    %21 = arith.mulf %20, %15 : vector<16x16xf32>
    %22 = arith.subf %19, %21 : vector<16x16xf32>
    %cst_15 = arith.constant 0.000000e+00 : f32
    %23 = vector.broadcast %cst_15 : f32 to vector<16x16xf32>
    %24 = arith.maximumf %22, %23 : vector<16x16xf32>
    %c1_16 = arith.constant 1 : index
    %c0_17 = arith.constant 0 : index
    %c0_18 = arith.constant 0 : index
    %25 = vector.load %arg3[%c1_16, %c0_17, %c0_18] : memref<2x16x3xf32, #tpu.memory_space<vmem>>, vector<1x16x3xf32>
    %26 = vector.shape_cast %25 : vector<1x16x3xf32> to vector<16x3xf32>
    %27 = arith.mulf %26, %26 : vector<16x3xf32>
    %cst_19 = arith.constant dense<0.000000e+00> : vector<16xf32>
    %28 = vector.multi_reduction <add>, %27, %cst_19 [1] : vector<16x3xf32> to vector<16xf32>
    %29 = vector.shape_cast %28 : vector<16xf32> to vector<16x1xf32>
    %cst_20 = arith.constant dense<0.000000e+00> : vector<16x16xf32>
    %30 = tpu.matmul %26, %26, %cst_20 {dimension_numbers = #tpu.dot_dimension_numbers<[1], [1], [0], [0], [0, 0, 1, 0], [], []>} : vector<16x3xf32>, vector<16x3xf32>, vector<16x16xf32> -> vector<16x16xf32>
    %31 = tpu.transpose %29, [1, 0] : vector<16x1xf32> -> vector<1x16xf32>
    %32 = vector.broadcast %29 : vector<16x1xf32> to vector<16x16xf32>
    %33 = vector.broadcast %31 : vector<1x16xf32> to vector<16x16xf32>
    %34 = arith.addf %32, %33 : vector<16x16xf32>
    %cst_21 = arith.constant 2.000000e+00 : f32
    %35 = vector.broadcast %cst_21 : f32 to vector<16x16xf32>
    %36 = arith.mulf %35, %30 : vector<16x16xf32>
    %37 = arith.subf %34, %36 : vector<16x16xf32>
    %cst_22 = arith.constant 0.000000e+00 : f32
    %38 = vector.broadcast %cst_22 : f32 to vector<16x16xf32>
    %39 = arith.maximumf %37, %38 : vector<16x16xf32>
    %cst_23 = arith.constant 1.600000e-01 : f32
    %40 = vector.broadcast %cst_23 : f32 to vector<16x16xf32>
    %41 = arith.cmpf oge, %24, %40 : vector<16x16xf32>
    %cst_24 = arith.constant -1.000000e+30 : f32
    %cst_25 = arith.constant 0.000000e+00 : f32
    %42 = vector.broadcast %cst_24 : f32 to vector<16x16xf32>
    %43 = vector.broadcast %cst_25 : f32 to vector<16x16xf32>
    %44 = arith.select %41, %42, %43 : vector<16x16xi1>, vector<16x16xf32>
    %cst_26 = arith.constant 1.600000e-01 : f32
    %45 = vector.broadcast %cst_26 : f32 to vector<16x16xf32>
    %46 = arith.cmpf oge, %39, %45 : vector<16x16xf32>
    %cst_27 = arith.constant -1.000000e+30 : f32
    %cst_28 = arith.constant 0.000000e+00 : f32
    %47 = vector.broadcast %cst_27 : f32 to vector<16x16xf32>
    %48 = vector.broadcast %cst_28 : f32 to vector<16x16xf32>
    %49 = arith.select %46, %47, %48 : vector<16x16xi1>, vector<16x16xf32>
    %cst_29 = arith.constant 6.400000e-01 : f32
    %50 = vector.broadcast %cst_29 : f32 to vector<16x16xf32>
    %51 = arith.cmpf oge, %24, %50 : vector<16x16xf32>
    %cst_30 = arith.constant -1.000000e+30 : f32
    %cst_31 = arith.constant 0.000000e+00 : f32
    %52 = vector.broadcast %cst_30 : f32 to vector<16x16xf32>
    %53 = vector.broadcast %cst_31 : f32 to vector<16x16xf32>
    %54 = arith.select %51, %52, %53 : vector<16x16xi1>, vector<16x16xf32>
    %cst_32 = arith.constant 6.400000e-01 : f32
    %55 = vector.broadcast %cst_32 : f32 to vector<16x16xf32>
    %56 = arith.cmpf oge, %39, %55 : vector<16x16xf32>
    %cst_33 = arith.constant -1.000000e+30 : f32
    %cst_34 = arith.constant 0.000000e+00 : f32
    %57 = vector.broadcast %cst_33 : f32 to vector<16x16xf32>
    %58 = vector.broadcast %cst_34 : f32 to vector<16x16xf32>
    %59 = arith.select %56, %57, %58 : vector<16x16xi1>, vector<16x16xf32>
    %cst_35 = arith.constant 1.440000e+00 : f32
    %60 = vector.broadcast %cst_35 : f32 to vector<16x16xf32>
    %61 = arith.cmpf oge, %24, %60 : vector<16x16xf32>
    %cst_36 = arith.constant -1.000000e+30 : f32
    %cst_37 = arith.constant 0.000000e+00 : f32
    %62 = vector.broadcast %cst_36 : f32 to vector<16x16xf32>
    %63 = vector.broadcast %cst_37 : f32 to vector<16x16xf32>
    %64 = arith.select %61, %62, %63 : vector<16x16xi1>, vector<16x16xf32>
    %cst_38 = arith.constant 1.440000e+00 : f32
    %65 = vector.broadcast %cst_38 : f32 to vector<16x16xf32>
    %66 = arith.cmpf oge, %39, %65 : vector<16x16xf32>
    %cst_39 = arith.constant -1.000000e+30 : f32
    %cst_40 = arith.constant 0.000000e+00 : f32
    %67 = vector.broadcast %cst_39 : f32 to vector<16x16xf32>
    %68 = vector.broadcast %cst_40 : f32 to vector<16x16xf32>
    %69 = arith.select %66, %67, %68 : vector<16x16xi1>, vector<16x16xf32>
    %70 = arith.addf %4, %9 : vector<32x32xf32>
    %71 = arith.truncf %70 : vector<32x32xf32> to vector<32x32xbf16>
    %72 = arith.truncf %4 : vector<32x32xf32> to vector<32x32xbf16>
    %c0_41 = arith.constant 0 : index
    %c0_42 = arith.constant 0 : index
    %c0_43 = arith.constant 0 : index
    %73 = vector.load %arg4[%c0_41, %c0_42, %c0_43] : memref<3x32x32xbf16, #tpu.memory_space<vmem>>, vector<1x32x32xbf16>
    %74 = vector.shape_cast %73 : vector<1x32x32xbf16> to vector<32x32xbf16>
    %cst_44 = arith.constant dense<0.000000e+00> : vector<32x32xf32>
    %75 = tpu.matmul %71, %74, %cst_44 {dimension_numbers = #tpu.dot_dimension_numbers<[1], [0], [0], [1], [0, 0, 1, 1], [], []>} : vector<32x32xbf16>, vector<32x32xbf16>, vector<32x32xf32> -> vector<32x32xf32>
    %c0_45 = arith.constant 0 : index
    %c0_46 = arith.constant 0 : index
    %c0_47 = arith.constant 0 : index
    %76 = vector.load %arg5[%c0_45, %c0_46, %c0_47] : memref<3x1x32xf32, #tpu.memory_space<vmem>>, vector<1x1x32xf32>
    %77 = vector.shape_cast %76 : vector<1x1x32xf32> to vector<1x32xf32>
    %78 = vector.broadcast %77 : vector<1x32xf32> to vector<32x32xf32>
    %79 = arith.addf %75, %78 : vector<32x32xf32>
    %c0_48 = arith.constant 0 : index
    %c0_49 = arith.constant 0 : index
    %c0_50 = arith.constant 0 : index
    %80 = vector.load %arg6[%c0_48, %c0_49, %c0_50] : memref<3x32x32xbf16, #tpu.memory_space<vmem>>, vector<1x32x32xbf16>
    %81 = vector.shape_cast %80 : vector<1x32x32xbf16> to vector<32x32xbf16>
    %cst_51 = arith.constant dense<0.000000e+00> : vector<32x32xf32>
    %82 = tpu.matmul %71, %81, %cst_51 {dimension_numbers = #tpu.dot_dimension_numbers<[1], [0], [0], [1], [0, 0, 1, 1], [], []>} : vector<32x32xbf16>, vector<32x32xbf16>, vector<32x32xf32> -> vector<32x32xf32>
    %c0_52 = arith.constant 0 : index
    %c0_53 = arith.constant 0 : index
    %c0_54 = arith.constant 0 : index
    %83 = vector.load %arg7[%c0_52, %c0_53, %c0_54] : memref<3x1x32xf32, #tpu.memory_space<vmem>>, vector<1x1x32xf32>
    %84 = vector.shape_cast %83 : vector<1x1x32xf32> to vector<1x32xf32>
    %85 = vector.broadcast %84 : vector<1x32xf32> to vector<32x32xf32>
    %86 = arith.addf %82, %85 : vector<32x32xf32>
    %c0_55 = arith.constant 0 : index
    %c0_56 = arith.constant 0 : index
    %c0_57 = arith.constant 0 : index
    %87 = vector.load %arg8[%c0_55, %c0_56, %c0_57] : memref<3x32x32xbf16, #tpu.memory_space<vmem>>, vector<1x32x32xbf16>
    %88 = vector.shape_cast %87 : vector<1x32x32xbf16> to vector<32x32xbf16>
    %cst_58 = arith.constant dense<0.000000e+00> : vector<32x32xf32>
    %89 = tpu.matmul %72, %88, %cst_58 {dimension_numbers = #tpu.dot_dimension_numbers<[1], [0], [0], [1], [0, 0, 1, 1], [], []>} : vector<32x32xbf16>, vector<32x32xbf16>, vector<32x32xf32> -> vector<32x32xf32>
    %c0_59 = arith.constant 0 : index
    %c0_60 = arith.constant 0 : index
    %c0_61 = arith.constant 0 : index
    %90 = vector.load %arg9[%c0_59, %c0_60, %c0_61] : memref<3x1x32xf32, #tpu.memory_space<vmem>>, vector<1x1x32xf32>
    %91 = vector.shape_cast %90 : vector<1x1x32xf32> to vector<1x32xf32>
    %92 = vector.broadcast %91 : vector<1x32xf32> to vector<32x32xf32>
    %93 = arith.addf %89, %92 : vector<32x32xf32>
    %94 = vector.extract_strided_slice %79 {offsets = [0, 0], sizes = [16, 32], strides = [1, 1]} : vector<32x32xf32> to vector<16x32xf32>
    %95 = arith.truncf %94 : vector<16x32xf32> to vector<16x32xbf16>
    %96 = vector.extract_strided_slice %86 {offsets = [0, 0], sizes = [16, 32], strides = [1, 1]} : vector<32x32xf32> to vector<16x32xf32>
    %97 = arith.truncf %96 : vector<16x32xf32> to vector<16x32xbf16>
    %98 = vector.extract_strided_slice %93 {offsets = [0, 0], sizes = [16, 32], strides = [1, 1]} : vector<32x32xf32> to vector<16x32xf32>
    %99 = arith.truncf %98 : vector<16x32xf32> to vector<16x32xbf16>
    %100 = vector.extract_strided_slice %95 {offsets = [0, 0], sizes = [16, 8], strides = [1, 1]} : vector<16x32xbf16> to vector<16x8xbf16>
    %101 = vector.extract_strided_slice %97 {offsets = [0, 0], sizes = [16, 8], strides = [1, 1]} : vector<16x32xbf16> to vector<16x8xbf16>
    %102 = vector.extract_strided_slice %99 {offsets = [0, 0], sizes = [16, 8], strides = [1, 1]} : vector<16x32xbf16> to vector<16x8xbf16>
    %cst_62 = arith.constant dense<0.000000e+00> : vector<16x16xf32>
    %103 = tpu.matmul %100, %101, %cst_62 {dimension_numbers = #tpu.dot_dimension_numbers<[1], [1], [0], [0], [0, 0, 1, 0], [], []>} : vector<16x8xbf16>, vector<16x8xbf16>, vector<16x16xf32> -> vector<16x16xf32>
    %104 = arith.addf %103, %44 : vector<16x16xf32>
    %cst_63 = arith.constant dense<0xFF800000> : vector<16xf32>
    %105 = vector.multi_reduction <maximumf>, %104, %cst_63 [1] : vector<16x16xf32> to vector<16xf32>
    %106 = vector.shape_cast %105 : vector<16xf32> to vector<16x1xf32>
    %107 = vector.broadcast %106 : vector<16x1xf32> to vector<16x16xf32>
    %108 = arith.subf %104, %107 : vector<16x16xf32>
    %109 = math.exp %108 : vector<16x16xf32>
    %cst_64 = arith.constant dense<0.000000e+00> : vector<16xf32>
    %110 = vector.multi_reduction <add>, %109, %cst_64 [1] : vector<16x16xf32> to vector<16xf32>
    %111 = vector.shape_cast %110 : vector<16xf32> to vector<16x1xf32>
    %112 = tpu.reciprocal %111 : vector<16x1xf32> -> vector<16x1xf32>
    %113 = vector.broadcast %112 : vector<16x1xf32> to vector<16x16xf32>
    %114 = arith.mulf %109, %113 : vector<16x16xf32>
    %115 = arith.truncf %114 : vector<16x16xf32> to vector<16x16xbf16>
    %cst_65 = arith.constant dense<0.000000e+00> : vector<16x8xf32>
    %116 = tpu.matmul %115, %102, %cst_65 {dimension_numbers = #tpu.dot_dimension_numbers<[1], [0], [0], [1], [0, 0, 1, 1], [], []>} : vector<16x16xbf16>, vector<16x8xbf16>, vector<16x8xf32> -> vector<16x8xf32>
    %117 = vector.extract_strided_slice %95 {offsets = [0, 8], sizes = [16, 8], strides = [1, 1]} : vector<16x32xbf16> to vector<16x8xbf16>
    %118 = vector.extract_strided_slice %97 {offsets = [0, 8], sizes = [16, 8], strides = [1, 1]} : vector<16x32xbf16> to vector<16x8xbf16>
    %119 = vector.extract_strided_slice %99 {offsets = [0, 8], sizes = [16, 8], strides = [1, 1]} : vector<16x32xbf16> to vector<16x8xbf16>
    %cst_66 = arith.constant dense<0.000000e+00> : vector<16x16xf32>
    %120 = tpu.matmul %117, %118, %cst_66 {dimension_numbers = #tpu.dot_dimension_numbers<[1], [1], [0], [0], [0, 0, 1, 0], [], []>} : vector<16x8xbf16>, vector<16x8xbf16>, vector<16x16xf32> -> vector<16x16xf32>
    %121 = arith.addf %120, %44 : vector<16x16xf32>
    %cst_67 = arith.constant dense<0xFF800000> : vector<16xf32>
    %122 = vector.multi_reduction <maximumf>, %121, %cst_67 [1] : vector<16x16xf32> to vector<16xf32>
    %123 = vector.shape_cast %122 : vector<16xf32> to vector<16x1xf32>
    %124 = vector.broadcast %123 : vector<16x1xf32> to vector<16x16xf32>
    %125 = arith.subf %121, %124 : vector<16x16xf32>
    %126 = math.exp %125 : vector<16x16xf32>
    %cst_68 = arith.constant dense<0.000000e+00> : vector<16xf32>
    %127 = vector.multi_reduction <add>, %126, %cst_68 [1] : vector<16x16xf32> to vector<16xf32>
    %128 = vector.shape_cast %127 : vector<16xf32> to vector<16x1xf32>
    %129 = tpu.reciprocal %128 : vector<16x1xf32> -> vector<16x1xf32>
    %130 = vector.broadcast %129 : vector<16x1xf32> to vector<16x16xf32>
    %131 = arith.mulf %126, %130 : vector<16x16xf32>
    %132 = arith.truncf %131 : vector<16x16xf32> to vector<16x16xbf16>
    %cst_69 = arith.constant dense<0.000000e+00> : vector<16x8xf32>
    %133 = tpu.matmul %132, %119, %cst_69 {dimension_numbers = #tpu.dot_dimension_numbers<[1], [0], [0], [1], [0, 0, 1, 1], [], []>} : vector<16x16xbf16>, vector<16x8xbf16>, vector<16x8xf32> -> vector<16x8xf32>
    %134 = vector.extract_strided_slice %95 {offsets = [0, 16], sizes = [16, 8], strides = [1, 1]} : vector<16x32xbf16> to vector<16x8xbf16>
    %135 = vector.extract_strided_slice %97 {offsets = [0, 16], sizes = [16, 8], strides = [1, 1]} : vector<16x32xbf16> to vector<16x8xbf16>
    %136 = vector.extract_strided_slice %99 {offsets = [0, 16], sizes = [16, 8], strides = [1, 1]} : vector<16x32xbf16> to vector<16x8xbf16>
    %cst_70 = arith.constant dense<0.000000e+00> : vector<16x16xf32>
    %137 = tpu.matmul %134, %135, %cst_70 {dimension_numbers = #tpu.dot_dimension_numbers<[1], [1], [0], [0], [0, 0, 1, 0], [], []>} : vector<16x8xbf16>, vector<16x8xbf16>, vector<16x16xf32> -> vector<16x16xf32>
    %138 = arith.addf %137, %44 : vector<16x16xf32>
    %cst_71 = arith.constant dense<0xFF800000> : vector<16xf32>
    %139 = vector.multi_reduction <maximumf>, %138, %cst_71 [1] : vector<16x16xf32> to vector<16xf32>
    %140 = vector.shape_cast %139 : vector<16xf32> to vector<16x1xf32>
    %141 = vector.broadcast %140 : vector<16x1xf32> to vector<16x16xf32>
    %142 = arith.subf %138, %141 : vector<16x16xf32>
    %143 = math.exp %142 : vector<16x16xf32>
    %cst_72 = arith.constant dense<0.000000e+00> : vector<16xf32>
    %144 = vector.multi_reduction <add>, %143, %cst_72 [1] : vector<16x16xf32> to vector<16xf32>
    %145 = vector.shape_cast %144 : vector<16xf32> to vector<16x1xf32>
    %146 = tpu.reciprocal %145 : vector<16x1xf32> -> vector<16x1xf32>
    %147 = vector.broadcast %146 : vector<16x1xf32> to vector<16x16xf32>
    %148 = arith.mulf %143, %147 : vector<16x16xf32>
    %149 = arith.truncf %148 : vector<16x16xf32> to vector<16x16xbf16>
    %cst_73 = arith.constant dense<0.000000e+00> : vector<16x8xf32>
    %150 = tpu.matmul %149, %136, %cst_73 {dimension_numbers = #tpu.dot_dimension_numbers<[1], [0], [0], [1], [0, 0, 1, 1], [], []>} : vector<16x16xbf16>, vector<16x8xbf16>, vector<16x8xf32> -> vector<16x8xf32>
    %151 = vector.extract_strided_slice %95 {offsets = [0, 24], sizes = [16, 8], strides = [1, 1]} : vector<16x32xbf16> to vector<16x8xbf16>
    %152 = vector.extract_strided_slice %97 {offsets = [0, 24], sizes = [16, 8], strides = [1, 1]} : vector<16x32xbf16> to vector<16x8xbf16>
    %153 = vector.extract_strided_slice %99 {offsets = [0, 24], sizes = [16, 8], strides = [1, 1]} : vector<16x32xbf16> to vector<16x8xbf16>
    %cst_74 = arith.constant dense<0.000000e+00> : vector<16x16xf32>
    %154 = tpu.matmul %151, %152, %cst_74 {dimension_numbers = #tpu.dot_dimension_numbers<[1], [1], [0], [0], [0, 0, 1, 0], [], []>} : vector<16x8xbf16>, vector<16x8xbf16>, vector<16x16xf32> -> vector<16x16xf32>
    %155 = arith.addf %154, %44 : vector<16x16xf32>
    %cst_75 = arith.constant dense<0xFF800000> : vector<16xf32>
    %156 = vector.multi_reduction <maximumf>, %155, %cst_75 [1] : vector<16x16xf32> to vector<16xf32>
    %157 = vector.shape_cast %156 : vector<16xf32> to vector<16x1xf32>
    %158 = vector.broadcast %157 : vector<16x1xf32> to vector<16x16xf32>
    %159 = arith.subf %155, %158 : vector<16x16xf32>
    %160 = math.exp %159 : vector<16x16xf32>
    %cst_76 = arith.constant dense<0.000000e+00> : vector<16xf32>
    %161 = vector.multi_reduction <add>, %160, %cst_76 [1] : vector<16x16xf32> to vector<16xf32>
    %162 = vector.shape_cast %161 : vector<16xf32> to vector<16x1xf32>
    %163 = tpu.reciprocal %162 : vector<16x1xf32> -> vector<16x1xf32>
    %164 = vector.broadcast %163 : vector<16x1xf32> to vector<16x16xf32>
    %165 = arith.mulf %160, %164 : vector<16x16xf32>
    %166 = arith.truncf %165 : vector<16x16xf32> to vector<16x16xbf16>
    %cst_77 = arith.constant dense<0.000000e+00> : vector<16x8xf32>
    %167 = tpu.matmul %166, %153, %cst_77 {dimension_numbers = #tpu.dot_dimension_numbers<[1], [0], [0], [1], [0, 0, 1, 1], [], []>} : vector<16x16xbf16>, vector<16x8xbf16>, vector<16x8xf32> -> vector<16x8xf32>
    %168 = tpu.concatenate %116, %133, %150, %167 in 1 : vector<16x8xf32>, vector<16x8xf32>, vector<16x8xf32>, vector<16x8xf32> -> vector<16x32xf32>
    %169 = vector.extract_strided_slice %79 {offsets = [16, 0], sizes = [16, 32], strides = [1, 1]} : vector<32x32xf32> to vector<16x32xf32>
    %170 = arith.truncf %169 : vector<16x32xf32> to vector<16x32xbf16>
    %171 = vector.extract_strided_slice %86 {offsets = [16, 0], sizes = [16, 32], strides = [1, 1]} : vector<32x32xf32> to vector<16x32xf32>
    %172 = arith.truncf %171 : vector<16x32xf32> to vector<16x32xbf16>
    %173 = vector.extract_strided_slice %93 {offsets = [16, 0], sizes = [16, 32], strides = [1, 1]} : vector<32x32xf32> to vector<16x32xf32>
    %174 = arith.truncf %173 : vector<16x32xf32> to vector<16x32xbf16>
    %175 = vector.extract_strided_slice %170 {offsets = [0, 0], sizes = [16, 8], strides = [1, 1]} : vector<16x32xbf16> to vector<16x8xbf16>
    %176 = vector.extract_strided_slice %172 {offsets = [0, 0], sizes = [16, 8], strides = [1, 1]} : vector<16x32xbf16> to vector<16x8xbf16>
    %177 = vector.extract_strided_slice %174 {offsets = [0, 0], sizes = [16, 8], strides = [1, 1]} : vector<16x32xbf16> to vector<16x8xbf16>
    %cst_78 = arith.constant dense<0.000000e+00> : vector<16x16xf32>
    %178 = tpu.matmul %175, %176, %cst_78 {dimension_numbers = #tpu.dot_dimension_numbers<[1], [1], [0], [0], [0, 0, 1, 0], [], []>} : vector<16x8xbf16>, vector<16x8xbf16>, vector<16x16xf32> -> vector<16x16xf32>
    %179 = arith.addf %178, %49 : vector<16x16xf32>
    %cst_79 = arith.constant dense<0xFF800000> : vector<16xf32>
    %180 = vector.multi_reduction <maximumf>, %179, %cst_79 [1] : vector<16x16xf32> to vector<16xf32>
    %181 = vector.shape_cast %180 : vector<16xf32> to vector<16x1xf32>
    %182 = vector.broadcast %181 : vector<16x1xf32> to vector<16x16xf32>
    %183 = arith.subf %179, %182 : vector<16x16xf32>
    %184 = math.exp %183 : vector<16x16xf32>
    %cst_80 = arith.constant dense<0.000000e+00> : vector<16xf32>
    %185 = vector.multi_reduction <add>, %184, %cst_80 [1] : vector<16x16xf32> to vector<16xf32>
    %186 = vector.shape_cast %185 : vector<16xf32> to vector<16x1xf32>
    %187 = tpu.reciprocal %186 : vector<16x1xf32> -> vector<16x1xf32>
    %188 = vector.broadcast %187 : vector<16x1xf32> to vector<16x16xf32>
    %189 = arith.mulf %184, %188 : vector<16x16xf32>
    %190 = arith.truncf %189 : vector<16x16xf32> to vector<16x16xbf16>
    %cst_81 = arith.constant dense<0.000000e+00> : vector<16x8xf32>
    %191 = tpu.matmul %190, %177, %cst_81 {dimension_numbers = #tpu.dot_dimension_numbers<[1], [0], [0], [1], [0, 0, 1, 1], [], []>} : vector<16x16xbf16>, vector<16x8xbf16>, vector<16x8xf32> -> vector<16x8xf32>
    %192 = vector.extract_strided_slice %170 {offsets = [0, 8], sizes = [16, 8], strides = [1, 1]} : vector<16x32xbf16> to vector<16x8xbf16>
    %193 = vector.extract_strided_slice %172 {offsets = [0, 8], sizes = [16, 8], strides = [1, 1]} : vector<16x32xbf16> to vector<16x8xbf16>
    %194 = vector.extract_strided_slice %174 {offsets = [0, 8], sizes = [16, 8], strides = [1, 1]} : vector<16x32xbf16> to vector<16x8xbf16>
    %cst_82 = arith.constant dense<0.000000e+00> : vector<16x16xf32>
    %195 = tpu.matmul %192, %193, %cst_82 {dimension_numbers = #tpu.dot_dimension_numbers<[1], [1], [0], [0], [0, 0, 1, 0], [], []>} : vector<16x8xbf16>, vector<16x8xbf16>, vector<16x16xf32> -> vector<16x16xf32>
    %196 = arith.addf %195, %49 : vector<16x16xf32>
    %cst_83 = arith.constant dense<0xFF800000> : vector<16xf32>
    %197 = vector.multi_reduction <maximumf>, %196, %cst_83 [1] : vector<16x16xf32> to vector<16xf32>
    %198 = vector.shape_cast %197 : vector<16xf32> to vector<16x1xf32>
    %199 = vector.broadcast %198 : vector<16x1xf32> to vector<16x16xf32>
    %200 = arith.subf %196, %199 : vector<16x16xf32>
    %201 = math.exp %200 : vector<16x16xf32>
    %cst_84 = arith.constant dense<0.000000e+00> : vector<16xf32>
    %202 = vector.multi_reduction <add>, %201, %cst_84 [1] : vector<16x16xf32> to vector<16xf32>
    %203 = vector.shape_cast %202 : vector<16xf32> to vector<16x1xf32>
    %204 = tpu.reciprocal %203 : vector<16x1xf32> -> vector<16x1xf32>
    %205 = vector.broadcast %204 : vector<16x1xf32> to vector<16x16xf32>
    %206 = arith.mulf %201, %205 : vector<16x16xf32>
    %207 = arith.truncf %206 : vector<16x16xf32> to vector<16x16xbf16>
    %cst_85 = arith.constant dense<0.000000e+00> : vector<16x8xf32>
    %208 = tpu.matmul %207, %194, %cst_85 {dimension_numbers = #tpu.dot_dimension_numbers<[1], [0], [0], [1], [0, 0, 1, 1], [], []>} : vector<16x16xbf16>, vector<16x8xbf16>, vector<16x8xf32> -> vector<16x8xf32>
    %209 = vector.extract_strided_slice %170 {offsets = [0, 16], sizes = [16, 8], strides = [1, 1]} : vector<16x32xbf16> to vector<16x8xbf16>
    %210 = vector.extract_strided_slice %172 {offsets = [0, 16], sizes = [16, 8], strides = [1, 1]} : vector<16x32xbf16> to vector<16x8xbf16>
    %211 = vector.extract_strided_slice %174 {offsets = [0, 16], sizes = [16, 8], strides = [1, 1]} : vector<16x32xbf16> to vector<16x8xbf16>
    %cst_86 = arith.constant dense<0.000000e+00> : vector<16x16xf32>
    %212 = tpu.matmul %209, %210, %cst_86 {dimension_numbers = #tpu.dot_dimension_numbers<[1], [1], [0], [0], [0, 0, 1, 0], [], []>} : vector<16x8xbf16>, vector<16x8xbf16>, vector<16x16xf32> -> vector<16x16xf32>
    %213 = arith.addf %212, %49 : vector<16x16xf32>
    %cst_87 = arith.constant dense<0xFF800000> : vector<16xf32>
    %214 = vector.multi_reduction <maximumf>, %213, %cst_87 [1] : vector<16x16xf32> to vector<16xf32>
    %215 = vector.shape_cast %214 : vector<16xf32> to vector<16x1xf32>
    %216 = vector.broadcast %215 : vector<16x1xf32> to vector<16x16xf32>
    %217 = arith.subf %213, %216 : vector<16x16xf32>
    %218 = math.exp %217 : vector<16x16xf32>
    %cst_88 = arith.constant dense<0.000000e+00> : vector<16xf32>
    %219 = vector.multi_reduction <add>, %218, %cst_88 [1] : vector<16x16xf32> to vector<16xf32>
    %220 = vector.shape_cast %219 : vector<16xf32> to vector<16x1xf32>
    %221 = tpu.reciprocal %220 : vector<16x1xf32> -> vector<16x1xf32>
    %222 = vector.broadcast %221 : vector<16x1xf32> to vector<16x16xf32>
    %223 = arith.mulf %218, %222 : vector<16x16xf32>
    %224 = arith.truncf %223 : vector<16x16xf32> to vector<16x16xbf16>
    %cst_89 = arith.constant dense<0.000000e+00> : vector<16x8xf32>
    %225 = tpu.matmul %224, %211, %cst_89 {dimension_numbers = #tpu.dot_dimension_numbers<[1], [0], [0], [1], [0, 0, 1, 1], [], []>} : vector<16x16xbf16>, vector<16x8xbf16>, vector<16x8xf32> -> vector<16x8xf32>
    %226 = vector.extract_strided_slice %170 {offsets = [0, 24], sizes = [16, 8], strides = [1, 1]} : vector<16x32xbf16> to vector<16x8xbf16>
    %227 = vector.extract_strided_slice %172 {offsets = [0, 24], sizes = [16, 8], strides = [1, 1]} : vector<16x32xbf16> to vector<16x8xbf16>
    %228 = vector.extract_strided_slice %174 {offsets = [0, 24], sizes = [16, 8], strides = [1, 1]} : vector<16x32xbf16> to vector<16x8xbf16>
    %cst_90 = arith.constant dense<0.000000e+00> : vector<16x16xf32>
    %229 = tpu.matmul %226, %227, %cst_90 {dimension_numbers = #tpu.dot_dimension_numbers<[1], [1], [0], [0], [0, 0, 1, 0], [], []>} : vector<16x8xbf16>, vector<16x8xbf16>, vector<16x16xf32> -> vector<16x16xf32>
    %230 = arith.addf %229, %49 : vector<16x16xf32>
    %cst_91 = arith.constant dense<0xFF800000> : vector<16xf32>
    %231 = vector.multi_reduction <maximumf>, %230, %cst_91 [1] : vector<16x16xf32> to vector<16xf32>
    %232 = vector.shape_cast %231 : vector<16xf32> to vector<16x1xf32>
    %233 = vector.broadcast %232 : vector<16x1xf32> to vector<16x16xf32>
    %234 = arith.subf %230, %233 : vector<16x16xf32>
    %235 = math.exp %234 : vector<16x16xf32>
    %cst_92 = arith.constant dense<0.000000e+00> : vector<16xf32>
    %236 = vector.multi_reduction <add>, %235, %cst_92 [1] : vector<16x16xf32> to vector<16xf32>
    %237 = vector.shape_cast %236 : vector<16xf32> to vector<16x1xf32>
    %238 = tpu.reciprocal %237 : vector<16x1xf32> -> vector<16x1xf32>
    %239 = vector.broadcast %238 : vector<16x1xf32> to vector<16x16xf32>
    %240 = arith.mulf %235, %239 : vector<16x16xf32>
    %241 = arith.truncf %240 : vector<16x16xf32> to vector<16x16xbf16>
    %cst_93 = arith.constant dense<0.000000e+00> : vector<16x8xf32>
    %242 = tpu.matmul %241, %228, %cst_93 {dimension_numbers = #tpu.dot_dimension_numbers<[1], [0], [0], [1], [0, 0, 1, 1], [], []>} : vector<16x16xbf16>, vector<16x8xbf16>, vector<16x8xf32> -> vector<16x8xf32>
    %243 = tpu.concatenate %191, %208, %225, %242 in 1 : vector<16x8xf32>, vector<16x8xf32>, vector<16x8xf32>, vector<16x8xf32> -> vector<16x32xf32>
    %244 = tpu.concatenate %168, %243 in 0 : vector<16x32xf32>, vector<16x32xf32> -> vector<32x32xf32>
    %245 = arith.truncf %244 : vector<32x32xf32> to vector<32x32xbf16>
    %c0_94 = arith.constant 0 : index
    %c0_95 = arith.constant 0 : index
    %c0_96 = arith.constant 0 : index
    %246 = vector.load %arg10[%c0_94, %c0_95, %c0_96] : memref<3x32x32xbf16, #tpu.memory_space<vmem>>, vector<1x32x32xbf16>
    %247 = vector.shape_cast %246 : vector<1x32x32xbf16> to vector<32x32xbf16>
    %cst_97 = arith.constant dense<0.000000e+00> : vector<32x32xf32>
    %248 = tpu.matmul %245, %247, %cst_97 {dimension_numbers = #tpu.dot_dimension_numbers<[1], [0], [0], [1], [0, 0, 1, 1], [], []>} : vector<32x32xbf16>, vector<32x32xbf16>, vector<32x32xf32> -> vector<32x32xf32>
    %c0_98 = arith.constant 0 : index
    %c0_99 = arith.constant 0 : index
    %c0_100 = arith.constant 0 : index
    %249 = vector.load %arg11[%c0_98, %c0_99, %c0_100] : memref<3x1x32xf32, #tpu.memory_space<vmem>>, vector<1x1x32xf32>
    %250 = vector.shape_cast %249 : vector<1x1x32xf32> to vector<1x32xf32>
    %251 = vector.broadcast %250 : vector<1x32xf32> to vector<32x32xf32>
    %252 = arith.addf %248, %251 : vector<32x32xf32>
    %253 = arith.addf %4, %252 : vector<32x32xf32>
    %c0_101 = arith.constant 0 : index
    %c0_102 = arith.constant 0 : index
    %c0_103 = arith.constant 0 : index
    %254 = vector.load %arg12[%c0_101, %c0_102, %c0_103] : memref<3x1x32xf32, #tpu.memory_space<vmem>>, vector<1x1x32xf32>
    %255 = vector.shape_cast %254 : vector<1x1x32xf32> to vector<1x32xf32>
    %c0_104 = arith.constant 0 : index
    %c0_105 = arith.constant 0 : index
    %c0_106 = arith.constant 0 : index
    %256 = vector.load %arg13[%c0_104, %c0_105, %c0_106] : memref<3x1x32xf32, #tpu.memory_space<vmem>>, vector<1x1x32xf32>
    %257 = vector.shape_cast %256 : vector<1x1x32xf32> to vector<1x32xf32>
    %cst_107 = arith.constant dense<0.000000e+00> : vector<32xf32>
    %258 = vector.multi_reduction <add>, %253, %cst_107 [1] : vector<32x32xf32> to vector<32xf32>
    %259 = vector.shape_cast %258 : vector<32xf32> to vector<32x1xf32>
    %cst_108 = arith.constant 3.200000e+01 : f32
    %260 = vector.broadcast %cst_108 : f32 to vector<32x1xf32>
    %261 = arith.divf %259, %260 : vector<32x1xf32>
    %262 = vector.broadcast %261 : vector<32x1xf32> to vector<32x32xf32>
    %263 = arith.subf %253, %262 : vector<32x32xf32>
    %264 = arith.mulf %263, %263 : vector<32x32xf32>
    %cst_109 = arith.constant dense<0.000000e+00> : vector<32xf32>
    %265 = vector.multi_reduction <add>, %264, %cst_109 [1] : vector<32x32xf32> to vector<32xf32>
    %266 = vector.shape_cast %265 : vector<32xf32> to vector<32x1xf32>
    %cst_110 = arith.constant 3.200000e+01 : f32
    %267 = vector.broadcast %cst_110 : f32 to vector<32x1xf32>
    %268 = arith.divf %266, %267 : vector<32x1xf32>
    %269 = vector.broadcast %261 : vector<32x1xf32> to vector<32x32xf32>
    %270 = arith.subf %253, %269 : vector<32x32xf32>
    %cst_111 = arith.constant 9.99999974E-6 : f32
    %271 = vector.broadcast %cst_111 : f32 to vector<32x1xf32>
    %272 = arith.addf %268, %271 : vector<32x1xf32>
    %273 = math.rsqrt %272 : vector<32x1xf32>
    %274 = vector.broadcast %273 : vector<32x1xf32> to vector<32x32xf32>
    %275 = arith.mulf %270, %274 : vector<32x32xf32>
    %276 = vector.broadcast %255 : vector<1x32xf32> to vector<32x32xf32>
    %277 = arith.mulf %275, %276 : vector<32x32xf32>
    %278 = vector.broadcast %257 : vector<1x32xf32> to vector<32x32xf32>
    %279 = arith.addf %277, %278 : vector<32x32xf32>
    %280 = arith.truncf %279 : vector<32x32xf32> to vector<32x32xbf16>
    %c0_112 = arith.constant 0 : index
    %c0_113 = arith.constant 0 : index
    %c0_114 = arith.constant 0 : index
    %281 = vector.load %arg14[%c0_112, %c0_113, %c0_114] : memref<3x32x64xbf16, #tpu.memory_space<vmem>>, vector<1x32x64xbf16>
    %282 = vector.shape_cast %281 : vector<1x32x64xbf16> to vector<32x64xbf16>
    %cst_115 = arith.constant dense<0.000000e+00> : vector<32x64xf32>
    %283 = tpu.matmul %280, %282, %cst_115 {dimension_numbers = #tpu.dot_dimension_numbers<[1], [0], [0], [1], [0, 0, 1, 1], [], []>} : vector<32x32xbf16>, vector<32x64xbf16>, vector<32x64xf32> -> vector<32x64xf32>
    %c0_116 = arith.constant 0 : index
    %c0_117 = arith.constant 0 : index
    %c0_118 = arith.constant 0 : index
    %284 = vector.load %arg15[%c0_116, %c0_117, %c0_118] : memref<3x1x64xf32, #tpu.memory_space<vmem>>, vector<1x1x64xf32>
    %285 = vector.shape_cast %284 : vector<1x1x64xf32> to vector<1x64xf32>
    %286 = vector.broadcast %285 : vector<1x64xf32> to vector<32x64xf32>
    %287 = arith.addf %283, %286 : vector<32x64xf32>
    %cst_119 = arith.constant 0.000000e+00 : f32
    %288 = vector.broadcast %cst_119 : f32 to vector<32x64xf32>
    %289 = arith.maximumf %287, %288 : vector<32x64xf32>
    %290 = arith.truncf %289 : vector<32x64xf32> to vector<32x64xbf16>
    %c0_120 = arith.constant 0 : index
    %c0_121 = arith.constant 0 : index
    %c0_122 = arith.constant 0 : index
    %291 = vector.load %arg16[%c0_120, %c0_121, %c0_122] : memref<3x64x32xbf16, #tpu.memory_space<vmem>>, vector<1x64x32xbf16>
    %292 = vector.shape_cast %291 : vector<1x64x32xbf16> to vector<64x32xbf16>
    %cst_123 = arith.constant dense<0.000000e+00> : vector<32x32xf32>
    %293 = tpu.matmul %290, %292, %cst_123 {dimension_numbers = #tpu.dot_dimension_numbers<[1], [0], [0], [1], [0, 0, 1, 1], [], []>} : vector<32x64xbf16>, vector<64x32xbf16>, vector<32x32xf32> -> vector<32x32xf32>
    %c0_124 = arith.constant 0 : index
    %c0_125 = arith.constant 0 : index
    %c0_126 = arith.constant 0 : index
    %294 = vector.load %arg17[%c0_124, %c0_125, %c0_126] : memref<3x1x32xf32, #tpu.memory_space<vmem>>, vector<1x1x32xf32>
    %295 = vector.shape_cast %294 : vector<1x1x32xf32> to vector<1x32xf32>
    %296 = vector.broadcast %295 : vector<1x32xf32> to vector<32x32xf32>
    %297 = arith.addf %293, %296 : vector<32x32xf32>
    %298 = arith.addf %279, %297 : vector<32x32xf32>
    %c0_127 = arith.constant 0 : index
    %c0_128 = arith.constant 0 : index
    %c0_129 = arith.constant 0 : index
    %299 = vector.load %arg18[%c0_127, %c0_128, %c0_129] : memref<3x1x32xf32, #tpu.memory_space<vmem>>, vector<1x1x32xf32>
    %300 = vector.shape_cast %299 : vector<1x1x32xf32> to vector<1x32xf32>
    %c0_130 = arith.constant 0 : index
    %c0_131 = arith.constant 0 : index
    %c0_132 = arith.constant 0 : index
    %301 = vector.load %arg19[%c0_130, %c0_131, %c0_132] : memref<3x1x32xf32, #tpu.memory_space<vmem>>, vector<1x1x32xf32>
    %302 = vector.shape_cast %301 : vector<1x1x32xf32> to vector<1x32xf32>
    %cst_133 = arith.constant dense<0.000000e+00> : vector<32xf32>
    %303 = vector.multi_reduction <add>, %298, %cst_133 [1] : vector<32x32xf32> to vector<32xf32>
    %304 = vector.shape_cast %303 : vector<32xf32> to vector<32x1xf32>
    %cst_134 = arith.constant 3.200000e+01 : f32
    %305 = vector.broadcast %cst_134 : f32 to vector<32x1xf32>
    %306 = arith.divf %304, %305 : vector<32x1xf32>
    %307 = vector.broadcast %306 : vector<32x1xf32> to vector<32x32xf32>
    %308 = arith.subf %298, %307 : vector<32x32xf32>
    %309 = arith.mulf %308, %308 : vector<32x32xf32>
    %cst_135 = arith.constant dense<0.000000e+00> : vector<32xf32>
    %310 = vector.multi_reduction <add>, %309, %cst_135 [1] : vector<32x32xf32> to vector<32xf32>
    %311 = vector.shape_cast %310 : vector<32xf32> to vector<32x1xf32>
    %cst_136 = arith.constant 3.200000e+01 : f32
    %312 = vector.broadcast %cst_136 : f32 to vector<32x1xf32>
    %313 = arith.divf %311, %312 : vector<32x1xf32>
    %314 = vector.broadcast %306 : vector<32x1xf32> to vector<32x32xf32>
    %315 = arith.subf %298, %314 : vector<32x32xf32>
    %cst_137 = arith.constant 9.99999974E-6 : f32
    %316 = vector.broadcast %cst_137 : f32 to vector<32x1xf32>
    %317 = arith.addf %313, %316 : vector<32x1xf32>
    %318 = math.rsqrt %317 : vector<32x1xf32>
    %319 = vector.broadcast %318 : vector<32x1xf32> to vector<32x32xf32>
    %320 = arith.mulf %315, %319 : vector<32x32xf32>
    %321 = vector.broadcast %300 : vector<1x32xf32> to vector<32x32xf32>
    %322 = arith.mulf %320, %321 : vector<32x32xf32>
    %323 = vector.broadcast %302 : vector<1x32xf32> to vector<32x32xf32>
    %324 = arith.addf %322, %323 : vector<32x32xf32>
    %325 = arith.addf %324, %9 : vector<32x32xf32>
    %326 = arith.truncf %325 : vector<32x32xf32> to vector<32x32xbf16>
    %327 = arith.truncf %324 : vector<32x32xf32> to vector<32x32xbf16>
    %c1_138 = arith.constant 1 : index
    %c0_139 = arith.constant 0 : index
    %c0_140 = arith.constant 0 : index
    %328 = vector.load %arg4[%c1_138, %c0_139, %c0_140] : memref<3x32x32xbf16, #tpu.memory_space<vmem>>, vector<1x32x32xbf16>
    %329 = vector.shape_cast %328 : vector<1x32x32xbf16> to vector<32x32xbf16>
    %cst_141 = arith.constant dense<0.000000e+00> : vector<32x32xf32>
    %330 = tpu.matmul %326, %329, %cst_141 {dimension_numbers = #tpu.dot_dimension_numbers<[1], [0], [0], [1], [0, 0, 1, 1], [], []>} : vector<32x32xbf16>, vector<32x32xbf16>, vector<32x32xf32> -> vector<32x32xf32>
    %c1_142 = arith.constant 1 : index
    %c0_143 = arith.constant 0 : index
    %c0_144 = arith.constant 0 : index
    %331 = vector.load %arg5[%c1_142, %c0_143, %c0_144] : memref<3x1x32xf32, #tpu.memory_space<vmem>>, vector<1x1x32xf32>
    %332 = vector.shape_cast %331 : vector<1x1x32xf32> to vector<1x32xf32>
    %333 = vector.broadcast %332 : vector<1x32xf32> to vector<32x32xf32>
    %334 = arith.addf %330, %333 : vector<32x32xf32>
    %c1_145 = arith.constant 1 : index
    %c0_146 = arith.constant 0 : index
    %c0_147 = arith.constant 0 : index
    %335 = vector.load %arg6[%c1_145, %c0_146, %c0_147] : memref<3x32x32xbf16, #tpu.memory_space<vmem>>, vector<1x32x32xbf16>
    %336 = vector.shape_cast %335 : vector<1x32x32xbf16> to vector<32x32xbf16>
    %cst_148 = arith.constant dense<0.000000e+00> : vector<32x32xf32>
    %337 = tpu.matmul %326, %336, %cst_148 {dimension_numbers = #tpu.dot_dimension_numbers<[1], [0], [0], [1], [0, 0, 1, 1], [], []>} : vector<32x32xbf16>, vector<32x32xbf16>, vector<32x32xf32> -> vector<32x32xf32>
    %c1_149 = arith.constant 1 : index
    %c0_150 = arith.constant 0 : index
    %c0_151 = arith.constant 0 : index
    %338 = vector.load %arg7[%c1_149, %c0_150, %c0_151] : memref<3x1x32xf32, #tpu.memory_space<vmem>>, vector<1x1x32xf32>
    %339 = vector.shape_cast %338 : vector<1x1x32xf32> to vector<1x32xf32>
    %340 = vector.broadcast %339 : vector<1x32xf32> to vector<32x32xf32>
    %341 = arith.addf %337, %340 : vector<32x32xf32>
    %c1_152 = arith.constant 1 : index
    %c0_153 = arith.constant 0 : index
    %c0_154 = arith.constant 0 : index
    %342 = vector.load %arg8[%c1_152, %c0_153, %c0_154] : memref<3x32x32xbf16, #tpu.memory_space<vmem>>, vector<1x32x32xbf16>
    %343 = vector.shape_cast %342 : vector<1x32x32xbf16> to vector<32x32xbf16>
    %cst_155 = arith.constant dense<0.000000e+00> : vector<32x32xf32>
    %344 = tpu.matmul %327, %343, %cst_155 {dimension_numbers = #tpu.dot_dimension_numbers<[1], [0], [0], [1], [0, 0, 1, 1], [], []>} : vector<32x32xbf16>, vector<32x32xbf16>, vector<32x32xf32> -> vector<32x32xf32>
    %c1_156 = arith.constant 1 : index
    %c0_157 = arith.constant 0 : index
    %c0_158 = arith.constant 0 : index
    %345 = vector.load %arg9[%c1_156, %c0_157, %c0_158] : memref<3x1x32xf32, #tpu.memory_space<vmem>>, vector<1x1x32xf32>
    %346 = vector.shape_cast %345 : vector<1x1x32xf32> to vector<1x32xf32>
    %347 = vector.broadcast %346 : vector<1x32xf32> to vector<32x32xf32>
    %348 = arith.addf %344, %347 : vector<32x32xf32>
    %349 = vector.extract_strided_slice %334 {offsets = [0, 0], sizes = [16, 32], strides = [1, 1]} : vector<32x32xf32> to vector<16x32xf32>
    %350 = arith.truncf %349 : vector<16x32xf32> to vector<16x32xbf16>
    %351 = vector.extract_strided_slice %341 {offsets = [0, 0], sizes = [16, 32], strides = [1, 1]} : vector<32x32xf32> to vector<16x32xf32>
    %352 = arith.truncf %351 : vector<16x32xf32> to vector<16x32xbf16>
    %353 = vector.extract_strided_slice %348 {offsets = [0, 0], sizes = [16, 32], strides = [1, 1]} : vector<32x32xf32> to vector<16x32xf32>
    %354 = arith.truncf %353 : vector<16x32xf32> to vector<16x32xbf16>
    %355 = vector.extract_strided_slice %350 {offsets = [0, 0], sizes = [16, 8], strides = [1, 1]} : vector<16x32xbf16> to vector<16x8xbf16>
    %356 = vector.extract_strided_slice %352 {offsets = [0, 0], sizes = [16, 8], strides = [1, 1]} : vector<16x32xbf16> to vector<16x8xbf16>
    %357 = vector.extract_strided_slice %354 {offsets = [0, 0], sizes = [16, 8], strides = [1, 1]} : vector<16x32xbf16> to vector<16x8xbf16>
    %cst_159 = arith.constant dense<0.000000e+00> : vector<16x16xf32>
    %358 = tpu.matmul %355, %356, %cst_159 {dimension_numbers = #tpu.dot_dimension_numbers<[1], [1], [0], [0], [0, 0, 1, 0], [], []>} : vector<16x8xbf16>, vector<16x8xbf16>, vector<16x16xf32> -> vector<16x16xf32>
    %359 = arith.addf %358, %54 : vector<16x16xf32>
    %cst_160 = arith.constant dense<0xFF800000> : vector<16xf32>
    %360 = vector.multi_reduction <maximumf>, %359, %cst_160 [1] : vector<16x16xf32> to vector<16xf32>
    %361 = vector.shape_cast %360 : vector<16xf32> to vector<16x1xf32>
    %362 = vector.broadcast %361 : vector<16x1xf32> to vector<16x16xf32>
    %363 = arith.subf %359, %362 : vector<16x16xf32>
    %364 = math.exp %363 : vector<16x16xf32>
    %cst_161 = arith.constant dense<0.000000e+00> : vector<16xf32>
    %365 = vector.multi_reduction <add>, %364, %cst_161 [1] : vector<16x16xf32> to vector<16xf32>
    %366 = vector.shape_cast %365 : vector<16xf32> to vector<16x1xf32>
    %367 = tpu.reciprocal %366 : vector<16x1xf32> -> vector<16x1xf32>
    %368 = vector.broadcast %367 : vector<16x1xf32> to vector<16x16xf32>
    %369 = arith.mulf %364, %368 : vector<16x16xf32>
    %370 = arith.truncf %369 : vector<16x16xf32> to vector<16x16xbf16>
    %cst_162 = arith.constant dense<0.000000e+00> : vector<16x8xf32>
    %371 = tpu.matmul %370, %357, %cst_162 {dimension_numbers = #tpu.dot_dimension_numbers<[1], [0], [0], [1], [0, 0, 1, 1], [], []>} : vector<16x16xbf16>, vector<16x8xbf16>, vector<16x8xf32> -> vector<16x8xf32>
    %372 = vector.extract_strided_slice %350 {offsets = [0, 8], sizes = [16, 8], strides = [1, 1]} : vector<16x32xbf16> to vector<16x8xbf16>
    %373 = vector.extract_strided_slice %352 {offsets = [0, 8], sizes = [16, 8], strides = [1, 1]} : vector<16x32xbf16> to vector<16x8xbf16>
    %374 = vector.extract_strided_slice %354 {offsets = [0, 8], sizes = [16, 8], strides = [1, 1]} : vector<16x32xbf16> to vector<16x8xbf16>
    %cst_163 = arith.constant dense<0.000000e+00> : vector<16x16xf32>
    %375 = tpu.matmul %372, %373, %cst_163 {dimension_numbers = #tpu.dot_dimension_numbers<[1], [1], [0], [0], [0, 0, 1, 0], [], []>} : vector<16x8xbf16>, vector<16x8xbf16>, vector<16x16xf32> -> vector<16x16xf32>
    %376 = arith.addf %375, %54 : vector<16x16xf32>
    %cst_164 = arith.constant dense<0xFF800000> : vector<16xf32>
    %377 = vector.multi_reduction <maximumf>, %376, %cst_164 [1] : vector<16x16xf32> to vector<16xf32>
    %378 = vector.shape_cast %377 : vector<16xf32> to vector<16x1xf32>
    %379 = vector.broadcast %378 : vector<16x1xf32> to vector<16x16xf32>
    %380 = arith.subf %376, %379 : vector<16x16xf32>
    %381 = math.exp %380 : vector<16x16xf32>
    %cst_165 = arith.constant dense<0.000000e+00> : vector<16xf32>
    %382 = vector.multi_reduction <add>, %381, %cst_165 [1] : vector<16x16xf32> to vector<16xf32>
    %383 = vector.shape_cast %382 : vector<16xf32> to vector<16x1xf32>
    %384 = tpu.reciprocal %383 : vector<16x1xf32> -> vector<16x1xf32>
    %385 = vector.broadcast %384 : vector<16x1xf32> to vector<16x16xf32>
    %386 = arith.mulf %381, %385 : vector<16x16xf32>
    %387 = arith.truncf %386 : vector<16x16xf32> to vector<16x16xbf16>
    %cst_166 = arith.constant dense<0.000000e+00> : vector<16x8xf32>
    %388 = tpu.matmul %387, %374, %cst_166 {dimension_numbers = #tpu.dot_dimension_numbers<[1], [0], [0], [1], [0, 0, 1, 1], [], []>} : vector<16x16xbf16>, vector<16x8xbf16>, vector<16x8xf32> -> vector<16x8xf32>
    %389 = vector.extract_strided_slice %350 {offsets = [0, 16], sizes = [16, 8], strides = [1, 1]} : vector<16x32xbf16> to vector<16x8xbf16>
    %390 = vector.extract_strided_slice %352 {offsets = [0, 16], sizes = [16, 8], strides = [1, 1]} : vector<16x32xbf16> to vector<16x8xbf16>
    %391 = vector.extract_strided_slice %354 {offsets = [0, 16], sizes = [16, 8], strides = [1, 1]} : vector<16x32xbf16> to vector<16x8xbf16>
    %cst_167 = arith.constant dense<0.000000e+00> : vector<16x16xf32>
    %392 = tpu.matmul %389, %390, %cst_167 {dimension_numbers = #tpu.dot_dimension_numbers<[1], [1], [0], [0], [0, 0, 1, 0], [], []>} : vector<16x8xbf16>, vector<16x8xbf16>, vector<16x16xf32> -> vector<16x16xf32>
    %393 = arith.addf %392, %54 : vector<16x16xf32>
    %cst_168 = arith.constant dense<0xFF800000> : vector<16xf32>
    %394 = vector.multi_reduction <maximumf>, %393, %cst_168 [1] : vector<16x16xf32> to vector<16xf32>
    %395 = vector.shape_cast %394 : vector<16xf32> to vector<16x1xf32>
    %396 = vector.broadcast %395 : vector<16x1xf32> to vector<16x16xf32>
    %397 = arith.subf %393, %396 : vector<16x16xf32>
    %398 = math.exp %397 : vector<16x16xf32>
    %cst_169 = arith.constant dense<0.000000e+00> : vector<16xf32>
    %399 = vector.multi_reduction <add>, %398, %cst_169 [1] : vector<16x16xf32> to vector<16xf32>
    %400 = vector.shape_cast %399 : vector<16xf32> to vector<16x1xf32>
    %401 = tpu.reciprocal %400 : vector<16x1xf32> -> vector<16x1xf32>
    %402 = vector.broadcast %401 : vector<16x1xf32> to vector<16x16xf32>
    %403 = arith.mulf %398, %402 : vector<16x16xf32>
    %404 = arith.truncf %403 : vector<16x16xf32> to vector<16x16xbf16>
    %cst_170 = arith.constant dense<0.000000e+00> : vector<16x8xf32>
    %405 = tpu.matmul %404, %391, %cst_170 {dimension_numbers = #tpu.dot_dimension_numbers<[1], [0], [0], [1], [0, 0, 1, 1], [], []>} : vector<16x16xbf16>, vector<16x8xbf16>, vector<16x8xf32> -> vector<16x8xf32>
    %406 = vector.extract_strided_slice %350 {offsets = [0, 24], sizes = [16, 8], strides = [1, 1]} : vector<16x32xbf16> to vector<16x8xbf16>
    %407 = vector.extract_strided_slice %352 {offsets = [0, 24], sizes = [16, 8], strides = [1, 1]} : vector<16x32xbf16> to vector<16x8xbf16>
    %408 = vector.extract_strided_slice %354 {offsets = [0, 24], sizes = [16, 8], strides = [1, 1]} : vector<16x32xbf16> to vector<16x8xbf16>
    %cst_171 = arith.constant dense<0.000000e+00> : vector<16x16xf32>
    %409 = tpu.matmul %406, %407, %cst_171 {dimension_numbers = #tpu.dot_dimension_numbers<[1], [1], [0], [0], [0, 0, 1, 0], [], []>} : vector<16x8xbf16>, vector<16x8xbf16>, vector<16x16xf32> -> vector<16x16xf32>
    %410 = arith.addf %409, %54 : vector<16x16xf32>
    %cst_172 = arith.constant dense<0xFF800000> : vector<16xf32>
    %411 = vector.multi_reduction <maximumf>, %410, %cst_172 [1] : vector<16x16xf32> to vector<16xf32>
    %412 = vector.shape_cast %411 : vector<16xf32> to vector<16x1xf32>
    %413 = vector.broadcast %412 : vector<16x1xf32> to vector<16x16xf32>
    %414 = arith.subf %410, %413 : vector<16x16xf32>
    %415 = math.exp %414 : vector<16x16xf32>
    %cst_173 = arith.constant dense<0.000000e+00> : vector<16xf32>
    %416 = vector.multi_reduction <add>, %415, %cst_173 [1] : vector<16x16xf32> to vector<16xf32>
    %417 = vector.shape_cast %416 : vector<16xf32> to vector<16x1xf32>
    %418 = tpu.reciprocal %417 : vector<16x1xf32> -> vector<16x1xf32>
    %419 = vector.broadcast %418 : vector<16x1xf32> to vector<16x16xf32>
    %420 = arith.mulf %415, %419 : vector<16x16xf32>
    %421 = arith.truncf %420 : vector<16x16xf32> to vector<16x16xbf16>
    %cst_174 = arith.constant dense<0.000000e+00> : vector<16x8xf32>
    %422 = tpu.matmul %421, %408, %cst_174 {dimension_numbers = #tpu.dot_dimension_numbers<[1], [0], [0], [1], [0, 0, 1, 1], [], []>} : vector<16x16xbf16>, vector<16x8xbf16>, vector<16x8xf32> -> vector<16x8xf32>
    %423 = tpu.concatenate %371, %388, %405, %422 in 1 : vector<16x8xf32>, vector<16x8xf32>, vector<16x8xf32>, vector<16x8xf32> -> vector<16x32xf32>
    %424 = vector.extract_strided_slice %334 {offsets = [16, 0], sizes = [16, 32], strides = [1, 1]} : vector<32x32xf32> to vector<16x32xf32>
    %425 = arith.truncf %424 : vector<16x32xf32> to vector<16x32xbf16>
    %426 = vector.extract_strided_slice %341 {offsets = [16, 0], sizes = [16, 32], strides = [1, 1]} : vector<32x32xf32> to vector<16x32xf32>
    %427 = arith.truncf %426 : vector<16x32xf32> to vector<16x32xbf16>
    %428 = vector.extract_strided_slice %348 {offsets = [16, 0], sizes = [16, 32], strides = [1, 1]} : vector<32x32xf32> to vector<16x32xf32>
    %429 = arith.truncf %428 : vector<16x32xf32> to vector<16x32xbf16>
    %430 = vector.extract_strided_slice %425 {offsets = [0, 0], sizes = [16, 8], strides = [1, 1]} : vector<16x32xbf16> to vector<16x8xbf16>
    %431 = vector.extract_strided_slice %427 {offsets = [0, 0], sizes = [16, 8], strides = [1, 1]} : vector<16x32xbf16> to vector<16x8xbf16>
    %432 = vector.extract_strided_slice %429 {offsets = [0, 0], sizes = [16, 8], strides = [1, 1]} : vector<16x32xbf16> to vector<16x8xbf16>
    %cst_175 = arith.constant dense<0.000000e+00> : vector<16x16xf32>
    %433 = tpu.matmul %430, %431, %cst_175 {dimension_numbers = #tpu.dot_dimension_numbers<[1], [1], [0], [0], [0, 0, 1, 0], [], []>} : vector<16x8xbf16>, vector<16x8xbf16>, vector<16x16xf32> -> vector<16x16xf32>
    %434 = arith.addf %433, %59 : vector<16x16xf32>
    %cst_176 = arith.constant dense<0xFF800000> : vector<16xf32>
    %435 = vector.multi_reduction <maximumf>, %434, %cst_176 [1] : vector<16x16xf32> to vector<16xf32>
    %436 = vector.shape_cast %435 : vector<16xf32> to vector<16x1xf32>
    %437 = vector.broadcast %436 : vector<16x1xf32> to vector<16x16xf32>
    %438 = arith.subf %434, %437 : vector<16x16xf32>
    %439 = math.exp %438 : vector<16x16xf32>
    %cst_177 = arith.constant dense<0.000000e+00> : vector<16xf32>
    %440 = vector.multi_reduction <add>, %439, %cst_177 [1] : vector<16x16xf32> to vector<16xf32>
    %441 = vector.shape_cast %440 : vector<16xf32> to vector<16x1xf32>
    %442 = tpu.reciprocal %441 : vector<16x1xf32> -> vector<16x1xf32>
    %443 = vector.broadcast %442 : vector<16x1xf32> to vector<16x16xf32>
    %444 = arith.mulf %439, %443 : vector<16x16xf32>
    %445 = arith.truncf %444 : vector<16x16xf32> to vector<16x16xbf16>
    %cst_178 = arith.constant dense<0.000000e+00> : vector<16x8xf32>
    %446 = tpu.matmul %445, %432, %cst_178 {dimension_numbers = #tpu.dot_dimension_numbers<[1], [0], [0], [1], [0, 0, 1, 1], [], []>} : vector<16x16xbf16>, vector<16x8xbf16>, vector<16x8xf32> -> vector<16x8xf32>
    %447 = vector.extract_strided_slice %425 {offsets = [0, 8], sizes = [16, 8], strides = [1, 1]} : vector<16x32xbf16> to vector<16x8xbf16>
    %448 = vector.extract_strided_slice %427 {offsets = [0, 8], sizes = [16, 8], strides = [1, 1]} : vector<16x32xbf16> to vector<16x8xbf16>
    %449 = vector.extract_strided_slice %429 {offsets = [0, 8], sizes = [16, 8], strides = [1, 1]} : vector<16x32xbf16> to vector<16x8xbf16>
    %cst_179 = arith.constant dense<0.000000e+00> : vector<16x16xf32>
    %450 = tpu.matmul %447, %448, %cst_179 {dimension_numbers = #tpu.dot_dimension_numbers<[1], [1], [0], [0], [0, 0, 1, 0], [], []>} : vector<16x8xbf16>, vector<16x8xbf16>, vector<16x16xf32> -> vector<16x16xf32>
    %451 = arith.addf %450, %59 : vector<16x16xf32>
    %cst_180 = arith.constant dense<0xFF800000> : vector<16xf32>
    %452 = vector.multi_reduction <maximumf>, %451, %cst_180 [1] : vector<16x16xf32> to vector<16xf32>
    %453 = vector.shape_cast %452 : vector<16xf32> to vector<16x1xf32>
    %454 = vector.broadcast %453 : vector<16x1xf32> to vector<16x16xf32>
    %455 = arith.subf %451, %454 : vector<16x16xf32>
    %456 = math.exp %455 : vector<16x16xf32>
    %cst_181 = arith.constant dense<0.000000e+00> : vector<16xf32>
    %457 = vector.multi_reduction <add>, %456, %cst_181 [1] : vector<16x16xf32> to vector<16xf32>
    %458 = vector.shape_cast %457 : vector<16xf32> to vector<16x1xf32>
    %459 = tpu.reciprocal %458 : vector<16x1xf32> -> vector<16x1xf32>
    %460 = vector.broadcast %459 : vector<16x1xf32> to vector<16x16xf32>
    %461 = arith.mulf %456, %460 : vector<16x16xf32>
    %462 = arith.truncf %461 : vector<16x16xf32> to vector<16x16xbf16>
    %cst_182 = arith.constant dense<0.000000e+00> : vector<16x8xf32>
    %463 = tpu.matmul %462, %449, %cst_182 {dimension_numbers = #tpu.dot_dimension_numbers<[1], [0], [0], [1], [0, 0, 1, 1], [], []>} : vector<16x16xbf16>, vector<16x8xbf16>, vector<16x8xf32> -> vector<16x8xf32>
    %464 = vector.extract_strided_slice %425 {offsets = [0, 16], sizes = [16, 8], strides = [1, 1]} : vector<16x32xbf16> to vector<16x8xbf16>
    %465 = vector.extract_strided_slice %427 {offsets = [0, 16], sizes = [16, 8], strides = [1, 1]} : vector<16x32xbf16> to vector<16x8xbf16>
    %466 = vector.extract_strided_slice %429 {offsets = [0, 16], sizes = [16, 8], strides = [1, 1]} : vector<16x32xbf16> to vector<16x8xbf16>
    %cst_183 = arith.constant dense<0.000000e+00> : vector<16x16xf32>
    %467 = tpu.matmul %464, %465, %cst_183 {dimension_numbers = #tpu.dot_dimension_numbers<[1], [1], [0], [0], [0, 0, 1, 0], [], []>} : vector<16x8xbf16>, vector<16x8xbf16>, vector<16x16xf32> -> vector<16x16xf32>
    %468 = arith.addf %467, %59 : vector<16x16xf32>
    %cst_184 = arith.constant dense<0xFF800000> : vector<16xf32>
    %469 = vector.multi_reduction <maximumf>, %468, %cst_184 [1] : vector<16x16xf32> to vector<16xf32>
    %470 = vector.shape_cast %469 : vector<16xf32> to vector<16x1xf32>
    %471 = vector.broadcast %470 : vector<16x1xf32> to vector<16x16xf32>
    %472 = arith.subf %468, %471 : vector<16x16xf32>
    %473 = math.exp %472 : vector<16x16xf32>
    %cst_185 = arith.constant dense<0.000000e+00> : vector<16xf32>
    %474 = vector.multi_reduction <add>, %473, %cst_185 [1] : vector<16x16xf32> to vector<16xf32>
    %475 = vector.shape_cast %474 : vector<16xf32> to vector<16x1xf32>
    %476 = tpu.reciprocal %475 : vector<16x1xf32> -> vector<16x1xf32>
    %477 = vector.broadcast %476 : vector<16x1xf32> to vector<16x16xf32>
    %478 = arith.mulf %473, %477 : vector<16x16xf32>
    %479 = arith.truncf %478 : vector<16x16xf32> to vector<16x16xbf16>
    %cst_186 = arith.constant dense<0.000000e+00> : vector<16x8xf32>
    %480 = tpu.matmul %479, %466, %cst_186 {dimension_numbers = #tpu.dot_dimension_numbers<[1], [0], [0], [1], [0, 0, 1, 1], [], []>} : vector<16x16xbf16>, vector<16x8xbf16>, vector<16x8xf32> -> vector<16x8xf32>
    %481 = vector.extract_strided_slice %425 {offsets = [0, 24], sizes = [16, 8], strides = [1, 1]} : vector<16x32xbf16> to vector<16x8xbf16>
    %482 = vector.extract_strided_slice %427 {offsets = [0, 24], sizes = [16, 8], strides = [1, 1]} : vector<16x32xbf16> to vector<16x8xbf16>
    %483 = vector.extract_strided_slice %429 {offsets = [0, 24], sizes = [16, 8], strides = [1, 1]} : vector<16x32xbf16> to vector<16x8xbf16>
    %cst_187 = arith.constant dense<0.000000e+00> : vector<16x16xf32>
    %484 = tpu.matmul %481, %482, %cst_187 {dimension_numbers = #tpu.dot_dimension_numbers<[1], [1], [0], [0], [0, 0, 1, 0], [], []>} : vector<16x8xbf16>, vector<16x8xbf16>, vector<16x16xf32> -> vector<16x16xf32>
    %485 = arith.addf %484, %59 : vector<16x16xf32>
    %cst_188 = arith.constant dense<0xFF800000> : vector<16xf32>
    %486 = vector.multi_reduction <maximumf>, %485, %cst_188 [1] : vector<16x16xf32> to vector<16xf32>
    %487 = vector.shape_cast %486 : vector<16xf32> to vector<16x1xf32>
    %488 = vector.broadcast %487 : vector<16x1xf32> to vector<16x16xf32>
    %489 = arith.subf %485, %488 : vector<16x16xf32>
    %490 = math.exp %489 : vector<16x16xf32>
    %cst_189 = arith.constant dense<0.000000e+00> : vector<16xf32>
    %491 = vector.multi_reduction <add>, %490, %cst_189 [1] : vector<16x16xf32> to vector<16xf32>
    %492 = vector.shape_cast %491 : vector<16xf32> to vector<16x1xf32>
    %493 = tpu.reciprocal %492 : vector<16x1xf32> -> vector<16x1xf32>
    %494 = vector.broadcast %493 : vector<16x1xf32> to vector<16x16xf32>
    %495 = arith.mulf %490, %494 : vector<16x16xf32>
    %496 = arith.truncf %495 : vector<16x16xf32> to vector<16x16xbf16>
    %cst_190 = arith.constant dense<0.000000e+00> : vector<16x8xf32>
    %497 = tpu.matmul %496, %483, %cst_190 {dimension_numbers = #tpu.dot_dimension_numbers<[1], [0], [0], [1], [0, 0, 1, 1], [], []>} : vector<16x16xbf16>, vector<16x8xbf16>, vector<16x8xf32> -> vector<16x8xf32>
    %498 = tpu.concatenate %446, %463, %480, %497 in 1 : vector<16x8xf32>, vector<16x8xf32>, vector<16x8xf32>, vector<16x8xf32> -> vector<16x32xf32>
    %499 = tpu.concatenate %423, %498 in 0 : vector<16x32xf32>, vector<16x32xf32> -> vector<32x32xf32>
    %500 = arith.truncf %499 : vector<32x32xf32> to vector<32x32xbf16>
    %c1_191 = arith.constant 1 : index
    %c0_192 = arith.constant 0 : index
    %c0_193 = arith.constant 0 : index
    %501 = vector.load %arg10[%c1_191, %c0_192, %c0_193] : memref<3x32x32xbf16, #tpu.memory_space<vmem>>, vector<1x32x32xbf16>
    %502 = vector.shape_cast %501 : vector<1x32x32xbf16> to vector<32x32xbf16>
    %cst_194 = arith.constant dense<0.000000e+00> : vector<32x32xf32>
    %503 = tpu.matmul %500, %502, %cst_194 {dimension_numbers = #tpu.dot_dimension_numbers<[1], [0], [0], [1], [0, 0, 1, 1], [], []>} : vector<32x32xbf16>, vector<32x32xbf16>, vector<32x32xf32> -> vector<32x32xf32>
    %c1_195 = arith.constant 1 : index
    %c0_196 = arith.constant 0 : index
    %c0_197 = arith.constant 0 : index
    %504 = vector.load %arg11[%c1_195, %c0_196, %c0_197] : memref<3x1x32xf32, #tpu.memory_space<vmem>>, vector<1x1x32xf32>
    %505 = vector.shape_cast %504 : vector<1x1x32xf32> to vector<1x32xf32>
    %506 = vector.broadcast %505 : vector<1x32xf32> to vector<32x32xf32>
    %507 = arith.addf %503, %506 : vector<32x32xf32>
    %508 = arith.addf %324, %507 : vector<32x32xf32>
    %c1_198 = arith.constant 1 : index
    %c0_199 = arith.constant 0 : index
    %c0_200 = arith.constant 0 : index
    %509 = vector.load %arg12[%c1_198, %c0_199, %c0_200] : memref<3x1x32xf32, #tpu.memory_space<vmem>>, vector<1x1x32xf32>
    %510 = vector.shape_cast %509 : vector<1x1x32xf32> to vector<1x32xf32>
    %c1_201 = arith.constant 1 : index
    %c0_202 = arith.constant 0 : index
    %c0_203 = arith.constant 0 : index
    %511 = vector.load %arg13[%c1_201, %c0_202, %c0_203] : memref<3x1x32xf32, #tpu.memory_space<vmem>>, vector<1x1x32xf32>
    %512 = vector.shape_cast %511 : vector<1x1x32xf32> to vector<1x32xf32>
    %cst_204 = arith.constant dense<0.000000e+00> : vector<32xf32>
    %513 = vector.multi_reduction <add>, %508, %cst_204 [1] : vector<32x32xf32> to vector<32xf32>
    %514 = vector.shape_cast %513 : vector<32xf32> to vector<32x1xf32>
    %cst_205 = arith.constant 3.200000e+01 : f32
    %515 = vector.broadcast %cst_205 : f32 to vector<32x1xf32>
    %516 = arith.divf %514, %515 : vector<32x1xf32>
    %517 = vector.broadcast %516 : vector<32x1xf32> to vector<32x32xf32>
    %518 = arith.subf %508, %517 : vector<32x32xf32>
    %519 = arith.mulf %518, %518 : vector<32x32xf32>
    %cst_206 = arith.constant dense<0.000000e+00> : vector<32xf32>
    %520 = vector.multi_reduction <add>, %519, %cst_206 [1] : vector<32x32xf32> to vector<32xf32>
    %521 = vector.shape_cast %520 : vector<32xf32> to vector<32x1xf32>
    %cst_207 = arith.constant 3.200000e+01 : f32
    %522 = vector.broadcast %cst_207 : f32 to vector<32x1xf32>
    %523 = arith.divf %521, %522 : vector<32x1xf32>
    %524 = vector.broadcast %516 : vector<32x1xf32> to vector<32x32xf32>
    %525 = arith.subf %508, %524 : vector<32x32xf32>
    %cst_208 = arith.constant 9.99999974E-6 : f32
    %526 = vector.broadcast %cst_208 : f32 to vector<32x1xf32>
    %527 = arith.addf %523, %526 : vector<32x1xf32>
    %528 = math.rsqrt %527 : vector<32x1xf32>
    %529 = vector.broadcast %528 : vector<32x1xf32> to vector<32x32xf32>
    %530 = arith.mulf %525, %529 : vector<32x32xf32>
    %531 = vector.broadcast %510 : vector<1x32xf32> to vector<32x32xf32>
    %532 = arith.mulf %530, %531 : vector<32x32xf32>
    %533 = vector.broadcast %512 : vector<1x32xf32> to vector<32x32xf32>
    %534 = arith.addf %532, %533 : vector<32x32xf32>
    %535 = arith.truncf %534 : vector<32x32xf32> to vector<32x32xbf16>
    %c1_209 = arith.constant 1 : index
    %c0_210 = arith.constant 0 : index
    %c0_211 = arith.constant 0 : index
    %536 = vector.load %arg14[%c1_209, %c0_210, %c0_211] : memref<3x32x64xbf16, #tpu.memory_space<vmem>>, vector<1x32x64xbf16>
    %537 = vector.shape_cast %536 : vector<1x32x64xbf16> to vector<32x64xbf16>
    %cst_212 = arith.constant dense<0.000000e+00> : vector<32x64xf32>
    %538 = tpu.matmul %535, %537, %cst_212 {dimension_numbers = #tpu.dot_dimension_numbers<[1], [0], [0], [1], [0, 0, 1, 1], [], []>} : vector<32x32xbf16>, vector<32x64xbf16>, vector<32x64xf32> -> vector<32x64xf32>
    %c1_213 = arith.constant 1 : index
    %c0_214 = arith.constant 0 : index
    %c0_215 = arith.constant 0 : index
    %539 = vector.load %arg15[%c1_213, %c0_214, %c0_215] : memref<3x1x64xf32, #tpu.memory_space<vmem>>, vector<1x1x64xf32>
    %540 = vector.shape_cast %539 : vector<1x1x64xf32> to vector<1x64xf32>
    %541 = vector.broadcast %540 : vector<1x64xf32> to vector<32x64xf32>
    %542 = arith.addf %538, %541 : vector<32x64xf32>
    %cst_216 = arith.constant 0.000000e+00 : f32
    %543 = vector.broadcast %cst_216 : f32 to vector<32x64xf32>
    %544 = arith.maximumf %542, %543 : vector<32x64xf32>
    %545 = arith.truncf %544 : vector<32x64xf32> to vector<32x64xbf16>
    %c1_217 = arith.constant 1 : index
    %c0_218 = arith.constant 0 : index
    %c0_219 = arith.constant 0 : index
    %546 = vector.load %arg16[%c1_217, %c0_218, %c0_219] : memref<3x64x32xbf16, #tpu.memory_space<vmem>>, vector<1x64x32xbf16>
    %547 = vector.shape_cast %546 : vector<1x64x32xbf16> to vector<64x32xbf16>
    %cst_220 = arith.constant dense<0.000000e+00> : vector<32x32xf32>
    %548 = tpu.matmul %545, %547, %cst_220 {dimension_numbers = #tpu.dot_dimension_numbers<[1], [0], [0], [1], [0, 0, 1, 1], [], []>} : vector<32x64xbf16>, vector<64x32xbf16>, vector<32x32xf32> -> vector<32x32xf32>
    %c1_221 = arith.constant 1 : index
    %c0_222 = arith.constant 0 : index
    %c0_223 = arith.constant 0 : index
    %549 = vector.load %arg17[%c1_221, %c0_222, %c0_223] : memref<3x1x32xf32, #tpu.memory_space<vmem>>, vector<1x1x32xf32>
    %550 = vector.shape_cast %549 : vector<1x1x32xf32> to vector<1x32xf32>
    %551 = vector.broadcast %550 : vector<1x32xf32> to vector<32x32xf32>
    %552 = arith.addf %548, %551 : vector<32x32xf32>
    %553 = arith.addf %534, %552 : vector<32x32xf32>
    %c1_224 = arith.constant 1 : index
    %c0_225 = arith.constant 0 : index
    %c0_226 = arith.constant 0 : index
    %554 = vector.load %arg18[%c1_224, %c0_225, %c0_226] : memref<3x1x32xf32, #tpu.memory_space<vmem>>, vector<1x1x32xf32>
    %555 = vector.shape_cast %554 : vector<1x1x32xf32> to vector<1x32xf32>
    %c1_227 = arith.constant 1 : index
    %c0_228 = arith.constant 0 : index
    %c0_229 = arith.constant 0 : index
    %556 = vector.load %arg19[%c1_227, %c0_228, %c0_229] : memref<3x1x32xf32, #tpu.memory_space<vmem>>, vector<1x1x32xf32>
    %557 = vector.shape_cast %556 : vector<1x1x32xf32> to vector<1x32xf32>
    %cst_230 = arith.constant dense<0.000000e+00> : vector<32xf32>
    %558 = vector.multi_reduction <add>, %553, %cst_230 [1] : vector<32x32xf32> to vector<32xf32>
    %559 = vector.shape_cast %558 : vector<32xf32> to vector<32x1xf32>
    %cst_231 = arith.constant 3.200000e+01 : f32
    %560 = vector.broadcast %cst_231 : f32 to vector<32x1xf32>
    %561 = arith.divf %559, %560 : vector<32x1xf32>
    %562 = vector.broadcast %561 : vector<32x1xf32> to vector<32x32xf32>
    %563 = arith.subf %553, %562 : vector<32x32xf32>
    %564 = arith.mulf %563, %563 : vector<32x32xf32>
    %cst_232 = arith.constant dense<0.000000e+00> : vector<32xf32>
    %565 = vector.multi_reduction <add>, %564, %cst_232 [1] : vector<32x32xf32> to vector<32xf32>
    %566 = vector.shape_cast %565 : vector<32xf32> to vector<32x1xf32>
    %cst_233 = arith.constant 3.200000e+01 : f32
    %567 = vector.broadcast %cst_233 : f32 to vector<32x1xf32>
    %568 = arith.divf %566, %567 : vector<32x1xf32>
    %569 = vector.broadcast %561 : vector<32x1xf32> to vector<32x32xf32>
    %570 = arith.subf %553, %569 : vector<32x32xf32>
    %cst_234 = arith.constant 9.99999974E-6 : f32
    %571 = vector.broadcast %cst_234 : f32 to vector<32x1xf32>
    %572 = arith.addf %568, %571 : vector<32x1xf32>
    %573 = math.rsqrt %572 : vector<32x1xf32>
    %574 = vector.broadcast %573 : vector<32x1xf32> to vector<32x32xf32>
    %575 = arith.mulf %570, %574 : vector<32x32xf32>
    %576 = vector.broadcast %555 : vector<1x32xf32> to vector<32x32xf32>
    %577 = arith.mulf %575, %576 : vector<32x32xf32>
    %578 = vector.broadcast %557 : vector<1x32xf32> to vector<32x32xf32>
    %579 = arith.addf %577, %578 : vector<32x32xf32>
    %580 = arith.addf %579, %9 : vector<32x32xf32>
    %581 = arith.truncf %580 : vector<32x32xf32> to vector<32x32xbf16>
    %582 = arith.truncf %579 : vector<32x32xf32> to vector<32x32xbf16>
    %c2 = arith.constant 2 : index
    %c0_235 = arith.constant 0 : index
    %c0_236 = arith.constant 0 : index
    %583 = vector.load %arg4[%c2, %c0_235, %c0_236] : memref<3x32x32xbf16, #tpu.memory_space<vmem>>, vector<1x32x32xbf16>
    %584 = vector.shape_cast %583 : vector<1x32x32xbf16> to vector<32x32xbf16>
    %cst_237 = arith.constant dense<0.000000e+00> : vector<32x32xf32>
    %585 = tpu.matmul %581, %584, %cst_237 {dimension_numbers = #tpu.dot_dimension_numbers<[1], [0], [0], [1], [0, 0, 1, 1], [], []>} : vector<32x32xbf16>, vector<32x32xbf16>, vector<32x32xf32> -> vector<32x32xf32>
    %c2_238 = arith.constant 2 : index
    %c0_239 = arith.constant 0 : index
    %c0_240 = arith.constant 0 : index
    %586 = vector.load %arg5[%c2_238, %c0_239, %c0_240] : memref<3x1x32xf32, #tpu.memory_space<vmem>>, vector<1x1x32xf32>
    %587 = vector.shape_cast %586 : vector<1x1x32xf32> to vector<1x32xf32>
    %588 = vector.broadcast %587 : vector<1x32xf32> to vector<32x32xf32>
    %589 = arith.addf %585, %588 : vector<32x32xf32>
    %c2_241 = arith.constant 2 : index
    %c0_242 = arith.constant 0 : index
    %c0_243 = arith.constant 0 : index
    %590 = vector.load %arg6[%c2_241, %c0_242, %c0_243] : memref<3x32x32xbf16, #tpu.memory_space<vmem>>, vector<1x32x32xbf16>
    %591 = vector.shape_cast %590 : vector<1x32x32xbf16> to vector<32x32xbf16>
    %cst_244 = arith.constant dense<0.000000e+00> : vector<32x32xf32>
    %592 = tpu.matmul %581, %591, %cst_244 {dimension_numbers = #tpu.dot_dimension_numbers<[1], [0], [0], [1], [0, 0, 1, 1], [], []>} : vector<32x32xbf16>, vector<32x32xbf16>, vector<32x32xf32> -> vector<32x32xf32>
    %c2_245 = arith.constant 2 : index
    %c0_246 = arith.constant 0 : index
    %c0_247 = arith.constant 0 : index
    %593 = vector.load %arg7[%c2_245, %c0_246, %c0_247] : memref<3x1x32xf32, #tpu.memory_space<vmem>>, vector<1x1x32xf32>
    %594 = vector.shape_cast %593 : vector<1x1x32xf32> to vector<1x32xf32>
    %595 = vector.broadcast %594 : vector<1x32xf32> to vector<32x32xf32>
    %596 = arith.addf %592, %595 : vector<32x32xf32>
    %c2_248 = arith.constant 2 : index
    %c0_249 = arith.constant 0 : index
    %c0_250 = arith.constant 0 : index
    %597 = vector.load %arg8[%c2_248, %c0_249, %c0_250] : memref<3x32x32xbf16, #tpu.memory_space<vmem>>, vector<1x32x32xbf16>
    %598 = vector.shape_cast %597 : vector<1x32x32xbf16> to vector<32x32xbf16>
    %cst_251 = arith.constant dense<0.000000e+00> : vector<32x32xf32>
    %599 = tpu.matmul %582, %598, %cst_251 {dimension_numbers = #tpu.dot_dimension_numbers<[1], [0], [0], [1], [0, 0, 1, 1], [], []>} : vector<32x32xbf16>, vector<32x32xbf16>, vector<32x32xf32> -> vector<32x32xf32>
    %c2_252 = arith.constant 2 : index
    %c0_253 = arith.constant 0 : index
    %c0_254 = arith.constant 0 : index
    %600 = vector.load %arg9[%c2_252, %c0_253, %c0_254] : memref<3x1x32xf32, #tpu.memory_space<vmem>>, vector<1x1x32xf32>
    %601 = vector.shape_cast %600 : vector<1x1x32xf32> to vector<1x32xf32>
    %602 = vector.broadcast %601 : vector<1x32xf32> to vector<32x32xf32>
    %603 = arith.addf %599, %602 : vector<32x32xf32>
    %604 = vector.extract_strided_slice %589 {offsets = [0, 0], sizes = [16, 32], strides = [1, 1]} : vector<32x32xf32> to vector<16x32xf32>
    %605 = arith.truncf %604 : vector<16x32xf32> to vector<16x32xbf16>
    %606 = vector.extract_strided_slice %596 {offsets = [0, 0], sizes = [16, 32], strides = [1, 1]} : vector<32x32xf32> to vector<16x32xf32>
    %607 = arith.truncf %606 : vector<16x32xf32> to vector<16x32xbf16>
    %608 = vector.extract_strided_slice %603 {offsets = [0, 0], sizes = [16, 32], strides = [1, 1]} : vector<32x32xf32> to vector<16x32xf32>
    %609 = arith.truncf %608 : vector<16x32xf32> to vector<16x32xbf16>
    %610 = vector.extract_strided_slice %605 {offsets = [0, 0], sizes = [16, 8], strides = [1, 1]} : vector<16x32xbf16> to vector<16x8xbf16>
    %611 = vector.extract_strided_slice %607 {offsets = [0, 0], sizes = [16, 8], strides = [1, 1]} : vector<16x32xbf16> to vector<16x8xbf16>
    %612 = vector.extract_strided_slice %609 {offsets = [0, 0], sizes = [16, 8], strides = [1, 1]} : vector<16x32xbf16> to vector<16x8xbf16>
    %cst_255 = arith.constant dense<0.000000e+00> : vector<16x16xf32>
    %613 = tpu.matmul %610, %611, %cst_255 {dimension_numbers = #tpu.dot_dimension_numbers<[1], [1], [0], [0], [0, 0, 1, 0], [], []>} : vector<16x8xbf16>, vector<16x8xbf16>, vector<16x16xf32> -> vector<16x16xf32>
    %614 = arith.addf %613, %64 : vector<16x16xf32>
    %cst_256 = arith.constant dense<0xFF800000> : vector<16xf32>
    %615 = vector.multi_reduction <maximumf>, %614, %cst_256 [1] : vector<16x16xf32> to vector<16xf32>
    %616 = vector.shape_cast %615 : vector<16xf32> to vector<16x1xf32>
    %617 = vector.broadcast %616 : vector<16x1xf32> to vector<16x16xf32>
    %618 = arith.subf %614, %617 : vector<16x16xf32>
    %619 = math.exp %618 : vector<16x16xf32>
    %cst_257 = arith.constant dense<0.000000e+00> : vector<16xf32>
    %620 = vector.multi_reduction <add>, %619, %cst_257 [1] : vector<16x16xf32> to vector<16xf32>
    %621 = vector.shape_cast %620 : vector<16xf32> to vector<16x1xf32>
    %622 = tpu.reciprocal %621 : vector<16x1xf32> -> vector<16x1xf32>
    %623 = vector.broadcast %622 : vector<16x1xf32> to vector<16x16xf32>
    %624 = arith.mulf %619, %623 : vector<16x16xf32>
    %625 = arith.truncf %624 : vector<16x16xf32> to vector<16x16xbf16>
    %cst_258 = arith.constant dense<0.000000e+00> : vector<16x8xf32>
    %626 = tpu.matmul %625, %612, %cst_258 {dimension_numbers = #tpu.dot_dimension_numbers<[1], [0], [0], [1], [0, 0, 1, 1], [], []>} : vector<16x16xbf16>, vector<16x8xbf16>, vector<16x8xf32> -> vector<16x8xf32>
    %627 = vector.extract_strided_slice %605 {offsets = [0, 8], sizes = [16, 8], strides = [1, 1]} : vector<16x32xbf16> to vector<16x8xbf16>
    %628 = vector.extract_strided_slice %607 {offsets = [0, 8], sizes = [16, 8], strides = [1, 1]} : vector<16x32xbf16> to vector<16x8xbf16>
    %629 = vector.extract_strided_slice %609 {offsets = [0, 8], sizes = [16, 8], strides = [1, 1]} : vector<16x32xbf16> to vector<16x8xbf16>
    %cst_259 = arith.constant dense<0.000000e+00> : vector<16x16xf32>
    %630 = tpu.matmul %627, %628, %cst_259 {dimension_numbers = #tpu.dot_dimension_numbers<[1], [1], [0], [0], [0, 0, 1, 0], [], []>} : vector<16x8xbf16>, vector<16x8xbf16>, vector<16x16xf32> -> vector<16x16xf32>
    %631 = arith.addf %630, %64 : vector<16x16xf32>
    %cst_260 = arith.constant dense<0xFF800000> : vector<16xf32>
    %632 = vector.multi_reduction <maximumf>, %631, %cst_260 [1] : vector<16x16xf32> to vector<16xf32>
    %633 = vector.shape_cast %632 : vector<16xf32> to vector<16x1xf32>
    %634 = vector.broadcast %633 : vector<16x1xf32> to vector<16x16xf32>
    %635 = arith.subf %631, %634 : vector<16x16xf32>
    %636 = math.exp %635 : vector<16x16xf32>
    %cst_261 = arith.constant dense<0.000000e+00> : vector<16xf32>
    %637 = vector.multi_reduction <add>, %636, %cst_261 [1] : vector<16x16xf32> to vector<16xf32>
    %638 = vector.shape_cast %637 : vector<16xf32> to vector<16x1xf32>
    %639 = tpu.reciprocal %638 : vector<16x1xf32> -> vector<16x1xf32>
    %640 = vector.broadcast %639 : vector<16x1xf32> to vector<16x16xf32>
    %641 = arith.mulf %636, %640 : vector<16x16xf32>
    %642 = arith.truncf %641 : vector<16x16xf32> to vector<16x16xbf16>
    %cst_262 = arith.constant dense<0.000000e+00> : vector<16x8xf32>
    %643 = tpu.matmul %642, %629, %cst_262 {dimension_numbers = #tpu.dot_dimension_numbers<[1], [0], [0], [1], [0, 0, 1, 1], [], []>} : vector<16x16xbf16>, vector<16x8xbf16>, vector<16x8xf32> -> vector<16x8xf32>
    %644 = vector.extract_strided_slice %605 {offsets = [0, 16], sizes = [16, 8], strides = [1, 1]} : vector<16x32xbf16> to vector<16x8xbf16>
    %645 = vector.extract_strided_slice %607 {offsets = [0, 16], sizes = [16, 8], strides = [1, 1]} : vector<16x32xbf16> to vector<16x8xbf16>
    %646 = vector.extract_strided_slice %609 {offsets = [0, 16], sizes = [16, 8], strides = [1, 1]} : vector<16x32xbf16> to vector<16x8xbf16>
    %cst_263 = arith.constant dense<0.000000e+00> : vector<16x16xf32>
    %647 = tpu.matmul %644, %645, %cst_263 {dimension_numbers = #tpu.dot_dimension_numbers<[1], [1], [0], [0], [0, 0, 1, 0], [], []>} : vector<16x8xbf16>, vector<16x8xbf16>, vector<16x16xf32> -> vector<16x16xf32>
    %648 = arith.addf %647, %64 : vector<16x16xf32>
    %cst_264 = arith.constant dense<0xFF800000> : vector<16xf32>
    %649 = vector.multi_reduction <maximumf>, %648, %cst_264 [1] : vector<16x16xf32> to vector<16xf32>
    %650 = vector.shape_cast %649 : vector<16xf32> to vector<16x1xf32>
    %651 = vector.broadcast %650 : vector<16x1xf32> to vector<16x16xf32>
    %652 = arith.subf %648, %651 : vector<16x16xf32>
    %653 = math.exp %652 : vector<16x16xf32>
    %cst_265 = arith.constant dense<0.000000e+00> : vector<16xf32>
    %654 = vector.multi_reduction <add>, %653, %cst_265 [1] : vector<16x16xf32> to vector<16xf32>
    %655 = vector.shape_cast %654 : vector<16xf32> to vector<16x1xf32>
    %656 = tpu.reciprocal %655 : vector<16x1xf32> -> vector<16x1xf32>
    %657 = vector.broadcast %656 : vector<16x1xf32> to vector<16x16xf32>
    %658 = arith.mulf %653, %657 : vector<16x16xf32>
    %659 = arith.truncf %658 : vector<16x16xf32> to vector<16x16xbf16>
    %cst_266 = arith.constant dense<0.000000e+00> : vector<16x8xf32>
    %660 = tpu.matmul %659, %646, %cst_266 {dimension_numbers = #tpu.dot_dimension_numbers<[1], [0], [0], [1], [0, 0, 1, 1], [], []>} : vector<16x16xbf16>, vector<16x8xbf16>, vector<16x8xf32> -> vector<16x8xf32>
    %661 = vector.extract_strided_slice %605 {offsets = [0, 24], sizes = [16, 8], strides = [1, 1]} : vector<16x32xbf16> to vector<16x8xbf16>
    %662 = vector.extract_strided_slice %607 {offsets = [0, 24], sizes = [16, 8], strides = [1, 1]} : vector<16x32xbf16> to vector<16x8xbf16>
    %663 = vector.extract_strided_slice %609 {offsets = [0, 24], sizes = [16, 8], strides = [1, 1]} : vector<16x32xbf16> to vector<16x8xbf16>
    %cst_267 = arith.constant dense<0.000000e+00> : vector<16x16xf32>
    %664 = tpu.matmul %661, %662, %cst_267 {dimension_numbers = #tpu.dot_dimension_numbers<[1], [1], [0], [0], [0, 0, 1, 0], [], []>} : vector<16x8xbf16>, vector<16x8xbf16>, vector<16x16xf32> -> vector<16x16xf32>
    %665 = arith.addf %664, %64 : vector<16x16xf32>
    %cst_268 = arith.constant dense<0xFF800000> : vector<16xf32>
    %666 = vector.multi_reduction <maximumf>, %665, %cst_268 [1] : vector<16x16xf32> to vector<16xf32>
    %667 = vector.shape_cast %666 : vector<16xf32> to vector<16x1xf32>
    %668 = vector.broadcast %667 : vector<16x1xf32> to vector<16x16xf32>
    %669 = arith.subf %665, %668 : vector<16x16xf32>
    %670 = math.exp %669 : vector<16x16xf32>
    %cst_269 = arith.constant dense<0.000000e+00> : vector<16xf32>
    %671 = vector.multi_reduction <add>, %670, %cst_269 [1] : vector<16x16xf32> to vector<16xf32>
    %672 = vector.shape_cast %671 : vector<16xf32> to vector<16x1xf32>
    %673 = tpu.reciprocal %672 : vector<16x1xf32> -> vector<16x1xf32>
    %674 = vector.broadcast %673 : vector<16x1xf32> to vector<16x16xf32>
    %675 = arith.mulf %670, %674 : vector<16x16xf32>
    %676 = arith.truncf %675 : vector<16x16xf32> to vector<16x16xbf16>
    %cst_270 = arith.constant dense<0.000000e+00> : vector<16x8xf32>
    %677 = tpu.matmul %676, %663, %cst_270 {dimension_numbers = #tpu.dot_dimension_numbers<[1], [0], [0], [1], [0, 0, 1, 1], [], []>} : vector<16x16xbf16>, vector<16x8xbf16>, vector<16x8xf32> -> vector<16x8xf32>
    %678 = tpu.concatenate %626, %643, %660, %677 in 1 : vector<16x8xf32>, vector<16x8xf32>, vector<16x8xf32>, vector<16x8xf32> -> vector<16x32xf32>
    %679 = vector.extract_strided_slice %589 {offsets = [16, 0], sizes = [16, 32], strides = [1, 1]} : vector<32x32xf32> to vector<16x32xf32>
    %680 = arith.truncf %679 : vector<16x32xf32> to vector<16x32xbf16>
    %681 = vector.extract_strided_slice %596 {offsets = [16, 0], sizes = [16, 32], strides = [1, 1]} : vector<32x32xf32> to vector<16x32xf32>
    %682 = arith.truncf %681 : vector<16x32xf32> to vector<16x32xbf16>
    %683 = vector.extract_strided_slice %603 {offsets = [16, 0], sizes = [16, 32], strides = [1, 1]} : vector<32x32xf32> to vector<16x32xf32>
    %684 = arith.truncf %683 : vector<16x32xf32> to vector<16x32xbf16>
    %685 = vector.extract_strided_slice %680 {offsets = [0, 0], sizes = [16, 8], strides = [1, 1]} : vector<16x32xbf16> to vector<16x8xbf16>
    %686 = vector.extract_strided_slice %682 {offsets = [0, 0], sizes = [16, 8], strides = [1, 1]} : vector<16x32xbf16> to vector<16x8xbf16>
    %687 = vector.extract_strided_slice %684 {offsets = [0, 0], sizes = [16, 8], strides = [1, 1]} : vector<16x32xbf16> to vector<16x8xbf16>
    %cst_271 = arith.constant dense<0.000000e+00> : vector<16x16xf32>
    %688 = tpu.matmul %685, %686, %cst_271 {dimension_numbers = #tpu.dot_dimension_numbers<[1], [1], [0], [0], [0, 0, 1, 0], [], []>} : vector<16x8xbf16>, vector<16x8xbf16>, vector<16x16xf32> -> vector<16x16xf32>
    %689 = arith.addf %688, %69 : vector<16x16xf32>
    %cst_272 = arith.constant dense<0xFF800000> : vector<16xf32>
    %690 = vector.multi_reduction <maximumf>, %689, %cst_272 [1] : vector<16x16xf32> to vector<16xf32>
    %691 = vector.shape_cast %690 : vector<16xf32> to vector<16x1xf32>
    %692 = vector.broadcast %691 : vector<16x1xf32> to vector<16x16xf32>
    %693 = arith.subf %689, %692 : vector<16x16xf32>
    %694 = math.exp %693 : vector<16x16xf32>
    %cst_273 = arith.constant dense<0.000000e+00> : vector<16xf32>
    %695 = vector.multi_reduction <add>, %694, %cst_273 [1] : vector<16x16xf32> to vector<16xf32>
    %696 = vector.shape_cast %695 : vector<16xf32> to vector<16x1xf32>
    %697 = tpu.reciprocal %696 : vector<16x1xf32> -> vector<16x1xf32>
    %698 = vector.broadcast %697 : vector<16x1xf32> to vector<16x16xf32>
    %699 = arith.mulf %694, %698 : vector<16x16xf32>
    %700 = arith.truncf %699 : vector<16x16xf32> to vector<16x16xbf16>
    %cst_274 = arith.constant dense<0.000000e+00> : vector<16x8xf32>
    %701 = tpu.matmul %700, %687, %cst_274 {dimension_numbers = #tpu.dot_dimension_numbers<[1], [0], [0], [1], [0, 0, 1, 1], [], []>} : vector<16x16xbf16>, vector<16x8xbf16>, vector<16x8xf32> -> vector<16x8xf32>
    %702 = vector.extract_strided_slice %680 {offsets = [0, 8], sizes = [16, 8], strides = [1, 1]} : vector<16x32xbf16> to vector<16x8xbf16>
    %703 = vector.extract_strided_slice %682 {offsets = [0, 8], sizes = [16, 8], strides = [1, 1]} : vector<16x32xbf16> to vector<16x8xbf16>
    %704 = vector.extract_strided_slice %684 {offsets = [0, 8], sizes = [16, 8], strides = [1, 1]} : vector<16x32xbf16> to vector<16x8xbf16>
    %cst_275 = arith.constant dense<0.000000e+00> : vector<16x16xf32>
    %705 = tpu.matmul %702, %703, %cst_275 {dimension_numbers = #tpu.dot_dimension_numbers<[1], [1], [0], [0], [0, 0, 1, 0], [], []>} : vector<16x8xbf16>, vector<16x8xbf16>, vector<16x16xf32> -> vector<16x16xf32>
    %706 = arith.addf %705, %69 : vector<16x16xf32>
    %cst_276 = arith.constant dense<0xFF800000> : vector<16xf32>
    %707 = vector.multi_reduction <maximumf>, %706, %cst_276 [1] : vector<16x16xf32> to vector<16xf32>
    %708 = vector.shape_cast %707 : vector<16xf32> to vector<16x1xf32>
    %709 = vector.broadcast %708 : vector<16x1xf32> to vector<16x16xf32>
    %710 = arith.subf %706, %709 : vector<16x16xf32>
    %711 = math.exp %710 : vector<16x16xf32>
    %cst_277 = arith.constant dense<0.000000e+00> : vector<16xf32>
    %712 = vector.multi_reduction <add>, %711, %cst_277 [1] : vector<16x16xf32> to vector<16xf32>
    %713 = vector.shape_cast %712 : vector<16xf32> to vector<16x1xf32>
    %714 = tpu.reciprocal %713 : vector<16x1xf32> -> vector<16x1xf32>
    %715 = vector.broadcast %714 : vector<16x1xf32> to vector<16x16xf32>
    %716 = arith.mulf %711, %715 : vector<16x16xf32>
    %717 = arith.truncf %716 : vector<16x16xf32> to vector<16x16xbf16>
    %cst_278 = arith.constant dense<0.000000e+00> : vector<16x8xf32>
    %718 = tpu.matmul %717, %704, %cst_278 {dimension_numbers = #tpu.dot_dimension_numbers<[1], [0], [0], [1], [0, 0, 1, 1], [], []>} : vector<16x16xbf16>, vector<16x8xbf16>, vector<16x8xf32> -> vector<16x8xf32>
    %719 = vector.extract_strided_slice %680 {offsets = [0, 16], sizes = [16, 8], strides = [1, 1]} : vector<16x32xbf16> to vector<16x8xbf16>
    %720 = vector.extract_strided_slice %682 {offsets = [0, 16], sizes = [16, 8], strides = [1, 1]} : vector<16x32xbf16> to vector<16x8xbf16>
    %721 = vector.extract_strided_slice %684 {offsets = [0, 16], sizes = [16, 8], strides = [1, 1]} : vector<16x32xbf16> to vector<16x8xbf16>
    %cst_279 = arith.constant dense<0.000000e+00> : vector<16x16xf32>
    %722 = tpu.matmul %719, %720, %cst_279 {dimension_numbers = #tpu.dot_dimension_numbers<[1], [1], [0], [0], [0, 0, 1, 0], [], []>} : vector<16x8xbf16>, vector<16x8xbf16>, vector<16x16xf32> -> vector<16x16xf32>
    %723 = arith.addf %722, %69 : vector<16x16xf32>
    %cst_280 = arith.constant dense<0xFF800000> : vector<16xf32>
    %724 = vector.multi_reduction <maximumf>, %723, %cst_280 [1] : vector<16x16xf32> to vector<16xf32>
    %725 = vector.shape_cast %724 : vector<16xf32> to vector<16x1xf32>
    %726 = vector.broadcast %725 : vector<16x1xf32> to vector<16x16xf32>
    %727 = arith.subf %723, %726 : vector<16x16xf32>
    %728 = math.exp %727 : vector<16x16xf32>
    %cst_281 = arith.constant dense<0.000000e+00> : vector<16xf32>
    %729 = vector.multi_reduction <add>, %728, %cst_281 [1] : vector<16x16xf32> to vector<16xf32>
    %730 = vector.shape_cast %729 : vector<16xf32> to vector<16x1xf32>
    %731 = tpu.reciprocal %730 : vector<16x1xf32> -> vector<16x1xf32>
    %732 = vector.broadcast %731 : vector<16x1xf32> to vector<16x16xf32>
    %733 = arith.mulf %728, %732 : vector<16x16xf32>
    %734 = arith.truncf %733 : vector<16x16xf32> to vector<16x16xbf16>
    %cst_282 = arith.constant dense<0.000000e+00> : vector<16x8xf32>
    %735 = tpu.matmul %734, %721, %cst_282 {dimension_numbers = #tpu.dot_dimension_numbers<[1], [0], [0], [1], [0, 0, 1, 1], [], []>} : vector<16x16xbf16>, vector<16x8xbf16>, vector<16x8xf32> -> vector<16x8xf32>
    %736 = vector.extract_strided_slice %680 {offsets = [0, 24], sizes = [16, 8], strides = [1, 1]} : vector<16x32xbf16> to vector<16x8xbf16>
    %737 = vector.extract_strided_slice %682 {offsets = [0, 24], sizes = [16, 8], strides = [1, 1]} : vector<16x32xbf16> to vector<16x8xbf16>
    %738 = vector.extract_strided_slice %684 {offsets = [0, 24], sizes = [16, 8], strides = [1, 1]} : vector<16x32xbf16> to vector<16x8xbf16>
    %cst_283 = arith.constant dense<0.000000e+00> : vector<16x16xf32>
    %739 = tpu.matmul %736, %737, %cst_283 {dimension_numbers = #tpu.dot_dimension_numbers<[1], [1], [0], [0], [0, 0, 1, 0], [], []>} : vector<16x8xbf16>, vector<16x8xbf16>, vector<16x16xf32> -> vector<16x16xf32>
    %740 = arith.addf %739, %69 : vector<16x16xf32>
    %cst_284 = arith.constant dense<0xFF800000> : vector<16xf32>
    %741 = vector.multi_reduction <maximumf>, %740, %cst_284 [1] : vector<16x16xf32> to vector<16xf32>
    %742 = vector.shape_cast %741 : vector<16xf32> to vector<16x1xf32>
    %743 = vector.broadcast %742 : vector<16x1xf32> to vector<16x16xf32>
    %744 = arith.subf %740, %743 : vector<16x16xf32>
    %745 = math.exp %744 : vector<16x16xf32>
    %cst_285 = arith.constant dense<0.000000e+00> : vector<16xf32>
    %746 = vector.multi_reduction <add>, %745, %cst_285 [1] : vector<16x16xf32> to vector<16xf32>
    %747 = vector.shape_cast %746 : vector<16xf32> to vector<16x1xf32>
    %748 = tpu.reciprocal %747 : vector<16x1xf32> -> vector<16x1xf32>
    %749 = vector.broadcast %748 : vector<16x1xf32> to vector<16x16xf32>
    %750 = arith.mulf %745, %749 : vector<16x16xf32>
    %751 = arith.truncf %750 : vector<16x16xf32> to vector<16x16xbf16>
    %cst_286 = arith.constant dense<0.000000e+00> : vector<16x8xf32>
    %752 = tpu.matmul %751, %738, %cst_286 {dimension_numbers = #tpu.dot_dimension_numbers<[1], [0], [0], [1], [0, 0, 1, 1], [], []>} : vector<16x16xbf16>, vector<16x8xbf16>, vector<16x8xf32> -> vector<16x8xf32>
    %753 = tpu.concatenate %701, %718, %735, %752 in 1 : vector<16x8xf32>, vector<16x8xf32>, vector<16x8xf32>, vector<16x8xf32> -> vector<16x32xf32>
    %754 = tpu.concatenate %678, %753 in 0 : vector<16x32xf32>, vector<16x32xf32> -> vector<32x32xf32>
    %755 = arith.truncf %754 : vector<32x32xf32> to vector<32x32xbf16>
    %c2_287 = arith.constant 2 : index
    %c0_288 = arith.constant 0 : index
    %c0_289 = arith.constant 0 : index
    %756 = vector.load %arg10[%c2_287, %c0_288, %c0_289] : memref<3x32x32xbf16, #tpu.memory_space<vmem>>, vector<1x32x32xbf16>
    %757 = vector.shape_cast %756 : vector<1x32x32xbf16> to vector<32x32xbf16>
    %cst_290 = arith.constant dense<0.000000e+00> : vector<32x32xf32>
    %758 = tpu.matmul %755, %757, %cst_290 {dimension_numbers = #tpu.dot_dimension_numbers<[1], [0], [0], [1], [0, 0, 1, 1], [], []>} : vector<32x32xbf16>, vector<32x32xbf16>, vector<32x32xf32> -> vector<32x32xf32>
    %c2_291 = arith.constant 2 : index
    %c0_292 = arith.constant 0 : index
    %c0_293 = arith.constant 0 : index
    %759 = vector.load %arg11[%c2_291, %c0_292, %c0_293] : memref<3x1x32xf32, #tpu.memory_space<vmem>>, vector<1x1x32xf32>
    %760 = vector.shape_cast %759 : vector<1x1x32xf32> to vector<1x32xf32>
    %761 = vector.broadcast %760 : vector<1x32xf32> to vector<32x32xf32>
    %762 = arith.addf %758, %761 : vector<32x32xf32>
    %763 = arith.addf %579, %762 : vector<32x32xf32>
    %c2_294 = arith.constant 2 : index
    %c0_295 = arith.constant 0 : index
    %c0_296 = arith.constant 0 : index
    %764 = vector.load %arg12[%c2_294, %c0_295, %c0_296] : memref<3x1x32xf32, #tpu.memory_space<vmem>>, vector<1x1x32xf32>
    %765 = vector.shape_cast %764 : vector<1x1x32xf32> to vector<1x32xf32>
    %c2_297 = arith.constant 2 : index
    %c0_298 = arith.constant 0 : index
    %c0_299 = arith.constant 0 : index
    %766 = vector.load %arg13[%c2_297, %c0_298, %c0_299] : memref<3x1x32xf32, #tpu.memory_space<vmem>>, vector<1x1x32xf32>
    %767 = vector.shape_cast %766 : vector<1x1x32xf32> to vector<1x32xf32>
    %cst_300 = arith.constant dense<0.000000e+00> : vector<32xf32>
    %768 = vector.multi_reduction <add>, %763, %cst_300 [1] : vector<32x32xf32> to vector<32xf32>
    %769 = vector.shape_cast %768 : vector<32xf32> to vector<32x1xf32>
    %cst_301 = arith.constant 3.200000e+01 : f32
    %770 = vector.broadcast %cst_301 : f32 to vector<32x1xf32>
    %771 = arith.divf %769, %770 : vector<32x1xf32>
    %772 = vector.broadcast %771 : vector<32x1xf32> to vector<32x32xf32>
    %773 = arith.subf %763, %772 : vector<32x32xf32>
    %774 = arith.mulf %773, %773 : vector<32x32xf32>
    %cst_302 = arith.constant dense<0.000000e+00> : vector<32xf32>
    %775 = vector.multi_reduction <add>, %774, %cst_302 [1] : vector<32x32xf32> to vector<32xf32>
    %776 = vector.shape_cast %775 : vector<32xf32> to vector<32x1xf32>
    %cst_303 = arith.constant 3.200000e+01 : f32
    %777 = vector.broadcast %cst_303 : f32 to vector<32x1xf32>
    %778 = arith.divf %776, %777 : vector<32x1xf32>
    %779 = vector.broadcast %771 : vector<32x1xf32> to vector<32x32xf32>
    %780 = arith.subf %763, %779 : vector<32x32xf32>
    %cst_304 = arith.constant 9.99999974E-6 : f32
    %781 = vector.broadcast %cst_304 : f32 to vector<32x1xf32>
    %782 = arith.addf %778, %781 : vector<32x1xf32>
    %783 = math.rsqrt %782 : vector<32x1xf32>
    %784 = vector.broadcast %783 : vector<32x1xf32> to vector<32x32xf32>
    %785 = arith.mulf %780, %784 : vector<32x32xf32>
    %786 = vector.broadcast %765 : vector<1x32xf32> to vector<32x32xf32>
    %787 = arith.mulf %785, %786 : vector<32x32xf32>
    %788 = vector.broadcast %767 : vector<1x32xf32> to vector<32x32xf32>
    %789 = arith.addf %787, %788 : vector<32x32xf32>
    %790 = arith.truncf %789 : vector<32x32xf32> to vector<32x32xbf16>
    %c2_305 = arith.constant 2 : index
    %c0_306 = arith.constant 0 : index
    %c0_307 = arith.constant 0 : index
    %791 = vector.load %arg14[%c2_305, %c0_306, %c0_307] : memref<3x32x64xbf16, #tpu.memory_space<vmem>>, vector<1x32x64xbf16>
    %792 = vector.shape_cast %791 : vector<1x32x64xbf16> to vector<32x64xbf16>
    %cst_308 = arith.constant dense<0.000000e+00> : vector<32x64xf32>
    %793 = tpu.matmul %790, %792, %cst_308 {dimension_numbers = #tpu.dot_dimension_numbers<[1], [0], [0], [1], [0, 0, 1, 1], [], []>} : vector<32x32xbf16>, vector<32x64xbf16>, vector<32x64xf32> -> vector<32x64xf32>
    %c2_309 = arith.constant 2 : index
    %c0_310 = arith.constant 0 : index
    %c0_311 = arith.constant 0 : index
    %794 = vector.load %arg15[%c2_309, %c0_310, %c0_311] : memref<3x1x64xf32, #tpu.memory_space<vmem>>, vector<1x1x64xf32>
    %795 = vector.shape_cast %794 : vector<1x1x64xf32> to vector<1x64xf32>
    %796 = vector.broadcast %795 : vector<1x64xf32> to vector<32x64xf32>
    %797 = arith.addf %793, %796 : vector<32x64xf32>
    %cst_312 = arith.constant 0.000000e+00 : f32
    %798 = vector.broadcast %cst_312 : f32 to vector<32x64xf32>
    %799 = arith.maximumf %797, %798 : vector<32x64xf32>
    %800 = arith.truncf %799 : vector<32x64xf32> to vector<32x64xbf16>
    %c2_313 = arith.constant 2 : index
    %c0_314 = arith.constant 0 : index
    %c0_315 = arith.constant 0 : index
    %801 = vector.load %arg16[%c2_313, %c0_314, %c0_315] : memref<3x64x32xbf16, #tpu.memory_space<vmem>>, vector<1x64x32xbf16>
    %802 = vector.shape_cast %801 : vector<1x64x32xbf16> to vector<64x32xbf16>
    %cst_316 = arith.constant dense<0.000000e+00> : vector<32x32xf32>
    %803 = tpu.matmul %800, %802, %cst_316 {dimension_numbers = #tpu.dot_dimension_numbers<[1], [0], [0], [1], [0, 0, 1, 1], [], []>} : vector<32x64xbf16>, vector<64x32xbf16>, vector<32x32xf32> -> vector<32x32xf32>
    %c2_317 = arith.constant 2 : index
    %c0_318 = arith.constant 0 : index
    %c0_319 = arith.constant 0 : index
    %804 = vector.load %arg17[%c2_317, %c0_318, %c0_319] : memref<3x1x32xf32, #tpu.memory_space<vmem>>, vector<1x1x32xf32>
    %805 = vector.shape_cast %804 : vector<1x1x32xf32> to vector<1x32xf32>
    %806 = vector.broadcast %805 : vector<1x32xf32> to vector<32x32xf32>
    %807 = arith.addf %803, %806 : vector<32x32xf32>
    %808 = arith.addf %789, %807 : vector<32x32xf32>
    %c2_320 = arith.constant 2 : index
    %c0_321 = arith.constant 0 : index
    %c0_322 = arith.constant 0 : index
    %809 = vector.load %arg18[%c2_320, %c0_321, %c0_322] : memref<3x1x32xf32, #tpu.memory_space<vmem>>, vector<1x1x32xf32>
    %810 = vector.shape_cast %809 : vector<1x1x32xf32> to vector<1x32xf32>
    %c2_323 = arith.constant 2 : index
    %c0_324 = arith.constant 0 : index
    %c0_325 = arith.constant 0 : index
    %811 = vector.load %arg19[%c2_323, %c0_324, %c0_325] : memref<3x1x32xf32, #tpu.memory_space<vmem>>, vector<1x1x32xf32>
    %812 = vector.shape_cast %811 : vector<1x1x32xf32> to vector<1x32xf32>
    %cst_326 = arith.constant dense<0.000000e+00> : vector<32xf32>
    %813 = vector.multi_reduction <add>, %808, %cst_326 [1] : vector<32x32xf32> to vector<32xf32>
    %814 = vector.shape_cast %813 : vector<32xf32> to vector<32x1xf32>
    %cst_327 = arith.constant 3.200000e+01 : f32
    %815 = vector.broadcast %cst_327 : f32 to vector<32x1xf32>
    %816 = arith.divf %814, %815 : vector<32x1xf32>
    %817 = vector.broadcast %816 : vector<32x1xf32> to vector<32x32xf32>
    %818 = arith.subf %808, %817 : vector<32x32xf32>
    %819 = arith.mulf %818, %818 : vector<32x32xf32>
    %cst_328 = arith.constant dense<0.000000e+00> : vector<32xf32>
    %820 = vector.multi_reduction <add>, %819, %cst_328 [1] : vector<32x32xf32> to vector<32xf32>
    %821 = vector.shape_cast %820 : vector<32xf32> to vector<32x1xf32>
    %cst_329 = arith.constant 3.200000e+01 : f32
    %822 = vector.broadcast %cst_329 : f32 to vector<32x1xf32>
    %823 = arith.divf %821, %822 : vector<32x1xf32>
    %824 = vector.broadcast %816 : vector<32x1xf32> to vector<32x32xf32>
    %825 = arith.subf %808, %824 : vector<32x32xf32>
    %cst_330 = arith.constant 9.99999974E-6 : f32
    %826 = vector.broadcast %cst_330 : f32 to vector<32x1xf32>
    %827 = arith.addf %823, %826 : vector<32x1xf32>
    %828 = math.rsqrt %827 : vector<32x1xf32>
    %829 = vector.broadcast %828 : vector<32x1xf32> to vector<32x32xf32>
    %830 = arith.mulf %825, %829 : vector<32x32xf32>
    %831 = vector.broadcast %810 : vector<1x32xf32> to vector<32x32xf32>
    %832 = arith.mulf %830, %831 : vector<32x32xf32>
    %833 = vector.broadcast %812 : vector<1x32xf32> to vector<32x32xf32>
    %834 = arith.addf %832, %833 : vector<32x32xf32>
    %835 = vector.extract_strided_slice %834 {offsets = [0, 0], sizes = [16, 32], strides = [1, 1]} : vector<32x32xf32> to vector<16x32xf32>
    %c0_331 = arith.constant 0 : index
    %c0_332 = arith.constant 0 : index
    %c0_333 = arith.constant 0 : index
    %836 = vector.load %arg20[%c0_331, %c0_332, %c0_333] : memref<2x16x32xf32, #tpu.memory_space<vmem>>, vector<1x16x32xf32>
    %837 = vector.shape_cast %836 : vector<1x16x32xf32> to vector<16x32xf32>
    %838 = vector.shape_cast %835 : vector<16x32xf32> to vector<1x16x32xf32>
    tpu.vector_store %arg20[%c0_331, %c0_332, %c0_333], %838 {strides = array<i32>} : memref<2x16x32xf32, #tpu.memory_space<vmem>>, vector<1x16x32xf32>,
    %839 = vector.extract_strided_slice %834 {offsets = [16, 0], sizes = [16, 32], strides = [1, 1]} : vector<32x32xf32> to vector<16x32xf32>
    %c1_334 = arith.constant 1 : index
    %c0_335 = arith.constant 0 : index
    %c0_336 = arith.constant 0 : index
    %840 = vector.load %arg20[%c1_334, %c0_335, %c0_336] : memref<2x16x32xf32, #tpu.memory_space<vmem>>, vector<1x16x32xf32>
    %841 = vector.shape_cast %840 : vector<1x16x32xf32> to vector<16x32xf32>
    %842 = vector.shape_cast %839 : vector<16x32xf32> to vector<1x16x32xf32>
    tpu.vector_store %arg20[%c1_334, %c0_335, %c0_336], %842 {strides = array<i32>} : memref<2x16x32xf32, #tpu.memory_space<vmem>>, vector<1x16x32xf32>,
    return
  }
  func.func @transform_0(%arg0: i32) -> (i32, i32, i32) {
    %c0_i32 = arith.constant 0 : i32
    %c0_i32_0 = arith.constant 0 : i32
    %c0_i32_1 = arith.constant 0 : i32
    return %arg0, %c0_i32, %c0_i32_0 : i32, i32, i32
  }
  func.func @transform_1(%arg0: i32) -> (i32, i32, i32) {
    %c0_i32 = arith.constant 0 : i32
    %c0_i32_0 = arith.constant 0 : i32
    %c0_i32_1 = arith.constant 0 : i32
    return %arg0, %c0_i32, %c0_i32_0 : i32, i32, i32
  }
  func.func @transform_2(%arg0: i32) -> (i32, i32, i32) {
    %c0_i32 = arith.constant 0 : i32
    %c0_i32_0 = arith.constant 0 : i32
    %c0_i32_1 = arith.constant 0 : i32
    return %arg0, %c0_i32, %c0_i32_0 : i32, i32, i32
  }
  func.func @transform_3(%arg0: i32) -> (i32, i32, i32) {
    %c0_i32 = arith.constant 0 : i32
    %c0_i32_0 = arith.constant 0 : i32
    %c0_i32_1 = arith.constant 0 : i32
    %c0_i32_2 = arith.constant 0 : i32
    return %c0_i32, %c0_i32_0, %c0_i32_1 : i32, i32, i32
  }
  func.func @transform_4(%arg0: i32) -> (i32, i32, i32) {
    %c0_i32 = arith.constant 0 : i32
    %c0_i32_0 = arith.constant 0 : i32
    %c0_i32_1 = arith.constant 0 : i32
    %c0_i32_2 = arith.constant 0 : i32
    return %c0_i32, %c0_i32_0, %c0_i32_1 : i32, i32, i32
  }
  func.func @transform_5(%arg0: i32) -> (i32, i32, i32) {
    %c0_i32 = arith.constant 0 : i32
    %c0_i32_0 = arith.constant 0 : i32
    %c0_i32_1 = arith.constant 0 : i32
    %c0_i32_2 = arith.constant 0 : i32
    return %c0_i32, %c0_i32_0, %c0_i32_1 : i32, i32, i32
  }
  func.func @transform_6(%arg0: i32) -> (i32, i32, i32) {
    %c0_i32 = arith.constant 0 : i32
    %c0_i32_0 = arith.constant 0 : i32
    %c0_i32_1 = arith.constant 0 : i32
    %c0_i32_2 = arith.constant 0 : i32
    return %c0_i32, %c0_i32_0, %c0_i32_1 : i32, i32, i32
  }
  func.func @transform_7(%arg0: i32) -> (i32, i32, i32) {
    %c0_i32 = arith.constant 0 : i32
    %c0_i32_0 = arith.constant 0 : i32
    %c0_i32_1 = arith.constant 0 : i32
    %c0_i32_2 = arith.constant 0 : i32
    return %c0_i32, %c0_i32_0, %c0_i32_1 : i32, i32, i32
  }
  func.func @transform_8(%arg0: i32) -> (i32, i32, i32) {
    %c0_i32 = arith.constant 0 : i32
    %c0_i32_0 = arith.constant 0 : i32
    %c0_i32_1 = arith.constant 0 : i32
    %c0_i32_2 = arith.constant 0 : i32
    return %c0_i32, %c0_i32_0, %c0_i32_1 : i32, i32, i32
  }
  func.func @transform_9(%arg0: i32) -> (i32, i32, i32) {
    %c0_i32 = arith.constant 0 : i32
    %c0_i32_0 = arith.constant 0 : i32
    %c0_i32_1 = arith.constant 0 : i32
    %c0_i32_2 = arith.constant 0 : i32
    return %c0_i32, %c0_i32_0, %c0_i32_1 : i32, i32, i32
  }
  func.func @transform_10(%arg0: i32) -> (i32, i32, i32) {
    %c0_i32 = arith.constant 0 : i32
    %c0_i32_0 = arith.constant 0 : i32
    %c0_i32_1 = arith.constant 0 : i32
    %c0_i32_2 = arith.constant 0 : i32
    return %c0_i32, %c0_i32_0, %c0_i32_1 : i32, i32, i32
  }
  func.func @transform_11(%arg0: i32) -> (i32, i32, i32) {
    %c0_i32 = arith.constant 0 : i32
    %c0_i32_0 = arith.constant 0 : i32
    %c0_i32_1 = arith.constant 0 : i32
    %c0_i32_2 = arith.constant 0 : i32
    return %c0_i32, %c0_i32_0, %c0_i32_1 : i32, i32, i32
  }
  func.func @transform_12(%arg0: i32) -> (i32, i32, i32) {
    %c0_i32 = arith.constant 0 : i32
    %c0_i32_0 = arith.constant 0 : i32
    %c0_i32_1 = arith.constant 0 : i32
    %c0_i32_2 = arith.constant 0 : i32
    return %c0_i32, %c0_i32_0, %c0_i32_1 : i32, i32, i32
  }
  func.func @transform_13(%arg0: i32) -> (i32, i32, i32) {
    %c0_i32 = arith.constant 0 : i32
    %c0_i32_0 = arith.constant 0 : i32
    %c0_i32_1 = arith.constant 0 : i32
    %c0_i32_2 = arith.constant 0 : i32
    return %c0_i32, %c0_i32_0, %c0_i32_1 : i32, i32, i32
  }
  func.func @transform_14(%arg0: i32) -> (i32, i32, i32) {
    %c0_i32 = arith.constant 0 : i32
    %c0_i32_0 = arith.constant 0 : i32
    %c0_i32_1 = arith.constant 0 : i32
    %c0_i32_2 = arith.constant 0 : i32
    return %c0_i32, %c0_i32_0, %c0_i32_1 : i32, i32, i32
  }
  func.func @transform_15(%arg0: i32) -> (i32, i32, i32) {
    %c0_i32 = arith.constant 0 : i32
    %c0_i32_0 = arith.constant 0 : i32
    %c0_i32_1 = arith.constant 0 : i32
    %c0_i32_2 = arith.constant 0 : i32
    return %c0_i32, %c0_i32_0, %c0_i32_1 : i32, i32, i32
  }
  func.func @transform_16(%arg0: i32) -> (i32, i32, i32) {
    %c0_i32 = arith.constant 0 : i32
    %c0_i32_0 = arith.constant 0 : i32
    %c0_i32_1 = arith.constant 0 : i32
    %c0_i32_2 = arith.constant 0 : i32
    return %c0_i32, %c0_i32_0, %c0_i32_1 : i32, i32, i32
  }
  func.func @transform_17(%arg0: i32) -> (i32, i32, i32) {
    %c0_i32 = arith.constant 0 : i32
    %c0_i32_0 = arith.constant 0 : i32
    %c0_i32_1 = arith.constant 0 : i32
    %c0_i32_2 = arith.constant 0 : i32
    return %c0_i32, %c0_i32_0, %c0_i32_1 : i32, i32, i32
  }
  func.func @transform_18(%arg0: i32) -> (i32, i32, i32) {
    %c0_i32 = arith.constant 0 : i32
    %c0_i32_0 = arith.constant 0 : i32
    %c0_i32_1 = arith.constant 0 : i32
    %c0_i32_2 = arith.constant 0 : i32
    return %c0_i32, %c0_i32_0, %c0_i32_1 : i32, i32, i32
  }
  func.func @transform_19(%arg0: i32) -> (i32, i32, i32) {
    %c0_i32 = arith.constant 0 : i32
    %c0_i32_0 = arith.constant 0 : i32
    %c0_i32_1 = arith.constant 0 : i32
    return %arg0, %c0_i32, %c0_i32_0 : i32, i32, i32
  }
}

</mosaic_0001>

<llo_original>
// kernel: tpu_custom_call.1
$region0: #{tpu_custom_call.1}
  #allocation0 [shape = 'u32[]', space=smem, size = 0x4, offset = 0x4, fixed_abs, tag = 'smem constant byte address 0x4 - core index']
  #allocation1 [shape = 'u32[72,128]{1,0:T(1,128)}', space=vmem, size = 0x9000, scoped, tag = 'internal scratch']
  %s0 = inlined_call_operand.vmem [shape: f32[4,16,32], index: 0, kind: input, shape index: {}]
  %s1 = inlined_call_operand.vmem [shape: f32[4,16,32], index: 1, kind: input, shape index: {}]
  %s2 = inlined_call_operand.vmem [shape: f32[4,16,3], index: 2, kind: input, shape index: {}]
  %s3 = inlined_call_operand.vmem [shape: bf16[3,32,32], index: 3, kind: input, shape index: {}]
  %s4 = inlined_call_operand.vmem [shape: f32[3,1,32], index: 4, kind: input, shape index: {}]
  %s5 = inlined_call_operand.hbm [shape: bf16[3,32,32], index: 5, kind: input, shape index: {}]
  %s6 = inlined_call_operand.vmem [shape: f32[3,1,32], index: 6, kind: input, shape index: {}]
  %s7 = inlined_call_operand.hbm [shape: bf16[3,32,32], index: 7, kind: input, shape index: {}]
  %s8 = inlined_call_operand.vmem [shape: f32[3,1,32], index: 8, kind: input, shape index: {}]
  %s9 = inlined_call_operand.hbm [shape: bf16[3,32,32], index: 9, kind: input, shape index: {}]
  %s10 = inlined_call_operand.hbm [shape: f32[3,1,32], index: 10, kind: input, shape index: {}]
  %s11 = inlined_call_operand.hbm [shape: f32[3,1,32], index: 11, kind: input, shape index: {}]
  %s12 = inlined_call_operand.hbm [shape: f32[3,1,32], index: 12, kind: input, shape index: {}]
  %s13 = inlined_call_operand.hbm [shape: bf16[3,32,64], index: 13, kind: input, shape index: {}]
  %s14 = inlined_call_operand.hbm [shape: f32[3,1,64], index: 14, kind: input, shape index: {}]
  %s15 = inlined_call_operand.vmem [shape: bf16[3,64,32], index: 15, kind: input, shape index: {}]
  %s16 = inlined_call_operand.hbm [shape: f32[3,1,32], index: 16, kind: input, shape index: {}]
  %s17 = inlined_call_operand.hbm [shape: f32[3,1,32], index: 17, kind: input, shape index: {}]
  %s18 = inlined_call_operand.vmem [shape: f32[3,1,32], index: 18, kind: input, shape index: {}]
  %s19 = inlined_call_operand.hbm [shape: f32[4,16,32], index: 19, kind: output, shape index: {}]
  %s20 = sld [smem:[#allocation0]]
  $region149: #{tpu_custom_call.1} parent=0
    _
  %s22 = ssub.s32 1, %s20
  %s23 = scalar_select 0, %s22, %s20
  $region1: #{tpu_custom_call.1} parent=0
    #allocation2 [shape = 'u8[24576]{0}', space=vmem, size = 0x6000, scoped, tag = 'input window, operand 5, single buffered']
    #allocation3 [shape = 's32[2]{0}', space=sflag, size = 0x8, scoped, tag = 'scoped memory for tpu_custom_call.1']
    #allocation4 [shape = 's32[2]{0}', space=sflag, size = 0x8, scoped, tag = 'scoped memory for tpu_custom_call.1']
    #allocation5 [shape = 'u8[24576]{0}', space=vmem, size = 0x6000, scoped, tag = 'input window, operand 7, single buffered']
    #allocation6 [shape = 's32[1]{0}', space=sflag, size = 0x4, scoped, tag = 'scoped memory for tpu_custom_call.1']
    #allocation7 [shape = 'u8[24576]{0}', space=vmem, size = 0x6000, scoped, tag = 'input window, operand 9, single buffered']
    #allocation8 [shape = 'u8[1536]{0}', space=vmem, size = 0x800, scoped, tag = 'input window, operand 10, single buffered']
    #allocation9 [shape = 's32[1]{0}', space=sflag, size = 0x4, scoped, tag = 'scoped memory for tpu_custom_call.1']
    #allocation10 [shape = 'u8[1536]{0}', space=vmem, size = 0x800, scoped, tag = 'input window, operand 11, single buffered']
    #allocation11 [shape = 'u8[1536]{0}', space=vmem, size = 0x800, scoped, tag = 'input window, operand 12, single buffered']
    #allocation12 [shape = 's32[1]{0}', space=sflag, size = 0x4, scoped, tag = 'scoped memory for tpu_custom_call.1']
    #allocation13 [shape = 'u8[24576]{0}', space=vmem, size = 0x6000, scoped, tag = 'input window, operand 13, single buffered']
    #allocation14 [shape = 'u8[1536]{0}', space=vmem, size = 0x800, scoped, tag = 'input window, operand 14, single buffered']
    #allocation15 [shape = 's32[1]{0}', space=sflag, size = 0x4, scoped, tag = 'scoped memory for tpu_custom_call.1']
    #allocation16 [shape = 'u8[1536]{0}', space=vmem, size = 0x800, scoped, tag = 'input window, operand 16, single buffered']
    #allocation17 [shape = 'u8[1536]{0}', space=vmem, size = 0x800, scoped, tag = 'input window, operand 17, single buffered']
    #allocation18 [shape = 's32[1]{0}', space=sflag, size = 0x4, scoped, tag = 'scoped memory for tpu_custom_call.1']
    #allocation19 [shape = 'u8[32768]{0}', space=vmem, size = 0x8000, scoped, tag = 'output window, operand 0']
    %24 = vsyncpa [#allocation3], 0
    %25 = vsyncpa [#allocation6], 0
    %26 = vsyncpa [#allocation9], 0
    %27 = vsyncpa [#allocation12], 0
    %28 = vsyncpa [#allocation15], 0
    %29 = vsyncpa [#allocation18], 0
    %30 = vsyncpa [#allocation4], 0
    %s31 = scalar_lea.sflag [#allocation4], 1
    %32 = vsyncpa %s31, 0
    loop: start=0, step=1, limit=4
    $region2: #{tpu_custom_call.1} parent=1 // loop_pre_header
      _
    $region3: #{tpu_custom_call.1} parent=1 // loop_header
      %s34 = sphi 0, %s38
      %p35 = scmp.ge.s32.totalorder %s34, 4
      %s44 = sphi 0, %s46
      %s47 = sphi 0, %s44
      %s48 = sphi 0, %s47
      %s64 = sphi 0, %s48
      %s70 = sphi 0, %s72
      %s73 = sphi 0, %s70
      %s74 = sphi 0, %s73
      %s90 = sphi 0, %s74
      %s96 = sphi 0, %s98
      %s99 = sphi 0, %s96
      %s100 = sphi 0, %s99
      %s116 = sphi 0, %s100
      %s120 = sphi 0, %s120
      %s122 = sphi 0, %s120
      %s123 = sphi 0, %s122
      %s137 = sphi 0, %s123
      %s141 = sphi 0, %s141
      %s143 = sphi 0, %s141
      %s144 = sphi 0, %s143
      %s158 = sphi 0, %s144
      %s162 = sphi 0, %s162
      %s164 = sphi 0, %s162
      %s165 = sphi 0, %s164
      %s179 = sphi 0, %s165
      %s183 = sphi 0, %s183
      %s185 = sphi 0, %s183
      %s186 = sphi 0, %s185
      %s200 = sphi 0, %s186
      %s204 = sphi 0, %s204
      %s206 = sphi 0, %s204
      %s207 = sphi 0, %s206
      %s221 = sphi 0, %s207
      %s225 = sphi 0, %s225
      %s227 = sphi 0, %s225
      %s228 = sphi 0, %s227
      %s242 = sphi 0, %s228
      %s246 = sphi 0, %s246
      %s248 = sphi 0, %s246
      %s249 = sphi 0, %s248
      %s263 = sphi 0, %s249
      %s267 = sphi 0, %s267
      %s269 = sphi 0, %s267
      %s270 = sphi 0, %s269
      %s284 = sphi 0, %s270
      %s288 = sphi 0, %s288
      %s290 = sphi 0, %s288
      %s291 = sphi 0, %s290
      %s305 = sphi 0, %s291
      %s309 = sphi 0, %s309
      %s311 = sphi 0, %s309
      %s312 = sphi 0, %s311
      %s326 = sphi 0, %s312
      %s330 = sphi 0, %s330
      %s332 = sphi 0, %s330
      %s333 = sphi 0, %s332
      %s347 = sphi 0, %s333
      %s351 = sphi 0, %s351
      %s353 = sphi 0, %s351
      %s354 = sphi 0, %s353
      %s368 = sphi 0, %s354
      %s372 = sphi 0, %s372
      %s374 = sphi 0, %s372
      %s375 = sphi 0, %s374
      %s389 = sphi 0, %s375
      %s393 = sphi 0, %s393
      %s395 = sphi 0, %s393
      %s396 = sphi 0, %s395
      %s410 = sphi 0, %s396
      %s414 = sphi 0, %s414
      %s416 = sphi 0, %s414
      %s417 = sphi 0, %s416
      %s431 = sphi 0, %s417
      %s435 = sphi 0, %s435
      %s437 = sphi 0, %s435
      %s438 = sphi 0, %s437
      %s452 = sphi 0, %s438
      %s458 = sphi 0, %s460
      %s461 = sphi 0, %s458
      %s462 = sphi 0, %s461
      %s478 = sphi 0, %s462
    $region4: #{tpu_custom_call.1} parent=1 // loop_header_branch
      %37 = sbr.rel (%p35) target = $region8
    $region5: #{tpu_custom_call.1} parent=1 // loop_body
      %s39 = ssub.s32 %s34, 1
      %s40 = ssub.s32 %s34, 2
      %s41 = sadd.s32 %s34, 1
      %s42 = ssub.s32 %s34, %s41
      %p43 = scmp.eq.s32.totalorder %s42, 0
      %s45 = sadd.s32 %s44, 1
      %s46 = scalar_select %p43, %s44, %s45
      %p49 = pneg %p43
      %p50 = scmp.eq.s32.totalorder %s34, 1
      %p51 = por %p49, %p50
      %p52 = scmp.ne.s32.totalorder %s44, %s47
      %p53 = scmp.eq.s32.totalorder %s34, 0
      %p54 = por %p52, %p53
      %p55 = scmp.ne.s32.totalorder %s44, %s47
      %p56 = scmp.eq.s32.totalorder %s39, 1
      %p57 = por %p55, %p56
      %p58 = scmp.ne.s32.totalorder %s47, %s48
      %p59 = scmp.eq.s32.totalorder %s39, 0
      %p60 = por %p58, %p59
      %p61 = scmp.ne.s32.totalorder %s47, %s48
      %p62 = scmp.eq.s32.totalorder %s40, 1
      %p63 = por %p61, %p62
      %p65 = scmp.ne.s32.totalorder %s48, %s64
      %p66 = scmp.eq.s32.totalorder %s40, 0
      %p67 = por %p65, %p66
      %s68 = ssub.s32 %s34, %s41
      %p69 = scmp.eq.s32.totalorder %s68, 0
      %s71 = sadd.s32 %s70, 1
      %s72 = scalar_select %p69, %s70, %s71
      %p75 = pneg %p69
      %p76 = scmp.eq.s32.totalorder %s34, 1
      %p77 = por %p75, %p76
      %p78 = scmp.ne.s32.totalorder %s70, %s73
      %p79 = scmp.eq.s32.totalorder %s34, 0
      %p80 = por %p78, %p79
      %p81 = scmp.ne.s32.totalorder %s70, %s73
      %p82 = scmp.eq.s32.totalorder %s39, 1
      %p83 = por %p81, %p82
      %p84 = scmp.ne.s32.totalorder %s73, %s74
      %p85 = scmp.eq.s32.totalorder %s39, 0
      %p86 = por %p84, %p85
      %p87 = scmp.ne.s32.totalorder %s73, %s74
      %p88 = scmp.eq.s32.totalorder %s40, 1
      %p89 = por %p87, %p88
      %p91 = scmp.ne.s32.totalorder %s74, %s90
      %p92 = scmp.eq.s32.totalorder %s40, 0
      %p93 = por %p91, %p92
      %s94 = ssub.s32 %s34, %s41
      %p95 = scmp.eq.s32.totalorder %s94, 0
      %s97 = sadd.s32 %s96, 1
      %s98 = scalar_select %p95, %s96, %s97
      %p101 = pneg %p95
      %p102 = scmp.eq.s32.totalorder %s34, 1
      %p103 = por %p101, %p102
      %p104 = scmp.ne.s32.totalorder %s96, %s99
      %p105 = scmp.eq.s32.totalorder %s34, 0
      %p106 = por %p104, %p105
      %p107 = scmp.ne.s32.totalorder %s96, %s99
      %p108 = scmp.eq.s32.totalorder %s39, 1
      %p109 = por %p107, %p108
      %p110 = scmp.ne.s32.totalorder %s99, %s100
      %p111 = scmp.eq.s32.totalorder %s39, 0
      %p112 = por %p110, %p111
      %p113 = scmp.ne.s32.totalorder %s99, %s100
      %p114 = scmp.eq.s32.totalorder %s40, 1
      %p115 = por %p113, %p114
      %p117 = scmp.ne.s32.totalorder %s100, %s116
      %p118 = scmp.eq.s32.totalorder %s40, 0
      %p119 = por %p117, %p118
      %s121 = sadd.s32 %s120, 1
      %p124 = scmp.eq.s32.totalorder %s34, 1
      %p125 = scmp.ne.s32.totalorder %s120, %s122
      %p126 = scmp.eq.s32.totalorder %s34, 0
      %p127 = por %p125, %p126
      %p128 = scmp.ne.s32.totalorder %s120, %s122
      %p129 = scmp.eq.s32.totalorder %s39, 1
      %p130 = por %p128, %p129
      %p131 = scmp.ne.s32.totalorder %s122, %s123
      %p132 = scmp.eq.s32.totalorder %s39, 0
      %p133 = por %p131, %p132
      %p134 = scmp.ne.s32.totalorder %s122, %s123
      %p135 = scmp.eq.s32.totalorder %s40, 1
      %p136 = por %p134, %p135
      %p138 = scmp.ne.s32.totalorder %s123, %s137
      %p139 = scmp.eq.s32.totalorder %s40, 0
      %p140 = por %p138, %p139
      %s142 = sadd.s32 %s141, 1
      %p145 = scmp.eq.s32.totalorder %s34, 1
      %p146 = scmp.ne.s32.totalorder %s141, %s143
      %p147 = scmp.eq.s32.totalorder %s34, 0
      %p148 = por %p146, %p147
      %p149 = scmp.ne.s32.totalorder %s141, %s143
      %p150 = scmp.eq.s32.totalorder %s39, 1
      %p151 = por %p149, %p150
      %p152 = scmp.ne.s32.totalorder %s143, %s144
      %p153 = scmp.eq.s32.totalorder %s39, 0
      %p154 = por %p152, %p153
      %p155 = scmp.ne.s32.totalorder %s143, %s144
      %p156 = scmp.eq.s32.totalorder %s40, 1
      %p157 = por %p155, %p156
      %p159 = scmp.ne.s32.totalorder %s144, %s158
      %p160 = scmp.eq.s32.totalorder %s40, 0
      %p161 = por %p159, %p160
      %s163 = sadd.s32 %s162, 1
      %p166 = scmp.eq.s32.totalorder %s34, 1
      %p167 = scmp.ne.s32.totalorder %s162, %s164
      %p168 = scmp.eq.s32.totalorder %s34, 0
      %p169 = por %p167, %p168
      %p170 = scmp.ne.s32.totalorder %s162, %s164
      %p171 = scmp.eq.s32.totalorder %s39, 1
      %p172 = por %p170, %p171
      %p173 = scmp.ne.s32.totalorder %s164, %s165
      %p174 = scmp.eq.s32.totalorder %s39, 0
      %p175 = por %p173, %p174
      %p176 = scmp.ne.s32.totalorder %s164, %s165
      %p177 = scmp.eq.s32.totalorder %s40, 1
      %p178 = por %p176, %p177
      %p180 = scmp.ne.s32.totalorder %s165, %s179
      %p181 = scmp.eq.s32.totalorder %s40, 0
      %p182 = por %p180, %p181
      %s184 = sadd.s32 %s183, 1
      %p187 = scmp.eq.s32.totalorder %s34, 1
      %p188 = scmp.ne.s32.totalorder %s183, %s185
      %p189 = scmp.eq.s32.totalorder %s34, 0
      %p190 = por %p188, %p189
      %p191 = scmp.ne.s32.totalorder %s183, %s185
      %p192 = scmp.eq.s32.totalorder %s39, 1
      %p193 = por %p191, %p192
      %p194 = scmp.ne.s32.totalorder %s185, %s186
      %p195 = scmp.eq.s32.totalorder %s39, 0
      %p196 = por %p194, %p195
      %p197 = scmp.ne.s32.totalorder %s185, %s186
      %p198 = scmp.eq.s32.totalorder %s40, 1
      %p199 = por %p197, %p198
      %p201 = scmp.ne.s32.totalorder %s186, %s200
      %p202 = scmp.eq.s32.totalorder %s40, 0
      %p203 = por %p201, %p202
      %s205 = sadd.s32 %s204, 1
      %p208 = scmp.eq.s32.totalorder %s34, 1
      %p209 = scmp.ne.s32.totalorder %s204, %s206
      %p210 = scmp.eq.s32.totalorder %s34, 0
      %p211 = por %p209, %p210
      %p212 = scmp.ne.s32.totalorder %s204, %s206
      %p213 = scmp.eq.s32.totalorder %s39, 1
      %p214 = por %p212, %p213
      %p215 = scmp.ne.s32.totalorder %s206, %s207
      %p216 = scmp.eq.s32.totalorder %s39, 0
      %p217 = por %p215, %p216
      %p218 = scmp.ne.s32.totalorder %s206, %s207
      %p219 = scmp.eq.s32.totalorder %s40, 1
      %p220 = por %p218, %p219
      %p222 = scmp.ne.s32.totalorder %s207, %s221
      %p223 = scmp.eq.s32.totalorder %s40, 0
      %p224 = por %p222, %p223
      %s226 = sadd.s32 %s225, 1
      %p229 = scmp.eq.s32.totalorder %s34, 1
      %p230 = scmp.ne.s32.totalorder %s225, %s227
      %p231 = scmp.eq.s32.totalorder %s34, 0
      %p232 = por %p230, %p231
      %p233 = scmp.ne.s32.totalorder %s225, %s227
      %p234 = scmp.eq.s32.totalorder %s39, 1
      %p235 = por %p233, %p234
      %p236 = scmp.ne.s32.totalorder %s227, %s228
      %p237 = scmp.eq.s32.totalorder %s39, 0
      %p238 = por %p236, %p237
      %p239 = scmp.ne.s32.totalorder %s227, %s228
      %p240 = scmp.eq.s32.totalorder %s40, 1
      %p241 = por %p239, %p240
      %p243 = scmp.ne.s32.totalorder %s228, %s242
      %p244 = scmp.eq.s32.totalorder %s40, 0
      %p245 = por %p243, %p244
      %s247 = sadd.s32 %s246, 1
      %p250 = scmp.eq.s32.totalorder %s34, 1
      %p251 = scmp.ne.s32.totalorder %s246, %s248
      %p252 = scmp.eq.s32.totalorder %s34, 0
      %p253 = por %p251, %p252
      %p254 = scmp.ne.s32.totalorder %s246, %s248
      %p255 = scmp.eq.s32.totalorder %s39, 1
      %p256 = por %p254, %p255
      %p257 = scmp.ne.s32.totalorder %s248, %s249
      %p258 = scmp.eq.s32.totalorder %s39, 0
      %p259 = por %p257, %p258
      %p260 = scmp.ne.s32.totalorder %s248, %s249
      %p261 = scmp.eq.s32.totalorder %s40, 1
      %p262 = por %p260, %p261
      %p264 = scmp.ne.s32.totalorder %s249, %s263
      %p265 = scmp.eq.s32.totalorder %s40, 0
      %p266 = por %p264, %p265
      %s268 = sadd.s32 %s267, 1
      %p271 = scmp.eq.s32.totalorder %s34, 1
      %p272 = scmp.ne.s32.totalorder %s267, %s269
      %p273 = scmp.eq.s32.totalorder %s34, 0
      %p274 = por %p272, %p273
      %p275 = scmp.ne.s32.totalorder %s267, %s269
      %p276 = scmp.eq.s32.totalorder %s39, 1
      %p277 = por %p275, %p276
      %p278 = scmp.ne.s32.totalorder %s269, %s270
      %p279 = scmp.eq.s32.totalorder %s39, 0
      %p280 = por %p278, %p279
      %p281 = scmp.ne.s32.totalorder %s269, %s270
      %p282 = scmp.eq.s32.totalorder %s40, 1
      %p283 = por %p281, %p282
      %p285 = scmp.ne.s32.totalorder %s270, %s284
      %p286 = scmp.eq.s32.totalorder %s40, 0
      %p287 = por %p285, %p286
      %s289 = sadd.s32 %s288, 1
      %p292 = scmp.eq.s32.totalorder %s34, 1
      %p293 = scmp.ne.s32.totalorder %s288, %s290
      %p294 = scmp.eq.s32.totalorder %s34, 0
      %p295 = por %p293, %p294
      %p296 = scmp.ne.s32.totalorder %s288, %s290
      %p297 = scmp.eq.s32.totalorder %s39, 1
      %p298 = por %p296, %p297
      %p299 = scmp.ne.s32.totalorder %s290, %s291
      %p300 = scmp.eq.s32.totalorder %s39, 0
      %p301 = por %p299, %p300
      %p302 = scmp.ne.s32.totalorder %s290, %s291
      %p303 = scmp.eq.s32.totalorder %s40, 1
      %p304 = por %p302, %p303
      %p306 = scmp.ne.s32.totalorder %s291, %s305
      %p307 = scmp.eq.s32.totalorder %s40, 0
      %p308 = por %p306, %p307
      %s310 = sadd.s32 %s309, 1
      %p313 = scmp.eq.s32.totalorder %s34, 1
      %p314 = scmp.ne.s32.totalorder %s309, %s311
      %p315 = scmp.eq.s32.totalorder %s34, 0
      %p316 = por %p314, %p315
      %p317 = scmp.ne.s32.totalorder %s309, %s311
      %p318 = scmp.eq.s32.totalorder %s39, 1
      %p319 = por %p317, %p318
      %p320 = scmp.ne.s32.totalorder %s311, %s312
      %p321 = scmp.eq.s32.totalorder %s39, 0
      %p322 = por %p320, %p321
      %p323 = scmp.ne.s32.totalorder %s311, %s312
      %p324 = scmp.eq.s32.totalorder %s40, 1
      %p325 = por %p323, %p324
      %p327 = scmp.ne.s32.totalorder %s312, %s326
      %p328 = scmp.eq.s32.totalorder %s40, 0
      %p329 = por %p327, %p328
      %s331 = sadd.s32 %s330, 1
      %p334 = scmp.eq.s32.totalorder %s34, 1
      %p335 = scmp.ne.s32.totalorder %s330, %s332
      %p336 = scmp.eq.s32.totalorder %s34, 0
      %p337 = por %p335, %p336
      %p338 = scmp.ne.s32.totalorder %s330, %s332
      %p339 = scmp.eq.s32.totalorder %s39, 1
      %p340 = por %p338, %p339
      %p341 = scmp.ne.s32.totalorder %s332, %s333
      %p342 = scmp.eq.s32.totalorder %s39, 0
      %p343 = por %p341, %p342
      %p344 = scmp.ne.s32.totalorder %s332, %s333
      %p345 = scmp.eq.s32.totalorder %s40, 1
      %p346 = por %p344, %p345
      %p348 = scmp.ne.s32.totalorder %s333, %s347
      %p349 = scmp.eq.s32.totalorder %s40, 0
      %p350 = por %p348, %p349
      %s352 = sadd.s32 %s351, 1
      %p355 = scmp.eq.s32.totalorder %s34, 1
      %p356 = scmp.ne.s32.totalorder %s351, %s353
      %p357 = scmp.eq.s32.totalorder %s34, 0
      %p358 = por %p356, %p357
      %p359 = scmp.ne.s32.totalorder %s351, %s353
      %p360 = scmp.eq.s32.totalorder %s39, 1
      %p361 = por %p359, %p360
      %p362 = scmp.ne.s32.totalorder %s353, %s354
      %p363 = scmp.eq.s32.totalorder %s39, 0
      %p364 = por %p362, %p363
      %p365 = scmp.ne.s32.totalorder %s353, %s354
      %p366 = scmp.eq.s32.totalorder %s40, 1
      %p367 = por %p365, %p366
      %p369 = scmp.ne.s32.totalorder %s354, %s368
      %p370 = scmp.eq.s32.totalorder %s40, 0
      %p371 = por %p369, %p370
      %s373 = sadd.s32 %s372, 1
      %p376 = scmp.eq.s32.totalorder %s34, 1
      %p377 = scmp.ne.s32.totalorder %s372, %s374
      %p378 = scmp.eq.s32.totalorder %s34, 0
      %p379 = por %p377, %p378
      %p380 = scmp.ne.s32.totalorder %s372, %s374
      %p381 = scmp.eq.s32.totalorder %s39, 1
      %p382 = por %p380, %p381
      %p383 = scmp.ne.s32.totalorder %s374, %s375
      %p384 = scmp.eq.s32.totalorder %s39, 0
      %p385 = por %p383, %p384
      %p386 = scmp.ne.s32.totalorder %s374, %s375
      %p387 = scmp.eq.s32.totalorder %s40, 1
      %p388 = por %p386, %p387
      %p390 = scmp.ne.s32.totalorder %s375, %s389
      %p391 = scmp.eq.s32.totalorder %s40, 0
      %p392 = por %p390, %p391
      %s394 = sadd.s32 %s393, 1
      %p397 = scmp.eq.s32.totalorder %s34, 1
      %p398 = scmp.ne.s32.totalorder %s393, %s395
      %p399 = scmp.eq.s32.totalorder %s34, 0
      %p400 = por %p398, %p399
      %p401 = scmp.ne.s32.totalorder %s393, %s395
      %p402 = scmp.eq.s32.totalorder %s39, 1
      %p403 = por %p401, %p402
      %p404 = scmp.ne.s32.totalorder %s395, %s396
      %p405 = scmp.eq.s32.totalorder %s39, 0
      %p406 = por %p404, %p405
      %p407 = scmp.ne.s32.totalorder %s395, %s396
      %p408 = scmp.eq.s32.totalorder %s40, 1
      %p409 = por %p407, %p408
      %p411 = scmp.ne.s32.totalorder %s396, %s410
      %p412 = scmp.eq.s32.totalorder %s40, 0
      %p413 = por %p411, %p412
      %s415 = sadd.s32 %s414, 1
      %p418 = scmp.eq.s32.totalorder %s34, 1
      %p419 = scmp.ne.s32.totalorder %s414, %s416
      %p420 = scmp.eq.s32.totalorder %s34, 0
      %p421 = por %p419, %p420
      %p422 = scmp.ne.s32.totalorder %s414, %s416
      %p423 = scmp.eq.s32.totalorder %s39, 1
      %p424 = por %p422, %p423
      %p425 = scmp.ne.s32.totalorder %s416, %s417
      %p426 = scmp.eq.s32.totalorder %s39, 0
      %p427 = por %p425, %p426
      %p428 = scmp.ne.s32.totalorder %s416, %s417
      %p429 = scmp.eq.s32.totalorder %s40, 1
      %p430 = por %p428, %p429
      %p432 = scmp.ne.s32.totalorder %s417, %s431
      %p433 = scmp.eq.s32.totalorder %s40, 0
      %p434 = por %p432, %p433
      %s436 = sadd.s32 %s435, 1
      %p439 = scmp.eq.s32.totalorder %s34, 1
      %p440 = scmp.ne.s32.totalorder %s435, %s437
      %p441 = scmp.eq.s32.totalorder %s34, 0
      %p442 = por %p440, %p441
      %p443 = scmp.ne.s32.totalorder %s435, %s437
      %p444 = scmp.eq.s32.totalorder %s39, 1
      %p445 = por %p443, %p444
      %p446 = scmp.ne.s32.totalorder %s437, %s438
      %p447 = scmp.eq.s32.totalorder %s39, 0
      %p448 = por %p446, %p447
      %p449 = scmp.ne.s32.totalorder %s437, %s438
      %p450 = scmp.eq.s32.totalorder %s40, 1
      %p451 = por %p449, %p450
      %p453 = scmp.ne.s32.totalorder %s438, %s452
      %p454 = scmp.eq.s32.totalorder %s40, 0
      %p455 = por %p453, %p454
      %s456 = ssub.s32 %s34, %s41
      %p457 = scmp.eq.s32.totalorder %s456, 0
      %s459 = sadd.s32 %s458, 1
      %s460 = scalar_select %p457, %s458, %s459
      %p463 = pneg %p457
      %p464 = scmp.eq.s32.totalorder %s34, 1
      %p465 = por %p463, %p464
      %p466 = scmp.ne.s32.totalorder %s458, %s461
      %p467 = scmp.eq.s32.totalorder %s34, 0
      %p468 = por %p466, %p467
      %p469 = scmp.ne.s32.totalorder %s458, %s461
      %p470 = scmp.eq.s32.totalorder %s39, 1
      %p471 = por %p469, %p470
      %p472 = scmp.ne.s32.totalorder %s461, %s462
      %p473 = scmp.eq.s32.totalorder %s39, 0
      %p474 = por %p472, %p473
      %p475 = scmp.ne.s32.totalorder %s461, %s462
      %p476 = scmp.eq.s32.totalorder %s40, 1
      %p477 = por %p475, %p476
      %p479 = scmp.ne.s32.totalorder %s462, %s478
      %p480 = scmp.eq.s32.totalorder %s40, 0
      %p481 = por %p479, %p480
      %p482 = scmp.le.s32.totalorder 1, %s34
      %p483 = scmp.lt.s32.totalorder %s34, 3
      %p484 = pnand %p482, %p483
      %p485 = pneg %p484
      // Predicated region
      $region9: #{tpu_custom_call.1} parent=5 // pred_check
        _
      $region10: #{tpu_custom_call.1} parent=5 // pred_check_branch
        %487 = sbr.rel (%p484) target = $region12
      $region11: #{tpu_custom_call.1} parent=5 // pred_region
        %s488 = ssub.s32 %s34, 1
        // Predicated region
        $region13: #{tpu_custom_call.1} parent=11 // pred_check
          %p489 = pneg %p133
        $region14: #{tpu_custom_call.1} parent=11 // pred_check_branch
          %491 = sbr.rel (%p489) target = $region16
        $region15: #{tpu_custom_call.1} parent=11 // pred_region
          _
        $region16: #{tpu_custom_call.1} parent=11 // pred_fallthru
          _
        // Predicated region
        $region17: #{tpu_custom_call.1} parent=11 // pred_check
          %p492 = pneg %p154
        $region18: #{tpu_custom_call.1} parent=11 // pred_check_branch
          %494 = sbr.rel (%p492) target = $region20
        $region19: #{tpu_custom_call.1} parent=11 // pred_region
          _
        $region20: #{tpu_custom_call.1} parent=11 // pred_fallthru
          _
        // Predicated region
        $region21: #{tpu_custom_call.1} parent=11 // pred_check
          %p495 = pneg %p175
        $region22: #{tpu_custom_call.1} parent=11 // pred_check_branch
          %497 = sbr.rel (%p495) target = $region24
        $region23: #{tpu_custom_call.1} parent=11 // pred_region
          %499 = vsyncadd [#allocation3], 0
          %s500 = sshll.u32 %s5, 4
          %s501 = int_to_ptr.hbm [resolvable:$true] %s500
          %s502 = sshll.u32 [#allocation2], 4
          %s503 = int_to_ptr.vmem [resolvable:$true] %s502
          %508 = dma.hbm_to_vmem [thread:$0]  %s501, 768, %s503, [#allocation3], 64, 64, 4
        $region24: #{tpu_custom_call.1} parent=11 // pred_fallthru
          _
        // Predicated region
        $region25: #{tpu_custom_call.1} parent=11 // pred_check
          %p509 = pneg %p196
        $region26: #{tpu_custom_call.1} parent=11 // pred_check_branch
          %511 = sbr.rel (%p509) target = $region28
        $region27: #{tpu_custom_call.1} parent=11 // pred_region
          _
        $region28: #{tpu_custom_call.1} parent=11 // pred_fallthru
          _
        // Predicated region
        $region29: #{tpu_custom_call.1} parent=11 // pred_check
          %p512 = pneg %p217
        $region30: #{tpu_custom_call.1} parent=11 // pred_check_branch
          %514 = sbr.rel (%p512) target = $region32
        $region31: #{tpu_custom_call.1} parent=11 // pred_region
          %516 = vsyncadd [#allocation6], 0
          %s517 = sshll.u32 %s7, 4
          %s518 = int_to_ptr.hbm [resolvable:$true] %s517
          %s519 = sshll.u32 [#allocation5], 4
          %s520 = int_to_ptr.vmem [resolvable:$true] %s519
          %525 = dma.hbm_to_vmem [thread:$0]  %s518, 768, %s520, [#allocation6], 64, 64, 4
        $region32: #{tpu_custom_call.1} parent=11 // pred_fallthru
          _
        // Predicated region
        $region33: #{tpu_custom_call.1} parent=11 // pred_check
          %p526 = pneg %p238
        $region34: #{tpu_custom_call.1} parent=11 // pred_check_branch
          %528 = sbr.rel (%p526) target = $region36
        $region35: #{tpu_custom_call.1} parent=11 // pred_region
          _
        $region36: #{tpu_custom_call.1} parent=11 // pred_fallthru
          _
        // Predicated region
        $region37: #{tpu_custom_call.1} parent=11 // pred_check
          %p529 = pneg %p259
        $region38: #{tpu_custom_call.1} parent=11 // pred_check_branch
          %531 = sbr.rel (%p529) target = $region40
        $region39: #{tpu_custom_call.1} parent=11 // pred_region
          %533 = vsyncadd [#allocation6], 0
          %s534 = sshll.u32 %s9, 4
          %s535 = int_to_ptr.hbm [resolvable:$true] %s534
          %s536 = sshll.u32 [#allocation7], 4
          %s537 = int_to_ptr.vmem [resolvable:$true] %s536
          %542 = dma.hbm_to_vmem [thread:$0]  %s535, 768, %s537, [#allocation6], 64, 64, 4
        $region40: #{tpu_custom_call.1} parent=11 // pred_fallthru
          _
        // Predicated region
        $region41: #{tpu_custom_call.1} parent=11 // pred_check
          %p543 = pneg %p280
        $region42: #{tpu_custom_call.1} parent=11 // pred_check_branch
          %545 = sbr.rel (%p543) target = $region44
        $region43: #{tpu_custom_call.1} parent=11 // pred_region
          %547 = vsyncadd [#allocation9], 0
          %s548 = sshll.u32 %s10, 4
          %s549 = int_to_ptr.hbm [resolvable:$true] %s548
          %s550 = sshll.u32 [#allocation8], 4
          %s551 = int_to_ptr.vmem [resolvable:$true] %s550
          %556 = dma.hbm_to_vmem [thread:$0]  %s549, 48, %s551, [#allocation9], 16, 16, 1
        $region44: #{tpu_custom_call.1} parent=11 // pred_fallthru
          _
        // Predicated region
        $region45: #{tpu_custom_call.1} parent=11 // pred_check
          %p557 = pneg %p301
        $region46: #{tpu_custom_call.1} parent=11 // pred_check_branch
          %559 = sbr.rel (%p557) target = $region48
        $region47: #{tpu_custom_call.1} parent=11 // pred_region
          %561 = vsyncadd [#allocation9], 0
          %s562 = sshll.u32 %s11, 4
          %s563 = int_to_ptr.hbm [resolvable:$true] %s562
          %s564 = sshll.u32 [#allocation10], 4
          %s565 = int_to_ptr.vmem [resolvable:$true] %s564
          %570 = dma.hbm_to_vmem [thread:$0]  %s563, 48, %s565, [#allocation9], 16, 16, 1
        $region48: #{tpu_custom_call.1} parent=11 // pred_fallthru
          _
        // Predicated region
        $region49: #{tpu_custom_call.1} parent=11 // pred_check
          %p571 = pneg %p322
        $region50: #{tpu_custom_call.1} parent=11 // pred_check_branch
          %573 = sbr.rel (%p571) target = $region52
        $region51: #{tpu_custom_call.1} parent=11 // pred_region
          %575 = vsyncadd [#allocation12], 0
          %s576 = sshll.u32 %s12, 4
          %s577 = int_to_ptr.hbm [resolvable:$true] %s576
          %s578 = sshll.u32 [#allocation11], 4
          %s579 = int_to_ptr.vmem [resolvable:$true] %s578
          %584 = dma.hbm_to_vmem [thread:$0]  %s577, 48, %s579, [#allocation12], 16, 16, 1
        $region52: #{tpu_custom_call.1} parent=11 // pred_fallthru
          _
        // Predicated region
        $region53: #{tpu_custom_call.1} parent=11 // pred_check
          %p585 = pneg %p343
        $region54: #{tpu_custom_call.1} parent=11 // pred_check_branch
          %587 = sbr.rel (%p585) target = $region56
        $region55: #{tpu_custom_call.1} parent=11 // pred_region
          %589 = vsyncadd [#allocation12], 0
          %s590 = sshll.u32 %s13, 4
          %s591 = int_to_ptr.hbm [resolvable:$true] %s590
          %s592 = sshll.u32 [#allocation13], 4
          %s593 = int_to_ptr.vmem [resolvable:$true] %s592
          %598 = dma.hbm_to_vmem [thread:$0]  %s591, 768, %s593, [#allocation12], 64, 64, 4
        $region56: #{tpu_custom_call.1} parent=11 // pred_fallthru
          _
        // Predicated region
        $region57: #{tpu_custom_call.1} parent=11 // pred_check
          %p599 = pneg %p364
        $region58: #{tpu_custom_call.1} parent=11 // pred_check_branch
          %601 = sbr.rel (%p599) target = $region60
        $region59: #{tpu_custom_call.1} parent=11 // pred_region
          %603 = vsyncadd [#allocation15], 0
          %s604 = sshll.u32 %s14, 4
          %s605 = int_to_ptr.hbm [resolvable:$true] %s604
          %s606 = sshll.u32 [#allocation14], 4
          %s607 = int_to_ptr.vmem [resolvable:$true] %s606
          %612 = dma.hbm_to_vmem [thread:$0]  %s605, 48, %s607, [#allocation15], 16, 16, 1
        $region60: #{tpu_custom_call.1} parent=11 // pred_fallthru
          _
        // Predicated region
        $region61: #{tpu_custom_call.1} parent=11 // pred_check
          %p613 = pneg %p385
        $region62: #{tpu_custom_call.1} parent=11 // pred_check_branch
          %615 = sbr.rel (%p613) target = $region64
        $region63: #{tpu_custom_call.1} parent=11 // pred_region
          _
        $region64: #{tpu_custom_call.1} parent=11 // pred_fallthru
          _
        // Predicated region
        $region65: #{tpu_custom_call.1} parent=11 // pred_check
          %p616 = pneg %p406
        $region66: #{tpu_custom_call.1} parent=11 // pred_check_branch
          %618 = sbr.rel (%p616) target = $region68
        $region67: #{tpu_custom_call.1} parent=11 // pred_region
          %620 = vsyncadd [#allocation15], 0
          %s621 = sshll.u32 %s16, 4
          %s622 = int_to_ptr.hbm [resolvable:$true] %s621
          %s623 = sshll.u32 [#allocation16], 4
          %s624 = int_to_ptr.vmem [resolvable:$true] %s623
          %629 = dma.hbm_to_vmem [thread:$0]  %s622, 48, %s624, [#allocation15], 16, 16, 1
        $region68: #{tpu_custom_call.1} parent=11 // pred_fallthru
          _
        // Predicated region
        $region69: #{tpu_custom_call.1} parent=11 // pred_check
          %p630 = pneg %p427
        $region70: #{tpu_custom_call.1} parent=11 // pred_check_branch
          %632 = sbr.rel (%p630) target = $region72
        $region71: #{tpu_custom_call.1} parent=11 // pred_region
          %634 = vsyncadd [#allocation18], 0
          %s635 = sshll.u32 %s17, 4
          %s636 = int_to_ptr.hbm [resolvable:$true] %s635
          %s637 = sshll.u32 [#allocation17], 4
          %s638 = int_to_ptr.vmem [resolvable:$true] %s637
          %643 = dma.hbm_to_vmem [thread:$0]  %s636, 48, %s638, [#allocation18], 16, 16, 1
        $region72: #{tpu_custom_call.1} parent=11 // pred_fallthru
          _
        // Predicated region
        $region73: #{tpu_custom_call.1} parent=11 // pred_check
          %p644 = pneg %p448
        $region74: #{tpu_custom_call.1} parent=11 // pred_check_branch
          %646 = sbr.rel (%p644) target = $region76
        $region75: #{tpu_custom_call.1} parent=11 // pred_region
          _
        $region76: #{tpu_custom_call.1} parent=11 // pred_fallthru
          _
      $region12: #{tpu_custom_call.1} parent=5 // pred_fallthru
        _
      %p647 = scmp.lt.s32.totalorder %s34, 2
      // Predicated region
      $region77: #{tpu_custom_call.1} parent=5 // pred_check
        %p648 = pneg %p647
      $region78: #{tpu_custom_call.1} parent=5 // pred_check_branch
        %650 = sbr.rel (%p648) target = $region80
      $region79: #{tpu_custom_call.1} parent=5 // pred_region
        // Predicated region
        $region81: #{tpu_custom_call.1} parent=79 // pred_check
          %p651 = pneg %p54
        $region82: #{tpu_custom_call.1} parent=79 // pred_check_branch
          %653 = sbr.rel (%p651) target = $region84
        $region83: #{tpu_custom_call.1} parent=79 // pred_region
          %s654 = smul.u32 2, %s34
          %p655 = scmp.lt.s32.totalorder %s654, 3
          %s656 = scalar_select %p655, %s654, 3
          %s657 = smul.addr %s656, 2
          %s658 = smul.addr %s657, 8
          %s659 = scalar_lea.vmem %s0, %s658
          %s660 = smul.u32 2, %s34
        $region84: #{tpu_custom_call.1} parent=79 // pred_fallthru
          _
        // Predicated region
        $region85: #{tpu_custom_call.1} parent=79 // pred_check
          %p661 = pneg %p80
        $region86: #{tpu_custom_call.1} parent=79 // pred_check_branch
          %663 = sbr.rel (%p661) target = $region88
        $region87: #{tpu_custom_call.1} parent=79 // pred_region
          %s664 = smul.u32 2, %s34
          %p665 = scmp.lt.s32.totalorder %s664, 3
          %s666 = scalar_select %p665, %s664, 3
          %s667 = smul.addr %s666, 2
          %s668 = smul.addr %s667, 8
          %s669 = scalar_lea.vmem %s1, %s668
          %s670 = smul.u32 2, %s34
        $region88: #{tpu_custom_call.1} parent=79 // pred_fallthru
          _
        // Predicated region
        $region89: #{tpu_custom_call.1} parent=79 // pred_check
          %p671 = pneg %p106
        $region90: #{tpu_custom_call.1} parent=79 // pred_check_branch
          %673 = sbr.rel (%p671) target = $region92
        $region91: #{tpu_custom_call.1} parent=79 // pred_region
          %s674 = smul.u32 2, %s34
          %p675 = scmp.lt.s32.totalorder %s674, 3
          %s676 = scalar_select %p675, %s674, 3
          %s677 = smul.addr %s676, 2
          %s678 = smul.addr %s677, 8
          %s679 = scalar_lea.vmem %s2, %s678
          %s680 = smul.u32 2, %s34
        $region92: #{tpu_custom_call.1} parent=79 // pred_fallthru
          _
      $region80: #{tpu_custom_call.1} parent=5 // pred_fallthru
        _
      %p681 = scmp.le.s32.totalorder 1, %s34
      %p682 = scmp.lt.s32.totalorder %s34, 3
      %p683 = pnand %p681, %p682
      %p684 = pneg %p683
      // Predicated region
      $region93: #{tpu_custom_call.1} parent=5 // pred_check
        _
      $region94: #{tpu_custom_call.1} parent=5 // pred_check_branch
        %686 = sbr.rel (%p683) target = $region96
      $region95: #{tpu_custom_call.1} parent=5 // pred_region
        %s687 = ssub.s32 %s34, 1
        // Predicated region
        $region97: #{tpu_custom_call.1} parent=95 // pred_check
          %p688 = pneg %p175
        $region98: #{tpu_custom_call.1} parent=95 // pred_check_branch
          %690 = sbr.rel (%p688) target = $region100
        $region99: #{tpu_custom_call.1} parent=95 // pred_region
          %692 = dma.done [#allocation3], 768
        $region100: #{tpu_custom_call.1} parent=95 // pred_fallthru
          _
        // Predicated region
        $region101: #{tpu_custom_call.1} parent=95 // pred_check
          %p693 = pneg %p217
        $region102: #{tpu_custom_call.1} parent=95 // pred_check_branch
          %695 = sbr.rel (%p693) target = $region104
        $region103: #{tpu_custom_call.1} parent=95 // pred_region
          %697 = dma.done [#allocation6], 768
        $region104: #{tpu_custom_call.1} parent=95 // pred_fallthru
          _
        // Predicated region
        $region105: #{tpu_custom_call.1} parent=95 // pred_check
          %p698 = pneg %p259
        $region106: #{tpu_custom_call.1} parent=95 // pred_check_branch
          %700 = sbr.rel (%p698) target = $region108
        $region107: #{tpu_custom_call.1} parent=95 // pred_region
          %702 = dma.done [#allocation6], 768
        $region108: #{tpu_custom_call.1} parent=95 // pred_fallthru
          _
        // Predicated region
        $region109: #{tpu_custom_call.1} parent=95 // pred_check
          %p703 = pneg %p280
        $region110: #{tpu_custom_call.1} parent=95 // pred_check_branch
          %705 = sbr.rel (%p703) target = $region112
        $region111: #{tpu_custom_call.1} parent=95 // pred_region
          %707 = dma.done [#allocation9], 48
        $region112: #{tpu_custom_call.1} parent=95 // pred_fallthru
          _
        // Predicated region
        $region113: #{tpu_custom_call.1} parent=95 // pred_check
          %p708 = pneg %p301
        $region114: #{tpu_custom_call.1} parent=95 // pred_check_branch
          %710 = sbr.rel (%p708) target = $region116
        $region115: #{tpu_custom_call.1} parent=95 // pred_region
          %712 = dma.done [#allocation9], 48
        $region116: #{tpu_custom_call.1} parent=95 // pred_fallthru
          _
        // Predicated region
        $region117: #{tpu_custom_call.1} parent=95 // pred_check
          %p713 = pneg %p322
        $region118: #{tpu_custom_call.1} parent=95 // pred_check_branch
          %715 = sbr.rel (%p713) target = $region120
        $region119: #{tpu_custom_call.1} parent=95 // pred_region
          %717 = dma.done [#allocation12], 48
        $region120: #{tpu_custom_call.1} parent=95 // pred_fallthru
          _
        // Predicated region
        $region121: #{tpu_custom_call.1} parent=95 // pred_check
          %p718 = pneg %p343
        $region122: #{tpu_custom_call.1} parent=95 // pred_check_branch
          %720 = sbr.rel (%p718) target = $region124
        $region123: #{tpu_custom_call.1} parent=95 // pred_region
          %722 = dma.done [#allocation12], 768
        $region124: #{tpu_custom_call.1} parent=95 // pred_fallthru
          _
        // Predicated region
        $region125: #{tpu_custom_call.1} parent=95 // pred_check
          %p723 = pneg %p364
        $region126: #{tpu_custom_call.1} parent=95 // pred_check_branch
          %725 = sbr.rel (%p723) target = $region128
        $region127: #{tpu_custom_call.1} parent=95 // pred_region
          %727 = dma.done [#allocation15], 48
        $region128: #{tpu_custom_call.1} parent=95 // pred_fallthru
          _
        // Predicated region
        $region129: #{tpu_custom_call.1} parent=95 // pred_check
          %p728 = pneg %p406
        $region130: #{tpu_custom_call.1} parent=95 // pred_check_branch
          %730 = sbr.rel (%p728) target = $region132
        $region131: #{tpu_custom_call.1} parent=95 // pred_region
          %732 = dma.done [#allocation15], 48
        $region132: #{tpu_custom_call.1} parent=95 // pred_fallthru
          _
        // Predicated region
        $region133: #{tpu_custom_call.1} parent=95 // pred_check
          %p733 = pneg %p427
        $region134: #{tpu_custom_call.1} parent=95 // pred_check_branch
          %735 = sbr.rel (%p733) target = $region136
        $region135: #{tpu_custom_call.1} parent=95 // pred_region
          %737 = dma.done [#allocation18], 48
        $region136: #{tpu_custom_call.1} parent=95 // pred_fallthru
          _
        %s738 = smul.u32 2, %s39
        %p739 = scmp.lt.s32.totalorder %s738, 3
        %s740 = scalar_select %p739, %s738, 3
        %s741 = smul.addr %s740, 2
        %s742 = smul.addr %s741, 8
        %s743 = scalar_lea.vmem %s0, %s742
        %p744 = pneg %p60
        %p745 = pneg %p57
        %s746 = smul.u32 2, %s39
        %p747 = scmp.lt.s32.totalorder %s746, 3
        %s748 = scalar_select %p747, %s746, 3
        %s749 = smul.addr %s748, 2
        %s750 = smul.addr %s749, 8
        %s751 = scalar_lea.vmem %s1, %s750
        %p752 = pneg %p86
        %p753 = pneg %p83
        %s754 = smul.u32 2, %s39
        %p755 = scmp.lt.s32.totalorder %s754, 3
        %s756 = scalar_select %p755, %s754, 3
        %s757 = smul.addr %s756, 2
        %s758 = smul.addr %s757, 8
        %s759 = scalar_lea.vmem %s2, %s758
        %p760 = pneg %p112
        %p761 = pneg %p109
        %p762 = pneg %p133
        %p763 = pneg %p130
        %p764 = pneg %p154
        %p765 = pneg %p151
        %p766 = pneg %p175
        %p767 = pneg %p172
        %p768 = pneg %p196
        %p769 = pneg %p193
        %p770 = pneg %p217
        %p771 = pneg %p214
        %p772 = pneg %p238
        %p773 = pneg %p235
        %p774 = pneg %p259
        %p775 = pneg %p256
        %p776 = pneg %p280
        %p777 = pneg %p277
        %p778 = pneg %p301
        %p779 = pneg %p298
        %p780 = pneg %p322
        %p781 = pneg %p319
        %p782 = pneg %p343
        %p783 = pneg %p340
        %p784 = pneg %p364
        %p785 = pneg %p361
        %p786 = pneg %p385
        %p787 = pneg %p382
        %p788 = pneg %p406
        %p789 = pneg %p403
        %p790 = pneg %p427
        %p791 = pneg %p424
        %p792 = pneg %p448
        %p793 = pneg %p445
        %p794 = pneg %p474
        %p795 = pneg %p471
        %s796 = sand.u32 %s461, 1
        %s797 = scalar_lea.sflag [#allocation4], %s796
        %s798 = sand.u32 %s461, 1
        %s799 = smul.addr %s798, 32
        %s800 = scalar_lea.vmem [#allocation19], %s799
        %s801 = smul.u32 2, %s39
        %p802 = scmp.lt.s32.totalorder %s801, 3
        %s803 = scalar_select %p802, %s801, 3
        %s804 = smul.addr %s803, 2
        %s805 = smul.addr %s804, 8
        %s806 = scalar_lea.vmem %s0, %s805
        %s807 = smul.u32 2, %s39
        %s808 = smul.u32 2, %s39
        %p809 = scmp.lt.s32.totalorder %s808, 3
        %s810 = scalar_select %p809, %s808, 3
        %s811 = smul.addr %s810, 2
        %s812 = smul.addr %s811, 8
        %s813 = scalar_lea.vmem %s1, %s812
        %s814 = smul.u32 2, %s39
        %s815 = smul.u32 2, %s39
        %p816 = scmp.lt.s32.totalorder %s815, 3
        %s817 = scalar_select %p816, %s815, 3
        %s818 = smul.addr %s817, 2
        %s819 = smul.addr %s818, 8
        %s820 = scalar_lea.vmem %s2, %s819
        %s821 = smul.u32 2, %s39
        %s822 = smul.u32 2, %s39
        %v824 = vld [vmem:[%s806] sm:$0xff]
        %v825 = vld [vmem:[%s806 + $0x8] sm:$0xff]
        %s826 = scalar_lea.vmem %s806, 16
        %v827 = vld [vmem:[%s826] sm:$0xff]
        %v828 = vld [vmem:[%s826 + $0x8] sm:$0xff]
        %v829 = vld [vmem:[%s813] sm:$0xff]
        %v830 = vld [vmem:[%s813 + $0x8] sm:$0xff]
        %s831 = scalar_lea.vmem %s813, 16
        %v832 = vld [vmem:[%s831] sm:$0xff]
        %v833 = vld [vmem:[%s831 + $0x8] sm:$0xff]
        %v834 = vld [vmem:[%s820] sm:$0xff]
        %v835 = vld [vmem:[%s820 + $0x8] sm:$0xff]
        %v836 = vmul.f32 %v834, %v834
        %v837 = vmul.f32 %v835, %v835
        %vm838 = vcmask 23552
        %v839 = vsel %vm838, %v836, 0.0
        %840 = vadd.xlane.f32.xlu0 %v839
        %v841 = vpop.xlane.xlu0 %840
        %v842 = vsel %vm838, %v837, 0.0
        %843 = vadd.xlane.f32.xlu0 %v842
        %v844 = vpop.xlane.xlu0 %843
        %v846 = vsel %vm838, %v834, 0
        %v849 = vsel %vm838, %v835, 0
        %851 = vmatpush.xpose.msra.mxu0 0.0
        %852 = vmatpush.xpose.msra.mxu0 0.0
        %853 = vmatpush.xpose.msra.mxu0 0.0
        %854 = vmatpush.xpose.msra.mxu0 0.0
        %855 = vmatpush.xpose.msra.mxu0 0.0
        %856 = vmatpush.xpose.msra.mxu0 0.0
        %857 = vmatpush.xpose.msra.mxu0 0.0
        %858 = vmatpush.xpose.msra.mxu0 0.0
        %859 = vmatpush.xpose.msra.mxu0 0.0
        %860 = vmatpush.xpose.msra.mxu0 0.0
        %861 = vmatpush.xpose.msra.mxu0 0.0
        %862 = vmatpush.xpose.msra.mxu0 0.0
        %863 = vmatpush.xpose.msra.mxu0 0.0
        %864 = vmatpush.xpose.msra.mxu0 0.0
        %865 = vmatpush.xpose.msra.mxu0 %v849
        %866 = vmatpush.xpose.msra.mxu0 %v846
        %867 = vmatmul.f32.gmra.mxu0 %v846
        %v868 = vpop.f32.mrf.mxu0
        %v869 = vadd.f32 0.0, %v868
        %870 = vmatmul.f32.gmra.mxu0 %v849
        %v871 = vpop.f32.mrf.mxu0
        %v872 = vadd.f32 0.0, %v871
        %873 = vdwg.mxu0
        %874 = vxpose.xlu0.b32.start [1/16] %v841, 128
        %875 = vxpose.xlu0.b32.cont [2/16] %v844, 128
        %876 = vxpose.xlu0.b32.cont [3/16] 0.0, 128
        %877 = vxpose.xlu0.b32.cont [4/16] 0.0, 128
        %878 = vxpose.xlu0.b32.cont [5/16] 0.0, 128
        %879 = vxpose.xlu0.b32.cont [6/16] 0.0, 128
        %880 = vxpose.xlu0.b32.cont [7/16] 0.0, 128
        %881 = vxpose.xlu0.b32.cont [8/16] 0.0, 128
        %882 = vxpose.xlu0.b32.cont [9/16] 0.0, 128
        %883 = vxpose.xlu0.b32.cont [10/16] 0.0, 128
        %884 = vxpose.xlu0.b32.cont [11/16] 0.0, 128
        %885 = vxpose.xlu0.b32.cont [12/16] 0.0, 128
        %886 = vxpose.xlu0.b32.cont [13/16] 0.0, 128
        %887 = vxpose.xlu0.b32.cont [14/16] 0.0, 128
        %888 = vxpose.xlu0.b32.cont [15/16] 0.0, 128
        %889 = vxpose.xlu0.b32.end [16/16] 0.0, 128
        %v890 = vpop.trf.xlu0
        %v891 = vpop.trf.xlu0
        %v892 = vpop.trf.xlu0
        %v893 = vpop.trf.xlu0
        %v894 = vpop.trf.xlu0
        %v895 = vpop.trf.xlu0
        %v896 = vpop.trf.xlu0
        %v897 = vpop.trf.xlu0
        %v898 = vpop.trf.xlu0
        %v899 = vpop.trf.xlu0
        %v900 = vpop.trf.xlu0
        %v901 = vpop.trf.xlu0
        %v902 = vpop.trf.xlu0
        %v903 = vpop.trf.xlu0
        %v904 = vpop.trf.xlu0
        %v905 = vpop.trf.xlu0
        %v906 = vperm.slane %v890, 0
        %v907 = vadd.f32 %v841, %v906
        %v908 = vadd.f32 %v844, %v906
        %v909 = vmul.f32 %v869, 2.0
        %v910 = vmul.f32 %v872, 2.0
        %v911 = vsub.f32 %v907, %v909
        %v912 = vsub.f32 %v908, %v910
        %v913 = vmax.f32 %v911, 0.0
        %v914 = vmax.f32 %v912, 0.0
        %s915 = scalar_lea.vmem %s820, 16
        %v916 = vld [vmem:[%s915] sm:$0xff]
        %v917 = vld [vmem:[%s915 + $0x8] sm:$0xff]
        %v918 = vmul.f32 %v916, %v916
        %v919 = vmul.f32 %v917, %v917
        %v920 = vsel %vm838, %v918, 0.0
        %921 = vadd.xlane.f32.xlu0 %v920
        %v922 = vpop.xlane.xlu0 %921
        %v923 = vsel %vm838, %v919, 0.0
        %924 = vadd.xlane.f32.xlu0 %v923
        %v925 = vpop.xlane.xlu0 %924
        %v927 = vsel %vm838, %v916, 0
        %v930 = vsel %vm838, %v917, 0
        %932 = vmatpush.xpose.msra.mxu0 0.0
        %933 = vmatpush.xpose.msra.mxu0 0.0
        %934 = vmatpush.xpose.msra.mxu0 0.0
        %935 = vmatpush.xpose.msra.mxu0 0.0
        %936 = vmatpush.xpose.msra.mxu0 0.0
        %937 = vmatpush.xpose.msra.mxu0 0.0
        %938 = vmatpush.xpose.msra.mxu0 0.0
        %939 = vmatpush.xpose.msra.mxu0 0.0
        %940 = vmatpush.xpose.msra.mxu0 0.0
        %941 = vmatpush.xpose.msra.mxu0 0.0
        %942 = vmatpush.xpose.msra.mxu0 0.0
        %943 = vmatpush.xpose.msra.mxu0 0.0
        %944 = vmatpush.xpose.msra.mxu0 0.0
        %945 = vmatpush.xpose.msra.mxu0 0.0
        %946 = vmatpush.xpose.msra.mxu0 %v930
        %947 = vmatpush.xpose.msra.mxu0 %v927
        %948 = vmatmul.f32.gmra.mxu0 %v927
        %v949 = vpop.f32.mrf.mxu0
        %v950 = vadd.f32 0.0, %v949
        %951 = vmatmul.f32.gmra.mxu0 %v930
        %v952 = vpop.f32.mrf.mxu0
        %v953 = vadd.f32 0.0, %v952
        %954 = vdwg.mxu0
        %955 = vxpose.xlu0.b32.start [1/16] %v922, 128
        %956 = vxpose.xlu0.b32.cont [2/16] %v925, 128
        %957 = vxpose.xlu0.b32.cont [3/16] 0.0, 128
        %958 = vxpose.xlu0.b32.cont [4/16] 0.0, 128
        %959 = vxpose.xlu0.b32.cont [5/16] 0.0, 128
        %960 = vxpose.xlu0.b32.cont [6/16] 0.0, 128
        %961 = vxpose.xlu0.b32.cont [7/16] 0.0, 128
        %962 = vxpose.xlu0.b32.cont [8/16] 0.0, 128
        %963 = vxpose.xlu0.b32.cont [9/16] 0.0, 128
        %964 = vxpose.xlu0.b32.cont [10/16] 0.0, 128
        %965 = vxpose.xlu0.b32.cont [11/16] 0.0, 128
        %966 = vxpose.xlu0.b32.cont [12/16] 0.0, 128
        %967 = vxpose.xlu0.b32.cont [13/16] 0.0, 128
        %968 = vxpose.xlu0.b32.cont [14/16] 0.0, 128
        %969 = vxpose.xlu0.b32.cont [15/16] 0.0, 128
        %970 = vxpose.xlu0.b32.end [16/16] 0.0, 128
        %v971 = vpop.trf.xlu0
        %v972 = vpop.trf.xlu0
        %v973 = vpop.trf.xlu0
        %v974 = vpop.trf.xlu0
        %v975 = vpop.trf.xlu0
        %v976 = vpop.trf.xlu0
        %v977 = vpop.trf.xlu0
        %v978 = vpop.trf.xlu0
        %v979 = vpop.trf.xlu0
        %v980 = vpop.trf.xlu0
        %v981 = vpop.trf.xlu0
        %v982 = vpop.trf.xlu0
        %v983 = vpop.trf.xlu0
        %v984 = vpop.trf.xlu0
        %v985 = vpop.trf.xlu0
        %v986 = vpop.trf.xlu0
        %v987 = vperm.slane %v971, 0
        %v988 = vadd.f32 %v922, %v987
        %v989 = vadd.f32 %v925, %v987
        %v990 = vmul.f32 %v950, 2.0
        %v991 = vmul.f32 %v953, 2.0
        %v992 = vsub.f32 %v988, %v990
        %v993 = vsub.f32 %v989, %v991
        %v994 = vmax.f32 %v992, 0.0
        %v995 = vmax.f32 %v993, 0.0
        %vm996 = vcmp.ge.f32.partialorder %v913, 0.16
        %vm997 = vcmp.ge.f32.partialorder %v914, 0.16
        %v998 = vsel %vm996, -1e+30, 0.0
        %v999 = vsel %vm997, -1e+30, 0.0
        %vm1000 = vcmp.ge.f32.partialorder %v994, 0.16
        %vm1001 = vcmp.ge.f32.partialorder %v995, 0.16
        %v1002 = vsel %vm1000, -1e+30, 0.0
        %v1003 = vsel %vm1001, -1e+30, 0.0
        %vm1004 = vcmp.ge.f32.partialorder %v913, 0.64
        %vm1005 = vcmp.ge.f32.partialorder %v914, 0.64
        %v1006 = vsel %vm1004, -1e+30, 0.0
        %v1007 = vsel %vm1005, -1e+30, 0.0
        %vm1008 = vcmp.ge.f32.partialorder %v994, 0.64
        %vm1009 = vcmp.ge.f32.partialorder %v995, 0.64
        %v1010 = vsel %vm1008, -1e+30, 0.0
        %v1011 = vsel %vm1009, -1e+30, 0.0
        %vm1012 = vcmp.ge.f32.partialorder %v913, 1.44
        %vm1013 = vcmp.ge.f32.partialorder %v914, 1.44
        %v1014 = vsel %vm1012, -1e+30, 0.0
        %v1015 = vsel %vm1013, -1e+30, 0.0
        %vm1016 = vcmp.ge.f32.partialorder %v994, 1.44
        %vm1017 = vcmp.ge.f32.partialorder %v995, 1.44
        %v1018 = vsel %vm1016, -1e+30, 0.0
        %v1019 = vsel %vm1017, -1e+30, 0.0
        %v1020 = vadd.f32 %v824, %v829
        %v1021 = vadd.f32 %v825, %v830
        %v1022 = vadd.f32 %v827, %v832
        %v1023 = vadd.f32 %v828, %v833
        %v1024 = vpack.c.bf16 %v1021, %v1020
        %v1025 = vpack.c.bf16 %v1023, %v1022
        %v1026 = vpack.c.bf16 %v825, %v824
        %v1027 = vpack.c.bf16 %v828, %v827
        %v1028 = vld [vmem:[%s3] sm:$0xf]
        %v1029 = vld [vmem:[%s3 + $0x4] sm:$0xf]
        %v1030 = vld [vmem:[%s3 + $0x8] sm:$0xf]
        %v1031 = vld [vmem:[%s3 + $0xc] sm:$0xf]
        %v1032 = vld [vmem:[%s4] sm:$0x1]
        %v1034 = vperm.slane %v1032, 0
        %v1040 = vunpack.c.l.b16 %v1028
        %v1041 = vunpack.c.l.b16 %v1029
        %v1042 = vunpack.c.l.b16 %v1030
        %v1043 = vunpack.c.l.b16 %v1031
        %v1044 = vpack.c.b16 %v1041, %v1040
        %v1045 = vpack.c.b16 %v1043, %v1042
        %vm1048 = vcmask 261120
        %v1050 = vsel %vm1048, %v1024, 0
        %v1053 = vsel %vm1048, %v1025, 0
        %1055 = vmatpush.bf16.msra.mxu0 0
        %1056 = vmatpush.bf16.msra.mxu0 0
        %1057 = vmatpush.bf16.msra.mxu0 0
        %1058 = vmatpush.bf16.msra.mxu0 0
        %1059 = vmatpush.bf16.msra.mxu0 0
        %1060 = vmatpush.bf16.msra.mxu0 0
        %1061 = vmatpush.bf16.msra.mxu0 %v1045
        %1062 = vmatpush.bf16.msra.mxu0 %v1044
        %1063 = vmatmul.bf16.gmra.mxu0 %v1050
        %v1064 = vpop.f32.mrf.mxu0
        %v1065 = vadd.f32 %v1034, %v1064
        %v1066 = vpop.f32.mrf.mxu0
        %v1067 = vadd.f32 %v1034, %v1066
        %1068 = vmatmul.bf16.gmra.mxu0 %v1053
        %v1069 = vpop.f32.mrf.mxu0
        %v1070 = vadd.f32 %v1034, %v1069
        %v1071 = vpop.f32.mrf.mxu0
        %v1072 = vadd.f32 %v1034, %v1071
        %1073 = vdwg.mxu0
        %v1074 = vld [vmem:[#allocation2] sm:$0xf]
        %v1075 = vld [vmem:[#allocation2 + $0x4] sm:$0xf]
        %v1076 = vld [vmem:[#allocation2 + $0x8] sm:$0xf]
        %v1077 = vld [vmem:[#allocation2 + $0xc] sm:$0xf]
        %v1078 = vld [vmem:[%s6] sm:$0x1]
        %v1080 = vperm.slane %v1078, 0
        %v1086 = vunpack.c.l.b16 %v1074
        %v1087 = vunpack.c.l.b16 %v1075
        %v1088 = vunpack.c.l.b16 %v1076
        %v1089 = vunpack.c.l.b16 %v1077
        %v1090 = vpack.c.b16 %v1087, %v1086
        %v1091 = vpack.c.b16 %v1089, %v1088
        %1094 = vmatpush.bf16.msra.mxu0 0
        %1095 = vmatpush.bf16.msra.mxu0 0
        %1096 = vmatpush.bf16.msra.mxu0 0
        %1097 = vmatpush.bf16.msra.mxu0 0
        %1098 = vmatpush.bf16.msra.mxu0 0
        %1099 = vmatpush.bf16.msra.mxu0 0
        %1100 = vmatpush.bf16.msra.mxu0 %v1091
        %1101 = vmatpush.bf16.msra.mxu0 %v1090
        %1102 = vmatmul.bf16.gmra.mxu0 %v1050
        %v1103 = vpop.f32.mrf.mxu0
        %v1104 = vadd.f32 %v1080, %v1103
        %v1105 = vpop.f32.mrf.mxu0
        %v1106 = vadd.f32 %v1080, %v1105
        %1107 = vmatmul.bf16.gmra.mxu0 %v1053
        %v1108 = vpop.f32.mrf.mxu0
        %v1109 = vadd.f32 %v1080, %v1108
        %v1110 = vpop.f32.mrf.mxu0
        %v1111 = vadd.f32 %v1080, %v1110
        %1112 = vdwg.mxu0
        %v1113 = vld [vmem:[#allocation5] sm:$0xf]
        %v1114 = vld [vmem:[#allocation5 + $0x4] sm:$0xf]
        %v1115 = vld [vmem:[#allocation5 + $0x8] sm:$0xf]
        %v1116 = vld [vmem:[#allocation5 + $0xc] sm:$0xf]
        %v1117 = vld [vmem:[%s8] sm:$0x1]
        %v1119 = vperm.slane %v1117, 0
        %v1125 = vunpack.c.l.b16 %v1113
        %v1126 = vunpack.c.l.b16 %v1114
        %v1127 = vunpack.c.l.b16 %v1115
        %v1128 = vunpack.c.l.b16 %v1116
        %v1129 = vpack.c.b16 %v1126, %v1125
        %v1130 = vpack.c.b16 %v1128, %v1127
        %v1134 = vsel %vm1048, %v1026, 0
        %v1137 = vsel %vm1048, %v1027, 0
        %1139 = vmatpush.bf16.msra.mxu0 0
        %1140 = vmatpush.bf16.msra.mxu0 0
        %1141 = vmatpush.bf16.msra.mxu0 0
        %1142 = vmatpush.bf16.msra.mxu0 0
        %1143 = vmatpush.bf16.msra.mxu0 0
        %1144 = vmatpush.bf16.msra.mxu0 0
        %1145 = vmatpush.bf16.msra.mxu0 %v1130
        %1146 = vmatpush.bf16.msra.mxu0 %v1129
        %1147 = vmatmul.bf16.gmra.mxu0 %v1134
        %v1148 = vpop.f32.mrf.mxu0
        %v1149 = vadd.f32 %v1119, %v1148
        %v1150 = vpop.f32.mrf.mxu0
        %v1151 = vadd.f32 %v1119, %v1150
        %1152 = vmatmul.bf16.gmra.mxu0 %v1137
        %v1153 = vpop.f32.mrf.mxu0
        %v1154 = vadd.f32 %v1119, %v1153
        %v1155 = vpop.f32.mrf.mxu0
        %v1156 = vadd.f32 %v1119, %v1155
        %1157 = vdwg.mxu0
        %v1158 = vpack.c.bf16 %v1065, %v1065
        %v1159 = vpack.c.bf16 %v1067, %v1067
        %v1160 = vpack.c.bf16 %v1104, %v1104
        %v1161 = vpack.c.bf16 %v1106, %v1106
        %v1162 = vpack.c.bf16 %v1149, %v1149
        %v1163 = vpack.c.bf16 %v1151, %v1151
        %v1166 = vunpack.c.l.b16 %v1158
        %v1167 = vunpack.c.l.b16 %v1159
        %v1168 = vpack.c.b16 %v1167, %v1166
        %v1171 = vunpack.c.l.b16 %v1160
        %v1172 = vunpack.c.l.b16 %v1161
        %v1173 = vpack.c.b16 %v1172, %v1171
        %vm1174 = vcmask 64512
        %v1176 = vsel %vm1174, %v1168, 0
        %v1179 = vsel %vm1174, %v1173, 0
        %1181 = vmatpush.bf16.xpose.msra.mxu0 0
        %1182 = vmatpush.bf16.xpose.msra.mxu0 0
        %1183 = vmatpush.bf16.xpose.msra.mxu0 0
        %1184 = vmatpush.bf16.xpose.msra.mxu0 0
        %1185 = vmatpush.bf16.xpose.msra.mxu0 0
        %1186 = vmatpush.bf16.xpose.msra.mxu0 0
        %1187 = vmatpush.bf16.xpose.msra.mxu0 0
        %1188 = vmatpush.bf16.xpose.msra.mxu0 %v1179
        %1189 = vmatmul.bf16.gmra.mxu0 %v1176
        %v1190 = vpop.f32.mrf.mxu0
        %v1191 = vadd.f32 %v998, %v1190
        %v1192 = vpop.f32.mrf.mxu0
        %v1193 = vadd.f32 %v999, %v1192
        %1194 = vdwg.mxu0
        %vm1195 = vcmask 130048
        %v1196 = vsel %vm1195, %v1191, -inf
        %1197 = vmax.xlane.f32.xlu0 %v1196
        %v1198 = vpop.xlane.xlu0 %1197
        %v1199 = vsel %vm1195, %v1193, -inf
        %1200 = vmax.xlane.f32.xlu0 %v1199
        %v1201 = vpop.xlane.xlu0 %1200
        %v1202 = vsub.f32 %v1191, %v1198
        %v1203 = vsub.f32 %v1193, %v1201
        %v1204 = vmul.f32 %v1202, 1.442695
        %v1205 = vpow.pop %v1204
        %v1206 = vmul.f32 %v1203, 1.442695
        %v1207 = vpow.pop %v1206
        %v1208 = vsel %vm1195, %v1205, 0.0
        %1209 = vadd.xlane.f32.xlu0 %v1208
        %v1210 = vpop.xlane.xlu0 %1209
        %v1211 = vsel %vm1195, %v1207, 0.0
        %1212 = vadd.xlane.f32.xlu0 %v1211
        %v1213 = vpop.xlane.xlu0 %1212
        %v1214 = vrcp.pop %v1210
        %v1215 = vmul.f32 %v1210, %v1214
        %v1216 = vsub.f32 1.0, %v1215
        %v1217 = vmul.f32 %v1214, %v1216
        %v1218 = vadd.f32 %v1214, %v1217
        %vm1219 = vweird.f32 %v1210
        %vm1220 = vweird.f32 %v1214
        %vm1221 = vmor %vm1219, %vm1220
        %v1222 = vsel %vm1221, %v1214, %v1218
        %v1223 = vand.u32 2147483647, %v1210
        %vm1224 = vcmp.eq.f32.partialorder %v1223, 8.507059e+37
        %v1225 = vand.u32 %v1210, 2147483648
        %v1226 = vor.u32 1.1754944e-38, %v1225
        %v1227 = vsel %vm1224, %v1226, %v1222
        %v1228 = vrcp.pop %v1213
        %v1229 = vmul.f32 %v1213, %v1228
        %v1230 = vsub.f32 1.0, %v1229
        %v1231 = vmul.f32 %v1228, %v1230
        %v1232 = vadd.f32 %v1228, %v1231
        %vm1233 = vweird.f32 %v1213
        %vm1234 = vweird.f32 %v1228
        %vm1235 = vmor %vm1233, %vm1234
        %v1236 = vsel %vm1235, %v1228, %v1232
        %v1237 = vand.u32 2147483647, %v1213
        %vm1238 = vcmp.eq.f32.partialorder %v1237, 8.507059e+37
        %v1239 = vand.u32 %v1213, 2147483648
        %v1240 = vor.u32 1.1754944e-38, %v1239
        %v1241 = vsel %vm1238, %v1240, %v1236
        %v1242 = vmul.f32 %v1205, %v1227
        %v1243 = vmul.f32 %v1207, %v1241
        %v1244 = vpack.c.bf16 %v1243, %v1242
        %v1247 = vunpack.c.l.b16 %v1162
        %v1248 = vunpack.c.l.b16 %v1163
        %v1249 = vpack.c.b16 %v1248, %v1247
        %v1252 = vsel %vm1195, %v1244, 0
        %1254 = vmatpush.bf16.msra.mxu0 0
        %1255 = vmatpush.bf16.msra.mxu0 0
        %1256 = vmatpush.bf16.msra.mxu0 0
        %1257 = vmatpush.bf16.msra.mxu0 0
        %1258 = vmatpush.bf16.msra.mxu0 0
        %1259 = vmatpush.bf16.msra.mxu0 0
        %1260 = vmatpush.bf16.msra.mxu0 0
        %1261 = vmatpush.bf16.msra.mxu0 %v1249
        %1262 = vmatmul.bf16.gmra.mxu0 %v1252
        %v1263 = vpop.f32.mrf.mxu0
        %v1264 = vadd.f32 0.0, %v1263
        %v1265 = vpop.f32.mrf.mxu0
        %v1266 = vadd.f32 0.0, %v1265
        %1267 = vdwg.mxu0
        %1268 = vrot.lane.b32.xlu0 %v1168, 120
        %v1269 = vpop.permute.xlu0 %1268
        %1270 = vrot.lane.b32.xlu0 %v1173, 120
        %v1271 = vpop.permute.xlu0 %1270
        %v1273 = vsel %vm1174, %v1269, 0
        %v1276 = vsel %vm1174, %v1271, 0
        %1278 = vmatpush.bf16.xpose.msra.mxu0 0
        %1279 = vmatpush.bf16.xpose.msra.mxu0 0
        %1280 = vmatpush.bf16.xpose.msra.mxu0 0
        %1281 = vmatpush.bf16.xpose.msra.mxu0 0
        %1282 = vmatpush.bf16.xpose.msra.mxu0 0
        %1283 = vmatpush.bf16.xpose.msra.mxu0 0
        %1284 = vmatpush.bf16.xpose.msra.mxu0 0
        %1285 = vmatpush.bf16.xpose.msra.mxu0 %v1276
        %1286 = vmatmul.bf16.gmra.mxu0 %v1273
        %v1287 = vpop.f32.mrf.mxu0
        %v1288 = vadd.f32 %v998, %v1287
        %v1289 = vpop.f32.mrf.mxu0
        %v1290 = vadd.f32 %v999, %v1289
        %1291 = vdwg.mxu0
        %v1292 = vsel %vm1195, %v1288, -inf
        %1293 = vmax.xlane.f32.xlu0 %v1292
        %v1294 = vpop.xlane.xlu0 %1293
        %v1295 = vsel %vm1195, %v1290, -inf
        %1296 = vmax.xlane.f32.xlu0 %v1295
        %v1297 = vpop.xlane.xlu0 %1296
        %v1298 = vsub.f32 %v1288, %v1294
        %v1299 = vsub.f32 %v1290, %v1297
        %v1300 = vmul.f32 %v1298, 1.442695
        %v1301 = vpow.pop %v1300
        %v1302 = vmul.f32 %v1299, 1.442695
        %v1303 = vpow.pop %v1302
        %v1304 = vsel %vm1195, %v1301, 0.0
        %1305 = vadd.xlane.f32.xlu0 %v1304
        %v1306 = vpop.xlane.xlu0 %1305
        %v1307 = vsel %vm1195, %v1303, 0.0
        %1308 = vadd.xlane.f32.xlu0 %v1307
        %v1309 = vpop.xlane.xlu0 %1308
        %v1310 = vrcp.pop %v1306
        %v1311 = vmul.f32 %v1306, %v1310
        %v1312 = vsub.f32 1.0, %v1311
        %v1313 = vmul.f32 %v1310, %v1312
        %v1314 = vadd.f32 %v1310, %v1313
        %vm1315 = vweird.f32 %v1306
        %vm1316 = vweird.f32 %v1310
        %vm1317 = vmor %vm1315, %vm1316
        %v1318 = vsel %vm1317, %v1310, %v1314
        %v1319 = vand.u32 2147483647, %v1306
        %vm1320 = vcmp.eq.f32.partialorder %v1319, 8.507059e+37
        %v1321 = vand.u32 %v1306, 2147483648
        %v1322 = vor.u32 1.1754944e-38, %v1321
        %v1323 = vsel %vm1320, %v1322, %v1318
        %v1324 = vrcp.pop %v1309
        %v1325 = vmul.f32 %v1309, %v1324
        %v1326 = vsub.f32 1.0, %v1325
        %v1327 = vmul.f32 %v1324, %v1326
        %v1328 = vadd.f32 %v1324, %v1327
        %vm1329 = vweird.f32 %v1309
        %vm1330 = vweird.f32 %v1324
        %vm1331 = vmor %vm1329, %vm1330
        %v1332 = vsel %vm1331, %v1324, %v1328
        %v1333 = vand.u32 2147483647, %v1309
        %vm1334 = vcmp.eq.f32.partialorder %v1333, 8.507059e+37
        %v1335 = vand.u32 %v1309, 2147483648
        %v1336 = vor.u32 1.1754944e-38, %v1335
        %v1337 = vsel %vm1334, %v1336, %v1332
        %v1338 = vmul.f32 %v1301, %v1323
        %v1339 = vmul.f32 %v1303, %v1337
        %v1340 = vpack.c.bf16 %v1339, %v1338
        %1341 = vrot.lane.b32.xlu0 %v1249, 120
        %v1342 = vpop.permute.xlu0 %1341
        %v1345 = vsel %vm1195, %v1340, 0
        %1347 = vmatpush.bf16.msra.mxu0 0
        %1348 = vmatpush.bf16.msra.mxu0 0
        %1349 = vmatpush.bf16.msra.mxu0 0
        %1350 = vmatpush.bf16.msra.mxu0 0
        %1351 = vmatpush.bf16.msra.mxu0 0
        %1352 = vmatpush.bf16.msra.mxu0 0
        %1353 = vmatpush.bf16.msra.mxu0 0
        %1354 = vmatpush.bf16.msra.mxu0 %v1342
        %1355 = vmatmul.bf16.gmra.mxu0 %v1345
        %v1356 = vpop.f32.mrf.mxu0
        %v1357 = vadd.f32 0.0, %v1356
        %v1358 = vpop.f32.mrf.mxu0
        %v1359 = vadd.f32 0.0, %v1358
        %1360 = vdwg.mxu0
        %1361 = vrot.lane.b32.xlu0 %v1168, 112
        %v1362 = vpop.permute.xlu0 %1361
        %1363 = vrot.lane.b32.xlu0 %v1173, 112
        %v1364 = vpop.permute.xlu0 %1363
        %v1366 = vsel %vm1174, %v1362, 0
        %v1369 = vsel %vm1174, %v1364, 0
        %1371 = vmatpush.bf16.xpose.msra.mxu0 0
        %1372 = vmatpush.bf16.xpose.msra.mxu0 0
        %1373 = vmatpush.bf16.xpose.msra.mxu0 0
        %1374 = vmatpush.bf16.xpose.msra.mxu0 0
        %1375 = vmatpush.bf16.xpose.msra.mxu0 0
        %1376 = vmatpush.bf16.xpose.msra.mxu0 0
        %1377 = vmatpush.bf16.xpose.msra.mxu0 0
        %1378 = vmatpush.bf16.xpose.msra.mxu0 %v1369
        %1379 = vmatmul.bf16.gmra.mxu0 %v1366
        %v1380 = vpop.f32.mrf.mxu0
        %v1381 = vadd.f32 %v998, %v1380
        %v1382 = vpop.f32.mrf.mxu0
        %v1383 = vadd.f32 %v999, %v1382
        %1384 = vdwg.mxu0
        %v1385 = vsel %vm1195, %v1381, -inf
        %1386 = vmax.xlane.f32.xlu0 %v1385
        %v1387 = vpop.xlane.xlu0 %1386
        %v1388 = vsel %vm1195, %v1383, -inf
        %1389 = vmax.xlane.f32.xlu0 %v1388
        %v1390 = vpop.xlane.xlu0 %1389
        %v1391 = vsub.f32 %v1381, %v1387
        %v1392 = vsub.f32 %v1383, %v1390
        %v1393 = vmul.f32 %v1391, 1.442695
        %v1394 = vpow.pop %v1393
        %v1395 = vmul.f32 %v1392, 1.442695
        %v1396 = vpow.pop %v1395
        %v1397 = vsel %vm1195, %v1394, 0.0
        %1398 = vadd.xlane.f32.xlu0 %v1397
        %v1399 = vpop.xlane.xlu0 %1398
        %v1400 = vsel %vm1195, %v1396, 0.0
        %1401 = vadd.xlane.f32.xlu0 %v1400
        %v1402 = vpop.xlane.xlu0 %1401
        %v1403 = vrcp.pop %v1399
        %v1404 = vmul.f32 %v1399, %v1403
        %v1405 = vsub.f32 1.0, %v1404
        %v1406 = vmul.f32 %v1403, %v1405
        %v1407 = vadd.f32 %v1403, %v1406
        %vm1408 = vweird.f32 %v1399
        %vm1409 = vweird.f32 %v1403
        %vm1410 = vmor %vm1408, %vm1409
        %v1411 = vsel %vm1410, %v1403, %v1407
        %v1412 = vand.u32 2147483647, %v1399
        %vm1413 = vcmp.eq.f32.partialorder %v1412, 8.507059e+37
        %v1414 = vand.u32 %v1399, 2147483648
        %v1415 = vor.u32 1.1754944e-38, %v1414
        %v1416 = vsel %vm1413, %v1415, %v1411
        %v1417 = vrcp.pop %v1402
        %v1418 = vmul.f32 %v1402, %v1417
        %v1419 = vsub.f32 1.0, %v1418
        %v1420 = vmul.f32 %v1417, %v1419
        %v1421 = vadd.f32 %v1417, %v1420
        %vm1422 = vweird.f32 %v1402
        %vm1423 = vweird.f32 %v1417
        %vm1424 = vmor %vm1422, %vm1423
        %v1425 = vsel %vm1424, %v1417, %v1421
        %v1426 = vand.u32 2147483647, %v1402
        %vm1427 = vcmp.eq.f32.partialorder %v1426, 8.507059e+37
        %v1428 = vand.u32 %v1402, 2147483648
        %v1429 = vor.u32 1.1754944e-38, %v1428
        %v1430 = vsel %vm1427, %v1429, %v1425
        %v1431 = vmul.f32 %v1394, %v1416
        %v1432 = vmul.f32 %v1396, %v1430
        %v1433 = vpack.c.bf16 %v1432, %v1431
        %1434 = vrot.lane.b32.xlu0 %v1249, 112
        %v1435 = vpop.permute.xlu0 %1434
        %v1438 = vsel %vm1195, %v1433, 0
        %1440 = vmatpush.bf16.msra.mxu0 0
        %1441 = vmatpush.bf16.msra.mxu0 0
        %1442 = vmatpush.bf16.msra.mxu0 0
        %1443 = vmatpush.bf16.msra.mxu0 0
        %1444 = vmatpush.bf16.msra.mxu0 0
        %1445 = vmatpush.bf16.msra.mxu0 0
        %1446 = vmatpush.bf16.msra.mxu0 0
        %1447 = vmatpush.bf16.msra.mxu0 %v1435
        %1448 = vmatmul.bf16.gmra.mxu0 %v1438
        %v1449 = vpop.f32.mrf.mxu0
        %v1450 = vadd.f32 0.0, %v1449
        %v1451 = vpop.f32.mrf.mxu0
        %v1452 = vadd.f32 0.0, %v1451
        %1453 = vdwg.mxu0
        %1454 = vrot.lane.b32.xlu0 %v1168, 104
        %v1455 = vpop.permute.xlu0 %1454
        %1456 = vrot.lane.b32.xlu0 %v1173, 104
        %v1457 = vpop.permute.xlu0 %1456
        %v1459 = vsel %vm1174, %v1455, 0
        %v1462 = vsel %vm1174, %v1457, 0
        %1464 = vmatpush.bf16.xpose.msra.mxu0 0
        %1465 = vmatpush.bf16.xpose.msra.mxu0 0
        %1466 = vmatpush.bf16.xpose.msra.mxu0 0
        %1467 = vmatpush.bf16.xpose.msra.mxu0 0
        %1468 = vmatpush.bf16.xpose.msra.mxu0 0
        %1469 = vmatpush.bf16.xpose.msra.mxu0 0
        %1470 = vmatpush.bf16.xpose.msra.mxu0 0
        %1471 = vmatpush.bf16.xpose.msra.mxu0 %v1462
        %1472 = vmatmul.bf16.gmra.mxu0 %v1459
        %v1473 = vpop.f32.mrf.mxu0
        %v1474 = vadd.f32 %v998, %v1473
        %v1475 = vpop.f32.mrf.mxu0
        %v1476 = vadd.f32 %v999, %v1475
        %1477 = vdwg.mxu0
        %v1478 = vsel %vm1195, %v1474, -inf
        %1479 = vmax.xlane.f32.xlu0 %v1478
        %v1480 = vpop.xlane.xlu0 %1479
        %v1481 = vsel %vm1195, %v1476, -inf
        %1482 = vmax.xlane.f32.xlu0 %v1481
        %v1483 = vpop.xlane.xlu0 %1482
        %v1484 = vsub.f32 %v1474, %v1480
        %v1485 = vsub.f32 %v1476, %v1483
        %v1486 = vmul.f32 %v1484, 1.442695
        %v1487 = vpow.pop %v1486
        %v1488 = vmul.f32 %v1485, 1.442695
        %v1489 = vpow.pop %v1488
        %v1490 = vsel %vm1195, %v1487, 0.0
        %1491 = vadd.xlane.f32.xlu0 %v1490
        %v1492 = vpop.xlane.xlu0 %1491
        %v1493 = vsel %vm1195, %v1489, 0.0
        %1494 = vadd.xlane.f32.xlu0 %v1493
        %v1495 = vpop.xlane.xlu0 %1494
        %v1496 = vrcp.pop %v1492
        %v1497 = vmul.f32 %v1492, %v1496
        %v1498 = vsub.f32 1.0, %v1497
        %v1499 = vmul.f32 %v1496, %v1498
        %v1500 = vadd.f32 %v1496, %v1499
        %vm1501 = vweird.f32 %v1492
        %vm1502 = vweird.f32 %v1496
        %vm1503 = vmor %vm1501, %vm1502
        %v1504 = vsel %vm1503, %v1496, %v1500
        %v1505 = vand.u32 2147483647, %v1492
        %vm1506 = vcmp.eq.f32.partialorder %v1505, 8.507059e+37
        %v1507 = vand.u32 %v1492, 2147483648
        %v1508 = vor.u32 1.1754944e-38, %v1507
        %v1509 = vsel %vm1506, %v1508, %v1504
        %v1510 = vrcp.pop %v1495
        %v1511 = vmul.f32 %v1495, %v1510
        %v1512 = vsub.f32 1.0, %v1511
        %v1513 = vmul.f32 %v1510, %v1512
        %v1514 = vadd.f32 %v1510, %v1513
        %vm1515 = vweird.f32 %v1495
        %vm1516 = vweird.f32 %v1510
        %vm1517 = vmor %vm1515, %vm1516
        %v1518 = vsel %vm1517, %v1510, %v1514
        %v1519 = vand.u32 2147483647, %v1495
        %vm1520 = vcmp.eq.f32.partialorder %v1519, 8.507059e+37
        %v1521 = vand.u32 %v1495, 2147483648
        %v1522 = vor.u32 1.1754944e-38, %v1521
        %v1523 = vsel %vm1520, %v1522, %v1518
        %v1524 = vmul.f32 %v1487, %v1509
        %v1525 = vmul.f32 %v1489, %v1523
        %v1526 = vpack.c.bf16 %v1525, %v1524
        %1527 = vrot.lane.b32.xlu0 %v1249, 104
        %v1528 = vpop.permute.xlu0 %1527
        %v1531 = vsel %vm1195, %v1526, 0
        %1533 = vmatpush.bf16.msra.mxu0 0
        %1534 = vmatpush.bf16.msra.mxu0 0
        %1535 = vmatpush.bf16.msra.mxu0 0
        %1536 = vmatpush.bf16.msra.mxu0 0
        %1537 = vmatpush.bf16.msra.mxu0 0
        %1538 = vmatpush.bf16.msra.mxu0 0
        %1539 = vmatpush.bf16.msra.mxu0 0
        %1540 = vmatpush.bf16.msra.mxu0 %v1528
        %1541 = vmatmul.bf16.gmra.mxu0 %v1531
        %v1542 = vpop.f32.mrf.mxu0
        %v1543 = vadd.f32 0.0, %v1542
        %v1544 = vpop.f32.mrf.mxu0
        %v1545 = vadd.f32 0.0, %v1544
        %1546 = vdwg.mxu0
        %1549 = vrot.lane.b32.xlu0 %v1357, 8
        %v1550 = vpop.permute.xlu0 %1549
        %1551 = vrot.lane.b32.xlu0 %v1359, 8
        %v1552 = vpop.permute.xlu0 %1551
        %1557 = vrot.lane.b32.xlu0 %v1450, 16
        %v1558 = vpop.permute.xlu0 %1557
        %1559 = vrot.lane.b32.xlu0 %v1452, 16
        %v1560 = vpop.permute.xlu0 %1559
        %1565 = vrot.lane.b32.xlu0 %v1543, 24
        %v1566 = vpop.permute.xlu0 %1565
        %1567 = vrot.lane.b32.xlu0 %v1545, 24
        %v1568 = vpop.permute.xlu0 %1567
        %v1571 = vsel %vm1174, %v1264, %v1550
        %v1572 = vsel %vm1174, %v1266, %v1552
        %v1573 = vsel %vm1195, %v1571, %v1558
        %v1574 = vsel %vm1195, %v1572, %v1560
        %vm1575 = vcmask 195584
        %v1576 = vsel %vm1575, %v1573, %v1566
        %v1577 = vsel %vm1575, %v1574, %v1568
        %v1578 = vpack.c.bf16 %v1070, %v1070
        %v1579 = vpack.c.bf16 %v1072, %v1072
        %v1580 = vpack.c.bf16 %v1109, %v1109
        %v1581 = vpack.c.bf16 %v1111, %v1111
        %v1582 = vpack.c.bf16 %v1154, %v1154
        %v1583 = vpack.c.bf16 %v1156, %v1156
        %v1586 = vunpack.c.l.b16 %v1578
        %v1587 = vunpack.c.l.b16 %v1579
        %v1588 = vpack.c.b16 %v1587, %v1586
        %v1591 = vunpack.c.l.b16 %v1580
        %v1592 = vunpack.c.l.b16 %v1581
        %v1593 = vpack.c.b16 %v1592, %v1591
        %v1595 = vsel %vm1174, %v1588, 0
        %v1598 = vsel %vm1174, %v1593, 0
        %1600 = vmatpush.bf16.xpose.msra.mxu0 0
        %1601 = vmatpush.bf16.xpose.msra.mxu0 0
        %1602 = vmatpush.bf16.xpose.msra.mxu0 0
        %1603 = vmatpush.bf16.xpose.msra.mxu0 0
        %1604 = vmatpush.bf16.xpose.msra.mxu0 0
        %1605 = vmatpush.bf16.xpose.msra.mxu0 0
        %1606 = vmatpush.bf16.xpose.msra.mxu0 0
        %1607 = vmatpush.bf16.xpose.msra.mxu0 %v1598
        %1608 = vmatmul.bf16.gmra.mxu0 %v1595
        %v1609 = vpop.f32.mrf.mxu0
        %v1610 = vadd.f32 %v1002, %v1609
        %v1611 = vpop.f32.mrf.mxu0
        %v1612 = vadd.f32 %v1003, %v1611
        %1613 = vdwg.mxu0
        %v1614 = vsel %vm1195, %v1610, -inf
        %1615 = vmax.xlane.f32.xlu0 %v1614
        %v1616 = vpop.xlane.xlu0 %1615
        %v1617 = vsel %vm1195, %v1612, -inf
        %1618 = vmax.xlane.f32.xlu0 %v1617
        %v1619 = vpop.xlane.xlu0 %1618
        %v1620 = vsub.f32 %v1610, %v1616
        %v1621 = vsub.f32 %v1612, %v1619
        %v1622 = vmul.f32 %v1620, 1.442695
        %v1623 = vpow.pop %v1622
        %v1624 = vmul.f32 %v1621, 1.442695
        %v1625 = vpow.pop %v1624
        %v1626 = vsel %vm1195, %v1623, 0.0
        %1627 = vadd.xlane.f32.xlu0 %v1626
        %v1628 = vpop.xlane.xlu0 %1627
        %v1629 = vsel %vm1195, %v1625, 0.0
        %1630 = vadd.xlane.f32.xlu0 %v1629
        %v1631 = vpop.xlane.xlu0 %1630
        %v1632 = vrcp.pop %v1628
        %v1633 = vmul.f32 %v1628, %v1632
        %v1634 = vsub.f32 1.0, %v1633
        %v1635 = vmul.f32 %v1632, %v1634
        %v1636 = vadd.f32 %v1632, %v1635
        %vm1637 = vweird.f32 %v1628
        %vm1638 = vweird.f32 %v1632
        %vm1639 = vmor %vm1637, %vm1638
        %v1640 = vsel %vm1639, %v1632, %v1636
        %v1641 = vand.u32 2147483647, %v1628
        %vm1642 = vcmp.eq.f32.partialorder %v1641, 8.507059e+37
        %v1643 = vand.u32 %v1628, 2147483648
        %v1644 = vor.u32 1.1754944e-38, %v1643
        %v1645 = vsel %vm1642, %v1644, %v1640
        %v1646 = vrcp.pop %v1631
        %v1647 = vmul.f32 %v1631, %v1646
        %v1648 = vsub.f32 1.0, %v1647
        %v1649 = vmul.f32 %v1646, %v1648
        %v1650 = vadd.f32 %v1646, %v1649
        %vm1651 = vweird.f32 %v1631
        %vm1652 = vweird.f32 %v1646
        %vm1653 = vmor %vm1651, %vm1652
        %v1654 = vsel %vm1653, %v1646, %v1650
        %v1655 = vand.u32 2147483647, %v1631
        %vm1656 = vcmp.eq.f32.partialorder %v1655, 8.507059e+37
        %v1657 = vand.u32 %v1631, 2147483648
        %v1658 = vor.u32 1.1754944e-38, %v1657
        %v1659 = vsel %vm1656, %v1658, %v1654
        %v1660 = vmul.f32 %v1623, %v1645
        %v1661 = vmul.f32 %v1625, %v1659
        %v1662 = vpack.c.bf16 %v1661, %v1660
        %v1665 = vunpack.c.l.b16 %v1582
        %v1666 = vunpack.c.l.b16 %v1583
        %v1667 = vpack.c.b16 %v1666, %v1665
        %v1670 = vsel %vm1195, %v1662, 0
        %1672 = vmatpush.bf16.msra.mxu0 0
        %1673 = vmatpush.bf16.msra.mxu0 0
        %1674 = vmatpush.bf16.msra.mxu0 0
        %1675 = vmatpush.bf16.msra.mxu0 0
        %1676 = vmatpush.bf16.msra.mxu0 0
        %1677 = vmatpush.bf16.msra.mxu0 0
        %1678 = vmatpush.bf16.msra.mxu0 0
        %1679 = vmatpush.bf16.msra.mxu0 %v1667
        %1680 = vmatmul.bf16.gmra.mxu0 %v1670
        %v1681 = vpop.f32.mrf.mxu0
        %v1682 = vadd.f32 0.0, %v1681
        %v1683 = vpop.f32.mrf.mxu0
        %v1684 = vadd.f32 0.0, %v1683
        %1685 = vdwg.mxu0
        %1686 = vrot.lane.b32.xlu0 %v1588, 120
        %v1687 = vpop.permute.xlu0 %1686
        %1688 = vrot.lane.b32.xlu0 %v1593, 120
        %v1689 = vpop.permute.xlu0 %1688
        %v1691 = vsel %vm1174, %v1687, 0
        %v1694 = vsel %vm1174, %v1689, 0
        %1696 = vmatpush.bf16.xpose.msra.mxu0 0
        %1697 = vmatpush.bf16.xpose.msra.mxu0 0
        %1698 = vmatpush.bf16.xpose.msra.mxu0 0
        %1699 = vmatpush.bf16.xpose.msra.mxu0 0
        %1700 = vmatpush.bf16.xpose.msra.mxu0 0
        %1701 = vmatpush.bf16.xpose.msra.mxu0 0
        %1702 = vmatpush.bf16.xpose.msra.mxu0 0
        %1703 = vmatpush.bf16.xpose.msra.mxu0 %v1694
        %1704 = vmatmul.bf16.gmra.mxu0 %v1691
        %v1705 = vpop.f32.mrf.mxu0
        %v1706 = vadd.f32 %v1002, %v1705
        %v1707 = vpop.f32.mrf.mxu0
        %v1708 = vadd.f32 %v1003, %v1707
        %1709 = vdwg.mxu0
        %v1710 = vsel %vm1195, %v1706, -inf
        %1711 = vmax.xlane.f32.xlu0 %v1710
        %v1712 = vpop.xlane.xlu0 %1711
        %v1713 = vsel %vm1195, %v1708, -inf
        %1714 = vmax.xlane.f32.xlu0 %v1713
        %v1715 = vpop.xlane.xlu0 %1714
        %v1716 = vsub.f32 %v1706, %v1712
        %v1717 = vsub.f32 %v1708, %v1715
        %v1718 = vmul.f32 %v1716, 1.442695
        %v1719 = vpow.pop %v1718
        %v1720 = vmul.f32 %v1717, 1.442695
        %v1721 = vpow.pop %v1720
        %v1722 = vsel %vm1195, %v1719, 0.0
        %1723 = vadd.xlane.f32.xlu0 %v1722
        %v1724 = vpop.xlane.xlu0 %1723
        %v1725 = vsel %vm1195, %v1721, 0.0
        %1726 = vadd.xlane.f32.xlu0 %v1725
        %v1727 = vpop.xlane.xlu0 %1726
        %v1728 = vrcp.pop %v1724
        %v1729 = vmul.f32 %v1724, %v1728
        %v1730 = vsub.f32 1.0, %v1729
        %v1731 = vmul.f32 %v1728, %v1730
        %v1732 = vadd.f32 %v1728, %v1731
        %vm1733 = vweird.f32 %v1724
        %vm1734 = vweird.f32 %v1728
        %vm1735 = vmor %vm1733, %vm1734
        %v1736 = vsel %vm1735, %v1728, %v1732
        %v1737 = vand.u32 2147483647, %v1724
        %vm1738 = vcmp.eq.f32.partialorder %v1737, 8.507059e+37
        %v1739 = vand.u32 %v1724, 2147483648
        %v1740 = vor.u32 1.1754944e-38, %v1739
        %v1741 = vsel %vm1738, %v1740, %v1736
        %v1742 = vrcp.pop %v1727
        %v1743 = vmul.f32 %v1727, %v1742
        %v1744 = vsub.f32 1.0, %v1743
        %v1745 = vmul.f32 %v1742, %v1744
        %v1746 = vadd.f32 %v1742, %v1745
        %vm1747 = vweird.f32 %v1727
        %vm1748 = vweird.f32 %v1742
        %vm1749 = vmor %vm1747, %vm1748
        %v1750 = vsel %vm1749, %v1742, %v1746
        %v1751 = vand.u32 2147483647, %v1727
        %vm1752 = vcmp.eq.f32.partialorder %v1751, 8.507059e+37
        %v1753 = vand.u32 %v1727, 2147483648
        %v1754 = vor.u32 1.1754944e-38, %v1753
        %v1755 = vsel %vm1752, %v1754, %v1750
        %v1756 = vmul.f32 %v1719, %v1741
        %v1757 = vmul.f32 %v1721, %v1755
        %v1758 = vpack.c.bf16 %v1757, %v1756
        %1759 = vrot.lane.b32.xlu0 %v1667, 120
        %v1760 = vpop.permute.xlu0 %1759
        %v1763 = vsel %vm1195, %v1758, 0
        %1765 = vmatpush.bf16.msra.mxu0 0
        %1766 = vmatpush.bf16.msra.mxu0 0
        %1767 = vmatpush.bf16.msra.mxu0 0
        %1768 = vmatpush.bf16.msra.mxu0 0
        %1769 = vmatpush.bf16.msra.mxu0 0
        %1770 = vmatpush.bf16.msra.mxu0 0
        %1771 = vmatpush.bf16.msra.mxu0 0
        %1772 = vmatpush.bf16.msra.mxu0 %v1760
        %1773 = vmatmul.bf16.gmra.mxu0 %v1763
        %v1774 = vpop.f32.mrf.mxu0
        %v1775 = vadd.f32 0.0, %v1774
        %v1776 = vpop.f32.mrf.mxu0
        %v1777 = vadd.f32 0.0, %v1776
        %1778 = vdwg.mxu0
        %1779 = vrot.lane.b32.xlu0 %v1588, 112
        %v1780 = vpop.permute.xlu0 %1779
        %1781 = vrot.lane.b32.xlu0 %v1593, 112
        %v1782 = vpop.permute.xlu0 %1781
        %v1784 = vsel %vm1174, %v1780, 0
        %v1787 = vsel %vm1174, %v1782, 0
        %1789 = vmatpush.bf16.xpose.msra.mxu0 0
        %1790 = vmatpush.bf16.xpose.msra.mxu0 0
        %1791 = vmatpush.bf16.xpose.msra.mxu0 0
        %1792 = vmatpush.bf16.xpose.msra.mxu0 0
        %1793 = vmatpush.bf16.xpose.msra.mxu0 0
        %1794 = vmatpush.bf16.xpose.msra.mxu0 0
        %1795 = vmatpush.bf16.xpose.msra.mxu0 0
        %1796 = vmatpush.bf16.xpose.msra.mxu0 %v1787
        %1797 = vmatmul.bf16.gmra.mxu0 %v1784
        %v1798 = vpop.f32.mrf.mxu0
        %v1799 = vadd.f32 %v1002, %v1798
        %v1800 = vpop.f32.mrf.mxu0
        %v1801 = vadd.f32 %v1003, %v1800
        %1802 = vdwg.mxu0
        %v1803 = vsel %vm1195, %v1799, -inf
        %1804 = vmax.xlane.f32.xlu0 %v1803
        %v1805 = vpop.xlane.xlu0 %1804
        %v1806 = vsel %vm1195, %v1801, -inf
        %1807 = vmax.xlane.f32.xlu0 %v1806
        %v1808 = vpop.xlane.xlu0 %1807
        %v1809 = vsub.f32 %v1799, %v1805
        %v1810 = vsub.f32 %v1801, %v1808
        %v1811 = vmul.f32 %v1809, 1.442695
        %v1812 = vpow.pop %v1811
        %v1813 = vmul.f32 %v1810, 1.442695
        %v1814 = vpow.pop %v1813
        %v1815 = vsel %vm1195, %v1812, 0.0
        %1816 = vadd.xlane.f32.xlu0 %v1815
        %v1817 = vpop.xlane.xlu0 %1816
        %v1818 = vsel %vm1195, %v1814, 0.0
        %1819 = vadd.xlane.f32.xlu0 %v1818
        %v1820 = vpop.xlane.xlu0 %1819
        %v1821 = vrcp.pop %v1817
        %v1822 = vmul.f32 %v1817, %v1821
        %v1823 = vsub.f32 1.0, %v1822
        %v1824 = vmul.f32 %v1821, %v1823
        %v1825 = vadd.f32 %v1821, %v1824
        %vm1826 = vweird.f32 %v1817
        %vm1827 = vweird.f32 %v1821
        %vm1828 = vmor %vm1826, %vm1827
        %v1829 = vsel %vm1828, %v1821, %v1825
        %v1830 = vand.u32 2147483647, %v1817
        %vm1831 = vcmp.eq.f32.partialorder %v1830, 8.507059e+37
        %v1832 = vand.u32 %v1817, 2147483648
        %v1833 = vor.u32 1.1754944e-38, %v1832
        %v1834 = vsel %vm1831, %v1833, %v1829
        %v1835 = vrcp.pop %v1820
        %v1836 = vmul.f32 %v1820, %v1835
        %v1837 = vsub.f32 1.0, %v1836
        %v1838 = vmul.f32 %v1835, %v1837
        %v1839 = vadd.f32 %v1835, %v1838
        %vm1840 = vweird.f32 %v1820
        %vm1841 = vweird.f32 %v1835
        %vm1842 = vmor %vm1840, %vm1841
        %v1843 = vsel %vm1842, %v1835, %v1839
        %v1844 = vand.u32 2147483647, %v1820
        %vm1845 = vcmp.eq.f32.partialorder %v1844, 8.507059e+37
        %v1846 = vand.u32 %v1820, 2147483648
        %v1847 = vor.u32 1.1754944e-38, %v1846
        %v1848 = vsel %vm1845, %v1847, %v1843
        %v1849 = vmul.f32 %v1812, %v1834
        %v1850 = vmul.f32 %v1814, %v1848
        %v1851 = vpack.c.bf16 %v1850, %v1849
        %1852 = vrot.lane.b32.xlu0 %v1667, 112
        %v1853 = vpop.permute.xlu0 %1852
        %v1856 = vsel %vm1195, %v1851, 0
        %1858 = vmatpush.bf16.msra.mxu0 0
        %1859 = vmatpush.bf16.msra.mxu0 0
        %1860 = vmatpush.bf16.msra.mxu0 0
        %1861 = vmatpush.bf16.msra.mxu0 0
        %1862 = vmatpush.bf16.msra.mxu0 0
        %1863 = vmatpush.bf16.msra.mxu0 0
        %1864 = vmatpush.bf16.msra.mxu0 0
        %1865 = vmatpush.bf16.msra.mxu0 %v1853
        %1866 = vmatmul.bf16.gmra.mxu0 %v1856
        %v1867 = vpop.f32.mrf.mxu0
        %v1868 = vadd.f32 0.0, %v1867
        %v1869 = vpop.f32.mrf.mxu0
        %v1870 = vadd.f32 0.0, %v1869
        %1871 = vdwg.mxu0
        %1872 = vrot.lane.b32.xlu0 %v1588, 104
        %v1873 = vpop.permute.xlu0 %1872
        %1874 = vrot.lane.b32.xlu0 %v1593, 104
        %v1875 = vpop.permute.xlu0 %1874
        %v1877 = vsel %vm1174, %v1873, 0
        %v1880 = vsel %vm1174, %v1875, 0
        %1882 = vmatpush.bf16.xpose.msra.mxu0 0
        %1883 = vmatpush.bf16.xpose.msra.mxu0 0
        %1884 = vmatpush.bf16.xpose.msra.mxu0 0
        %1885 = vmatpush.bf16.xpose.msra.mxu0 0
        %1886 = vmatpush.bf16.xpose.msra.mxu0 0
        %1887 = vmatpush.bf16.xpose.msra.mxu0 0
        %1888 = vmatpush.bf16.xpose.msra.mxu0 0
        %1889 = vmatpush.bf16.xpose.msra.mxu0 %v1880
        %1890 = vmatmul.bf16.gmra.mxu0 %v1877
        %v1891 = vpop.f32.mrf.mxu0
        %v1892 = vadd.f32 %v1002, %v1891
        %v1893 = vpop.f32.mrf.mxu0
        %v1894 = vadd.f32 %v1003, %v1893
        %1895 = vdwg.mxu0
        %v1896 = vsel %vm1195, %v1892, -inf
        %1897 = vmax.xlane.f32.xlu0 %v1896
        %v1898 = vpop.xlane.xlu0 %1897
        %v1899 = vsel %vm1195, %v1894, -inf
        %1900 = vmax.xlane.f32.xlu0 %v1899
        %v1901 = vpop.xlane.xlu0 %1900
        %v1902 = vsub.f32 %v1892, %v1898
        %v1903 = vsub.f32 %v1894, %v1901
        %v1904 = vmul.f32 %v1902, 1.442695
        %v1905 = vpow.pop %v1904
        %v1906 = vmul.f32 %v1903, 1.442695
        %v1907 = vpow.pop %v1906
        %v1908 = vsel %vm1195, %v1905, 0.0
        %1909 = vadd.xlane.f32.xlu0 %v1908
        %v1910 = vpop.xlane.xlu0 %1909
        %v1911 = vsel %vm1195, %v1907, 0.0
        %1912 = vadd.xlane.f32.xlu0 %v1911
        %v1913 = vpop.xlane.xlu0 %1912
        %v1914 = vrcp.pop %v1910
        %v1915 = vmul.f32 %v1910, %v1914
        %v1916 = vsub.f32 1.0, %v1915
        %v1917 = vmul.f32 %v1914, %v1916
        %v1918 = vadd.f32 %v1914, %v1917
        %vm1919 = vweird.f32 %v1910
        %vm1920 = vweird.f32 %v1914
        %vm1921 = vmor %vm1919, %vm1920
        %v1922 = vsel %vm1921, %v1914, %v1918
        %v1923 = vand.u32 2147483647, %v1910
        %vm1924 = vcmp.eq.f32.partialorder %v1923, 8.507059e+37
        %v1925 = vand.u32 %v1910, 2147483648
        %v1926 = vor.u32 1.1754944e-38, %v1925
        %v1927 = vsel %vm1924, %v1926, %v1922
        %v1928 = vrcp.pop %v1913
        %v1929 = vmul.f32 %v1913, %v1928
        %v1930 = vsub.f32 1.0, %v1929
        %v1931 = vmul.f32 %v1928, %v1930
        %v1932 = vadd.f32 %v1928, %v1931
        %vm1933 = vweird.f32 %v1913
        %vm1934 = vweird.f32 %v1928
        %vm1935 = vmor %vm1933, %vm1934
        %v1936 = vsel %vm1935, %v1928, %v1932
        %v1937 = vand.u32 2147483647, %v1913
        %vm1938 = vcmp.eq.f32.partialorder %v1937, 8.507059e+37
        %v1939 = vand.u32 %v1913, 2147483648
        %v1940 = vor.u32 1.1754944e-38, %v1939
        %v1941 = vsel %vm1938, %v1940, %v1936
        %v1942 = vmul.f32 %v1905, %v1927
        %v1943 = vmul.f32 %v1907, %v1941
        %v1944 = vpack.c.bf16 %v1943, %v1942
        %1945 = vrot.lane.b32.xlu0 %v1667, 104
        %v1946 = vpop.permute.xlu0 %1945
        %v1949 = vsel %vm1195, %v1944, 0
        %1951 = vmatpush.bf16.msra.mxu0 0
        %1952 = vmatpush.bf16.msra.mxu0 0
        %1953 = vmatpush.bf16.msra.mxu0 0
        %1954 = vmatpush.bf16.msra.mxu0 0
        %1955 = vmatpush.bf16.msra.mxu0 0
        %1956 = vmatpush.bf16.msra.mxu0 0
        %1957 = vmatpush.bf16.msra.mxu0 0
        %1958 = vmatpush.bf16.msra.mxu0 %v1946
        %1959 = vmatmul.bf16.gmra.mxu0 %v1949
        %v1960 = vpop.f32.mrf.mxu0
        %v1961 = vadd.f32 0.0, %v1960
        %v1962 = vpop.f32.mrf.mxu0
        %v1963 = vadd.f32 0.0, %v1962
        %1964 = vdwg.mxu0
        %1967 = vrot.lane.b32.xlu0 %v1775, 8
        %v1968 = vpop.permute.xlu0 %1967
        %1969 = vrot.lane.b32.xlu0 %v1777, 8
        %v1970 = vpop.permute.xlu0 %1969
        %1975 = vrot.lane.b32.xlu0 %v1868, 16
        %v1976 = vpop.permute.xlu0 %1975
        %1977 = vrot.lane.b32.xlu0 %v1870, 16
        %v1978 = vpop.permute.xlu0 %1977
        %1983 = vrot.lane.b32.xlu0 %v1961, 24
        %v1984 = vpop.permute.xlu0 %1983
        %1985 = vrot.lane.b32.xlu0 %v1963, 24
        %v1986 = vpop.permute.xlu0 %1985
        %v1989 = vsel %vm1174, %v1682, %v1968
        %v1990 = vsel %vm1174, %v1684, %v1970
        %v1991 = vsel %vm1195, %v1989, %v1976
        %v1992 = vsel %vm1195, %v1990, %v1978
        %v1993 = vsel %vm1575, %v1991, %v1984
        %v1994 = vsel %vm1575, %v1992, %v1986
        %v1995 = vpack.c.bf16 %v1577, %v1576
        %v1996 = vpack.c.bf16 %v1994, %v1993
        %v1997 = vld [vmem:[#allocation7] sm:$0xf]
        %v1998 = vld [vmem:[#allocation7 + $0x4] sm:$0xf]
        %v1999 = vld [vmem:[#allocation7 + $0x8] sm:$0xf]
        %v2000 = vld [vmem:[#allocation7 + $0xc] sm:$0xf]
        %v2001 = vld [vmem:[#allocation8] sm:$0x1]
        %v2003 = vperm.slane %v2001, 0
        %v2009 = vunpack.c.l.b16 %v1997
        %v2010 = vunpack.c.l.b16 %v1998
        %v2011 = vunpack.c.l.b16 %v1999
        %v2012 = vunpack.c.l.b16 %v2000
        %v2013 = vpack.c.b16 %v2010, %v2009
        %v2014 = vpack.c.b16 %v2012, %v2011
        %v2018 = vsel %vm1048, %v1995, 0
        %v2021 = vsel %vm1048, %v1996, 0
        %2023 = vmatpush.bf16.msra.mxu0 0
        %2024 = vmatpush.bf16.msra.mxu0 0
        %2025 = vmatpush.bf16.msra.mxu0 0
        %2026 = vmatpush.bf16.msra.mxu0 0
        %2027 = vmatpush.bf16.msra.mxu0 0
        %2028 = vmatpush.bf16.msra.mxu0 0
        %2029 = vmatpush.bf16.msra.mxu0 %v2014
        %2030 = vmatpush.bf16.msra.mxu0 %v2013
        %2031 = vmatmul.bf16.gmra.mxu0 %v2018
        %v2032 = vpop.f32.mrf.mxu0
        %v2033 = vadd.f32 %v2003, %v2032
        %v2034 = vpop.f32.mrf.mxu0
        %v2035 = vadd.f32 %v2003, %v2034
        %2036 = vmatmul.bf16.gmra.mxu0 %v2021
        %v2037 = vpop.f32.mrf.mxu0
        %v2038 = vadd.f32 %v2003, %v2037
        %v2039 = vpop.f32.mrf.mxu0
        %v2040 = vadd.f32 %v2003, %v2039
        %2041 = vdwg.mxu0
        %v2042 = vadd.f32 %v824, %v2033
        %v2043 = vadd.f32 %v825, %v2035
        %v2044 = vadd.f32 %v827, %v2038
        %v2045 = vadd.f32 %v828, %v2040
        %v2046 = vld [vmem:[#allocation10] sm:$0x1]
        %v2047 = vld [vmem:[#allocation11] sm:$0x1]
        %v2048 = vsel %vm1048, %v2042, 0.0
        %2049 = vadd.xlane.f32.xlu0 %v2048
        %v2050 = vpop.xlane.xlu0 %2049
        %v2051 = vsel %vm1048, %v2043, 0.0
        %2052 = vadd.xlane.f32.xlu0 %v2051
        %v2053 = vpop.xlane.xlu0 %2052
        %v2054 = vsel %vm1048, %v2044, 0.0
        %2055 = vadd.xlane.f32.xlu0 %v2054
        %v2056 = vpop.xlane.xlu0 %2055
        %v2057 = vsel %vm1048, %v2045, 0.0
        %2058 = vadd.xlane.f32.xlu0 %v2057
        %v2059 = vpop.xlane.xlu0 %2058
        %v2060 = vrcp.pop 32.0
        %v2061 = vmul.f32 32.0, %v2060
        %v2062 = vsub.f32 1.0, %v2061
        %v2063 = vmul.f32 %v2060, %v2062
        %v2064 = vadd.f32 %v2060, %v2063
        %vm2065 = vweird.f32 %v2060
        %v2066 = vsel %vm2065, %v2060, %v2064
        %v2067 = vmul.f32 %v2050, %v2066
        %v2068 = vmul.f32 %v2053, %v2066
        %v2069 = vmul.f32 %v2056, %v2066
        %v2070 = vmul.f32 %v2059, %v2066
        %v2071 = vsub.f32 %v2042, %v2067
        %v2072 = vsub.f32 %v2043, %v2068
        %v2073 = vsub.f32 %v2044, %v2069
        %v2074 = vsub.f32 %v2045, %v2070
        %v2075 = vmul.f32 %v2071, %v2071
        %v2076 = vmul.f32 %v2072, %v2072
        %v2077 = vmul.f32 %v2073, %v2073
        %v2078 = vmul.f32 %v2074, %v2074
        %v2079 = vsel %vm1048, %v2075, 0.0
        %2080 = vadd.xlane.f32.xlu0 %v2079
        %v2081 = vpop.xlane.xlu0 %2080
        %v2082 = vsel %vm1048, %v2076, 0.0
        %2083 = vadd.xlane.f32.xlu0 %v2082
        %v2084 = vpop.xlane.xlu0 %2083
        %v2085 = vsel %vm1048, %v2077, 0.0
        %2086 = vadd.xlane.f32.xlu0 %v2085
        %v2087 = vpop.xlane.xlu0 %2086
        %v2088 = vsel %vm1048, %v2078, 0.0
        %2089 = vadd.xlane.f32.xlu0 %v2088
        %v2090 = vpop.xlane.xlu0 %2089
        %v2091 = vmul.f32 %v2081, %v2066
        %v2092 = vmul.f32 %v2084, %v2066
        %v2093 = vmul.f32 %v2087, %v2066
        %v2094 = vmul.f32 %v2090, %v2066
        %v2095 = vadd.f32 %v2091, 1e-05
        %v2096 = vadd.f32 %v2092, 1e-05
        %v2097 = vadd.f32 %v2093, 1e-05
        %v2098 = vadd.f32 %v2094, 1e-05
        %v2099 = vrsqrt.pop %v2095
        %v2100 = vmul.f32 %v2099, %v2095
        %v2101 = vmul.f32 %v2100, %v2099
        %v2102 = vmul.f32 0.5, %v2101
        %v2103 = vsub.f32 1.5, %v2102
        %v2104 = vmul.f32 %v2099, %v2103
        %vm2105 = vweird.f32 %v2095
        %vm2106 = vweird.f32 %v2099
        %vm2107 = vmor %vm2105, %vm2106
        %v2108 = vsel %vm2107, %v2099, %v2104
        %v2109 = vrsqrt.pop %v2096
        %v2110 = vmul.f32 %v2109, %v2096
        %v2111 = vmul.f32 %v2110, %v2109
        %v2112 = vmul.f32 0.5, %v2111
        %v2113 = vsub.f32 1.5, %v2112
        %v2114 = vmul.f32 %v2109, %v2113
        %vm2115 = vweird.f32 %v2096
        %vm2116 = vweird.f32 %v2109
        %vm2117 = vmor %vm2115, %vm2116
        %v2118 = vsel %vm2117, %v2109, %v2114
        %v2119 = vrsqrt.pop %v2097
        %v2120 = vmul.f32 %v2119, %v2097
        %v2121 = vmul.f32 %v2120, %v2119
        %v2122 = vmul.f32 0.5, %v2121
        %v2123 = vsub.f32 1.5, %v2122
        %v2124 = vmul.f32 %v2119, %v2123
        %vm2125 = vweird.f32 %v2097
        %vm2126 = vweird.f32 %v2119
        %vm2127 = vmor %vm2125, %vm2126
        %v2128 = vsel %vm2127, %v2119, %v2124
        %v2129 = vrsqrt.pop %v2098
        %v2130 = vmul.f32 %v2129, %v2098
        %v2131 = vmul.f32 %v2130, %v2129
        %v2132 = vmul.f32 0.5, %v2131
        %v2133 = vsub.f32 1.5, %v2132
        %v2134 = vmul.f32 %v2129, %v2133
        %vm2135 = vweird.f32 %v2098
        %vm2136 = vweird.f32 %v2129
        %vm2137 = vmor %vm2135, %vm2136
        %v2138 = vsel %vm2137, %v2129, %v2134
        %v2139 = vmul.f32 %v2071, %v2108
        %v2140 = vmul.f32 %v2072, %v2118
        %v2141 = vmul.f32 %v2073, %v2128
        %v2142 = vmul.f32 %v2074, %v2138
        %v2144 = vperm.slane %v2046, 0
        %v2146 = vmul.f32 %v2139, %v2144
        %v2147 = vmul.f32 %v2140, %v2144
        %v2148 = vmul.f32 %v2141, %v2144
        %v2149 = vmul.f32 %v2142, %v2144
        %v2151 = vperm.slane %v2047, 0
        %v2153 = vadd.f32 %v2146, %v2151
        %v2154 = vadd.f32 %v2147, %v2151
        %v2155 = vadd.f32 %v2148, %v2151
        %v2156 = vadd.f32 %v2149, %v2151
        %v2157 = vpack.c.bf16 %v2154, %v2153
        %v2158 = vpack.c.bf16 %v2156, %v2155
        %v2159 = vld [vmem:[#allocation13] sm:$0xf]
        %v2160 = vld [vmem:[#allocation13 + $0x4] sm:$0xf]
        %v2161 = vld [vmem:[#allocation13 + $0x8] sm:$0xf]
        %v2162 = vld [vmem:[#allocation13 + $0xc] sm:$0xf]
        %v2163 = vld [vmem:[#allocation14] sm:$0x1]
        %v2165 = vperm.slane %v2163, 0
        %v2171 = vunpack.c.l.b16 %v2159
        %v2172 = vunpack.c.l.b16 %v2160
        %v2173 = vunpack.c.l.b16 %v2161
        %v2174 = vunpack.c.l.b16 %v2162
        %v2175 = vpack.c.b16 %v2172, %v2171
        %v2176 = vpack.c.b16 %v2174, %v2173
        %v2180 = vsel %vm1048, %v2157, 0
        %v2183 = vsel %vm1048, %v2158, 0
        %2185 = vmatpush.bf16.msra.mxu0 0
        %2186 = vmatpush.bf16.msra.mxu0 0
        %2187 = vmatpush.bf16.msra.mxu0 0
        %2188 = vmatpush.bf16.msra.mxu0 0
        %2189 = vmatpush.bf16.msra.mxu0 0
        %2190 = vmatpush.bf16.msra.mxu0 0
        %2191 = vmatpush.bf16.msra.mxu0 %v2176
        %2192 = vmatpush.bf16.msra.mxu0 %v2175
        %2193 = vmatmul.bf16.gmra.mxu0 %v2180
        %v2194 = vpop.f32.mrf.mxu0
        %v2195 = vadd.f32 %v2165, %v2194
        %v2196 = vpop.f32.mrf.mxu0
        %v2197 = vadd.f32 %v2165, %v2196
        %2198 = vmatmul.bf16.gmra.mxu0 %v2183
        %v2199 = vpop.f32.mrf.mxu0
        %v2200 = vadd.f32 %v2165, %v2199
        %v2201 = vpop.f32.mrf.mxu0
        %v2202 = vadd.f32 %v2165, %v2201
        %2203 = vdwg.mxu0
        %v2204 = vmax.f32 %v2195, 0.0
        %v2205 = vmax.f32 %v2197, 0.0
        %v2206 = vmax.f32 %v2200, 0.0
        %v2207 = vmax.f32 %v2202, 0.0
        %v2208 = vpack.c.bf16 %v2205, %v2204
        %v2209 = vpack.c.bf16 %v2207, %v2206
        %v2210 = vld [vmem:[%s15] sm:$0xf]
        %v2211 = vld [vmem:[%s15 + $0x4] sm:$0xf]
        %v2212 = vld [vmem:[%s15 + $0x8] sm:$0xf]
        %v2213 = vld [vmem:[%s15 + $0xc] sm:$0xf]
        %v2214 = vld [vmem:[%s15 + $0x10] sm:$0xf]
        %v2215 = vld [vmem:[%s15 + $0x14] sm:$0xf]
        %v2216 = vld [vmem:[%s15 + $0x18] sm:$0xf]
        %v2217 = vld [vmem:[%s15 + $0x1c] sm:$0xf]
        %v2218 = vld [vmem:[#allocation16] sm:$0x1]
        %v2220 = vperm.slane %v2218, 0
        %v2230 = vunpack.c.l.b16 %v2210
        %v2231 = vunpack.c.l.b16 %v2211
        %v2232 = vunpack.c.l.b16 %v2212
        %v2233 = vunpack.c.l.b16 %v2213
        %v2234 = vunpack.c.l.b16 %v2214
        %v2235 = vunpack.c.l.b16 %v2215
        %v2236 = vunpack.c.l.b16 %v2216
        %v2237 = vunpack.c.l.b16 %v2217
        %v2238 = vpack.c.b16 %v2231, %v2230
        %v2239 = vpack.c.b16 %v2233, %v2232
        %v2240 = vpack.c.b16 %v2235, %v2234
        %v2241 = vpack.c.b16 %v2237, %v2236
        %vm2246 = vcmask 523264
        %v2248 = vsel %vm2246, %v2208, 0
        %v2251 = vsel %vm2246, %v2209, 0
        %2253 = vmatpush.bf16.msra.mxu0 0
        %2254 = vmatpush.bf16.msra.mxu0 0
        %2255 = vmatpush.bf16.msra.mxu0 0
        %2256 = vmatpush.bf16.msra.mxu0 0
        %2257 = vmatpush.bf16.msra.mxu0 %v2241
        %2258 = vmatpush.bf16.msra.mxu0 %v2240
        %2259 = vmatpush.bf16.msra.mxu0 %v2239
        %2260 = vmatpush.bf16.msra.mxu0 %v2238
        %2261 = vmatmul.bf16.gmra.mxu0 %v2248
        %v2262 = vpop.f32.mrf.mxu0
        %v2263 = vadd.f32 %v2220, %v2262
        %v2264 = vpop.f32.mrf.mxu0
        %v2265 = vadd.f32 %v2220, %v2264
        %2266 = vmatmul.bf16.gmra.mxu0 %v2251
        %v2267 = vpop.f32.mrf.mxu0
        %v2268 = vadd.f32 %v2220, %v2267
        %v2269 = vpop.f32.mrf.mxu0
        %v2270 = vadd.f32 %v2220, %v2269
        %2271 = vdwg.mxu0
        %v2272 = vadd.f32 %v2153, %v2263
        %v2273 = vadd.f32 %v2154, %v2265
        %v2274 = vadd.f32 %v2155, %v2268
        %v2275 = vadd.f32 %v2156, %v2270
        %v2276 = vld [vmem:[#allocation17] sm:$0x1]
        %v2277 = vld [vmem:[%s18] sm:$0x1]
        %v2278 = vsel %vm1048, %v2272, 0.0
        %2279 = vadd.xlane.f32.xlu0 %v2278
        %v2280 = vpop.xlane.xlu0 %2279
        %v2281 = vsel %vm1048, %v2273, 0.0
        %2282 = vadd.xlane.f32.xlu0 %v2281
        %v2283 = vpop.xlane.xlu0 %2282
        %v2284 = vsel %vm1048, %v2274, 0.0
        %2285 = vadd.xlane.f32.xlu0 %v2284
        %v2286 = vpop.xlane.xlu0 %2285
        %v2287 = vsel %vm1048, %v2275, 0.0
        %2288 = vadd.xlane.f32.xlu0 %v2287
        %v2289 = vpop.xlane.xlu0 %2288
        %v2290 = vmul.f32 %v2280, %v2066
        %v2291 = vmul.f32 %v2283, %v2066
        %v2292 = vmul.f32 %v2286, %v2066
        %v2293 = vmul.f32 %v2289, %v2066
        %v2294 = vsub.f32 %v2272, %v2290
        %v2295 = vsub.f32 %v2273, %v2291
        %v2296 = vsub.f32 %v2274, %v2292
        %v2297 = vsub.f32 %v2275, %v2293
        %v2298 = vmul.f32 %v2294, %v2294
        %v2299 = vmul.f32 %v2295, %v2295
        %v2300 = vmul.f32 %v2296, %v2296
        %v2301 = vmul.f32 %v2297, %v2297
        %v2302 = vsel %vm1048, %v2298, 0.0
        %2303 = vadd.xlane.f32.xlu0 %v2302
        %v2304 = vpop.xlane.xlu0 %2303
        %v2305 = vsel %vm1048, %v2299, 0.0
        %2306 = vadd.xlane.f32.xlu0 %v2305
        %v2307 = vpop.xlane.xlu0 %2306
        %v2308 = vsel %vm1048, %v2300, 0.0
        %2309 = vadd.xlane.f32.xlu0 %v2308
        %v2310 = vpop.xlane.xlu0 %2309
        %v2311 = vsel %vm1048, %v2301, 0.0
        %2312 = vadd.xlane.f32.xlu0 %v2311
        %v2313 = vpop.xlane.xlu0 %2312
        %v2314 = vmul.f32 %v2304, %v2066
        %v2315 = vmul.f32 %v2307, %v2066
        %v2316 = vmul.f32 %v2310, %v2066
        %v2317 = vmul.f32 %v2313, %v2066
        %v2318 = vadd.f32 %v2314, 1e-05
        %v2319 = vadd.f32 %v2315, 1e-05
        %v2320 = vadd.f32 %v2316, 1e-05
        %v2321 = vadd.f32 %v2317, 1e-05
        %v2322 = vrsqrt.pop %v2318
        %v2323 = vmul.f32 %v2322, %v2318
        %v2324 = vmul.f32 %v2323, %v2322
        %v2325 = vmul.f32 0.5, %v2324
        %v2326 = vsub.f32 1.5, %v2325
        %v2327 = vmul.f32 %v2322, %v2326
        %vm2328 = vweird.f32 %v2318
        %vm2329 = vweird.f32 %v2322
        %vm2330 = vmor %vm2328, %vm2329
        %v2331 = vsel %vm2330, %v2322, %v2327
        %v2332 = vrsqrt.pop %v2319
        %v2333 = vmul.f32 %v2332, %v2319
        %v2334 = vmul.f32 %v2333, %v2332
        %v2335 = vmul.f32 0.5, %v2334
        %v2336 = vsub.f32 1.5, %v2335
        %v2337 = vmul.f32 %v2332, %v2336
        %vm2338 = vweird.f32 %v2319
        %vm2339 = vweird.f32 %v2332
        %vm2340 = vmor %vm2338, %vm2339
        %v2341 = vsel %vm2340, %v2332, %v2337
        %v2342 = vrsqrt.pop %v2320
        %v2343 = vmul.f32 %v2342, %v2320
        %v2344 = vmul.f32 %v2343, %v2342
        %v2345 = vmul.f32 0.5, %v2344
        %v2346 = vsub.f32 1.5, %v2345
        %v2347 = vmul.f32 %v2342, %v2346
        %vm2348 = vweird.f32 %v2320
        %vm2349 = vweird.f32 %v2342
        %vm2350 = vmor %vm2348, %vm2349
        %v2351 = vsel %vm2350, %v2342, %v2347
        %v2352 = vrsqrt.pop %v2321
        %v2353 = vmul.f32 %v2352, %v2321
        %v2354 = vmul.f32 %v2353, %v2352
        %v2355 = vmul.f32 0.5, %v2354
        %v2356 = vsub.f32 1.5, %v2355
        %v2357 = vmul.f32 %v2352, %v2356
        %vm2358 = vweird.f32 %v2321
        %vm2359 = vweird.f32 %v2352
        %vm2360 = vmor %vm2358, %vm2359
        %v2361 = vsel %vm2360, %v2352, %v2357
        %v2362 = vmul.f32 %v2294, %v2331
        %v2363 = vmul.f32 %v2295, %v2341
        %v2364 = vmul.f32 %v2296, %v2351
        %v2365 = vmul.f32 %v2297, %v2361
        %v2367 = vperm.slane %v2276, 0
        %v2369 = vmul.f32 %v2362, %v2367
        %v2370 = vmul.f32 %v2363, %v2367
        %v2371 = vmul.f32 %v2364, %v2367
        %v2372 = vmul.f32 %v2365, %v2367
        %v2374 = vperm.slane %v2277, 0
        %v2376 = vadd.f32 %v2369, %v2374
        %v2377 = vadd.f32 %v2370, %v2374
        %v2378 = vadd.f32 %v2371, %v2374
        %v2379 = vadd.f32 %v2372, %v2374
        %v2380 = vadd.f32 %v2376, %v829
        %v2381 = vadd.f32 %v2377, %v830
        %v2382 = vadd.f32 %v2378, %v832
        %v2383 = vadd.f32 %v2379, %v833
        %v2384 = vpack.c.bf16 %v2381, %v2380
        %v2385 = vpack.c.bf16 %v2383, %v2382
        %v2386 = vpack.c.bf16 %v2377, %v2376
        %v2387 = vpack.c.bf16 %v2379, %v2378
        %s2388 = scalar_lea.vmem %s3, 16
        %v2389 = vld [vmem:[%s2388] sm:$0xf]
        %v2390 = vld [vmem:[%s2388 + $0x4] sm:$0xf]
        %v2391 = vld [vmem:[%s2388 + $0x8] sm:$0xf]
        %v2392 = vld [vmem:[%s2388 + $0xc] sm:$0xf]
        %s2393 = scalar_lea.vmem %s4, 1
        %v2394 = vld [vmem:[%s2393] sm:$0x1]
        %v2396 = vperm.slane %v2394, 0
        %v2402 = vunpack.c.l.b16 %v2389
        %v2403 = vunpack.c.l.b16 %v2390
        %v2404 = vunpack.c.l.b16 %v2391
        %v2405 = vunpack.c.l.b16 %v2392
        %v2406 = vpack.c.b16 %v2403, %v2402
        %v2407 = vpack.c.b16 %v2405, %v2404
        %v2411 = vsel %vm1048, %v2384, 0
        %v2414 = vsel %vm1048, %v2385, 0
        %2416 = vmatpush.bf16.msra.mxu0 0
        %2417 = vmatpush.bf16.msra.mxu0 0
        %2418 = vmatpush.bf16.msra.mxu0 0
        %2419 = vmatpush.bf16.msra.mxu0 0
        %2420 = vmatpush.bf16.msra.mxu0 0
        %2421 = vmatpush.bf16.msra.mxu0 0
        %2422 = vmatpush.bf16.msra.mxu0 %v2407
        %2423 = vmatpush.bf16.msra.mxu0 %v2406
        %2424 = vmatmul.bf16.gmra.mxu0 %v2411
        %v2425 = vpop.f32.mrf.mxu0
        %v2426 = vadd.f32 %v2396, %v2425
        %v2427 = vpop.f32.mrf.mxu0
        %v2428 = vadd.f32 %v2396, %v2427
        %2429 = vmatmul.bf16.gmra.mxu0 %v2414
        %v2430 = vpop.f32.mrf.mxu0
        %v2431 = vadd.f32 %v2396, %v2430
        %v2432 = vpop.f32.mrf.mxu0
        %v2433 = vadd.f32 %v2396, %v2432
        %2434 = vdwg.mxu0
        %s2435 = scalar_lea.vmem [#allocation2], 16
        %v2436 = vld [vmem:[%s2435] sm:$0xf]
        %v2437 = vld [vmem:[%s2435 + $0x4] sm:$0xf]
        %v2438 = vld [vmem:[%s2435 + $0x8] sm:$0xf]
        %v2439 = vld [vmem:[%s2435 + $0xc] sm:$0xf]
        %s2440 = scalar_lea.vmem %s6, 1
        %v2441 = vld [vmem:[%s2440] sm:$0x1]
        %v2443 = vperm.slane %v2441, 0
        %v2449 = vunpack.c.l.b16 %v2436
        %v2450 = vunpack.c.l.b16 %v2437
        %v2451 = vunpack.c.l.b16 %v2438
        %v2452 = vunpack.c.l.b16 %v2439
        %v2453 = vpack.c.b16 %v2450, %v2449
        %v2454 = vpack.c.b16 %v2452, %v2451
        %2457 = vmatpush.bf16.msra.mxu0 0
        %2458 = vmatpush.bf16.msra.mxu0 0
        %2459 = vmatpush.bf16.msra.mxu0 0
        %2460 = vmatpush.bf16.msra.mxu0 0
        %2461 = vmatpush.bf16.msra.mxu0 0
        %2462 = vmatpush.bf16.msra.mxu0 0
        %2463 = vmatpush.bf16.msra.mxu0 %v2454
        %2464 = vmatpush.bf16.msra.mxu0 %v2453
        %2465 = vmatmul.bf16.gmra.mxu0 %v2411
        %v2466 = vpop.f32.mrf.mxu0
        %v2467 = vadd.f32 %v2443, %v2466
        %v2468 = vpop.f32.mrf.mxu0
        %v2469 = vadd.f32 %v2443, %v2468
        %2470 = vmatmul.bf16.gmra.mxu0 %v2414
        %v2471 = vpop.f32.mrf.mxu0
        %v2472 = vadd.f32 %v2443, %v2471
        %v2473 = vpop.f32.mrf.mxu0
        %v2474 = vadd.f32 %v2443, %v2473
        %2475 = vdwg.mxu0
        %s2476 = scalar_lea.vmem [#allocation5], 16
        %v2477 = vld [vmem:[%s2476] sm:$0xf]
        %v2478 = vld [vmem:[%s2476 + $0x4] sm:$0xf]
        %v2479 = vld [vmem:[%s2476 + $0x8] sm:$0xf]
        %v2480 = vld [vmem:[%s2476 + $0xc] sm:$0xf]
        %s2481 = scalar_lea.vmem %s8, 1
        %v2482 = vld [vmem:[%s2481] sm:$0x1]
        %v2484 = vperm.slane %v2482, 0
        %v2490 = vunpack.c.l.b16 %v2477
        %v2491 = vunpack.c.l.b16 %v2478
        %v2492 = vunpack.c.l.b16 %v2479
        %v2493 = vunpack.c.l.b16 %v2480
        %v2494 = vpack.c.b16 %v2491, %v2490
        %v2495 = vpack.c.b16 %v2493, %v2492
        %v2499 = vsel %vm1048, %v2386, 0
        %v2502 = vsel %vm1048, %v2387, 0
        %2504 = vmatpush.bf16.msra.mxu0 0
        %2505 = vmatpush.bf16.msra.mxu0 0
        %2506 = vmatpush.bf16.msra.mxu0 0
        %2507 = vmatpush.bf16.msra.mxu0 0
        %2508 = vmatpush.bf16.msra.mxu0 0
        %2509 = vmatpush.bf16.msra.mxu0 0
        %2510 = vmatpush.bf16.msra.mxu0 %v2495
        %2511 = vmatpush.bf16.msra.mxu0 %v2494
        %2512 = vmatmul.bf16.gmra.mxu0 %v2499
        %v2513 = vpop.f32.mrf.mxu0
        %v2514 = vadd.f32 %v2484, %v2513
        %v2515 = vpop.f32.mrf.mxu0
        %v2516 = vadd.f32 %v2484, %v2515
        %2517 = vmatmul.bf16.gmra.mxu0 %v2502
        %v2518 = vpop.f32.mrf.mxu0
        %v2519 = vadd.f32 %v2484, %v2518
        %v2520 = vpop.f32.mrf.mxu0
        %v2521 = vadd.f32 %v2484, %v2520
        %2522 = vdwg.mxu0
        %v2523 = vpack.c.bf16 %v2426, %v2426
        %v2524 = vpack.c.bf16 %v2428, %v2428
        %v2525 = vpack.c.bf16 %v2467, %v2467
        %v2526 = vpack.c.bf16 %v2469, %v2469
        %v2527 = vpack.c.bf16 %v2514, %v2514
        %v2528 = vpack.c.bf16 %v2516, %v2516
        %v2531 = vunpack.c.l.b16 %v2523
        %v2532 = vunpack.c.l.b16 %v2524
        %v2533 = vpack.c.b16 %v2532, %v2531
        %v2536 = vunpack.c.l.b16 %v2525
        %v2537 = vunpack.c.l.b16 %v2526
        %v2538 = vpack.c.b16 %v2537, %v2536
        %v2540 = vsel %vm1174, %v2533, 0
        %v2543 = vsel %vm1174, %v2538, 0
        %2545 = vmatpush.bf16.xpose.msra.mxu0 0
        %2546 = vmatpush.bf16.xpose.msra.mxu0 0
        %2547 = vmatpush.bf16.xpose.msra.mxu0 0
        %2548 = vmatpush.bf16.xpose.msra.mxu0 0
        %2549 = vmatpush.bf16.xpose.msra.mxu0 0
        %2550 = vmatpush.bf16.xpose.msra.mxu0 0
        %2551 = vmatpush.bf16.xpose.msra.mxu0 0
        %2552 = vmatpush.bf16.xpose.msra.mxu0 %v2543
        %2553 = vmatmul.bf16.gmra.mxu0 %v2540
        %v2554 = vpop.f32.mrf.mxu0
        %v2555 = vadd.f32 %v1006, %v2554
        %v2556 = vpop.f32.mrf.mxu0
        %v2557 = vadd.f32 %v1007, %v2556
        %2558 = vdwg.mxu0
        %v2559 = vsel %vm1195, %v2555, -inf
        %2560 = vmax.xlane.f32.xlu0 %v2559
        %v2561 = vpop.xlane.xlu0 %2560
        %v2562 = vsel %vm1195, %v2557, -inf
        %2563 = vmax.xlane.f32.xlu0 %v2562
        %v2564 = vpop.xlane.xlu0 %2563
        %v2565 = vsub.f32 %v2555, %v2561
        %v2566 = vsub.f32 %v2557, %v2564
        %v2567 = vmul.f32 %v2565, 1.442695
        %v2568 = vpow.pop %v2567
        %v2569 = vmul.f32 %v2566, 1.442695
        %v2570 = vpow.pop %v2569
        %v2571 = vsel %vm1195, %v2568, 0.0
        %2572 = vadd.xlane.f32.xlu0 %v2571
        %v2573 = vpop.xlane.xlu0 %2572
        %v2574 = vsel %vm1195, %v2570, 0.0
        %2575 = vadd.xlane.f32.xlu0 %v2574
        %v2576 = vpop.xlane.xlu0 %2575
        %v2577 = vrcp.pop %v2573
        %v2578 = vmul.f32 %v2573, %v2577
        %v2579 = vsub.f32 1.0, %v2578
        %v2580 = vmul.f32 %v2577, %v2579
        %v2581 = vadd.f32 %v2577, %v2580
        %vm2582 = vweird.f32 %v2573
        %vm2583 = vweird.f32 %v2577
        %vm2584 = vmor %vm2582, %vm2583
        %v2585 = vsel %vm2584, %v2577, %v2581
        %v2586 = vand.u32 2147483647, %v2573
        %vm2587 = vcmp.eq.f32.partialorder %v2586, 8.507059e+37
        %v2588 = vand.u32 %v2573, 2147483648
        %v2589 = vor.u32 1.1754944e-38, %v2588
        %v2590 = vsel %vm2587, %v2589, %v2585
        %v2591 = vrcp.pop %v2576
        %v2592 = vmul.f32 %v2576, %v2591
        %v2593 = vsub.f32 1.0, %v2592
        %v2594 = vmul.f32 %v2591, %v2593
        %v2595 = vadd.f32 %v2591, %v2594
        %vm2596 = vweird.f32 %v2576
        %vm2597 = vweird.f32 %v2591
        %vm2598 = vmor %vm2596, %vm2597
        %v2599 = vsel %vm2598, %v2591, %v2595
        %v2600 = vand.u32 2147483647, %v2576
        %vm2601 = vcmp.eq.f32.partialorder %v2600, 8.507059e+37
        %v2602 = vand.u32 %v2576, 2147483648
        %v2603 = vor.u32 1.1754944e-38, %v2602
        %v2604 = vsel %vm2601, %v2603, %v2599
        %v2605 = vmul.f32 %v2568, %v2590
        %v2606 = vmul.f32 %v2570, %v2604
        %v2607 = vpack.c.bf16 %v2606, %v2605
        %v2610 = vunpack.c.l.b16 %v2527
        %v2611 = vunpack.c.l.b16 %v2528
        %v2612 = vpack.c.b16 %v2611, %v2610
        %v2615 = vsel %vm1195, %v2607, 0
        %2617 = vmatpush.bf16.msra.mxu0 0
        %2618 = vmatpush.bf16.msra.mxu0 0
        %2619 = vmatpush.bf16.msra.mxu0 0
        %2620 = vmatpush.bf16.msra.mxu0 0
        %2621 = vmatpush.bf16.msra.mxu0 0
        %2622 = vmatpush.bf16.msra.mxu0 0
        %2623 = vmatpush.bf16.msra.mxu0 0
        %2624 = vmatpush.bf16.msra.mxu0 %v2612
        %2625 = vmatmul.bf16.gmra.mxu0 %v2615
        %v2626 = vpop.f32.mrf.mxu0
        %v2627 = vadd.f32 0.0, %v2626
        %v2628 = vpop.f32.mrf.mxu0
        %v2629 = vadd.f32 0.0, %v2628
        %2630 = vdwg.mxu0
        %2631 = vrot.lane.b32.xlu0 %v2533, 120
        %v2632 = vpop.permute.xlu0 %2631
        %2633 = vrot.lane.b32.xlu0 %v2538, 120
        %v2634 = vpop.permute.xlu0 %2633
        %v2636 = vsel %vm1174, %v2632, 0
        %v2639 = vsel %vm1174, %v2634, 0
        %2641 = vmatpush.bf16.xpose.msra.mxu0 0
        %2642 = vmatpush.bf16.xpose.msra.mxu0 0
        %2643 = vmatpush.bf16.xpose.msra.mxu0 0
        %2644 = vmatpush.bf16.xpose.msra.mxu0 0
        %2645 = vmatpush.bf16.xpose.msra.mxu0 0
        %2646 = vmatpush.bf16.xpose.msra.mxu0 0
        %2647 = vmatpush.bf16.xpose.msra.mxu0 0
        %2648 = vmatpush.bf16.xpose.msra.mxu0 %v2639
        %2649 = vmatmul.bf16.gmra.mxu0 %v2636
        %v2650 = vpop.f32.mrf.mxu0
        %v2651 = vadd.f32 %v1006, %v2650
        %v2652 = vpop.f32.mrf.mxu0
        %v2653 = vadd.f32 %v1007, %v2652
        %2654 = vdwg.mxu0
        %v2655 = vsel %vm1195, %v2651, -inf
        %2656 = vmax.xlane.f32.xlu0 %v2655
        %v2657 = vpop.xlane.xlu0 %2656
        %v2658 = vsel %vm1195, %v2653, -inf
        %2659 = vmax.xlane.f32.xlu0 %v2658
        %v2660 = vpop.xlane.xlu0 %2659
        %v2661 = vsub.f32 %v2651, %v2657
        %v2662 = vsub.f32 %v2653, %v2660
        %v2663 = vmul.f32 %v2661, 1.442695
        %v2664 = vpow.pop %v2663
        %v2665 = vmul.f32 %v2662, 1.442695
        %v2666 = vpow.pop %v2665
        %v2667 = vsel %vm1195, %v2664, 0.0
        %2668 = vadd.xlane.f32.xlu0 %v2667
        %v2669 = vpop.xlane.xlu0 %2668
        %v2670 = vsel %vm1195, %v2666, 0.0
        %2671 = vadd.xlane.f32.xlu0 %v2670
        %v2672 = vpop.xlane.xlu0 %2671
        %v2673 = vrcp.pop %v2669
        %v2674 = vmul.f32 %v2669, %v2673
        %v2675 = vsub.f32 1.0, %v2674
        %v2676 = vmul.f32 %v2673, %v2675
        %v2677 = vadd.f32 %v2673, %v2676
        %vm2678 = vweird.f32 %v2669
        %vm2679 = vweird.f32 %v2673
        %vm2680 = vmor %vm2678, %vm2679
        %v2681 = vsel %vm2680, %v2673, %v2677
        %v2682 = vand.u32 2147483647, %v2669
        %vm2683 = vcmp.eq.f32.partialorder %v2682, 8.507059e+37
        %v2684 = vand.u32 %v2669, 2147483648
        %v2685 = vor.u32 1.1754944e-38, %v2684
        %v2686 = vsel %vm2683, %v2685, %v2681
        %v2687 = vrcp.pop %v2672
        %v2688 = vmul.f32 %v2672, %v2687
        %v2689 = vsub.f32 1.0, %v2688
        %v2690 = vmul.f32 %v2687, %v2689
        %v2691 = vadd.f32 %v2687, %v2690
        %vm2692 = vweird.f32 %v2672
        %vm2693 = vweird.f32 %v2687
        %vm2694 = vmor %vm2692, %vm2693
        %v2695 = vsel %vm2694, %v2687, %v2691
        %v2696 = vand.u32 2147483647, %v2672
        %vm2697 = vcmp.eq.f32.partialorder %v2696, 8.507059e+37
        %v2698 = vand.u32 %v2672, 2147483648
        %v2699 = vor.u32 1.1754944e-38, %v2698
        %v2700 = vsel %vm2697, %v2699, %v2695
        %v2701 = vmul.f32 %v2664, %v2686
        %v2702 = vmul.f32 %v2666, %v2700
        %v2703 = vpack.c.bf16 %v2702, %v2701
        %2704 = vrot.lane.b32.xlu0 %v2612, 120
        %v2705 = vpop.permute.xlu0 %2704
        %v2708 = vsel %vm1195, %v2703, 0
        %2710 = vmatpush.bf16.msra.mxu0 0
        %2711 = vmatpush.bf16.msra.mxu0 0
        %2712 = vmatpush.bf16.msra.mxu0 0
        %2713 = vmatpush.bf16.msra.mxu0 0
        %2714 = vmatpush.bf16.msra.mxu0 0
        %2715 = vmatpush.bf16.msra.mxu0 0
        %2716 = vmatpush.bf16.msra.mxu0 0
        %2717 = vmatpush.bf16.msra.mxu0 %v2705
        %2718 = vmatmul.bf16.gmra.mxu0 %v2708
        %v2719 = vpop.f32.mrf.mxu0
        %v2720 = vadd.f32 0.0, %v2719
        %v2721 = vpop.f32.mrf.mxu0
        %v2722 = vadd.f32 0.0, %v2721
        %2723 = vdwg.mxu0
        %2724 = vrot.lane.b32.xlu0 %v2533, 112
        %v2725 = vpop.permute.xlu0 %2724
        %2726 = vrot.lane.b32.xlu0 %v2538, 112
        %v2727 = vpop.permute.xlu0 %2726
        %v2729 = vsel %vm1174, %v2725, 0
        %v2732 = vsel %vm1174, %v2727, 0
        %2734 = vmatpush.bf16.xpose.msra.mxu0 0
        %2735 = vmatpush.bf16.xpose.msra.mxu0 0
        %2736 = vmatpush.bf16.xpose.msra.mxu0 0
        %2737 = vmatpush.bf16.xpose.msra.mxu0 0
        %2738 = vmatpush.bf16.xpose.msra.mxu0 0
        %2739 = vmatpush.bf16.xpose.msra.mxu0 0
        %2740 = vmatpush.bf16.xpose.msra.mxu0 0
        %2741 = vmatpush.bf16.xpose.msra.mxu0 %v2732
        %2742 = vmatmul.bf16.gmra.mxu0 %v2729
        %v2743 = vpop.f32.mrf.mxu0
        %v2744 = vadd.f32 %v1006, %v2743
        %v2745 = vpop.f32.mrf.mxu0
        %v2746 = vadd.f32 %v1007, %v2745
        %2747 = vdwg.mxu0
        %v2748 = vsel %vm1195, %v2744, -inf
        %2749 = vmax.xlane.f32.xlu0 %v2748
        %v2750 = vpop.xlane.xlu0 %2749
        %v2751 = vsel %vm1195, %v2746, -inf
        %2752 = vmax.xlane.f32.xlu0 %v2751
        %v2753 = vpop.xlane.xlu0 %2752
        %v2754 = vsub.f32 %v2744, %v2750
        %v2755 = vsub.f32 %v2746, %v2753
        %v2756 = vmul.f32 %v2754, 1.442695
        %v2757 = vpow.pop %v2756
        %v2758 = vmul.f32 %v2755, 1.442695
        %v2759 = vpow.pop %v2758
        %v2760 = vsel %vm1195, %v2757, 0.0
        %2761 = vadd.xlane.f32.xlu0 %v2760
        %v2762 = vpop.xlane.xlu0 %2761
        %v2763 = vsel %vm1195, %v2759, 0.0
        %2764 = vadd.xlane.f32.xlu0 %v2763
        %v2765 = vpop.xlane.xlu0 %2764
        %v2766 = vrcp.pop %v2762
        %v2767 = vmul.f32 %v2762, %v2766
        %v2768 = vsub.f32 1.0, %v2767
        %v2769 = vmul.f32 %v2766, %v2768
        %v2770 = vadd.f32 %v2766, %v2769
        %vm2771 = vweird.f32 %v2762
        %vm2772 = vweird.f32 %v2766
        %vm2773 = vmor %vm2771, %vm2772
        %v2774 = vsel %vm2773, %v2766, %v2770
        %v2775 = vand.u32 2147483647, %v2762
        %vm2776 = vcmp.eq.f32.partialorder %v2775, 8.507059e+37
        %v2777 = vand.u32 %v2762, 2147483648
        %v2778 = vor.u32 1.1754944e-38, %v2777
        %v2779 = vsel %vm2776, %v2778, %v2774
        %v2780 = vrcp.pop %v2765
        %v2781 = vmul.f32 %v2765, %v2780
        %v2782 = vsub.f32 1.0, %v2781
        %v2783 = vmul.f32 %v2780, %v2782
        %v2784 = vadd.f32 %v2780, %v2783
        %vm2785 = vweird.f32 %v2765
        %vm2786 = vweird.f32 %v2780
        %vm2787 = vmor %vm2785, %vm2786
        %v2788 = vsel %vm2787, %v2780, %v2784
        %v2789 = vand.u32 2147483647, %v2765
        %vm2790 = vcmp.eq.f32.partialorder %v2789, 8.507059e+37
        %v2791 = vand.u32 %v2765, 2147483648
        %v2792 = vor.u32 1.1754944e-38, %v2791
        %v2793 = vsel %vm2790, %v2792, %v2788
        %v2794 = vmul.f32 %v2757, %v2779
        %v2795 = vmul.f32 %v2759, %v2793
        %v2796 = vpack.c.bf16 %v2795, %v2794
        %2797 = vrot.lane.b32.xlu0 %v2612, 112
        %v2798 = vpop.permute.xlu0 %2797
        %v2801 = vsel %vm1195, %v2796, 0
        %2803 = vmatpush.bf16.msra.mxu0 0
        %2804 = vmatpush.bf16.msra.mxu0 0
        %2805 = vmatpush.bf16.msra.mxu0 0
        %2806 = vmatpush.bf16.msra.mxu0 0
        %2807 = vmatpush.bf16.msra.mxu0 0
        %2808 = vmatpush.bf16.msra.mxu0 0
        %2809 = vmatpush.bf16.msra.mxu0 0
        %2810 = vmatpush.bf16.msra.mxu0 %v2798
        %2811 = vmatmul.bf16.gmra.mxu0 %v2801
        %v2812 = vpop.f32.mrf.mxu0
        %v2813 = vadd.f32 0.0, %v2812
        %v2814 = vpop.f32.mrf.mxu0
        %v2815 = vadd.f32 0.0, %v2814
        %2816 = vdwg.mxu0
        %2817 = vrot.lane.b32.xlu0 %v2533, 104
        %v2818 = vpop.permute.xlu0 %2817
        %2819 = vrot.lane.b32.xlu0 %v2538, 104
        %v2820 = vpop.permute.xlu0 %2819
        %v2822 = vsel %vm1174, %v2818, 0
        %v2825 = vsel %vm1174, %v2820, 0
        %2827 = vmatpush.bf16.xpose.msra.mxu0 0
        %2828 = vmatpush.bf16.xpose.msra.mxu0 0
        %2829 = vmatpush.bf16.xpose.msra.mxu0 0
        %2830 = vmatpush.bf16.xpose.msra.mxu0 0
        %2831 = vmatpush.bf16.xpose.msra.mxu0 0
        %2832 = vmatpush.bf16.xpose.msra.mxu0 0
        %2833 = vmatpush.bf16.xpose.msra.mxu0 0
        %2834 = vmatpush.bf16.xpose.msra.mxu0 %v2825
        %2835 = vmatmul.bf16.gmra.mxu0 %v2822
        %v2836 = vpop.f32.mrf.mxu0
        %v2837 = vadd.f32 %v1006, %v2836
        %v2838 = vpop.f32.mrf.mxu0
        %v2839 = vadd.f32 %v1007, %v2838
        %2840 = vdwg.mxu0
        %v2841 = vsel %vm1195, %v2837, -inf
        %2842 = vmax.xlane.f32.xlu0 %v2841
        %v2843 = vpop.xlane.xlu0 %2842
        %v2844 = vsel %vm1195, %v2839, -inf
        %2845 = vmax.xlane.f32.xlu0 %v2844
        %v2846 = vpop.xlane.xlu0 %2845
        %v2847 = vsub.f32 %v2837, %v2843
        %v2848 = vsub.f32 %v2839, %v2846
        %v2849 = vmul.f32 %v2847, 1.442695
        %v2850 = vpow.pop %v2849
        %v2851 = vmul.f32 %v2848, 1.442695
        %v2852 = vpow.pop %v2851
        %v2853 = vsel %vm1195, %v2850, 0.0
        %2854 = vadd.xlane.f32.xlu0 %v2853
        %v2855 = vpop.xlane.xlu0 %2854
        %v2856 = vsel %vm1195, %v2852, 0.0
        %2857 = vadd.xlane.f32.xlu0 %v2856
        %v2858 = vpop.xlane.xlu0 %2857
        %v2859 = vrcp.pop %v2855
        %v2860 = vmul.f32 %v2855, %v2859
        %v2861 = vsub.f32 1.0, %v2860
        %v2862 = vmul.f32 %v2859, %v2861
        %v2863 = vadd.f32 %v2859, %v2862
        %vm2864 = vweird.f32 %v2855
        %vm2865 = vweird.f32 %v2859
        %vm2866 = vmor %vm2864, %vm2865
        %v2867 = vsel %vm2866, %v2859, %v2863
        %v2868 = vand.u32 2147483647, %v2855
        %vm2869 = vcmp.eq.f32.partialorder %v2868, 8.507059e+37
        %v2870 = vand.u32 %v2855, 2147483648
        %v2871 = vor.u32 1.1754944e-38, %v2870
        %v2872 = vsel %vm2869, %v2871, %v2867
        %v2873 = vrcp.pop %v2858
        %v2874 = vmul.f32 %v2858, %v2873
        %v2875 = vsub.f32 1.0, %v2874
        %v2876 = vmul.f32 %v2873, %v2875
        %v2877 = vadd.f32 %v2873, %v2876
        %vm2878 = vweird.f32 %v2858
        %vm2879 = vweird.f32 %v2873
        %vm2880 = vmor %vm2878, %vm2879
        %v2881 = vsel %vm2880, %v2873, %v2877
        %v2882 = vand.u32 2147483647, %v2858
        %vm2883 = vcmp.eq.f32.partialorder %v2882, 8.507059e+37
        %v2884 = vand.u32 %v2858, 2147483648
        %v2885 = vor.u32 1.1754944e-38, %v2884
        %v2886 = vsel %vm2883, %v2885, %v2881
        %v2887 = vmul.f32 %v2850, %v2872
        %v2888 = vmul.f32 %v2852, %v2886
        %v2889 = vpack.c.bf16 %v2888, %v2887
        %2890 = vrot.lane.b32.xlu0 %v2612, 104
        %v2891 = vpop.permute.xlu0 %2890
        %v2894 = vsel %vm1195, %v2889, 0
        %2896 = vmatpush.bf16.msra.mxu0 0
        %2897 = vmatpush.bf16.msra.mxu0 0
        %2898 = vmatpush.bf16.msra.mxu0 0
        %2899 = vmatpush.bf16.msra.mxu0 0
        %2900 = vmatpush.bf16.msra.mxu0 0
        %2901 = vmatpush.bf16.msra.mxu0 0
        %2902 = vmatpush.bf16.msra.mxu0 0
        %2903 = vmatpush.bf16.msra.mxu0 %v2891
        %2904 = vmatmul.bf16.gmra.mxu0 %v2894
        %v2905 = vpop.f32.mrf.mxu0
        %v2906 = vadd.f32 0.0, %v2905
        %v2907 = vpop.f32.mrf.mxu0
        %v2908 = vadd.f32 0.0, %v2907
        %2909 = vdwg.mxu0
        %2912 = vrot.lane.b32.xlu0 %v2720, 8
        %v2913 = vpop.permute.xlu0 %2912
        %2914 = vrot.lane.b32.xlu0 %v2722, 8
        %v2915 = vpop.permute.xlu0 %2914
        %2920 = vrot.lane.b32.xlu0 %v2813, 16
        %v2921 = vpop.permute.xlu0 %2920
        %2922 = vrot.lane.b32.xlu0 %v2815, 16
        %v2923 = vpop.permute.xlu0 %2922
        %2928 = vrot.lane.b32.xlu0 %v2906, 24
        %v2929 = vpop.permute.xlu0 %2928
        %2930 = vrot.lane.b32.xlu0 %v2908, 24
        %v2931 = vpop.permute.xlu0 %2930
        %v2934 = vsel %vm1174, %v2627, %v2913
        %v2935 = vsel %vm1174, %v2629, %v2915
        %v2936 = vsel %vm1195, %v2934, %v2921
        %v2937 = vsel %vm1195, %v2935, %v2923
        %v2938 = vsel %vm1575, %v2936, %v2929
        %v2939 = vsel %vm1575, %v2937, %v2931
        %v2940 = vpack.c.bf16 %v2431, %v2431
        %v2941 = vpack.c.bf16 %v2433, %v2433
        %v2942 = vpack.c.bf16 %v2472, %v2472
        %v2943 = vpack.c.bf16 %v2474, %v2474
        %v2944 = vpack.c.bf16 %v2519, %v2519
        %v2945 = vpack.c.bf16 %v2521, %v2521
        %v2948 = vunpack.c.l.b16 %v2940
        %v2949 = vunpack.c.l.b16 %v2941
        %v2950 = vpack.c.b16 %v2949, %v2948
        %v2953 = vunpack.c.l.b16 %v2942
        %v2954 = vunpack.c.l.b16 %v2943
        %v2955 = vpack.c.b16 %v2954, %v2953
        %v2957 = vsel %vm1174, %v2950, 0
        %v2960 = vsel %vm1174, %v2955, 0
        %2962 = vmatpush.bf16.xpose.msra.mxu0 0
        %2963 = vmatpush.bf16.xpose.msra.mxu0 0
        %2964 = vmatpush.bf16.xpose.msra.mxu0 0
        %2965 = vmatpush.bf16.xpose.msra.mxu0 0
        %2966 = vmatpush.bf16.xpose.msra.mxu0 0
        %2967 = vmatpush.bf16.xpose.msra.mxu0 0
        %2968 = vmatpush.bf16.xpose.msra.mxu0 0
        %2969 = vmatpush.bf16.xpose.msra.mxu0 %v2960
        %2970 = vmatmul.bf16.gmra.mxu0 %v2957
        %v2971 = vpop.f32.mrf.mxu0
        %v2972 = vadd.f32 %v1010, %v2971
        %v2973 = vpop.f32.mrf.mxu0
        %v2974 = vadd.f32 %v1011, %v2973
        %2975 = vdwg.mxu0
        %v2976 = vsel %vm1195, %v2972, -inf
        %2977 = vmax.xlane.f32.xlu0 %v2976
        %v2978 = vpop.xlane.xlu0 %2977
        %v2979 = vsel %vm1195, %v2974, -inf
        %2980 = vmax.xlane.f32.xlu0 %v2979
        %v2981 = vpop.xlane.xlu0 %2980
        %v2982 = vsub.f32 %v2972, %v2978
        %v2983 = vsub.f32 %v2974, %v2981
        %v2984 = vmul.f32 %v2982, 1.442695
        %v2985 = vpow.pop %v2984
        %v2986 = vmul.f32 %v2983, 1.442695
        %v2987 = vpow.pop %v2986
        %v2988 = vsel %vm1195, %v2985, 0.0
        %2989 = vadd.xlane.f32.xlu0 %v2988
        %v2990 = vpop.xlane.xlu0 %2989
        %v2991 = vsel %vm1195, %v2987, 0.0
        %2992 = vadd.xlane.f32.xlu0 %v2991
        %v2993 = vpop.xlane.xlu0 %2992
        %v2994 = vrcp.pop %v2990
        %v2995 = vmul.f32 %v2990, %v2994
        %v2996 = vsub.f32 1.0, %v2995
        %v2997 = vmul.f32 %v2994, %v2996
        %v2998 = vadd.f32 %v2994, %v2997
        %vm2999 = vweird.f32 %v2990
        %vm3000 = vweird.f32 %v2994
        %vm3001 = vmor %vm2999, %vm3000
        %v3002 = vsel %vm3001, %v2994, %v2998
        %v3003 = vand.u32 2147483647, %v2990
        %vm3004 = vcmp.eq.f32.partialorder %v3003, 8.507059e+37
        %v3005 = vand.u32 %v2990, 2147483648
        %v3006 = vor.u32 1.1754944e-38, %v3005
        %v3007 = vsel %vm3004, %v3006, %v3002
        %v3008 = vrcp.pop %v2993
        %v3009 = vmul.f32 %v2993, %v3008
        %v3010 = vsub.f32 1.0, %v3009
        %v3011 = vmul.f32 %v3008, %v3010
        %v3012 = vadd.f32 %v3008, %v3011
        %vm3013 = vweird.f32 %v2993
        %vm3014 = vweird.f32 %v3008
        %vm3015 = vmor %vm3013, %vm3014
        %v3016 = vsel %vm3015, %v3008, %v3012
        %v3017 = vand.u32 2147483647, %v2993
        %vm3018 = vcmp.eq.f32.partialorder %v3017, 8.507059e+37
        %v3019 = vand.u32 %v2993, 2147483648
        %v3020 = vor.u32 1.1754944e-38, %v3019
        %v3021 = vsel %vm3018, %v3020, %v3016
        %v3022 = vmul.f32 %v2985, %v3007
        %v3023 = vmul.f32 %v2987, %v3021
        %v3024 = vpack.c.bf16 %v3023, %v3022
        %v3027 = vunpack.c.l.b16 %v2944
        %v3028 = vunpack.c.l.b16 %v2945
        %v3029 = vpack.c.b16 %v3028, %v3027
        %v3032 = vsel %vm1195, %v3024, 0
        %3034 = vmatpush.bf16.msra.mxu0 0
        %3035 = vmatpush.bf16.msra.mxu0 0
        %3036 = vmatpush.bf16.msra.mxu0 0
        %3037 = vmatpush.bf16.msra.mxu0 0
        %3038 = vmatpush.bf16.msra.mxu0 0
        %3039 = vmatpush.bf16.msra.mxu0 0
        %3040 = vmatpush.bf16.msra.mxu0 0
        %3041 = vmatpush.bf16.msra.mxu0 %v3029
        %3042 = vmatmul.bf16.gmra.mxu0 %v3032
        %v3043 = vpop.f32.mrf.mxu0
        %v3044 = vadd.f32 0.0, %v3043
        %v3045 = vpop.f32.mrf.mxu0
        %v3046 = vadd.f32 0.0, %v3045
        %3047 = vdwg.mxu0
        %3048 = vrot.lane.b32.xlu0 %v2950, 120
        %v3049 = vpop.permute.xlu0 %3048
        %3050 = vrot.lane.b32.xlu0 %v2955, 120
        %v3051 = vpop.permute.xlu0 %3050
        %v3053 = vsel %vm1174, %v3049, 0
        %v3056 = vsel %vm1174, %v3051, 0
        %3058 = vmatpush.bf16.xpose.msra.mxu0 0
        %3059 = vmatpush.bf16.xpose.msra.mxu0 0
        %3060 = vmatpush.bf16.xpose.msra.mxu0 0
        %3061 = vmatpush.bf16.xpose.msra.mxu0 0
        %3062 = vmatpush.bf16.xpose.msra.mxu0 0
        %3063 = vmatpush.bf16.xpose.msra.mxu0 0
        %3064 = vmatpush.bf16.xpose.msra.mxu0 0
        %3065 = vmatpush.bf16.xpose.msra.mxu0 %v3056
        %3066 = vmatmul.bf16.gmra.mxu0 %v3053
        %v3067 = vpop.f32.mrf.mxu0
        %v3068 = vadd.f32 %v1010, %v3067
        %v3069 = vpop.f32.mrf.mxu0
        %v3070 = vadd.f32 %v1011, %v3069
        %3071 = vdwg.mxu0
        %v3072 = vsel %vm1195, %v3068, -inf
        %3073 = vmax.xlane.f32.xlu0 %v3072
        %v3074 = vpop.xlane.xlu0 %3073
        %v3075 = vsel %vm1195, %v3070, -inf
        %3076 = vmax.xlane.f32.xlu0 %v3075
        %v3077 = vpop.xlane.xlu0 %3076
        %v3078 = vsub.f32 %v3068, %v3074
        %v3079 = vsub.f32 %v3070, %v3077
        %v3080 = vmul.f32 %v3078, 1.442695
        %v3081 = vpow.pop %v3080
        %v3082 = vmul.f32 %v3079, 1.442695
        %v3083 = vpow.pop %v3082
        %v3084 = vsel %vm1195, %v3081, 0.0
        %3085 = vadd.xlane.f32.xlu0 %v3084
        %v3086 = vpop.xlane.xlu0 %3085
        %v3087 = vsel %vm1195, %v3083, 0.0
        %3088 = vadd.xlane.f32.xlu0 %v3087
        %v3089 = vpop.xlane.xlu0 %3088
        %v3090 = vrcp.pop %v3086
        %v3091 = vmul.f32 %v3086, %v3090
        %v3092 = vsub.f32 1.0, %v3091
        %v3093 = vmul.f32 %v3090, %v3092
        %v3094 = vadd.f32 %v3090, %v3093
        %vm3095 = vweird.f32 %v3086
        %vm3096 = vweird.f32 %v3090
        %vm3097 = vmor %vm3095, %vm3096
        %v3098 = vsel %vm3097, %v3090, %v3094
        %v3099 = vand.u32 2147483647, %v3086
        %vm3100 = vcmp.eq.f32.partialorder %v3099, 8.507059e+37
        %v3101 = vand.u32 %v3086, 2147483648
        %v3102 = vor.u32 1.1754944e-38, %v3101
        %v3103 = vsel %vm3100, %v3102, %v3098
        %v3104 = vrcp.pop %v3089
        %v3105 = vmul.f32 %v3089, %v3104
        %v3106 = vsub.f32 1.0, %v3105
        %v3107 = vmul.f32 %v3104, %v3106
        %v3108 = vadd.f32 %v3104, %v3107
        %vm3109 = vweird.f32 %v3089
        %vm3110 = vweird.f32 %v3104
        %vm3111 = vmor %vm3109, %vm3110
        %v3112 = vsel %vm3111, %v3104, %v3108
        %v3113 = vand.u32 2147483647, %v3089
        %vm3114 = vcmp.eq.f32.partialorder %v3113, 8.507059e+37
        %v3115 = vand.u32 %v3089, 2147483648
        %v3116 = vor.u32 1.1754944e-38, %v3115
        %v3117 = vsel %vm3114, %v3116, %v3112
        %v3118 = vmul.f32 %v3081, %v3103
        %v3119 = vmul.f32 %v3083, %v3117
        %v3120 = vpack.c.bf16 %v3119, %v3118
        %3121 = vrot.lane.b32.xlu0 %v3029, 120
        %v3122 = vpop.permute.xlu0 %3121
        %v3125 = vsel %vm1195, %v3120, 0
        %3127 = vmatpush.bf16.msra.mxu0 0
        %3128 = vmatpush.bf16.msra.mxu0 0
        %3129 = vmatpush.bf16.msra.mxu0 0
        %3130 = vmatpush.bf16.msra.mxu0 0
        %3131 = vmatpush.bf16.msra.mxu0 0
        %3132 = vmatpush.bf16.msra.mxu0 0
        %3133 = vmatpush.bf16.msra.mxu0 0
        %3134 = vmatpush.bf16.msra.mxu0 %v3122
        %3135 = vmatmul.bf16.gmra.mxu0 %v3125
        %v3136 = vpop.f32.mrf.mxu0
        %v3137 = vadd.f32 0.0, %v3136
        %v3138 = vpop.f32.mrf.mxu0
        %v3139 = vadd.f32 0.0, %v3138
        %3140 = vdwg.mxu0
        %3141 = vrot.lane.b32.xlu0 %v2950, 112
        %v3142 = vpop.permute.xlu0 %3141
        %3143 = vrot.lane.b32.xlu0 %v2955, 112
        %v3144 = vpop.permute.xlu0 %3143
        %v3146 = vsel %vm1174, %v3142, 0
        %v3149 = vsel %vm1174, %v3144, 0
        %3151 = vmatpush.bf16.xpose.msra.mxu0 0
        %3152 = vmatpush.bf16.xpose.msra.mxu0 0
        %3153 = vmatpush.bf16.xpose.msra.mxu0 0
        %3154 = vmatpush.bf16.xpose.msra.mxu0 0
        %3155 = vmatpush.bf16.xpose.msra.mxu0 0
        %3156 = vmatpush.bf16.xpose.msra.mxu0 0
        %3157 = vmatpush.bf16.xpose.msra.mxu0 0
        %3158 = vmatpush.bf16.xpose.msra.mxu0 %v3149
        %3159 = vmatmul.bf16.gmra.mxu0 %v3146
        %v3160 = vpop.f32.mrf.mxu0
        %v3161 = vadd.f32 %v1010, %v3160
        %v3162 = vpop.f32.mrf.mxu0
        %v3163 = vadd.f32 %v1011, %v3162
        %3164 = vdwg.mxu0
        %v3165 = vsel %vm1195, %v3161, -inf
        %3166 = vmax.xlane.f32.xlu0 %v3165
        %v3167 = vpop.xlane.xlu0 %3166
        %v3168 = vsel %vm1195, %v3163, -inf
        %3169 = vmax.xlane.f32.xlu0 %v3168
        %v3170 = vpop.xlane.xlu0 %3169
        %v3171 = vsub.f32 %v3161, %v3167
        %v3172 = vsub.f32 %v3163, %v3170
        %v3173 = vmul.f32 %v3171, 1.442695
        %v3174 = vpow.pop %v3173
        %v3175 = vmul.f32 %v3172, 1.442695
        %v3176 = vpow.pop %v3175
        %v3177 = vsel %vm1195, %v3174, 0.0
        %3178 = vadd.xlane.f32.xlu0 %v3177
        %v3179 = vpop.xlane.xlu0 %3178
        %v3180 = vsel %vm1195, %v3176, 0.0
        %3181 = vadd.xlane.f32.xlu0 %v3180
        %v3182 = vpop.xlane.xlu0 %3181
        %v3183 = vrcp.pop %v3179
        %v3184 = vmul.f32 %v3179, %v3183
        %v3185 = vsub.f32 1.0, %v3184
        %v3186 = vmul.f32 %v3183, %v3185
        %v3187 = vadd.f32 %v3183, %v3186
        %vm3188 = vweird.f32 %v3179
        %vm3189 = vweird.f32 %v3183
        %vm3190 = vmor %vm3188, %vm3189
        %v3191 = vsel %vm3190, %v3183, %v3187
        %v3192 = vand.u32 2147483647, %v3179
        %vm3193 = vcmp.eq.f32.partialorder %v3192, 8.507059e+37
        %v3194 = vand.u32 %v3179, 2147483648
        %v3195 = vor.u32 1.1754944e-38, %v3194
        %v3196 = vsel %vm3193, %v3195, %v3191
        %v3197 = vrcp.pop %v3182
        %v3198 = vmul.f32 %v3182, %v3197
        %v3199 = vsub.f32 1.0, %v3198
        %v3200 = vmul.f32 %v3197, %v3199
        %v3201 = vadd.f32 %v3197, %v3200
        %vm3202 = vweird.f32 %v3182
        %vm3203 = vweird.f32 %v3197
        %vm3204 = vmor %vm3202, %vm3203
        %v3205 = vsel %vm3204, %v3197, %v3201
        %v3206 = vand.u32 2147483647, %v3182
        %vm3207 = vcmp.eq.f32.partialorder %v3206, 8.507059e+37
        %v3208 = vand.u32 %v3182, 2147483648
        %v3209 = vor.u32 1.1754944e-38, %v3208
        %v3210 = vsel %vm3207, %v3209, %v3205
        %v3211 = vmul.f32 %v3174, %v3196
        %v3212 = vmul.f32 %v3176, %v3210
        %v3213 = vpack.c.bf16 %v3212, %v3211
        %3214 = vrot.lane.b32.xlu0 %v3029, 112
        %v3215 = vpop.permute.xlu0 %3214
        %v3218 = vsel %vm1195, %v3213, 0
        %3220 = vmatpush.bf16.msra.mxu0 0
        %3221 = vmatpush.bf16.msra.mxu0 0
        %3222 = vmatpush.bf16.msra.mxu0 0
        %3223 = vmatpush.bf16.msra.mxu0 0
        %3224 = vmatpush.bf16.msra.mxu0 0
        %3225 = vmatpush.bf16.msra.mxu0 0
        %3226 = vmatpush.bf16.msra.mxu0 0
        %3227 = vmatpush.bf16.msra.mxu0 %v3215
        %3228 = vmatmul.bf16.gmra.mxu0 %v3218
        %v3229 = vpop.f32.mrf.mxu0
        %v3230 = vadd.f32 0.0, %v3229
        %v3231 = vpop.f32.mrf.mxu0
        %v3232 = vadd.f32 0.0, %v3231
        %3233 = vdwg.mxu0
        %3234 = vrot.lane.b32.xlu0 %v2950, 104
        %v3235 = vpop.permute.xlu0 %3234
        %3236 = vrot.lane.b32.xlu0 %v2955, 104
        %v3237 = vpop.permute.xlu0 %3236
        %v3239 = vsel %vm1174, %v3235, 0
        %v3242 = vsel %vm1174, %v3237, 0
        %3244 = vmatpush.bf16.xpose.msra.mxu0 0
        %3245 = vmatpush.bf16.xpose.msra.mxu0 0
        %3246 = vmatpush.bf16.xpose.msra.mxu0 0
        %3247 = vmatpush.bf16.xpose.msra.mxu0 0
        %3248 = vmatpush.bf16.xpose.msra.mxu0 0
        %3249 = vmatpush.bf16.xpose.msra.mxu0 0
        %3250 = vmatpush.bf16.xpose.msra.mxu0 0
        %3251 = vmatpush.bf16.xpose.msra.mxu0 %v3242
        %3252 = vmatmul.bf16.gmra.mxu0 %v3239
        %v3253 = vpop.f32.mrf.mxu0
        %v3254 = vadd.f32 %v1010, %v3253
        %v3255 = vpop.f32.mrf.mxu0
        %v3256 = vadd.f32 %v1011, %v3255
        %3257 = vdwg.mxu0
        %v3258 = vsel %vm1195, %v3254, -inf
        %3259 = vmax.xlane.f32.xlu0 %v3258
        %v3260 = vpop.xlane.xlu0 %3259
        %v3261 = vsel %vm1195, %v3256, -inf
        %3262 = vmax.xlane.f32.xlu0 %v3261
        %v3263 = vpop.xlane.xlu0 %3262
        %v3264 = vsub.f32 %v3254, %v3260
        %v3265 = vsub.f32 %v3256, %v3263
        %v3266 = vmul.f32 %v3264, 1.442695
        %v3267 = vpow.pop %v3266
        %v3268 = vmul.f32 %v3265, 1.442695
        %v3269 = vpow.pop %v3268
        %v3270 = vsel %vm1195, %v3267, 0.0
        %3271 = vadd.xlane.f32.xlu0 %v3270
        %v3272 = vpop.xlane.xlu0 %3271
        %v3273 = vsel %vm1195, %v3269, 0.0
        %3274 = vadd.xlane.f32.xlu0 %v3273
        %v3275 = vpop.xlane.xlu0 %3274
        %v3276 = vrcp.pop %v3272
        %v3277 = vmul.f32 %v3272, %v3276
        %v3278 = vsub.f32 1.0, %v3277
        %v3279 = vmul.f32 %v3276, %v3278
        %v3280 = vadd.f32 %v3276, %v3279
        %vm3281 = vweird.f32 %v3272
        %vm3282 = vweird.f32 %v3276
        %vm3283 = vmor %vm3281, %vm3282
        %v3284 = vsel %vm3283, %v3276, %v3280
        %v3285 = vand.u32 2147483647, %v3272
        %vm3286 = vcmp.eq.f32.partialorder %v3285, 8.507059e+37
        %v3287 = vand.u32 %v3272, 2147483648
        %v3288 = vor.u32 1.1754944e-38, %v3287
        %v3289 = vsel %vm3286, %v3288, %v3284
        %v3290 = vrcp.pop %v3275
        %v3291 = vmul.f32 %v3275, %v3290
        %v3292 = vsub.f32 1.0, %v3291
        %v3293 = vmul.f32 %v3290, %v3292
        %v3294 = vadd.f32 %v3290, %v3293
        %vm3295 = vweird.f32 %v3275
        %vm3296 = vweird.f32 %v3290
        %vm3297 = vmor %vm3295, %vm3296
        %v3298 = vsel %vm3297, %v3290, %v3294
        %v3299 = vand.u32 2147483647, %v3275
        %vm3300 = vcmp.eq.f32.partialorder %v3299, 8.507059e+37
        %v3301 = vand.u32 %v3275, 2147483648
        %v3302 = vor.u32 1.1754944e-38, %v3301
        %v3303 = vsel %vm3300, %v3302, %v3298
        %v3304 = vmul.f32 %v3267, %v3289
        %v3305 = vmul.f32 %v3269, %v3303
        %v3306 = vpack.c.bf16 %v3305, %v3304
        %3307 = vrot.lane.b32.xlu0 %v3029, 104
        %v3308 = vpop.permute.xlu0 %3307
        %v3311 = vsel %vm1195, %v3306, 0
        %3313 = vmatpush.bf16.msra.mxu0 0
        %3314 = vmatpush.bf16.msra.mxu0 0
        %3315 = vmatpush.bf16.msra.mxu0 0
        %3316 = vmatpush.bf16.msra.mxu0 0
        %3317 = vmatpush.bf16.msra.mxu0 0
        %3318 = vmatpush.bf16.msra.mxu0 0
        %3319 = vmatpush.bf16.msra.mxu0 0
        %3320 = vmatpush.bf16.msra.mxu0 %v3308
        %3321 = vmatmul.bf16.gmra.mxu0 %v3311
        %v3322 = vpop.f32.mrf.mxu0
        %v3323 = vadd.f32 0.0, %v3322
        %v3324 = vpop.f32.mrf.mxu0
        %v3325 = vadd.f32 0.0, %v3324
        %3326 = vdwg.mxu0
        %3329 = vrot.lane.b32.xlu0 %v3137, 8
        %v3330 = vpop.permute.xlu0 %3329
        %3331 = vrot.lane.b32.xlu0 %v3139, 8
        %v3332 = vpop.permute.xlu0 %3331
        %3337 = vrot.lane.b32.xlu0 %v3230, 16
        %v3338 = vpop.permute.xlu0 %3337
        %3339 = vrot.lane.b32.xlu0 %v3232, 16
        %v3340 = vpop.permute.xlu0 %3339
        %3345 = vrot.lane.b32.xlu0 %v3323, 24
        %v3346 = vpop.permute.xlu0 %3345
        %3347 = vrot.lane.b32.xlu0 %v3325, 24
        %v3348 = vpop.permute.xlu0 %3347
        %v3351 = vsel %vm1174, %v3044, %v3330
        %v3352 = vsel %vm1174, %v3046, %v3332
        %v3353 = vsel %vm1195, %v3351, %v3338
        %v3354 = vsel %vm1195, %v3352, %v3340
        %v3355 = vsel %vm1575, %v3353, %v3346
        %v3356 = vsel %vm1575, %v3354, %v3348
        %v3357 = vpack.c.bf16 %v2939, %v2938
        %v3358 = vpack.c.bf16 %v3356, %v3355
        %s3359 = scalar_lea.vmem [#allocation7], 16
        %v3360 = vld [vmem:[%s3359] sm:$0xf]
        %v3361 = vld [vmem:[%s3359 + $0x4] sm:$0xf]
        %v3362 = vld [vmem:[%s3359 + $0x8] sm:$0xf]
        %v3363 = vld [vmem:[%s3359 + $0xc] sm:$0xf]
        %s3364 = scalar_lea.vmem [#allocation8], 1
        %v3365 = vld [vmem:[%s3364] sm:$0x1]
        %v3367 = vperm.slane %v3365, 0
        %v3373 = vunpack.c.l.b16 %v3360
        %v3374 = vunpack.c.l.b16 %v3361
        %v3375 = vunpack.c.l.b16 %v3362
        %v3376 = vunpack.c.l.b16 %v3363
        %v3377 = vpack.c.b16 %v3374, %v3373
        %v3378 = vpack.c.b16 %v3376, %v3375
        %v3382 = vsel %vm1048, %v3357, 0
        %v3385 = vsel %vm1048, %v3358, 0
        %3387 = vmatpush.bf16.msra.mxu0 0
        %3388 = vmatpush.bf16.msra.mxu0 0
        %3389 = vmatpush.bf16.msra.mxu0 0
        %3390 = vmatpush.bf16.msra.mxu0 0
        %3391 = vmatpush.bf16.msra.mxu0 0
        %3392 = vmatpush.bf16.msra.mxu0 0
        %3393 = vmatpush.bf16.msra.mxu0 %v3378
        %3394 = vmatpush.bf16.msra.mxu0 %v3377
        %3395 = vmatmul.bf16.gmra.mxu0 %v3382
        %v3396 = vpop.f32.mrf.mxu0
        %v3397 = vadd.f32 %v3367, %v3396
        %v3398 = vpop.f32.mrf.mxu0
        %v3399 = vadd.f32 %v3367, %v3398
        %3400 = vmatmul.bf16.gmra.mxu0 %v3385
        %v3401 = vpop.f32.mrf.mxu0
        %v3402 = vadd.f32 %v3367, %v3401
        %v3403 = vpop.f32.mrf.mxu0
        %v3404 = vadd.f32 %v3367, %v3403
        %3405 = vdwg.mxu0
        %v3406 = vadd.f32 %v2376, %v3397
        %v3407 = vadd.f32 %v2377, %v3399
        %v3408 = vadd.f32 %v2378, %v3402
        %v3409 = vadd.f32 %v2379, %v3404
        %s3410 = scalar_lea.vmem [#allocation10], 1
        %v3411 = vld [vmem:[%s3410] sm:$0x1]
        %s3412 = scalar_lea.vmem [#allocation11], 1
        %v3413 = vld [vmem:[%s3412] sm:$0x1]
        %v3414 = vsel %vm1048, %v3406, 0.0
        %3415 = vadd.xlane.f32.xlu0 %v3414
        %v3416 = vpop.xlane.xlu0 %3415
        %v3417 = vsel %vm1048, %v3407, 0.0
        %3418 = vadd.xlane.f32.xlu0 %v3417
        %v3419 = vpop.xlane.xlu0 %3418
        %v3420 = vsel %vm1048, %v3408, 0.0
        %3421 = vadd.xlane.f32.xlu0 %v3420
        %v3422 = vpop.xlane.xlu0 %3421
        %v3423 = vsel %vm1048, %v3409, 0.0
        %3424 = vadd.xlane.f32.xlu0 %v3423
        %v3425 = vpop.xlane.xlu0 %3424
        %v3426 = vmul.f32 %v3416, %v2066
        %v3427 = vmul.f32 %v3419, %v2066
        %v3428 = vmul.f32 %v3422, %v2066
        %v3429 = vmul.f32 %v3425, %v2066
        %v3430 = vsub.f32 %v3406, %v3426
        %v3431 = vsub.f32 %v3407, %v3427
        %v3432 = vsub.f32 %v3408, %v3428
        %v3433 = vsub.f32 %v3409, %v3429
        %v3434 = vmul.f32 %v3430, %v3430
        %v3435 = vmul.f32 %v3431, %v3431
        %v3436 = vmul.f32 %v3432, %v3432
        %v3437 = vmul.f32 %v3433, %v3433
        %v3438 = vsel %vm1048, %v3434, 0.0
        %3439 = vadd.xlane.f32.xlu0 %v3438
        %v3440 = vpop.xlane.xlu0 %3439
        %v3441 = vsel %vm1048, %v3435, 0.0
        %3442 = vadd.xlane.f32.xlu0 %v3441
        %v3443 = vpop.xlane.xlu0 %3442
        %v3444 = vsel %vm1048, %v3436, 0.0
        %3445 = vadd.xlane.f32.xlu0 %v3444
        %v3446 = vpop.xlane.xlu0 %3445
        %v3447 = vsel %vm1048, %v3437, 0.0
        %3448 = vadd.xlane.f32.xlu0 %v3447
        %v3449 = vpop.xlane.xlu0 %3448
        %v3450 = vmul.f32 %v3440, %v2066
        %v3451 = vmul.f32 %v3443, %v2066
        %v3452 = vmul.f32 %v3446, %v2066
        %v3453 = vmul.f32 %v3449, %v2066
        %v3454 = vadd.f32 %v3450, 1e-05
        %v3455 = vadd.f32 %v3451, 1e-05
        %v3456 = vadd.f32 %v3452, 1e-05
        %v3457 = vadd.f32 %v3453, 1e-05
        %v3458 = vrsqrt.pop %v3454
        %v3459 = vmul.f32 %v3458, %v3454
        %v3460 = vmul.f32 %v3459, %v3458
        %v3461 = vmul.f32 0.5, %v3460
        %v3462 = vsub.f32 1.5, %v3461
        %v3463 = vmul.f32 %v3458, %v3462
        %vm3464 = vweird.f32 %v3454
        %vm3465 = vweird.f32 %v3458
        %vm3466 = vmor %vm3464, %vm3465
        %v3467 = vsel %vm3466, %v3458, %v3463
        %v3468 = vrsqrt.pop %v3455
        %v3469 = vmul.f32 %v3468, %v3455
        %v3470 = vmul.f32 %v3469, %v3468
        %v3471 = vmul.f32 0.5, %v3470
        %v3472 = vsub.f32 1.5, %v3471
        %v3473 = vmul.f32 %v3468, %v3472
        %vm3474 = vweird.f32 %v3455
        %vm3475 = vweird.f32 %v3468
        %vm3476 = vmor %vm3474, %vm3475
        %v3477 = vsel %vm3476, %v3468, %v3473
        %v3478 = vrsqrt.pop %v3456
        %v3479 = vmul.f32 %v3478, %v3456
        %v3480 = vmul.f32 %v3479, %v3478
        %v3481 = vmul.f32 0.5, %v3480
        %v3482 = vsub.f32 1.5, %v3481
        %v3483 = vmul.f32 %v3478, %v3482
        %vm3484 = vweird.f32 %v3456
        %vm3485 = vweird.f32 %v3478
        %vm3486 = vmor %vm3484, %vm3485
        %v3487 = vsel %vm3486, %v3478, %v3483
        %v3488 = vrsqrt.pop %v3457
        %v3489 = vmul.f32 %v3488, %v3457
        %v3490 = vmul.f32 %v3489, %v3488
        %v3491 = vmul.f32 0.5, %v3490
        %v3492 = vsub.f32 1.5, %v3491
        %v3493 = vmul.f32 %v3488, %v3492
        %vm3494 = vweird.f32 %v3457
        %vm3495 = vweird.f32 %v3488
        %vm3496 = vmor %vm3494, %vm3495
        %v3497 = vsel %vm3496, %v3488, %v3493
        %v3498 = vmul.f32 %v3430, %v3467
        %v3499 = vmul.f32 %v3431, %v3477
        %v3500 = vmul.f32 %v3432, %v3487
        %v3501 = vmul.f32 %v3433, %v3497
        %v3503 = vperm.slane %v3411, 0
        %v3505 = vmul.f32 %v3498, %v3503
        %v3506 = vmul.f32 %v3499, %v3503
        %v3507 = vmul.f32 %v3500, %v3503
        %v3508 = vmul.f32 %v3501, %v3503
        %v3510 = vperm.slane %v3413, 0
        %v3512 = vadd.f32 %v3505, %v3510
        %v3513 = vadd.f32 %v3506, %v3510
        %v3514 = vadd.f32 %v3507, %v3510
        %v3515 = vadd.f32 %v3508, %v3510
        %v3516 = vpack.c.bf16 %v3513, %v3512
        %v3517 = vpack.c.bf16 %v3515, %v3514
        %s3518 = scalar_lea.vmem [#allocation13], 16
        %v3519 = vld [vmem:[%s3518] sm:$0xf]
        %v3520 = vld [vmem:[%s3518 + $0x4] sm:$0xf]
        %v3521 = vld [vmem:[%s3518 + $0x8] sm:$0xf]
        %v3522 = vld [vmem:[%s3518 + $0xc] sm:$0xf]
        %s3523 = scalar_lea.vmem [#allocation14], 1
        %v3524 = vld [vmem:[%s3523] sm:$0x1]
        %v3526 = vperm.slane %v3524, 0
        %v3532 = vunpack.c.l.b16 %v3519
        %v3533 = vunpack.c.l.b16 %v3520
        %v3534 = vunpack.c.l.b16 %v3521
        %v3535 = vunpack.c.l.b16 %v3522
        %v3536 = vpack.c.b16 %v3533, %v3532
        %v3537 = vpack.c.b16 %v3535, %v3534
        %v3541 = vsel %vm1048, %v3516, 0
        %v3544 = vsel %vm1048, %v3517, 0
        %3546 = vmatpush.bf16.msra.mxu0 0
        %3547 = vmatpush.bf16.msra.mxu0 0
        %3548 = vmatpush.bf16.msra.mxu0 0
        %3549 = vmatpush.bf16.msra.mxu0 0
        %3550 = vmatpush.bf16.msra.mxu0 0
        %3551 = vmatpush.bf16.msra.mxu0 0
        %3552 = vmatpush.bf16.msra.mxu0 %v3537
        %3553 = vmatpush.bf16.msra.mxu0 %v3536
        %3554 = vmatmul.bf16.gmra.mxu0 %v3541
        %v3555 = vpop.f32.mrf.mxu0
        %v3556 = vadd.f32 %v3526, %v3555
        %v3557 = vpop.f32.mrf.mxu0
        %v3558 = vadd.f32 %v3526, %v3557
        %3559 = vmatmul.bf16.gmra.mxu0 %v3544
        %v3560 = vpop.f32.mrf.mxu0
        %v3561 = vadd.f32 %v3526, %v3560
        %v3562 = vpop.f32.mrf.mxu0
        %v3563 = vadd.f32 %v3526, %v3562
        %3564 = vdwg.mxu0
        %v3565 = vmax.f32 %v3556, 0.0
        %v3566 = vmax.f32 %v3558, 0.0
        %v3567 = vmax.f32 %v3561, 0.0
        %v3568 = vmax.f32 %v3563, 0.0
        %v3569 = vpack.c.bf16 %v3566, %v3565
        %v3570 = vpack.c.bf16 %v3568, %v3567
        %s3571 = scalar_lea.vmem %s15, 32
        %v3572 = vld [vmem:[%s3571] sm:$0xf]
        %v3573 = vld [vmem:[%s3571 + $0x4] sm:$0xf]
        %v3574 = vld [vmem:[%s3571 + $0x8] sm:$0xf]
        %v3575 = vld [vmem:[%s3571 + $0xc] sm:$0xf]
        %v3576 = vld [vmem:[%s3571 + $0x10] sm:$0xf]
        %v3577 = vld [vmem:[%s3571 + $0x14] sm:$0xf]
        %v3578 = vld [vmem:[%s3571 + $0x18] sm:$0xf]
        %v3579 = vld [vmem:[%s3571 + $0x1c] sm:$0xf]
        %s3580 = scalar_lea.vmem [#allocation16], 1
        %v3581 = vld [vmem:[%s3580] sm:$0x1]
        %v3583 = vperm.slane %v3581, 0
        %v3593 = vunpack.c.l.b16 %v3572
        %v3594 = vunpack.c.l.b16 %v3573
        %v3595 = vunpack.c.l.b16 %v3574
        %v3596 = vunpack.c.l.b16 %v3575
        %v3597 = vunpack.c.l.b16 %v3576
        %v3598 = vunpack.c.l.b16 %v3577
        %v3599 = vunpack.c.l.b16 %v3578
        %v3600 = vunpack.c.l.b16 %v3579
        %v3601 = vpack.c.b16 %v3594, %v3593
        %v3602 = vpack.c.b16 %v3596, %v3595
        %v3603 = vpack.c.b16 %v3598, %v3597
        %v3604 = vpack.c.b16 %v3600, %v3599
        %v3610 = vsel %vm2246, %v3569, 0
        %v3613 = vsel %vm2246, %v3570, 0
        %3615 = vmatpush.bf16.msra.mxu0 0
        %3616 = vmatpush.bf16.msra.mxu0 0
        %3617 = vmatpush.bf16.msra.mxu0 0
        %3618 = vmatpush.bf16.msra.mxu0 0
        %3619 = vmatpush.bf16.msra.mxu0 %v3604
        %3620 = vmatpush.bf16.msra.mxu0 %v3603
        %3621 = vmatpush.bf16.msra.mxu0 %v3602
        %3622 = vmatpush.bf16.msra.mxu0 %v3601
        %3623 = vmatmul.bf16.gmra.mxu0 %v3610
        %v3624 = vpop.f32.mrf.mxu0
        %v3625 = vadd.f32 %v3583, %v3624
        %v3626 = vpop.f32.mrf.mxu0
        %v3627 = vadd.f32 %v3583, %v3626
        %3628 = vmatmul.bf16.gmra.mxu0 %v3613
        %v3629 = vpop.f32.mrf.mxu0
        %v3630 = vadd.f32 %v3583, %v3629
        %v3631 = vpop.f32.mrf.mxu0
        %v3632 = vadd.f32 %v3583, %v3631
        %3633 = vdwg.mxu0
        %v3634 = vadd.f32 %v3512, %v3625
        %v3635 = vadd.f32 %v3513, %v3627
        %v3636 = vadd.f32 %v3514, %v3630
        %v3637 = vadd.f32 %v3515, %v3632
        %s3638 = scalar_lea.vmem [#allocation17], 1
        %v3639 = vld [vmem:[%s3638] sm:$0x1]
        %s3640 = scalar_lea.vmem %s18, 1
        %v3641 = vld [vmem:[%s3640] sm:$0x1]
        %v3642 = vsel %vm1048, %v3634, 0.0
        %3643 = vadd.xlane.f32.xlu0 %v3642
        %v3644 = vpop.xlane.xlu0 %3643
        %v3645 = vsel %vm1048, %v3635, 0.0
        %3646 = vadd.xlane.f32.xlu0 %v3645
        %v3647 = vpop.xlane.xlu0 %3646
        %v3648 = vsel %vm1048, %v3636, 0.0
        %3649 = vadd.xlane.f32.xlu0 %v3648
        %v3650 = vpop.xlane.xlu0 %3649
        %v3651 = vsel %vm1048, %v3637, 0.0
        %3652 = vadd.xlane.f32.xlu0 %v3651
        %v3653 = vpop.xlane.xlu0 %3652
        %v3654 = vmul.f32 %v3644, %v2066
        %v3655 = vmul.f32 %v3647, %v2066
        %v3656 = vmul.f32 %v3650, %v2066
        %v3657 = vmul.f32 %v3653, %v2066
        %v3658 = vsub.f32 %v3634, %v3654
        %v3659 = vsub.f32 %v3635, %v3655
        %v3660 = vsub.f32 %v3636, %v3656
        %v3661 = vsub.f32 %v3637, %v3657
        %v3662 = vmul.f32 %v3658, %v3658
        %v3663 = vmul.f32 %v3659, %v3659
        %v3664 = vmul.f32 %v3660, %v3660
        %v3665 = vmul.f32 %v3661, %v3661
        %v3666 = vsel %vm1048, %v3662, 0.0
        %3667 = vadd.xlane.f32.xlu0 %v3666
        %v3668 = vpop.xlane.xlu0 %3667
        %v3669 = vsel %vm1048, %v3663, 0.0
        %3670 = vadd.xlane.f32.xlu0 %v3669
        %v3671 = vpop.xlane.xlu0 %3670
        %v3672 = vsel %vm1048, %v3664, 0.0
        %3673 = vadd.xlane.f32.xlu0 %v3672
        %v3674 = vpop.xlane.xlu0 %3673
        %v3675 = vsel %vm1048, %v3665, 0.0
        %3676 = vadd.xlane.f32.xlu0 %v3675
        %v3677 = vpop.xlane.xlu0 %3676
        %v3678 = vmul.f32 %v3668, %v2066
        %v3679 = vmul.f32 %v3671, %v2066
        %v3680 = vmul.f32 %v3674, %v2066
        %v3681 = vmul.f32 %v3677, %v2066
        %v3682 = vadd.f32 %v3678, 1e-05
        %v3683 = vadd.f32 %v3679, 1e-05
        %v3684 = vadd.f32 %v3680, 1e-05
        %v3685 = vadd.f32 %v3681, 1e-05
        %v3686 = vrsqrt.pop %v3682
        %v3687 = vmul.f32 %v3686, %v3682
        %v3688 = vmul.f32 %v3687, %v3686
        %v3689 = vmul.f32 0.5, %v3688
        %v3690 = vsub.f32 1.5, %v3689
        %v3691 = vmul.f32 %v3686, %v3690
        %vm3692 = vweird.f32 %v3682
        %vm3693 = vweird.f32 %v3686
        %vm3694 = vmor %vm3692, %vm3693
        %v3695 = vsel %vm3694, %v3686, %v3691
        %v3696 = vrsqrt.pop %v3683
        %v3697 = vmul.f32 %v3696, %v3683
        %v3698 = vmul.f32 %v3697, %v3696
        %v3699 = vmul.f32 0.5, %v3698
        %v3700 = vsub.f32 1.5, %v3699
        %v3701 = vmul.f32 %v3696, %v3700
        %vm3702 = vweird.f32 %v3683
        %vm3703 = vweird.f32 %v3696
        %vm3704 = vmor %vm3702, %vm3703
        %v3705 = vsel %vm3704, %v3696, %v3701
        %v3706 = vrsqrt.pop %v3684
        %v3707 = vmul.f32 %v3706, %v3684
        %v3708 = vmul.f32 %v3707, %v3706
        %v3709 = vmul.f32 0.5, %v3708
        %v3710 = vsub.f32 1.5, %v3709
        %v3711 = vmul.f32 %v3706, %v3710
        %vm3712 = vweird.f32 %v3684
        %vm3713 = vweird.f32 %v3706
        %vm3714 = vmor %vm3712, %vm3713
        %v3715 = vsel %vm3714, %v3706, %v3711
        %v3716 = vrsqrt.pop %v3685
        %v3717 = vmul.f32 %v3716, %v3685
        %v3718 = vmul.f32 %v3717, %v3716
        %v3719 = vmul.f32 0.5, %v3718
        %v3720 = vsub.f32 1.5, %v3719
        %v3721 = vmul.f32 %v3716, %v3720
        %vm3722 = vweird.f32 %v3685
        %vm3723 = vweird.f32 %v3716
        %vm3724 = vmor %vm3722, %vm3723
        %v3725 = vsel %vm3724, %v3716, %v3721
        %v3726 = vmul.f32 %v3658, %v3695
        %v3727 = vmul.f32 %v3659, %v3705
        %v3728 = vmul.f32 %v3660, %v3715
        %v3729 = vmul.f32 %v3661, %v3725
        %v3731 = vperm.slane %v3639, 0
        %v3733 = vmul.f32 %v3726, %v3731
        %v3734 = vmul.f32 %v3727, %v3731
        %v3735 = vmul.f32 %v3728, %v3731
        %v3736 = vmul.f32 %v3729, %v3731
        %v3738 = vperm.slane %v3641, 0
        %v3740 = vadd.f32 %v3733, %v3738
        %v3741 = vadd.f32 %v3734, %v3738
        %v3742 = vadd.f32 %v3735, %v3738
        %v3743 = vadd.f32 %v3736, %v3738
        %v3744 = vadd.f32 %v3740, %v829
        %v3745 = vadd.f32 %v3741, %v830
        %v3746 = vadd.f32 %v3742, %v832
        %v3747 = vadd.f32 %v3743, %v833
        %v3748 = vpack.c.bf16 %v3745, %v3744
        %v3749 = vpack.c.bf16 %v3747, %v3746
        %v3750 = vpack.c.bf16 %v3741, %v3740
        %v3751 = vpack.c.bf16 %v3743, %v3742
        %s3752 = scalar_lea.vmem %s3, 32
        %v3753 = vld [vmem:[%s3752] sm:$0xf]
        %v3754 = vld [vmem:[%s3752 + $0x4] sm:$0xf]
        %v3755 = vld [vmem:[%s3752 + $0x8] sm:$0xf]
        %v3756 = vld [vmem:[%s3752 + $0xc] sm:$0xf]
        %s3757 = scalar_lea.vmem %s4, 2
        %v3758 = vld [vmem:[%s3757] sm:$0x1]
        %v3760 = vperm.slane %v3758, 0
        %v3766 = vunpack.c.l.b16 %v3753
        %v3767 = vunpack.c.l.b16 %v3754
        %v3768 = vunpack.c.l.b16 %v3755
        %v3769 = vunpack.c.l.b16 %v3756
        %v3770 = vpack.c.b16 %v3767, %v3766
        %v3771 = vpack.c.b16 %v3769, %v3768
        %v3775 = vsel %vm1048, %v3748, 0
        %v3778 = vsel %vm1048, %v3749, 0
        %3780 = vmatpush.bf16.msra.mxu0 0
        %3781 = vmatpush.bf16.msra.mxu0 0
        %3782 = vmatpush.bf16.msra.mxu0 0
        %3783 = vmatpush.bf16.msra.mxu0 0
        %3784 = vmatpush.bf16.msra.mxu0 0
        %3785 = vmatpush.bf16.msra.mxu0 0
        %3786 = vmatpush.bf16.msra.mxu0 %v3771
        %3787 = vmatpush.bf16.msra.mxu0 %v3770
        %3788 = vmatmul.bf16.gmra.mxu0 %v3775
        %v3789 = vpop.f32.mrf.mxu0
        %v3790 = vadd.f32 %v3760, %v3789
        %v3791 = vpop.f32.mrf.mxu0
        %v3792 = vadd.f32 %v3760, %v3791
        %3793 = vmatmul.bf16.gmra.mxu0 %v3778
        %v3794 = vpop.f32.mrf.mxu0
        %v3795 = vadd.f32 %v3760, %v3794
        %v3796 = vpop.f32.mrf.mxu0
        %v3797 = vadd.f32 %v3760, %v3796
        %3798 = vdwg.mxu0
        %s3799 = scalar_lea.vmem [#allocation2], 32
        %v3800 = vld [vmem:[%s3799] sm:$0xf]
        %v3801 = vld [vmem:[%s3799 + $0x4] sm:$0xf]
        %v3802 = vld [vmem:[%s3799 + $0x8] sm:$0xf]
        %v3803 = vld [vmem:[%s3799 + $0xc] sm:$0xf]
        %s3804 = scalar_lea.vmem %s6, 2
        %v3805 = vld [vmem:[%s3804] sm:$0x1]
        %v3807 = vperm.slane %v3805, 0
        %v3813 = vunpack.c.l.b16 %v3800
        %v3814 = vunpack.c.l.b16 %v3801
        %v3815 = vunpack.c.l.b16 %v3802
        %v3816 = vunpack.c.l.b16 %v3803
        %v3817 = vpack.c.b16 %v3814, %v3813
        %v3818 = vpack.c.b16 %v3816, %v3815
        %3821 = vmatpush.bf16.msra.mxu0 0
        %3822 = vmatpush.bf16.msra.mxu0 0
        %3823 = vmatpush.bf16.msra.mxu0 0
        %3824 = vmatpush.bf16.msra.mxu0 0
        %3825 = vmatpush.bf16.msra.mxu0 0
        %3826 = vmatpush.bf16.msra.mxu0 0
        %3827 = vmatpush.bf16.msra.mxu0 %v3818
        %3828 = vmatpush.bf16.msra.mxu0 %v3817
        %3829 = vmatmul.bf16.gmra.mxu0 %v3775
        %v3830 = vpop.f32.mrf.mxu0
        %v3831 = vadd.f32 %v3807, %v3830
        %v3832 = vpop.f32.mrf.mxu0
        %v3833 = vadd.f32 %v3807, %v3832
        %3834 = vmatmul.bf16.gmra.mxu0 %v3778
        %v3835 = vpop.f32.mrf.mxu0
        %v3836 = vadd.f32 %v3807, %v3835
        %v3837 = vpop.f32.mrf.mxu0
        %v3838 = vadd.f32 %v3807, %v3837
        %3839 = vdwg.mxu0
        %s3840 = scalar_lea.vmem [#allocation5], 32
        %v3841 = vld [vmem:[%s3840] sm:$0xf]
        %v3842 = vld [vmem:[%s3840 + $0x4] sm:$0xf]
        %v3843 = vld [vmem:[%s3840 + $0x8] sm:$0xf]
        %v3844 = vld [vmem:[%s3840 + $0xc] sm:$0xf]
        %s3845 = scalar_lea.vmem %s8, 2
        %v3846 = vld [vmem:[%s3845] sm:$0x1]
        %v3848 = vperm.slane %v3846, 0
        %v3854 = vunpack.c.l.b16 %v3841
        %v3855 = vunpack.c.l.b16 %v3842
        %v3856 = vunpack.c.l.b16 %v3843
        %v3857 = vunpack.c.l.b16 %v3844
        %v3858 = vpack.c.b16 %v3855, %v3854
        %v3859 = vpack.c.b16 %v3857, %v3856
        %v3863 = vsel %vm1048, %v3750, 0
        %v3866 = vsel %vm1048, %v3751, 0
        %3868 = vmatpush.bf16.msra.mxu0 0
        %3869 = vmatpush.bf16.msra.mxu0 0
        %3870 = vmatpush.bf16.msra.mxu0 0
        %3871 = vmatpush.bf16.msra.mxu0 0
        %3872 = vmatpush.bf16.msra.mxu0 0
        %3873 = vmatpush.bf16.msra.mxu0 0
        %3874 = vmatpush.bf16.msra.mxu0 %v3859
        %3875 = vmatpush.bf16.msra.mxu0 %v3858
        %3876 = vmatmul.bf16.gmra.mxu0 %v3863
        %v3877 = vpop.f32.mrf.mxu0
        %v3878 = vadd.f32 %v3848, %v3877
        %v3879 = vpop.f32.mrf.mxu0
        %v3880 = vadd.f32 %v3848, %v3879
        %3881 = vmatmul.bf16.gmra.mxu0 %v3866
        %v3882 = vpop.f32.mrf.mxu0
        %v3883 = vadd.f32 %v3848, %v3882
        %v3884 = vpop.f32.mrf.mxu0
        %v3885 = vadd.f32 %v3848, %v3884
        %3886 = vdwg.mxu0
        %v3887 = vpack.c.bf16 %v3790, %v3790
        %v3888 = vpack.c.bf16 %v3792, %v3792
        %v3889 = vpack.c.bf16 %v3831, %v3831
        %v3890 = vpack.c.bf16 %v3833, %v3833
        %v3891 = vpack.c.bf16 %v3878, %v3878
        %v3892 = vpack.c.bf16 %v3880, %v3880
        %v3895 = vunpack.c.l.b16 %v3887
        %v3896 = vunpack.c.l.b16 %v3888
        %v3897 = vpack.c.b16 %v3896, %v3895
        %v3900 = vunpack.c.l.b16 %v3889
        %v3901 = vunpack.c.l.b16 %v3890
        %v3902 = vpack.c.b16 %v3901, %v3900
        %v3904 = vsel %vm1174, %v3897, 0
        %v3907 = vsel %vm1174, %v3902, 0
        %3909 = vmatpush.bf16.xpose.msra.mxu0 0
        %3910 = vmatpush.bf16.xpose.msra.mxu0 0
        %3911 = vmatpush.bf16.xpose.msra.mxu0 0
        %3912 = vmatpush.bf16.xpose.msra.mxu0 0
        %3913 = vmatpush.bf16.xpose.msra.mxu0 0
        %3914 = vmatpush.bf16.xpose.msra.mxu0 0
        %3915 = vmatpush.bf16.xpose.msra.mxu0 0
        %3916 = vmatpush.bf16.xpose.msra.mxu0 %v3907
        %3917 = vmatmul.bf16.gmra.mxu0 %v3904
        %v3918 = vpop.f32.mrf.mxu0
        %v3919 = vadd.f32 %v1014, %v3918
        %v3920 = vpop.f32.mrf.mxu0
        %v3921 = vadd.f32 %v1015, %v3920
        %3922 = vdwg.mxu0
        %v3923 = vsel %vm1195, %v3919, -inf
        %3924 = vmax.xlane.f32.xlu0 %v3923
        %v3925 = vpop.xlane.xlu0 %3924
        %v3926 = vsel %vm1195, %v3921, -inf
        %3927 = vmax.xlane.f32.xlu0 %v3926
        %v3928 = vpop.xlane.xlu0 %3927
        %v3929 = vsub.f32 %v3919, %v3925
        %v3930 = vsub.f32 %v3921, %v3928
        %v3931 = vmul.f32 %v3929, 1.442695
        %v3932 = vpow.pop %v3931
        %v3933 = vmul.f32 %v3930, 1.442695
        %v3934 = vpow.pop %v3933
        %v3935 = vsel %vm1195, %v3932, 0.0
        %3936 = vadd.xlane.f32.xlu0 %v3935
        %v3937 = vpop.xlane.xlu0 %3936
        %v3938 = vsel %vm1195, %v3934, 0.0
        %3939 = vadd.xlane.f32.xlu0 %v3938
        %v3940 = vpop.xlane.xlu0 %3939
        %v3941 = vrcp.pop %v3937
        %v3942 = vmul.f32 %v3937, %v3941
        %v3943 = vsub.f32 1.0, %v3942
        %v3944 = vmul.f32 %v3941, %v3943
        %v3945 = vadd.f32 %v3941, %v3944
        %vm3946 = vweird.f32 %v3937
        %vm3947 = vweird.f32 %v3941
        %vm3948 = vmor %vm3946, %vm3947
        %v3949 = vsel %vm3948, %v3941, %v3945
        %v3950 = vand.u32 2147483647, %v3937
        %vm3951 = vcmp.eq.f32.partialorder %v3950, 8.507059e+37
        %v3952 = vand.u32 %v3937, 2147483648
        %v3953 = vor.u32 1.1754944e-38, %v3952
        %v3954 = vsel %vm3951, %v3953, %v3949
        %v3955 = vrcp.pop %v3940
        %v3956 = vmul.f32 %v3940, %v3955
        %v3957 = vsub.f32 1.0, %v3956
        %v3958 = vmul.f32 %v3955, %v3957
        %v3959 = vadd.f32 %v3955, %v3958
        %vm3960 = vweird.f32 %v3940
        %vm3961 = vweird.f32 %v3955
        %vm3962 = vmor %vm3960, %vm3961
        %v3963 = vsel %vm3962, %v3955, %v3959
        %v3964 = vand.u32 2147483647, %v3940
        %vm3965 = vcmp.eq.f32.partialorder %v3964, 8.507059e+37
        %v3966 = vand.u32 %v3940, 2147483648
        %v3967 = vor.u32 1.1754944e-38, %v3966
        %v3968 = vsel %vm3965, %v3967, %v3963
        %v3969 = vmul.f32 %v3932, %v3954
        %v3970 = vmul.f32 %v3934, %v3968
        %v3971 = vpack.c.bf16 %v3970, %v3969
        %v3974 = vunpack.c.l.b16 %v3891
        %v3975 = vunpack.c.l.b16 %v3892
        %v3976 = vpack.c.b16 %v3975, %v3974
        %v3979 = vsel %vm1195, %v3971, 0
        %3981 = vmatpush.bf16.msra.mxu0 0
        %3982 = vmatpush.bf16.msra.mxu0 0
        %3983 = vmatpush.bf16.msra.mxu0 0
        %3984 = vmatpush.bf16.msra.mxu0 0
        %3985 = vmatpush.bf16.msra.mxu0 0
        %3986 = vmatpush.bf16.msra.mxu0 0
        %3987 = vmatpush.bf16.msra.mxu0 0
        %3988 = vmatpush.bf16.msra.mxu0 %v3976
        %3989 = vmatmul.bf16.gmra.mxu0 %v3979
        %v3990 = vpop.f32.mrf.mxu0
        %v3991 = vadd.f32 0.0, %v3990
        %v3992 = vpop.f32.mrf.mxu0
        %v3993 = vadd.f32 0.0, %v3992
        %3994 = vdwg.mxu0
        %3995 = vrot.lane.b32.xlu0 %v3897, 120
        %v3996 = vpop.permute.xlu0 %3995
        %3997 = vrot.lane.b32.xlu0 %v3902, 120
        %v3998 = vpop.permute.xlu0 %3997
        %v4000 = vsel %vm1174, %v3996, 0
        %v4003 = vsel %vm1174, %v3998, 0
        %4005 = vmatpush.bf16.xpose.msra.mxu0 0
        %4006 = vmatpush.bf16.xpose.msra.mxu0 0
        %4007 = vmatpush.bf16.xpose.msra.mxu0 0
        %4008 = vmatpush.bf16.xpose.msra.mxu0 0
        %4009 = vmatpush.bf16.xpose.msra.mxu0 0
        %4010 = vmatpush.bf16.xpose.msra.mxu0 0
        %4011 = vmatpush.bf16.xpose.msra.mxu0 0
        %4012 = vmatpush.bf16.xpose.msra.mxu0 %v4003
        %4013 = vmatmul.bf16.gmra.mxu0 %v4000
        %v4014 = vpop.f32.mrf.mxu0
        %v4015 = vadd.f32 %v1014, %v4014
        %v4016 = vpop.f32.mrf.mxu0
        %v4017 = vadd.f32 %v1015, %v4016
        %4018 = vdwg.mxu0
        %v4019 = vsel %vm1195, %v4015, -inf
        %4020 = vmax.xlane.f32.xlu0 %v4019
        %v4021 = vpop.xlane.xlu0 %4020
        %v4022 = vsel %vm1195, %v4017, -inf
        %4023 = vmax.xlane.f32.xlu0 %v4022
        %v4024 = vpop.xlane.xlu0 %4023
        %v4025 = vsub.f32 %v4015, %v4021
        %v4026 = vsub.f32 %v4017, %v4024
        %v4027 = vmul.f32 %v4025, 1.442695
        %v4028 = vpow.pop %v4027
        %v4029 = vmul.f32 %v4026, 1.442695
        %v4030 = vpow.pop %v4029
        %v4031 = vsel %vm1195, %v4028, 0.0
        %4032 = vadd.xlane.f32.xlu0 %v4031
        %v4033 = vpop.xlane.xlu0 %4032
        %v4034 = vsel %vm1195, %v4030, 0.0
        %4035 = vadd.xlane.f32.xlu0 %v4034
        %v4036 = vpop.xlane.xlu0 %4035
        %v4037 = vrcp.pop %v4033
        %v4038 = vmul.f32 %v4033, %v4037
        %v4039 = vsub.f32 1.0, %v4038
        %v4040 = vmul.f32 %v4037, %v4039
        %v4041 = vadd.f32 %v4037, %v4040
        %vm4042 = vweird.f32 %v4033
        %vm4043 = vweird.f32 %v4037
        %vm4044 = vmor %vm4042, %vm4043
        %v4045 = vsel %vm4044, %v4037, %v4041
        %v4046 = vand.u32 2147483647, %v4033
        %vm4047 = vcmp.eq.f32.partialorder %v4046, 8.507059e+37
        %v4048 = vand.u32 %v4033, 2147483648
        %v4049 = vor.u32 1.1754944e-38, %v4048
        %v4050 = vsel %vm4047, %v4049, %v4045
        %v4051 = vrcp.pop %v4036
        %v4052 = vmul.f32 %v4036, %v4051
        %v4053 = vsub.f32 1.0, %v4052
        %v4054 = vmul.f32 %v4051, %v4053
        %v4055 = vadd.f32 %v4051, %v4054
        %vm4056 = vweird.f32 %v4036
        %vm4057 = vweird.f32 %v4051
        %vm4058 = vmor %vm4056, %vm4057
        %v4059 = vsel %vm4058, %v4051, %v4055
        %v4060 = vand.u32 2147483647, %v4036
        %vm4061 = vcmp.eq.f32.partialorder %v4060, 8.507059e+37
        %v4062 = vand.u32 %v4036, 2147483648
        %v4063 = vor.u32 1.1754944e-38, %v4062
        %v4064 = vsel %vm4061, %v4063, %v4059
        %v4065 = vmul.f32 %v4028, %v4050
        %v4066 = vmul.f32 %v4030, %v4064
        %v4067 = vpack.c.bf16 %v4066, %v4065
        %4068 = vrot.lane.b32.xlu0 %v3976, 120
        %v4069 = vpop.permute.xlu0 %4068
        %v4072 = vsel %vm1195, %v4067, 0
        %4074 = vmatpush.bf16.msra.mxu0 0
        %4075 = vmatpush.bf16.msra.mxu0 0
        %4076 = vmatpush.bf16.msra.mxu0 0
        %4077 = vmatpush.bf16.msra.mxu0 0
        %4078 = vmatpush.bf16.msra.mxu0 0
        %4079 = vmatpush.bf16.msra.mxu0 0
        %4080 = vmatpush.bf16.msra.mxu0 0
        %4081 = vmatpush.bf16.msra.mxu0 %v4069
        %4082 = vmatmul.bf16.gmra.mxu0 %v4072
        %v4083 = vpop.f32.mrf.mxu0
        %v4084 = vadd.f32 0.0, %v4083
        %v4085 = vpop.f32.mrf.mxu0
        %v4086 = vadd.f32 0.0, %v4085
        %4087 = vdwg.mxu0
        %4088 = vrot.lane.b32.xlu0 %v3897, 112
        %v4089 = vpop.permute.xlu0 %4088
        %4090 = vrot.lane.b32.xlu0 %v3902, 112
        %v4091 = vpop.permute.xlu0 %4090
        %v4093 = vsel %vm1174, %v4089, 0
        %v4096 = vsel %vm1174, %v4091, 0
        %4098 = vmatpush.bf16.xpose.msra.mxu0 0
        %4099 = vmatpush.bf16.xpose.msra.mxu0 0
        %4100 = vmatpush.bf16.xpose.msra.mxu0 0
        %4101 = vmatpush.bf16.xpose.msra.mxu0 0
        %4102 = vmatpush.bf16.xpose.msra.mxu0 0
        %4103 = vmatpush.bf16.xpose.msra.mxu0 0
        %4104 = vmatpush.bf16.xpose.msra.mxu0 0
        %4105 = vmatpush.bf16.xpose.msra.mxu0 %v4096
        %4106 = vmatmul.bf16.gmra.mxu0 %v4093
        %v4107 = vpop.f32.mrf.mxu0
        %v4108 = vadd.f32 %v1014, %v4107
        %v4109 = vpop.f32.mrf.mxu0
        %v4110 = vadd.f32 %v1015, %v4109
        %4111 = vdwg.mxu0
        %v4112 = vsel %vm1195, %v4108, -inf
        %4113 = vmax.xlane.f32.xlu0 %v4112
        %v4114 = vpop.xlane.xlu0 %4113
        %v4115 = vsel %vm1195, %v4110, -inf
        %4116 = vmax.xlane.f32.xlu0 %v4115
        %v4117 = vpop.xlane.xlu0 %4116
        %v4118 = vsub.f32 %v4108, %v4114
        %v4119 = vsub.f32 %v4110, %v4117
        %v4120 = vmul.f32 %v4118, 1.442695
        %v4121 = vpow.pop %v4120
        %v4122 = vmul.f32 %v4119, 1.442695
        %v4123 = vpow.pop %v4122
        %v4124 = vsel %vm1195, %v4121, 0.0
        %4125 = vadd.xlane.f32.xlu0 %v4124
        %v4126 = vpop.xlane.xlu0 %4125
        %v4127 = vsel %vm1195, %v4123, 0.0
        %4128 = vadd.xlane.f32.xlu0 %v4127
        %v4129 = vpop.xlane.xlu0 %4128
        %v4130 = vrcp.pop %v4126
        %v4131 = vmul.f32 %v4126, %v4130
        %v4132 = vsub.f32 1.0, %v4131
        %v4133 = vmul.f32 %v4130, %v4132
        %v4134 = vadd.f32 %v4130, %v4133
        %vm4135 = vweird.f32 %v4126
        %vm4136 = vweird.f32 %v4130
        %vm4137 = vmor %vm4135, %vm4136
        %v4138 = vsel %vm4137, %v4130, %v4134
        %v4139 = vand.u32 2147483647, %v4126
        %vm4140 = vcmp.eq.f32.partialorder %v4139, 8.507059e+37
        %v4141 = vand.u32 %v4126, 2147483648
        %v4142 = vor.u32 1.1754944e-38, %v4141
        %v4143 = vsel %vm4140, %v4142, %v4138
        %v4144 = vrcp.pop %v4129
        %v4145 = vmul.f32 %v4129, %v4144
        %v4146 = vsub.f32 1.0, %v4145
        %v4147 = vmul.f32 %v4144, %v4146
        %v4148 = vadd.f32 %v4144, %v4147
        %vm4149 = vweird.f32 %v4129
        %vm4150 = vweird.f32 %v4144
        %vm4151 = vmor %vm4149, %vm4150
        %v4152 = vsel %vm4151, %v4144, %v4148
        %v4153 = vand.u32 2147483647, %v4129
        %vm4154 = vcmp.eq.f32.partialorder %v4153, 8.507059e+37
        %v4155 = vand.u32 %v4129, 2147483648
        %v4156 = vor.u32 1.1754944e-38, %v4155
        %v4157 = vsel %vm4154, %v4156, %v4152
        %v4158 = vmul.f32 %v4121, %v4143
        %v4159 = vmul.f32 %v4123, %v4157
        %v4160 = vpack.c.bf16 %v4159, %v4158
        %4161 = vrot.lane.b32.xlu0 %v3976, 112
        %v4162 = vpop.permute.xlu0 %4161
        %v4165 = vsel %vm1195, %v4160, 0
        %4167 = vmatpush.bf16.msra.mxu0 0
        %4168 = vmatpush.bf16.msra.mxu0 0
        %4169 = vmatpush.bf16.msra.mxu0 0
        %4170 = vmatpush.bf16.msra.mxu0 0
        %4171 = vmatpush.bf16.msra.mxu0 0
        %4172 = vmatpush.bf16.msra.mxu0 0
        %4173 = vmatpush.bf16.msra.mxu0 0
        %4174 = vmatpush.bf16.msra.mxu0 %v4162
        %4175 = vmatmul.bf16.gmra.mxu0 %v4165
        %v4176 = vpop.f32.mrf.mxu0
        %v4177 = vadd.f32 0.0, %v4176
        %v4178 = vpop.f32.mrf.mxu0
        %v4179 = vadd.f32 0.0, %v4178
        %4180 = vdwg.mxu0
        %4181 = vrot.lane.b32.xlu0 %v3897, 104
        %v4182 = vpop.permute.xlu0 %4181
        %4183 = vrot.lane.b32.xlu0 %v3902, 104
        %v4184 = vpop.permute.xlu0 %4183
        %v4186 = vsel %vm1174, %v4182, 0
        %v4189 = vsel %vm1174, %v4184, 0
        %4191 = vmatpush.bf16.xpose.msra.mxu0 0
        %4192 = vmatpush.bf16.xpose.msra.mxu0 0
        %4193 = vmatpush.bf16.xpose.msra.mxu0 0
        %4194 = vmatpush.bf16.xpose.msra.mxu0 0
        %4195 = vmatpush.bf16.xpose.msra.mxu0 0
        %4196 = vmatpush.bf16.xpose.msra.mxu0 0
        %4197 = vmatpush.bf16.xpose.msra.mxu0 0
        %4198 = vmatpush.bf16.xpose.msra.mxu0 %v4189
        %4199 = vmatmul.bf16.gmra.mxu0 %v4186
        %v4200 = vpop.f32.mrf.mxu0
        %v4201 = vadd.f32 %v1014, %v4200
        %v4202 = vpop.f32.mrf.mxu0
        %v4203 = vadd.f32 %v1015, %v4202
        %4204 = vdwg.mxu0
        %v4205 = vsel %vm1195, %v4201, -inf
        %4206 = vmax.xlane.f32.xlu0 %v4205
        %v4207 = vpop.xlane.xlu0 %4206
        %v4208 = vsel %vm1195, %v4203, -inf
        %4209 = vmax.xlane.f32.xlu0 %v4208
        %v4210 = vpop.xlane.xlu0 %4209
        %v4211 = vsub.f32 %v4201, %v4207
        %v4212 = vsub.f32 %v4203, %v4210
        %v4213 = vmul.f32 %v4211, 1.442695
        %v4214 = vpow.pop %v4213
        %v4215 = vmul.f32 %v4212, 1.442695
        %v4216 = vpow.pop %v4215
        %v4217 = vsel %vm1195, %v4214, 0.0
        %4218 = vadd.xlane.f32.xlu0 %v4217
        %v4219 = vpop.xlane.xlu0 %4218
        %v4220 = vsel %vm1195, %v4216, 0.0
        %4221 = vadd.xlane.f32.xlu0 %v4220
        %v4222 = vpop.xlane.xlu0 %4221
        %v4223 = vrcp.pop %v4219
        %v4224 = vmul.f32 %v4219, %v4223
        %v4225 = vsub.f32 1.0, %v4224
        %v4226 = vmul.f32 %v4223, %v4225
        %v4227 = vadd.f32 %v4223, %v4226
        %vm4228 = vweird.f32 %v4219
        %vm4229 = vweird.f32 %v4223
        %vm4230 = vmor %vm4228, %vm4229
        %v4231 = vsel %vm4230, %v4223, %v4227
        %v4232 = vand.u32 2147483647, %v4219
        %vm4233 = vcmp.eq.f32.partialorder %v4232, 8.507059e+37
        %v4234 = vand.u32 %v4219, 2147483648
        %v4235 = vor.u32 1.1754944e-38, %v4234
        %v4236 = vsel %vm4233, %v4235, %v4231
        %v4237 = vrcp.pop %v4222
        %v4238 = vmul.f32 %v4222, %v4237
        %v4239 = vsub.f32 1.0, %v4238
        %v4240 = vmul.f32 %v4237, %v4239
        %v4241 = vadd.f32 %v4237, %v4240
        %vm4242 = vweird.f32 %v4222
        %vm4243 = vweird.f32 %v4237
        %vm4244 = vmor %vm4242, %vm4243
        %v4245 = vsel %vm4244, %v4237, %v4241
        %v4246 = vand.u32 2147483647, %v4222
        %vm4247 = vcmp.eq.f32.partialorder %v4246, 8.507059e+37
        %v4248 = vand.u32 %v4222, 2147483648
        %v4249 = vor.u32 1.1754944e-38, %v4248
        %v4250 = vsel %vm4247, %v4249, %v4245
        %v4251 = vmul.f32 %v4214, %v4236
        %v4252 = vmul.f32 %v4216, %v4250
        %v4253 = vpack.c.bf16 %v4252, %v4251
        %4254 = vrot.lane.b32.xlu0 %v3976, 104
        %v4255 = vpop.permute.xlu0 %4254
        %v4258 = vsel %vm1195, %v4253, 0
        %4260 = vmatpush.bf16.msra.mxu0 0
        %4261 = vmatpush.bf16.msra.mxu0 0
        %4262 = vmatpush.bf16.msra.mxu0 0
        %4263 = vmatpush.bf16.msra.mxu0 0
        %4264 = vmatpush.bf16.msra.mxu0 0
        %4265 = vmatpush.bf16.msra.mxu0 0
        %4266 = vmatpush.bf16.msra.mxu0 0
        %4267 = vmatpush.bf16.msra.mxu0 %v4255
        %4268 = vmatmul.bf16.gmra.mxu0 %v4258
        %v4269 = vpop.f32.mrf.mxu0
        %v4270 = vadd.f32 0.0, %v4269
        %v4271 = vpop.f32.mrf.mxu0
        %v4272 = vadd.f32 0.0, %v4271
        %4273 = vdwg.mxu0
        %4276 = vrot.lane.b32.xlu0 %v4084, 8
        %v4277 = vpop.permute.xlu0 %4276
        %4278 = vrot.lane.b32.xlu0 %v4086, 8
        %v4279 = vpop.permute.xlu0 %4278
        %4284 = vrot.lane.b32.xlu0 %v4177, 16
        %v4285 = vpop.permute.xlu0 %4284
        %4286 = vrot.lane.b32.xlu0 %v4179, 16
        %v4287 = vpop.permute.xlu0 %4286
        %4292 = vrot.lane.b32.xlu0 %v4270, 24
        %v4293 = vpop.permute.xlu0 %4292
        %4294 = vrot.lane.b32.xlu0 %v4272, 24
        %v4295 = vpop.permute.xlu0 %4294
        %v4298 = vsel %vm1174, %v3991, %v4277
        %v4299 = vsel %vm1174, %v3993, %v4279
        %v4300 = vsel %vm1195, %v4298, %v4285
        %v4301 = vsel %vm1195, %v4299, %v4287
        %v4302 = vsel %vm1575, %v4300, %v4293
        %v4303 = vsel %vm1575, %v4301, %v4295
        %v4304 = vpack.c.bf16 %v3795, %v3795
        %v4305 = vpack.c.bf16 %v3797, %v3797
        %v4306 = vpack.c.bf16 %v3836, %v3836
        %v4307 = vpack.c.bf16 %v3838, %v3838
        %v4308 = vpack.c.bf16 %v3883, %v3883
        %v4309 = vpack.c.bf16 %v3885, %v3885
        %v4312 = vunpack.c.l.b16 %v4304
        %v4313 = vunpack.c.l.b16 %v4305
        %v4314 = vpack.c.b16 %v4313, %v4312
        %v4317 = vunpack.c.l.b16 %v4306
        %v4318 = vunpack.c.l.b16 %v4307
        %v4319 = vpack.c.b16 %v4318, %v4317
        %v4321 = vsel %vm1174, %v4314, 0
        %v4324 = vsel %vm1174, %v4319, 0
        %4326 = vmatpush.bf16.xpose.msra.mxu0 0
        %4327 = vmatpush.bf16.xpose.msra.mxu0 0
        %4328 = vmatpush.bf16.xpose.msra.mxu0 0
        %4329 = vmatpush.bf16.xpose.msra.mxu0 0
        %4330 = vmatpush.bf16.xpose.msra.mxu0 0
        %4331 = vmatpush.bf16.xpose.msra.mxu0 0
        %4332 = vmatpush.bf16.xpose.msra.mxu0 0
        %4333 = vmatpush.bf16.xpose.msra.mxu0 %v4324
        %4334 = vmatmul.bf16.gmra.mxu0 %v4321
        %v4335 = vpop.f32.mrf.mxu0
        %v4336 = vadd.f32 %v1018, %v4335
        %v4337 = vpop.f32.mrf.mxu0
        %v4338 = vadd.f32 %v1019, %v4337
        %4339 = vdwg.mxu0
        %v4340 = vsel %vm1195, %v4336, -inf
        %4341 = vmax.xlane.f32.xlu0 %v4340
        %v4342 = vpop.xlane.xlu0 %4341
        %v4343 = vsel %vm1195, %v4338, -inf
        %4344 = vmax.xlane.f32.xlu0 %v4343
        %v4345 = vpop.xlane.xlu0 %4344
        %v4346 = vsub.f32 %v4336, %v4342
        %v4347 = vsub.f32 %v4338, %v4345
        %v4348 = vmul.f32 %v4346, 1.442695
        %v4349 = vpow.pop %v4348
        %v4350 = vmul.f32 %v4347, 1.442695
        %v4351 = vpow.pop %v4350
        %v4352 = vsel %vm1195, %v4349, 0.0
        %4353 = vadd.xlane.f32.xlu0 %v4352
        %v4354 = vpop.xlane.xlu0 %4353
        %v4355 = vsel %vm1195, %v4351, 0.0
        %4356 = vadd.xlane.f32.xlu0 %v4355
        %v4357 = vpop.xlane.xlu0 %4356
        %v4358 = vrcp.pop %v4354
        %v4359 = vmul.f32 %v4354, %v4358
        %v4360 = vsub.f32 1.0, %v4359
        %v4361 = vmul.f32 %v4358, %v4360
        %v4362 = vadd.f32 %v4358, %v4361
        %vm4363 = vweird.f32 %v4354
        %vm4364 = vweird.f32 %v4358
        %vm4365 = vmor %vm4363, %vm4364
        %v4366 = vsel %vm4365, %v4358, %v4362
        %v4367 = vand.u32 2147483647, %v4354
        %vm4368 = vcmp.eq.f32.partialorder %v4367, 8.507059e+37
        %v4369 = vand.u32 %v4354, 2147483648
        %v4370 = vor.u32 1.1754944e-38, %v4369
        %v4371 = vsel %vm4368, %v4370, %v4366
        %v4372 = vrcp.pop %v4357
        %v4373 = vmul.f32 %v4357, %v4372
        %v4374 = vsub.f32 1.0, %v4373
        %v4375 = vmul.f32 %v4372, %v4374
        %v4376 = vadd.f32 %v4372, %v4375
        %vm4377 = vweird.f32 %v4357
        %vm4378 = vweird.f32 %v4372
        %vm4379 = vmor %vm4377, %vm4378
        %v4380 = vsel %vm4379, %v4372, %v4376
        %v4381 = vand.u32 2147483647, %v4357
        %vm4382 = vcmp.eq.f32.partialorder %v4381, 8.507059e+37
        %v4383 = vand.u32 %v4357, 2147483648
        %v4384 = vor.u32 1.1754944e-38, %v4383
        %v4385 = vsel %vm4382, %v4384, %v4380
        %v4386 = vmul.f32 %v4349, %v4371
        %v4387 = vmul.f32 %v4351, %v4385
        %v4388 = vpack.c.bf16 %v4387, %v4386
        %v4391 = vunpack.c.l.b16 %v4308
        %v4392 = vunpack.c.l.b16 %v4309
        %v4393 = vpack.c.b16 %v4392, %v4391
        %v4396 = vsel %vm1195, %v4388, 0
        %4398 = vmatpush.bf16.msra.mxu0 0
        %4399 = vmatpush.bf16.msra.mxu0 0
        %4400 = vmatpush.bf16.msra.mxu0 0
        %4401 = vmatpush.bf16.msra.mxu0 0
        %4402 = vmatpush.bf16.msra.mxu0 0
        %4403 = vmatpush.bf16.msra.mxu0 0
        %4404 = vmatpush.bf16.msra.mxu0 0
        %4405 = vmatpush.bf16.msra.mxu0 %v4393
        %4406 = vmatmul.bf16.gmra.mxu0 %v4396
        %v4407 = vpop.f32.mrf.mxu0
        %v4408 = vadd.f32 0.0, %v4407
        %v4409 = vpop.f32.mrf.mxu0
        %v4410 = vadd.f32 0.0, %v4409
        %4411 = vdwg.mxu0
        %4412 = vrot.lane.b32.xlu0 %v4314, 120
        %v4413 = vpop.permute.xlu0 %4412
        %4414 = vrot.lane.b32.xlu0 %v4319, 120
        %v4415 = vpop.permute.xlu0 %4414
        %v4417 = vsel %vm1174, %v4413, 0
        %v4420 = vsel %vm1174, %v4415, 0
        %4422 = vmatpush.bf16.xpose.msra.mxu0 0
        %4423 = vmatpush.bf16.xpose.msra.mxu0 0
        %4424 = vmatpush.bf16.xpose.msra.mxu0 0
        %4425 = vmatpush.bf16.xpose.msra.mxu0 0
        %4426 = vmatpush.bf16.xpose.msra.mxu0 0
        %4427 = vmatpush.bf16.xpose.msra.mxu0 0
        %4428 = vmatpush.bf16.xpose.msra.mxu0 0
        %4429 = vmatpush.bf16.xpose.msra.mxu0 %v4420
        %4430 = vmatmul.bf16.gmra.mxu0 %v4417
        %v4431 = vpop.f32.mrf.mxu0
        %v4432 = vadd.f32 %v1018, %v4431
        %v4433 = vpop.f32.mrf.mxu0
        %v4434 = vadd.f32 %v1019, %v4433
        %4435 = vdwg.mxu0
        %v4436 = vsel %vm1195, %v4432, -inf
        %4437 = vmax.xlane.f32.xlu0 %v4436
        %v4438 = vpop.xlane.xlu0 %4437
        %v4439 = vsel %vm1195, %v4434, -inf
        %4440 = vmax.xlane.f32.xlu0 %v4439
        %v4441 = vpop.xlane.xlu0 %4440
        %v4442 = vsub.f32 %v4432, %v4438
        %v4443 = vsub.f32 %v4434, %v4441
        %v4444 = vmul.f32 %v4442, 1.442695
        %v4445 = vpow.pop %v4444
        %v4446 = vmul.f32 %v4443, 1.442695
        %v4447 = vpow.pop %v4446
        %v4448 = vsel %vm1195, %v4445, 0.0
        %4449 = vadd.xlane.f32.xlu0 %v4448
        %v4450 = vpop.xlane.xlu0 %4449
        %v4451 = vsel %vm1195, %v4447, 0.0
        %4452 = vadd.xlane.f32.xlu0 %v4451
        %v4453 = vpop.xlane.xlu0 %4452
        %v4454 = vrcp.pop %v4450
        %v4455 = vmul.f32 %v4450, %v4454
        %v4456 = vsub.f32 1.0, %v4455
        %v4457 = vmul.f32 %v4454, %v4456
        %v4458 = vadd.f32 %v4454, %v4457
        %vm4459 = vweird.f32 %v4450
        %vm4460 = vweird.f32 %v4454
        %vm4461 = vmor %vm4459, %vm4460
        %v4462 = vsel %vm4461, %v4454, %v4458
        %v4463 = vand.u32 2147483647, %v4450
        %vm4464 = vcmp.eq.f32.partialorder %v4463, 8.507059e+37
        %v4465 = vand.u32 %v4450, 2147483648
        %v4466 = vor.u32 1.1754944e-38, %v4465
        %v4467 = vsel %vm4464, %v4466, %v4462
        %v4468 = vrcp.pop %v4453
        %v4469 = vmul.f32 %v4453, %v4468
        %v4470 = vsub.f32 1.0, %v4469
        %v4471 = vmul.f32 %v4468, %v4470
        %v4472 = vadd.f32 %v4468, %v4471
        %vm4473 = vweird.f32 %v4453
        %vm4474 = vweird.f32 %v4468
        %vm4475 = vmor %vm4473, %vm4474
        %v4476 = vsel %vm4475, %v4468, %v4472
        %v4477 = vand.u32 2147483647, %v4453
        %vm4478 = vcmp.eq.f32.partialorder %v4477, 8.507059e+37
        %v4479 = vand.u32 %v4453, 2147483648
        %v4480 = vor.u32 1.1754944e-38, %v4479
        %v4481 = vsel %vm4478, %v4480, %v4476
        %v4482 = vmul.f32 %v4445, %v4467
        %v4483 = vmul.f32 %v4447, %v4481
        %v4484 = vpack.c.bf16 %v4483, %v4482
        %4485 = vrot.lane.b32.xlu0 %v4393, 120
        %v4486 = vpop.permute.xlu0 %4485
        %v4489 = vsel %vm1195, %v4484, 0
        %4491 = vmatpush.bf16.msra.mxu0 0
        %4492 = vmatpush.bf16.msra.mxu0 0
        %4493 = vmatpush.bf16.msra.mxu0 0
        %4494 = vmatpush.bf16.msra.mxu0 0
        %4495 = vmatpush.bf16.msra.mxu0 0
        %4496 = vmatpush.bf16.msra.mxu0 0
        %4497 = vmatpush.bf16.msra.mxu0 0
        %4498 = vmatpush.bf16.msra.mxu0 %v4486
        %4499 = vmatmul.bf16.gmra.mxu0 %v4489
        %v4500 = vpop.f32.mrf.mxu0
        %v4501 = vadd.f32 0.0, %v4500
        %v4502 = vpop.f32.mrf.mxu0
        %v4503 = vadd.f32 0.0, %v4502
        %4504 = vdwg.mxu0
        %4505 = vrot.lane.b32.xlu0 %v4314, 112
        %v4506 = vpop.permute.xlu0 %4505
        %4507 = vrot.lane.b32.xlu0 %v4319, 112
        %v4508 = vpop.permute.xlu0 %4507
        %v4510 = vsel %vm1174, %v4506, 0
        %v4513 = vsel %vm1174, %v4508, 0
        %4515 = vmatpush.bf16.xpose.msra.mxu0 0
        %4516 = vmatpush.bf16.xpose.msra.mxu0 0
        %4517 = vmatpush.bf16.xpose.msra.mxu0 0
        %4518 = vmatpush.bf16.xpose.msra.mxu0 0
        %4519 = vmatpush.bf16.xpose.msra.mxu0 0
        %4520 = vmatpush.bf16.xpose.msra.mxu0 0
        %4521 = vmatpush.bf16.xpose.msra.mxu0 0
        %4522 = vmatpush.bf16.xpose.msra.mxu0 %v4513
        %4523 = vmatmul.bf16.gmra.mxu0 %v4510
        %v4524 = vpop.f32.mrf.mxu0
        %v4525 = vadd.f32 %v1018, %v4524
        %v4526 = vpop.f32.mrf.mxu0
        %v4527 = vadd.f32 %v1019, %v4526
        %4528 = vdwg.mxu0
        %v4529 = vsel %vm1195, %v4525, -inf
        %4530 = vmax.xlane.f32.xlu0 %v4529
        %v4531 = vpop.xlane.xlu0 %4530
        %v4532 = vsel %vm1195, %v4527, -inf
        %4533 = vmax.xlane.f32.xlu0 %v4532
        %v4534 = vpop.xlane.xlu0 %4533
        %v4535 = vsub.f32 %v4525, %v4531
        %v4536 = vsub.f32 %v4527, %v4534
        %v4537 = vmul.f32 %v4535, 1.442695
        %v4538 = vpow.pop %v4537
        %v4539 = vmul.f32 %v4536, 1.442695
        %v4540 = vpow.pop %v4539
        %v4541 = vsel %vm1195, %v4538, 0.0
        %4542 = vadd.xlane.f32.xlu0 %v4541
        %v4543 = vpop.xlane.xlu0 %4542
        %v4544 = vsel %vm1195, %v4540, 0.0
        %4545 = vadd.xlane.f32.xlu0 %v4544
        %v4546 = vpop.xlane.xlu0 %4545
        %v4547 = vrcp.pop %v4543
        %v4548 = vmul.f32 %v4543, %v4547
        %v4549 = vsub.f32 1.0, %v4548
        %v4550 = vmul.f32 %v4547, %v4549
        %v4551 = vadd.f32 %v4547, %v4550
        %vm4552 = vweird.f32 %v4543
        %vm4553 = vweird.f32 %v4547
        %vm4554 = vmor %vm4552, %vm4553
        %v4555 = vsel %vm4554, %v4547, %v4551
        %v4556 = vand.u32 2147483647, %v4543
        %vm4557 = vcmp.eq.f32.partialorder %v4556, 8.507059e+37
        %v4558 = vand.u32 %v4543, 2147483648
        %v4559 = vor.u32 1.1754944e-38, %v4558
        %v4560 = vsel %vm4557, %v4559, %v4555
        %v4561 = vrcp.pop %v4546
        %v4562 = vmul.f32 %v4546, %v4561
        %v4563 = vsub.f32 1.0, %v4562
        %v4564 = vmul.f32 %v4561, %v4563
        %v4565 = vadd.f32 %v4561, %v4564
        %vm4566 = vweird.f32 %v4546
        %vm4567 = vweird.f32 %v4561
        %vm4568 = vmor %vm4566, %vm4567
        %v4569 = vsel %vm4568, %v4561, %v4565
        %v4570 = vand.u32 2147483647, %v4546
        %vm4571 = vcmp.eq.f32.partialorder %v4570, 8.507059e+37
        %v4572 = vand.u32 %v4546, 2147483648
        %v4573 = vor.u32 1.1754944e-38, %v4572
        %v4574 = vsel %vm4571, %v4573, %v4569
        %v4575 = vmul.f32 %v4538, %v4560
        %v4576 = vmul.f32 %v4540, %v4574
        %v4577 = vpack.c.bf16 %v4576, %v4575
        %4578 = vrot.lane.b32.xlu0 %v4393, 112
        %v4579 = vpop.permute.xlu0 %4578
        %v4582 = vsel %vm1195, %v4577, 0
        %4584 = vmatpush.bf16.msra.mxu0 0
        %4585 = vmatpush.bf16.msra.mxu0 0
        %4586 = vmatpush.bf16.msra.mxu0 0
        %4587 = vmatpush.bf16.msra.mxu0 0
        %4588 = vmatpush.bf16.msra.mxu0 0
        %4589 = vmatpush.bf16.msra.mxu0 0
        %4590 = vmatpush.bf16.msra.mxu0 0
        %4591 = vmatpush.bf16.msra.mxu0 %v4579
        %4592 = vmatmul.bf16.gmra.mxu0 %v4582
        %v4593 = vpop.f32.mrf.mxu0
        %v4594 = vadd.f32 0.0, %v4593
        %v4595 = vpop.f32.mrf.mxu0
        %v4596 = vadd.f32 0.0, %v4595
        %4597 = vdwg.mxu0
        %4598 = vrot.lane.b32.xlu0 %v4314, 104
        %v4599 = vpop.permute.xlu0 %4598
        %4600 = vrot.lane.b32.xlu0 %v4319, 104
        %v4601 = vpop.permute.xlu0 %4600
        %v4603 = vsel %vm1174, %v4599, 0
        %v4606 = vsel %vm1174, %v4601, 0
        %4608 = vmatpush.bf16.xpose.msra.mxu0 0
        %4609 = vmatpush.bf16.xpose.msra.mxu0 0
        %4610 = vmatpush.bf16.xpose.msra.mxu0 0
        %4611 = vmatpush.bf16.xpose.msra.mxu0 0
        %4612 = vmatpush.bf16.xpose.msra.mxu0 0
        %4613 = vmatpush.bf16.xpose.msra.mxu0 0
        %4614 = vmatpush.bf16.xpose.msra.mxu0 0
        %4615 = vmatpush.bf16.xpose.msra.mxu0 %v4606
        %4616 = vmatmul.bf16.gmra.mxu0 %v4603
        %v4617 = vpop.f32.mrf.mxu0
        %v4618 = vadd.f32 %v1018, %v4617
        %v4619 = vpop.f32.mrf.mxu0
        %v4620 = vadd.f32 %v1019, %v4619
        %4621 = vdwg.mxu0
        %v4622 = vsel %vm1195, %v4618, -inf
        %4623 = vmax.xlane.f32.xlu0 %v4622
        %v4624 = vpop.xlane.xlu0 %4623
        %v4625 = vsel %vm1195, %v4620, -inf
        %4626 = vmax.xlane.f32.xlu0 %v4625
        %v4627 = vpop.xlane.xlu0 %4626
        %v4628 = vsub.f32 %v4618, %v4624
        %v4629 = vsub.f32 %v4620, %v4627
        %v4630 = vmul.f32 %v4628, 1.442695
        %v4631 = vpow.pop %v4630
        %v4632 = vmul.f32 %v4629, 1.442695
        %v4633 = vpow.pop %v4632
        %v4634 = vsel %vm1195, %v4631, 0.0
        %4635 = vadd.xlane.f32.xlu0 %v4634
        %v4636 = vpop.xlane.xlu0 %4635
        %v4637 = vsel %vm1195, %v4633, 0.0
        %4638 = vadd.xlane.f32.xlu0 %v4637
        %v4639 = vpop.xlane.xlu0 %4638
        %v4640 = vrcp.pop %v4636
        %v4641 = vmul.f32 %v4636, %v4640
        %v4642 = vsub.f32 1.0, %v4641
        %v4643 = vmul.f32 %v4640, %v4642
        %v4644 = vadd.f32 %v4640, %v4643
        %vm4645 = vweird.f32 %v4636
        %vm4646 = vweird.f32 %v4640
        %vm4647 = vmor %vm4645, %vm4646
        %v4648 = vsel %vm4647, %v4640, %v4644
        %v4649 = vand.u32 2147483647, %v4636
        %vm4650 = vcmp.eq.f32.partialorder %v4649, 8.507059e+37
        %v4651 = vand.u32 %v4636, 2147483648
        %v4652 = vor.u32 1.1754944e-38, %v4651
        %v4653 = vsel %vm4650, %v4652, %v4648
        %v4654 = vrcp.pop %v4639
        %v4655 = vmul.f32 %v4639, %v4654
        %v4656 = vsub.f32 1.0, %v4655
        %v4657 = vmul.f32 %v4654, %v4656
        %v4658 = vadd.f32 %v4654, %v4657
        %vm4659 = vweird.f32 %v4639
        %vm4660 = vweird.f32 %v4654
        %vm4661 = vmor %vm4659, %vm4660
        %v4662 = vsel %vm4661, %v4654, %v4658
        %v4663 = vand.u32 2147483647, %v4639
        %vm4664 = vcmp.eq.f32.partialorder %v4663, 8.507059e+37
        %v4665 = vand.u32 %v4639, 2147483648
        %v4666 = vor.u32 1.1754944e-38, %v4665
        %v4667 = vsel %vm4664, %v4666, %v4662
        %v4668 = vmul.f32 %v4631, %v4653
        %v4669 = vmul.f32 %v4633, %v4667
        %v4670 = vpack.c.bf16 %v4669, %v4668
        %4671 = vrot.lane.b32.xlu0 %v4393, 104
        %v4672 = vpop.permute.xlu0 %4671
        %v4675 = vsel %vm1195, %v4670, 0
        %4677 = vmatpush.bf16.msra.mxu0 0
        %4678 = vmatpush.bf16.msra.mxu0 0
        %4679 = vmatpush.bf16.msra.mxu0 0
        %4680 = vmatpush.bf16.msra.mxu0 0
        %4681 = vmatpush.bf16.msra.mxu0 0
        %4682 = vmatpush.bf16.msra.mxu0 0
        %4683 = vmatpush.bf16.msra.mxu0 0
        %4684 = vmatpush.bf16.msra.mxu0 %v4672
        %4685 = vmatmul.bf16.gmra.mxu0 %v4675
        %v4686 = vpop.f32.mrf.mxu0
        %v4687 = vadd.f32 0.0, %v4686
        %v4688 = vpop.f32.mrf.mxu0
        %v4689 = vadd.f32 0.0, %v4688
        %4690 = vdwg.mxu0
        %4693 = vrot.lane.b32.xlu0 %v4501, 8
        %v4694 = vpop.permute.xlu0 %4693
        %4695 = vrot.lane.b32.xlu0 %v4503, 8
        %v4696 = vpop.permute.xlu0 %4695
        %4701 = vrot.lane.b32.xlu0 %v4594, 16
        %v4702 = vpop.permute.xlu0 %4701
        %4703 = vrot.lane.b32.xlu0 %v4596, 16
        %v4704 = vpop.permute.xlu0 %4703
        %4709 = vrot.lane.b32.xlu0 %v4687, 24
        %v4710 = vpop.permute.xlu0 %4709
        %4711 = vrot.lane.b32.xlu0 %v4689, 24
        %v4712 = vpop.permute.xlu0 %4711
        %v4715 = vsel %vm1174, %v4408, %v4694
        %v4716 = vsel %vm1174, %v4410, %v4696
        %v4717 = vsel %vm1195, %v4715, %v4702
        %v4718 = vsel %vm1195, %v4716, %v4704
        %v4719 = vsel %vm1575, %v4717, %v4710
        %v4720 = vsel %vm1575, %v4718, %v4712
        %v4721 = vpack.c.bf16 %v4303, %v4302
        %v4722 = vpack.c.bf16 %v4720, %v4719
        %s4723 = scalar_lea.vmem [#allocation7], 32
        %v4724 = vld [vmem:[%s4723] sm:$0xf]
        %v4725 = vld [vmem:[%s4723 + $0x4] sm:$0xf]
        %v4726 = vld [vmem:[%s4723 + $0x8] sm:$0xf]
        %v4727 = vld [vmem:[%s4723 + $0xc] sm:$0xf]
        %s4728 = scalar_lea.vmem [#allocation8], 2
        %v4729 = vld [vmem:[%s4728] sm:$0x1]
        %v4731 = vperm.slane %v4729, 0
        %v4737 = vunpack.c.l.b16 %v4724
        %v4738 = vunpack.c.l.b16 %v4725
        %v4739 = vunpack.c.l.b16 %v4726
        %v4740 = vunpack.c.l.b16 %v4727
        %v4741 = vpack.c.b16 %v4738, %v4737
        %v4742 = vpack.c.b16 %v4740, %v4739
        %v4746 = vsel %vm1048, %v4721, 0
        %v4749 = vsel %vm1048, %v4722, 0
        %4751 = vmatpush.bf16.msra.mxu0 0
        %4752 = vmatpush.bf16.msra.mxu0 0
        %4753 = vmatpush.bf16.msra.mxu0 0
        %4754 = vmatpush.bf16.msra.mxu0 0
        %4755 = vmatpush.bf16.msra.mxu0 0
        %4756 = vmatpush.bf16.msra.mxu0 0
        %4757 = vmatpush.bf16.msra.mxu0 %v4742
        %4758 = vmatpush.bf16.msra.mxu0 %v4741
        %4759 = vmatmul.bf16.gmra.mxu0 %v4746
        %v4760 = vpop.f32.mrf.mxu0
        %v4761 = vadd.f32 %v4731, %v4760
        %v4762 = vpop.f32.mrf.mxu0
        %v4763 = vadd.f32 %v4731, %v4762
        %4764 = vmatmul.bf16.gmra.mxu0 %v4749
        %v4765 = vpop.f32.mrf.mxu0
        %v4766 = vadd.f32 %v4731, %v4765
        %v4767 = vpop.f32.mrf.mxu0
        %v4768 = vadd.f32 %v4731, %v4767
        %4769 = vdwg.mxu0
        %v4770 = vadd.f32 %v3740, %v4761
        %v4771 = vadd.f32 %v3741, %v4763
        %v4772 = vadd.f32 %v3742, %v4766
        %v4773 = vadd.f32 %v3743, %v4768
        %s4774 = scalar_lea.vmem [#allocation10], 2
        %v4775 = vld [vmem:[%s4774] sm:$0x1]
        %s4776 = scalar_lea.vmem [#allocation11], 2
        %v4777 = vld [vmem:[%s4776] sm:$0x1]
        %v4778 = vsel %vm1048, %v4770, 0.0
        %4779 = vadd.xlane.f32.xlu0 %v4778
        %v4780 = vpop.xlane.xlu0 %4779
        %v4781 = vsel %vm1048, %v4771, 0.0
        %4782 = vadd.xlane.f32.xlu0 %v4781
        %v4783 = vpop.xlane.xlu0 %4782
        %v4784 = vsel %vm1048, %v4772, 0.0
        %4785 = vadd.xlane.f32.xlu0 %v4784
        %v4786 = vpop.xlane.xlu0 %4785
        %v4787 = vsel %vm1048, %v4773, 0.0
        %4788 = vadd.xlane.f32.xlu0 %v4787
        %v4789 = vpop.xlane.xlu0 %4788
        %v4790 = vmul.f32 %v4780, %v2066
        %v4791 = vmul.f32 %v4783, %v2066
        %v4792 = vmul.f32 %v4786, %v2066
        %v4793 = vmul.f32 %v4789, %v2066
        %v4794 = vsub.f32 %v4770, %v4790
        %v4795 = vsub.f32 %v4771, %v4791
        %v4796 = vsub.f32 %v4772, %v4792
        %v4797 = vsub.f32 %v4773, %v4793
        %v4798 = vmul.f32 %v4794, %v4794
        %v4799 = vmul.f32 %v4795, %v4795
        %v4800 = vmul.f32 %v4796, %v4796
        %v4801 = vmul.f32 %v4797, %v4797
        %v4802 = vsel %vm1048, %v4798, 0.0
        %4803 = vadd.xlane.f32.xlu0 %v4802
        %v4804 = vpop.xlane.xlu0 %4803
        %v4805 = vsel %vm1048, %v4799, 0.0
        %4806 = vadd.xlane.f32.xlu0 %v4805
        %v4807 = vpop.xlane.xlu0 %4806
        %v4808 = vsel %vm1048, %v4800, 0.0
        %4809 = vadd.xlane.f32.xlu0 %v4808
        %v4810 = vpop.xlane.xlu0 %4809
        %v4811 = vsel %vm1048, %v4801, 0.0
        %4812 = vadd.xlane.f32.xlu0 %v4811
        %v4813 = vpop.xlane.xlu0 %4812
        %v4814 = vmul.f32 %v4804, %v2066
        %v4815 = vmul.f32 %v4807, %v2066
        %v4816 = vmul.f32 %v4810, %v2066
        %v4817 = vmul.f32 %v4813, %v2066
        %v4818 = vadd.f32 %v4814, 1e-05
        %v4819 = vadd.f32 %v4815, 1e-05
        %v4820 = vadd.f32 %v4816, 1e-05
        %v4821 = vadd.f32 %v4817, 1e-05
        %v4822 = vrsqrt.pop %v4818
        %v4823 = vmul.f32 %v4822, %v4818
        %v4824 = vmul.f32 %v4823, %v4822
        %v4825 = vmul.f32 0.5, %v4824
        %v4826 = vsub.f32 1.5, %v4825
        %v4827 = vmul.f32 %v4822, %v4826
        %vm4828 = vweird.f32 %v4818
        %vm4829 = vweird.f32 %v4822
        %vm4830 = vmor %vm4828, %vm4829
        %v4831 = vsel %vm4830, %v4822, %v4827
        %v4832 = vrsqrt.pop %v4819
        %v4833 = vmul.f32 %v4832, %v4819
        %v4834 = vmul.f32 %v4833, %v4832
        %v4835 = vmul.f32 0.5, %v4834
        %v4836 = vsub.f32 1.5, %v4835
        %v4837 = vmul.f32 %v4832, %v4836
        %vm4838 = vweird.f32 %v4819
        %vm4839 = vweird.f32 %v4832
        %vm4840 = vmor %vm4838, %vm4839
        %v4841 = vsel %vm4840, %v4832, %v4837
        %v4842 = vrsqrt.pop %v4820
        %v4843 = vmul.f32 %v4842, %v4820
        %v4844 = vmul.f32 %v4843, %v4842
        %v4845 = vmul.f32 0.5, %v4844
        %v4846 = vsub.f32 1.5, %v4845
        %v4847 = vmul.f32 %v4842, %v4846
        %vm4848 = vweird.f32 %v4820
        %vm4849 = vweird.f32 %v4842
        %vm4850 = vmor %vm4848, %vm4849
        %v4851 = vsel %vm4850, %v4842, %v4847
        %v4852 = vrsqrt.pop %v4821
        %v4853 = vmul.f32 %v4852, %v4821
        %v4854 = vmul.f32 %v4853, %v4852
        %v4855 = vmul.f32 0.5, %v4854
        %v4856 = vsub.f32 1.5, %v4855
        %v4857 = vmul.f32 %v4852, %v4856
        %vm4858 = vweird.f32 %v4821
        %vm4859 = vweird.f32 %v4852
        %vm4860 = vmor %vm4858, %vm4859
        %v4861 = vsel %vm4860, %v4852, %v4857
        %v4862 = vmul.f32 %v4794, %v4831
        %v4863 = vmul.f32 %v4795, %v4841
        %v4864 = vmul.f32 %v4796, %v4851
        %v4865 = vmul.f32 %v4797, %v4861
        %v4867 = vperm.slane %v4775, 0
        %v4869 = vmul.f32 %v4862, %v4867
        %v4870 = vmul.f32 %v4863, %v4867
        %v4871 = vmul.f32 %v4864, %v4867
        %v4872 = vmul.f32 %v4865, %v4867
        %v4874 = vperm.slane %v4777, 0
        %v4876 = vadd.f32 %v4869, %v4874
        %v4877 = vadd.f32 %v4870, %v4874
        %v4878 = vadd.f32 %v4871, %v4874
        %v4879 = vadd.f32 %v4872, %v4874
        %v4880 = vpack.c.bf16 %v4877, %v4876
        %v4881 = vpack.c.bf16 %v4879, %v4878
        %s4882 = scalar_lea.vmem [#allocation13], 32
        %v4883 = vld [vmem:[%s4882] sm:$0xf]
        %v4884 = vld [vmem:[%s4882 + $0x4] sm:$0xf]
        %v4885 = vld [vmem:[%s4882 + $0x8] sm:$0xf]
        %v4886 = vld [vmem:[%s4882 + $0xc] sm:$0xf]
        %s4887 = scalar_lea.vmem [#allocation14], 2
        %v4888 = vld [vmem:[%s4887] sm:$0x1]
        %v4890 = vperm.slane %v4888, 0
        %v4896 = vunpack.c.l.b16 %v4883
        %v4897 = vunpack.c.l.b16 %v4884
        %v4898 = vunpack.c.l.b16 %v4885
        %v4899 = vunpack.c.l.b16 %v4886
        %v4900 = vpack.c.b16 %v4897, %v4896
        %v4901 = vpack.c.b16 %v4899, %v4898
        %v4905 = vsel %vm1048, %v4880, 0
        %v4908 = vsel %vm1048, %v4881, 0
        %4910 = vmatpush.bf16.msra.mxu0 0
        %4911 = vmatpush.bf16.msra.mxu0 0
        %4912 = vmatpush.bf16.msra.mxu0 0
        %4913 = vmatpush.bf16.msra.mxu0 0
        %4914 = vmatpush.bf16.msra.mxu0 0
        %4915 = vmatpush.bf16.msra.mxu0 0
        %4916 = vmatpush.bf16.msra.mxu0 %v4901
        %4917 = vmatpush.bf16.msra.mxu0 %v4900
        %4918 = vmatmul.bf16.gmra.mxu0 %v4905
        %v4919 = vpop.f32.mrf.mxu0
        %v4920 = vadd.f32 %v4890, %v4919
        %v4921 = vpop.f32.mrf.mxu0
        %v4922 = vadd.f32 %v4890, %v4921
        %4923 = vmatmul.bf16.gmra.mxu0 %v4908
        %v4924 = vpop.f32.mrf.mxu0
        %v4925 = vadd.f32 %v4890, %v4924
        %v4926 = vpop.f32.mrf.mxu0
        %v4927 = vadd.f32 %v4890, %v4926
        %4928 = vdwg.mxu0
        %v4929 = vmax.f32 %v4920, 0.0
        %v4930 = vmax.f32 %v4922, 0.0
        %v4931 = vmax.f32 %v4925, 0.0
        %v4932 = vmax.f32 %v4927, 0.0
        %v4933 = vpack.c.bf16 %v4930, %v4929
        %v4934 = vpack.c.bf16 %v4932, %v4931
        %s4935 = scalar_lea.vmem %s15, 64
        %v4936 = vld [vmem:[%s4935] sm:$0xf]
        %v4937 = vld [vmem:[%s4935 + $0x4] sm:$0xf]
        %v4938 = vld [vmem:[%s4935 + $0x8] sm:$0xf]
        %v4939 = vld [vmem:[%s4935 + $0xc] sm:$0xf]
        %v4940 = vld [vmem:[%s4935 + $0x10] sm:$0xf]
        %v4941 = vld [vmem:[%s4935 + $0x14] sm:$0xf]
        %v4942 = vld [vmem:[%s4935 + $0x18] sm:$0xf]
        %v4943 = vld [vmem:[%s4935 + $0x1c] sm:$0xf]
        %s4944 = scalar_lea.vmem [#allocation16], 2
        %v4945 = vld [vmem:[%s4944] sm:$0x1]
        %v4947 = vperm.slane %v4945, 0
        %v4957 = vunpack.c.l.b16 %v4936
        %v4958 = vunpack.c.l.b16 %v4937
        %v4959 = vunpack.c.l.b16 %v4938
        %v4960 = vunpack.c.l.b16 %v4939
        %v4961 = vunpack.c.l.b16 %v4940
        %v4962 = vunpack.c.l.b16 %v4941
        %v4963 = vunpack.c.l.b16 %v4942
        %v4964 = vunpack.c.l.b16 %v4943
        %v4965 = vpack.c.b16 %v4958, %v4957
        %v4966 = vpack.c.b16 %v4960, %v4959
        %v4967 = vpack.c.b16 %v4962, %v4961
        %v4968 = vpack.c.b16 %v4964, %v4963
        %v4974 = vsel %vm2246, %v4933, 0
        %v4977 = vsel %vm2246, %v4934, 0
        %4979 = vmatpush.bf16.msra.mxu0 0
        %4980 = vmatpush.bf16.msra.mxu0 0
        %4981 = vmatpush.bf16.msra.mxu0 0
        %4982 = vmatpush.bf16.msra.mxu0 0
        %4983 = vmatpush.bf16.msra.mxu0 %v4968
        %4984 = vmatpush.bf16.msra.mxu0 %v4967
        %4985 = vmatpush.bf16.msra.mxu0 %v4966
        %4986 = vmatpush.bf16.msra.mxu0 %v4965
        %4987 = vmatmul.bf16.gmra.mxu0 %v4974
        %v4988 = vpop.f32.mrf.mxu0
        %v4989 = vadd.f32 %v4947, %v4988
        %v4990 = vpop.f32.mrf.mxu0
        %v4991 = vadd.f32 %v4947, %v4990
        %4992 = vmatmul.bf16.gmra.mxu0 %v4977
        %v4993 = vpop.f32.mrf.mxu0
        %v4994 = vadd.f32 %v4947, %v4993
        %v4995 = vpop.f32.mrf.mxu0
        %v4996 = vadd.f32 %v4947, %v4995
        %4997 = vdwg.mxu0
        %v4998 = vadd.f32 %v4876, %v4989
        %v4999 = vadd.f32 %v4877, %v4991
        %v5000 = vadd.f32 %v4878, %v4994
        %v5001 = vadd.f32 %v4879, %v4996
        %s5002 = scalar_lea.vmem [#allocation17], 2
        %v5003 = vld [vmem:[%s5002] sm:$0x1]
        %s5004 = scalar_lea.vmem %s18, 2
        %v5005 = vld [vmem:[%s5004] sm:$0x1]
        %v5006 = vsel %vm1048, %v4998, 0.0
        %5007 = vadd.xlane.f32.xlu0 %v5006
        %v5008 = vpop.xlane.xlu0 %5007
        %v5009 = vsel %vm1048, %v4999, 0.0
        %5010 = vadd.xlane.f32.xlu0 %v5009
        %v5011 = vpop.xlane.xlu0 %5010
        %v5012 = vsel %vm1048, %v5000, 0.0
        %5013 = vadd.xlane.f32.xlu0 %v5012
        %v5014 = vpop.xlane.xlu0 %5013
        %v5015 = vsel %vm1048, %v5001, 0.0
        %5016 = vadd.xlane.f32.xlu0 %v5015
        %v5017 = vpop.xlane.xlu0 %5016
        %v5018 = vmul.f32 %v5008, %v2066
        %v5019 = vmul.f32 %v5011, %v2066
        %v5020 = vmul.f32 %v5014, %v2066
        %v5021 = vmul.f32 %v5017, %v2066
        %v5022 = vsub.f32 %v4998, %v5018
        %v5023 = vsub.f32 %v4999, %v5019
        %v5024 = vsub.f32 %v5000, %v5020
        %v5025 = vsub.f32 %v5001, %v5021
        %v5026 = vmul.f32 %v5022, %v5022
        %v5027 = vmul.f32 %v5023, %v5023
        %v5028 = vmul.f32 %v5024, %v5024
        %v5029 = vmul.f32 %v5025, %v5025
        %v5030 = vsel %vm1048, %v5026, 0.0
        %5031 = vadd.xlane.f32.xlu0 %v5030
        %v5032 = vpop.xlane.xlu0 %5031
        %v5033 = vsel %vm1048, %v5027, 0.0
        %5034 = vadd.xlane.f32.xlu0 %v5033
        %v5035 = vpop.xlane.xlu0 %5034
        %v5036 = vsel %vm1048, %v5028, 0.0
        %5037 = vadd.xlane.f32.xlu0 %v5036
        %v5038 = vpop.xlane.xlu0 %5037
        %v5039 = vsel %vm1048, %v5029, 0.0
        %5040 = vadd.xlane.f32.xlu0 %v5039
        %v5041 = vpop.xlane.xlu0 %5040
        %v5042 = vmul.f32 %v5032, %v2066
        %v5043 = vmul.f32 %v5035, %v2066
        %v5044 = vmul.f32 %v5038, %v2066
        %v5045 = vmul.f32 %v5041, %v2066
        %v5046 = vadd.f32 %v5042, 1e-05
        %v5047 = vadd.f32 %v5043, 1e-05
        %v5048 = vadd.f32 %v5044, 1e-05
        %v5049 = vadd.f32 %v5045, 1e-05
        %v5050 = vrsqrt.pop %v5046
        %v5051 = vmul.f32 %v5050, %v5046
        %v5052 = vmul.f32 %v5051, %v5050
        %v5053 = vmul.f32 0.5, %v5052
        %v5054 = vsub.f32 1.5, %v5053
        %v5055 = vmul.f32 %v5050, %v5054
        %vm5056 = vweird.f32 %v5046
        %vm5057 = vweird.f32 %v5050
        %vm5058 = vmor %vm5056, %vm5057
        %v5059 = vsel %vm5058, %v5050, %v5055
        %v5060 = vrsqrt.pop %v5047
        %v5061 = vmul.f32 %v5060, %v5047
        %v5062 = vmul.f32 %v5061, %v5060
        %v5063 = vmul.f32 0.5, %v5062
        %v5064 = vsub.f32 1.5, %v5063
        %v5065 = vmul.f32 %v5060, %v5064
        %vm5066 = vweird.f32 %v5047
        %vm5067 = vweird.f32 %v5060
        %vm5068 = vmor %vm5066, %vm5067
        %v5069 = vsel %vm5068, %v5060, %v5065
        %v5070 = vrsqrt.pop %v5048
        %v5071 = vmul.f32 %v5070, %v5048
        %v5072 = vmul.f32 %v5071, %v5070
        %v5073 = vmul.f32 0.5, %v5072
        %v5074 = vsub.f32 1.5, %v5073
        %v5075 = vmul.f32 %v5070, %v5074
        %vm5076 = vweird.f32 %v5048
        %vm5077 = vweird.f32 %v5070
        %vm5078 = vmor %vm5076, %vm5077
        %v5079 = vsel %vm5078, %v5070, %v5075
        %v5080 = vrsqrt.pop %v5049
        %v5081 = vmul.f32 %v5080, %v5049
        %v5082 = vmul.f32 %v5081, %v5080
        %v5083 = vmul.f32 0.5, %v5082
        %v5084 = vsub.f32 1.5, %v5083
        %v5085 = vmul.f32 %v5080, %v5084
        %vm5086 = vweird.f32 %v5049
        %vm5087 = vweird.f32 %v5080
        %vm5088 = vmor %vm5086, %vm5087
        %v5089 = vsel %vm5088, %v5080, %v5085
        %v5090 = vmul.f32 %v5022, %v5059
        %v5091 = vmul.f32 %v5023, %v5069
        %v5092 = vmul.f32 %v5024, %v5079
        %v5093 = vmul.f32 %v5025, %v5089
        %v5095 = vperm.slane %v5003, 0
        %v5097 = vmul.f32 %v5090, %v5095
        %v5098 = vmul.f32 %v5091, %v5095
        %v5099 = vmul.f32 %v5092, %v5095
        %v5100 = vmul.f32 %v5093, %v5095
        %v5102 = vperm.slane %v5005, 0
        %v5104 = vadd.f32 %v5097, %v5102
        %v5105 = vadd.f32 %v5098, %v5102
        %v5106 = vadd.f32 %v5099, %v5102
        %v5107 = vadd.f32 %v5100, %v5102
        %5108 = vst.msk [vmem:[%s800] sm:$0xff] %vm1048, %v5104
        %5109 = vst.msk [vmem:[%s800 + $0x8] sm:$0xff] %vm1048, %v5105
        %s5110 = scalar_lea.vmem %s800, 16 [#allocation19]
        %5111 = vst.msk [vmem:[%s5110] sm:$0xff] %vm1048, %v5106
        %5112 = vst.msk [vmem:[%s5110 + $0x8] sm:$0xff] %vm1048, %v5107
        %s5113 = sand.u32 %s461, 1
        %s5114 = scalar_lea.sflag [#allocation4], %s5113
        %s5115 = sand.u32 %s461, 1
        %s5116 = smul.addr %s5115, 32
        %s5117 = scalar_lea.vmem [#allocation19], %s5116
        // Predicated region
        $region137: #{tpu_custom_call.1} parent=95 // pred_check
          %p5118 = pneg %p471
        $region138: #{tpu_custom_call.1} parent=95 // pred_check_branch
          %5120 = sbr.rel (%p5118) target = $region140
        $region139: #{tpu_custom_call.1} parent=95 // pred_region
          %s5121 = smul.u32 2, %s39
          %5123 = vsyncadd %s5114, 0
          %s5124 = smul.addr %s5121, 2
          %s5125 = smul.addr %s5124, 8
          %s5126 = scalar_lea.hbm %s19, %s5125
          %s5127 = sshll.u32 %s5117, 4
          %s5128 = int_to_ptr.vmem [resolvable:$true] %s5127
          %s5129 = sshll.u32 %s5126, 4
          %s5130 = int_to_ptr.hbm [resolvable:$true] %s5129
          %5135 = dma.vmem_to_hbm [thread:$0]  %s5128, 512, %s5130, %s5114, 128, 128, 8
        $region140: #{tpu_custom_call.1} parent=95 // pred_fallthru
          _
      $region96: #{tpu_custom_call.1} parent=5 // pred_fallthru
        _
      %p5136 = scmp.le.s32.totalorder 2, %s34
      // Predicated region
      $region141: #{tpu_custom_call.1} parent=5 // pred_check
        %p5137 = pneg %p5136
      $region142: #{tpu_custom_call.1} parent=5 // pred_check_branch
        %5139 = sbr.rel (%p5137) target = $region144
      $region143: #{tpu_custom_call.1} parent=5 // pred_region
        %s5140 = ssub.s32 %s34, 2
        // Predicated region
        $region145: #{tpu_custom_call.1} parent=143 // pred_check
          %p5141 = pneg %p477
        $region146: #{tpu_custom_call.1} parent=143 // pred_check_branch
          %5143 = sbr.rel (%p5141) target = $region148
        $region147: #{tpu_custom_call.1} parent=143 // pred_region
          %s5144 = sand.u32 %s462, 1
          %s5145 = scalar_lea.sflag [#allocation4], %s5144
          %s5146 = sand.u32 %s462, 1
          %s5147 = smul.addr %s5146, 32
          %s5148 = scalar_lea.vmem [#allocation19], %s5147
          %5150 = dma.done %s5145, 512
        $region148: #{tpu_custom_call.1} parent=143 // pred_fallthru
          _
      $region144: #{tpu_custom_call.1} parent=5 // pred_fallthru
        _
    $region6: #{tpu_custom_call.1} parent=1 // loop_footer
      %s38 = sadd.s32 1, %s34
    $region7: #{tpu_custom_call.1} parent=1 // loop_footer_branch
      %33 = sbr.rel target = $region3
    $region8: #{tpu_custom_call.1} parent=1 // loop_exit
      _
    %5151 = vsyncpa [#allocation3], 1
    %s5152 = scalar_lea.sflag [#allocation3], 1
    %5153 = vsyncpa %s5152, 1
    %5154 = vsyncpa [#allocation6], 1
    %5155 = vsyncpa [#allocation9], 1
    %5156 = vsyncpa [#allocation12], 1
    %5157 = vsyncpa [#allocation15], 1
    %5158 = vsyncpa [#allocation18], 1
    %5159 = vsyncpa [#allocation4], 1
    %s5160 = scalar_lea.sflag [#allocation4], 1
    %5161 = vsyncpa %s5160, 1

</llo_original>
